<compile_context>
chip_gen: v7x
topology: tpu7x:2x2x1
jax: 0.10.0
libtpu: 0.0.40
codegen_flags: <defaults>
</compile_context>

<pallas_src>
import functools

import jax
import jax.numpy as jnp
from jax.experimental import pallas as pl
from jax.experimental.pallas import tpu as pltpu

# Flat-layout constants (CIFAR-sized 3x32x32 input, required by 16*5*5 flatten)
_K = 5        # conv kernel size
_W1 = 32      # row stride of conv1's flat pixel layout (input width)
_P0 = 1280    # padded flat input length (>= 4 + _PS1)
_PS1 = 1152   # j-stacked conv1 RHS width (>= 4*_W1 + _L1)
_L1 = 1024    # conv1 output length computed per image
_L1P = 896    # pool1 base length (multiple of 128, covers source lane <= 858)
_W2 = 14      # row stride of conv2's flat pixel layout (pooled width)
_P2 = 256     # conv2 input length (padded 14*14 = 196)
_PS2 = 200    # j-stacked conv2 RHS width (>= 4*_W2 + _L2)
_L2 = 144     # conv2 output length computed (pool2 reads reach lane 142)
_L2P = 128    # pool2 base length (valid selected lanes reach 120)


# --------------------------------------------------------------------------
# Fused Pallas kernel: whole network for one batch tile per grid step
# --------------------------------------------------------------------------
def _cnn_fused_kernel(x_ref, w1_ref, b1_ref, s1_ref, w2_ref, b2_ref,
                      wfc1_ref, bfc1_ref, wfc2_ref, bfc2_ref,
                      wfc3_ref, bfc3_ref, o_ref, *, bt):
    f32 = jnp.float32
    bf16 = jnp.bfloat16

    # Input arrives j-stacked from the wrapper: row = j*3*bt + c*bt + b,
    # lane q holds flat pixel (q + j).  conv1 = 5 MXU dots with K = 15*bt.
    xj = x_ref[0]                                                  # (15bt, _PS1)
    acc1 = jnp.dot(w1_ref[0], xj[:, 0:_L1], preferred_element_type=f32)
    for i in range(1, _K):
        off = i * _W1
        acc1 += jnp.dot(w1_ref[i], xj[:, off:off + _L1],
                        preferred_element_type=f32)
    h1 = jnp.maximum(acc1 + b1_ref[...], 0.0).astype(bf16)         # (6bt, _L1)

    # ---- pool1: elementwise VPU max of four lane-shifted views (bf16) ----
    m1 = jnp.maximum(jnp.maximum(h1[:, 0:_L1P], h1[:, 1:_L1P + 1]),
                     jnp.maximum(h1[:, _W1:_W1 + _L1P],
                                 h1[:, _W1 + 1:_W1 + 1 + _L1P]))

    # stride-2 subsample + repack to a width-14 flat layout (one MXU matmul)
    # TODO(synk): if a bundle dump shows the MXU as the binding slot, fold this
    # 896-K 0/1 selection into conv2's tap offsets instead of a matmul.
    x2 = jnp.dot(m1, s1_ref[...], preferred_element_type=f32).astype(bf16)

    # ---- conv2: stack the 5 column taps along K (aligned 6*bt-row pieces),
    # then 5 MXU dots with K = 30*bt, f32 accumulation ----
    x2j = jnp.concatenate([x2[:, j:j + _PS2] for j in range(_K)], axis=0)
    acc2 = jnp.dot(w2_ref[0], x2j[:, 0:_L2], preferred_element_type=f32)
    for i in range(1, _K):
        off = i * _W2
        acc2 += jnp.dot(w2_ref[i], x2j[:, off:off + _L2],
                        preferred_element_type=f32)
    h2 = jnp.maximum(acc2 + b2_ref[...], 0.0).astype(bf16)         # (16bt, _L2)

    # ---- pool2 ----
    m2 = jnp.maximum(jnp.maximum(h2[:, 0:_L2P], h2[:, 1:_L2P + 1]),
                     jnp.maximum(h2[:, _W2:_W2 + _L2P],
                                 h2[:, _W2 + 1:_W2 + 1 + _L2P]))   # (16bt, 128)

    # ---- fc1: per-channel slabs vs pre-scattered, 128-lane-padded weights ----
    acc = jnp.dot(m2[0:bt, :], wfc1_ref[0], preferred_element_type=f32)
    for c in range(1, 16):
        acc += jnp.dot(m2[c * bt:(c + 1) * bt, :], wfc1_ref[c],
                       preferred_element_type=f32)
    hf1 = jnp.maximum(acc + bfc1_ref[...], 0.0).astype(bf16)       # (bt, 128)

    # ---- fc2 (lanes padded 84 -> 128, unmasked) ----
    hf2 = jnp.dot(hf1, wfc2_ref[...], preferred_element_type=f32)
    hf2 = jnp.maximum(hf2 + bfc2_ref[...], 0.0).astype(bf16)       # (bt, 128)

    # ---- fc3 (lane-dense output: N padded 10 -> 128) ----
    out = jnp.dot(hf2, wfc3_ref[...], preferred_element_type=f32)
    o_ref[...] = (out + bfc3_ref[...]).astype(o_ref.dtype)         # (bt, 128)


# --------------------------------------------------------------------------
# Wrapper-side layout plumbing (j-stacked input + fused / padded weights)
# --------------------------------------------------------------------------
def _pick_bt(B):
    # bt in {8, 16} keeps every sublane count bf16-packing aligned
    # (3bt/6bt/15bt/16bt/30bt) and guarantees >= 2 grid steps once B > bt so
    # v7x's second TensorCore gets work.  K per tap-group = 15*bt (conv1) /
    # 30*bt (conv2): 120/240 at bt=8 (~v5e MXU width), 240/480 at bt=16
    # (~fills the 256-wide v6e/v7x MXU).
    return 16 if B >= 32 else 8


def _pack_inputs(x, p, bt):
    f32, bf16 = jnp.float32, jnp.bfloat16
    B = x.shape[0]
    bp = ((B + bt - 1) // bt) * bt
    t = bp // bt

    # input: NCHW -> j-stacked flat layout (T, 15*BT, _PS1):
    #   row = j*3*BT + c*BT + b_local, lane q = flat pixel (q + j) (p = 32*h + w)
    xf = x.reshape(B, 3, 32 * 32).astype(f32)
    xf = jnp.pad(xf, ((0, bp - B), (0, 0), (0, _P0 - 32 * 32)))
    xf = jnp.stack([xf[:, :, j:j + _PS1] for j in range(_K)], axis=1)
    xf = xf.reshape(t, bt, _K, 3, _PS1).transpose(0, 2, 3, 1, 4)
    xf = xf.reshape(t, _K * 3 * bt, _PS1).astype(bf16)

    # conv weights: per row-tap i, the 5 column taps stacked along K:
    #   w[i][o*bt + a, j*C*bt + c*bt + b] = conv_w[o, c, i, j] * (a == b)
    eye = jnp.eye(bt, dtype=f32)
    w1s = jnp.einsum('ocij,ab->ioajcb', p["conv1_w"], eye)
    w1s = w1s.reshape(_K, 6 * bt, _K * 3 * bt).astype(bf16)
    w2s = jnp.einsum('ocij,ab->ioajcb', p["conv2_w"], eye)
    w2s = w2s.reshape(_K, 16 * bt, _K * 6 * bt).astype(bf16)
    b1t = jnp.repeat(p["conv1_b"], bt).reshape(6 * bt, 1).astype(f32)
    b2t = jnp.repeat(p["conv2_b"], bt).reshape(16 * bt, 1).astype(f32)

    # pool1 selection matrix: one-hot columns picking flat index 64*hq + 2*wq
    q = jnp.arange(_P2)
    hq, wq = q // _W2, q % _W2
    src = 2 * hq * _W1 + 2 * wq
    s1 = ((jnp.arange(_L1P)[:, None] == src[None, :]) &
          (q[None, :] < _W2 * _W2)).astype(bf16)                   # (896, 256)

    # fc1 weights scattered to the (channel, pool2-lane) layout:
    #   wfc1[c, v, n] = fc1_w[n, 25*c + 5*h4 + w4]  iff  v == 28*h4 + 2*w4
    # output lanes padded 120 -> 128.
    v = jnp.arange(_L2P)
    h4, r = v // (2 * _W2), v % (2 * _W2)
    w4 = r // 2
    vvalid = (r % 2 == 0) & (h4 < 5) & (w4 < 5)
    feat = jnp.where(vvalid, 5 * h4 + w4, 0)                       # (128,)
    full = jnp.arange(16)[:, None] * 25 + feat[None, :]            # (16, 128)
    wfc1 = p["fc1_w"].T[full]                                      # (16, 128, 120)
    wfc1 = jnp.where(vvalid[None, :, None], wfc1, 0.0)
    wfc1 = jnp.pad(wfc1, ((0, 0), (0, 0), (0, 8))).astype(bf16)    # (16, 128, 128)

    bfc1 = jnp.pad(p["fc1_b"], (0, 8)).reshape(1, 128).astype(f32)
    wfc2 = jnp.pad(p["fc2_w"].T, ((0, 8), (0, 44))).astype(bf16)   # (128, 128)
    bfc2 = jnp.pad(p["fc2_b"], (0, 44)).reshape(1, 128).astype(f32)
    wfc3 = jnp.pad(p["fc3_w"].T, ((0, 44), (0, 118))).astype(bf16) # (128, 128)
    bfc3 = jnp.pad(p["fc3_b"], (0, 118)).reshape(1, 128).astype(f32)

    return (xf, w1s, b1t, s1, w2s, b2t, wfc1, bfc1, wfc2, bfc2,
            wfc3, bfc3), bp, t


@jax.jit
def cnn_model1_forward(x, p):
    B = x.shape[0]
    bt = _pick_bt(B)
    inputs, bp, t = _pack_inputs(x, p, bt)

    out = pl.pallas_call(
        functools.partial(_cnn_fused_kernel, bt=bt),
        out_shape=jax.ShapeDtypeStruct((bp, 128), jnp.float32),
        grid=(t,),
        in_specs=[
            pl.BlockSpec((1, _K * 3 * bt, _PS1), lambda i: (i, 0, 0)),      # x (j-stacked)
            pl.BlockSpec((_K, 6 * bt, _K * 3 * bt), lambda i: (0, 0, 0)),   # conv1 w
            pl.BlockSpec((6 * bt, 1), lambda i: (0, 0)),                    # conv1 b
            pl.BlockSpec((_L1P, _P2), lambda i: (0, 0)),                    # pool1 select
            pl.BlockSpec((_K, 16 * bt, _K * 6 * bt), lambda i: (0, 0, 0)),  # conv2 w
            pl.BlockSpec((16 * bt, 1), lambda i: (0, 0)),                   # conv2 b
            pl.BlockSpec((16, _L2P, 128), lambda i: (0, 0, 0)),             # fc1 w (pad)
            pl.BlockSpec((1, 128), lambda i: (0, 0)),                       # fc1 b (pad)
            pl.BlockSpec((128, 128), lambda i: (0, 0)),                     # fc2 w (pad)
            pl.BlockSpec((1, 128), lambda i: (0, 0)),                       # fc2 b (pad)
            pl.BlockSpec((128, 128), lambda i: (0, 0)),                     # fc3 w (pad)
            pl.BlockSpec((1, 128), lambda i: (0, 0)),                       # fc3 b (pad)
        ],
        out_specs=pl.BlockSpec((bt, 128), lambda i: (i, 0)),
        compiler_params=pltpu.CompilerParams(
            dimension_semantics=("parallel",),
            vmem_limit_bytes=32 * 1024 * 1024),
    )(*inputs)
    return out[:B, :10]


# --------------------------------------------------------------------------
# Parameters (deterministic, PyTorch-style uniform(-1/sqrt(fan_in), ...))
# --------------------------------------------------------------------------
def init_params(key):
    def u(k, shape, fan_in):
        bound = 1.0 / jnp.sqrt(jnp.float32(fan_in))
        return jax.random.uniform(k, shape, jnp.float32, -bound, bound)

    ks = jax.random.split(key, 10)
    return {
        "conv1_w": u(ks[0], (6, 3, 5, 5), 3 * 5 * 5),
        "conv1_b": u(ks[1], (6,), 3 * 5 * 5),
        "conv2_w": u(ks[2], (16, 6, 5, 5), 6 * 5 * 5),
        "conv2_b": u(ks[3], (16,), 6 * 5 * 5),
        "fc1_w":   u(ks[4], (120, 400), 400),
        "fc1_b":   u(ks[5], (120,), 400),
        "fc2_w":   u(ks[6], (84, 120), 120),
        "fc2_b":   u(ks[7], (84,), 120),
        "fc3_w":   u(ks[8], (10, 84), 84),
        "fc3_b":   u(ks[9], (10,), 84),
    }


# Pure-JAX reference (mirrors CNNModel1.forward) for a sanity check.
def _reference_forward(x, p):
    def conv(h, w, b):
        out = jax.lax.conv_general_dilated(
            h, w, (1, 1), "VALID",
            dimension_numbers=("NCHW", "OIHW", "NCHW"))
        return out + b[None, :, None, None]

    def pool(h):
        B, C, H, W = h.shape
        return h.reshape(B, C, H // 2, 2, W // 2, 2).max(axis=(3, 5))

    h = pool(jax.nn.relu(conv(x, p["conv1_w"], p["conv1_b"])))
    h = pool(jax.nn.relu(conv(h, p["conv2_w"], p["conv2_b"])))
    h = h.reshape(h.shape[0], 16 * 5 * 5)
    h = jax.nn.relu(h @ p["fc1_w"].T + p["fc1_b"])
    h = jax.nn.relu(h @ p["fc2_w"].T + p["fc2_b"])
    return h @ p["fc3_w"].T + p["fc3_b"]


if __name__ == "__main__":
    key = jax.random.PRNGKey(0)
    k_x, k_p = jax.random.split(key)
    # CIFAR-10 shaped input: the 16*5*5 flatten requires 3x32x32 input.
    x = jax.random.normal(k_x, (2, 3, 32, 32), dtype=jnp.float32)
    params = init_params(k_p)

    out = jax.block_until_ready(cnn_model1_forward(x, params))
    assert out.shape == (2, 10) and out.dtype == jnp.float32

    ref = jax.block_until_ready(_reference_forward(x, params))
    err = float(jnp.max(jnp.abs(out - ref)))
    assert err < 0.15, f"max |diff| vs reference too large: {err}"

    print("KERNEL_OK")
</pallas_src>

<mosaic_0001>
module attributes {stable_mosaic.version = 11 : i64} {
  func.func @_cnn_fused_kernel(%arg0: i32, %arg1: memref<1x120x1152xbf16, #tpu.memory_space<vmem>>, %arg2: memref<5x48x120xbf16, #tpu.memory_space<vmem>>, %arg3: memref<48x1xf32, #tpu.memory_space<vmem>>, %arg4: memref<896x256xbf16, #tpu.memory_space<vmem>>, %arg5: memref<5x128x240xbf16, #tpu.memory_space<vmem>>, %arg6: memref<128x1xf32, #tpu.memory_space<vmem>>, %arg7: memref<16x128x128xbf16, #tpu.memory_space<vmem>>, %arg8: memref<1x128xf32, #tpu.memory_space<vmem>>, %arg9: memref<128x128xbf16, #tpu.memory_space<vmem>>, %arg10: memref<1x128xf32, #tpu.memory_space<vmem>>, %arg11: memref<128x128xbf16, #tpu.memory_space<vmem>>, %arg12: memref<1x128xf32, #tpu.memory_space<vmem>>, %arg13: memref<8x128xf32, #tpu.memory_space<vmem>>) attributes {dimension_semantics = [#tpu.dimension_semantics<parallel>], iteration_bounds = array<i64: 1>, scalar_prefetch = 0 : i64, scratch_operands = 0 : i64, tpu.core_type = #tpu.core_type<tc>, window_params = [{transform_indices = @transform_0, window_bounds = array<i64: 1, 120, 1152>}, {pipeline_mode = #tpu.pipeline_mode<synchronous>, transform_indices = @transform_1, window_bounds = array<i64: 5, 48, 120>}, {pipeline_mode = #tpu.pipeline_mode<synchronous>, transform_indices = @transform_2, window_bounds = array<i64: 48, 1>}, {pipeline_mode = #tpu.pipeline_mode<synchronous>, transform_indices = @transform_3, window_bounds = array<i64: 896, 256>}, {pipeline_mode = #tpu.pipeline_mode<synchronous>, transform_indices = @transform_4, window_bounds = array<i64: 5, 128, 240>}, {pipeline_mode = #tpu.pipeline_mode<synchronous>, transform_indices = @transform_5, window_bounds = array<i64: 128, 1>}, {pipeline_mode = #tpu.pipeline_mode<synchronous>, transform_indices = @transform_6, window_bounds = array<i64: 16, 128, 128>}, {pipeline_mode = #tpu.pipeline_mode<synchronous>, transform_indices = @transform_7, window_bounds = array<i64: 1, 128>}, {pipeline_mode = #tpu.pipeline_mode<synchronous>, transform_indices = @transform_8, window_bounds = array<i64: 128, 128>}, {pipeline_mode = #tpu.pipeline_mode<synchronous>, transform_indices = @transform_9, window_bounds = array<i64: 1, 128>}, {pipeline_mode = #tpu.pipeline_mode<synchronous>, transform_indices = @transform_10, window_bounds = array<i64: 128, 128>}, {pipeline_mode = #tpu.pipeline_mode<synchronous>, transform_indices = @transform_11, window_bounds = array<i64: 1, 128>}, {transform_indices = @transform_12, window_bounds = array<i64: 8, 128>}]} {
    %c0 = arith.constant 0 : index
    %c0_0 = arith.constant 0 : index
    %c0_1 = arith.constant 0 : index
    %0 = vector.load %arg1[%c0, %c0_0, %c0_1] : memref<1x120x1152xbf16, #tpu.memory_space<vmem>>, vector<1x120x1152xbf16>
    %1 = vector.shape_cast %0 : vector<1x120x1152xbf16> to vector<120x1152xbf16>
    %c0_2 = arith.constant 0 : index
    %c0_3 = arith.constant 0 : index
    %c0_4 = arith.constant 0 : index
    %2 = vector.load %arg2[%c0_2, %c0_3, %c0_4] : memref<5x48x120xbf16, #tpu.memory_space<vmem>>, vector<1x48x120xbf16>
    %3 = vector.shape_cast %2 : vector<1x48x120xbf16> to vector<48x120xbf16>
    %4 = vector.extract_strided_slice %1 {offsets = [0, 0], sizes = [120, 1024], strides = [1, 1]} : vector<120x1152xbf16> to vector<120x1024xbf16>
    %cst = arith.constant dense<0.000000e+00> : vector<48x1024xf32>
    %5 = tpu.matmul %3, %4, %cst {dimension_numbers = #tpu.dot_dimension_numbers<[1], [0], [0], [1], [0, 0, 1, 1], [], []>} : vector<48x120xbf16>, vector<120x1024xbf16>, vector<48x1024xf32> -> vector<48x1024xf32>
    %c1 = arith.constant 1 : index
    %c0_5 = arith.constant 0 : index
    %c0_6 = arith.constant 0 : index
    %6 = vector.load %arg2[%c1, %c0_5, %c0_6] : memref<5x48x120xbf16, #tpu.memory_space<vmem>>, vector<1x48x120xbf16>
    %7 = vector.shape_cast %6 : vector<1x48x120xbf16> to vector<48x120xbf16>
    %8 = vector.extract_strided_slice %1 {offsets = [0, 32], sizes = [120, 1024], strides = [1, 1]} : vector<120x1152xbf16> to vector<120x1024xbf16>
    %cst_7 = arith.constant dense<0.000000e+00> : vector<48x1024xf32>
    %9 = tpu.matmul %7, %8, %cst_7 {dimension_numbers = #tpu.dot_dimension_numbers<[1], [0], [0], [1], [0, 0, 1, 1], [], []>} : vector<48x120xbf16>, vector<120x1024xbf16>, vector<48x1024xf32> -> vector<48x1024xf32>
    %10 = arith.addf %5, %9 : vector<48x1024xf32>
    %c2 = arith.constant 2 : index
    %c0_8 = arith.constant 0 : index
    %c0_9 = arith.constant 0 : index
    %11 = vector.load %arg2[%c2, %c0_8, %c0_9] : memref<5x48x120xbf16, #tpu.memory_space<vmem>>, vector<1x48x120xbf16>
    %12 = vector.shape_cast %11 : vector<1x48x120xbf16> to vector<48x120xbf16>
    %13 = vector.extract_strided_slice %1 {offsets = [0, 64], sizes = [120, 1024], strides = [1, 1]} : vector<120x1152xbf16> to vector<120x1024xbf16>
    %cst_10 = arith.constant dense<0.000000e+00> : vector<48x1024xf32>
    %14 = tpu.matmul %12, %13, %cst_10 {dimension_numbers = #tpu.dot_dimension_numbers<[1], [0], [0], [1], [0, 0, 1, 1], [], []>} : vector<48x120xbf16>, vector<120x1024xbf16>, vector<48x1024xf32> -> vector<48x1024xf32>
    %15 = arith.addf %10, %14 : vector<48x1024xf32>
    %c3 = arith.constant 3 : index
    %c0_11 = arith.constant 0 : index
    %c0_12 = arith.constant 0 : index
    %16 = vector.load %arg2[%c3, %c0_11, %c0_12] : memref<5x48x120xbf16, #tpu.memory_space<vmem>>, vector<1x48x120xbf16>
    %17 = vector.shape_cast %16 : vector<1x48x120xbf16> to vector<48x120xbf16>
    %18 = vector.extract_strided_slice %1 {offsets = [0, 96], sizes = [120, 1024], strides = [1, 1]} : vector<120x1152xbf16> to vector<120x1024xbf16>
    %cst_13 = arith.constant dense<0.000000e+00> : vector<48x1024xf32>
    %19 = tpu.matmul %17, %18, %cst_13 {dimension_numbers = #tpu.dot_dimension_numbers<[1], [0], [0], [1], [0, 0, 1, 1], [], []>} : vector<48x120xbf16>, vector<120x1024xbf16>, vector<48x1024xf32> -> vector<48x1024xf32>
    %20 = arith.addf %15, %19 : vector<48x1024xf32>
    %c4 = arith.constant 4 : index
    %c0_14 = arith.constant 0 : index
    %c0_15 = arith.constant 0 : index
    %21 = vector.load %arg2[%c4, %c0_14, %c0_15] : memref<5x48x120xbf16, #tpu.memory_space<vmem>>, vector<1x48x120xbf16>
    %22 = vector.shape_cast %21 : vector<1x48x120xbf16> to vector<48x120xbf16>
    %23 = vector.extract_strided_slice %1 {offsets = [0, 128], sizes = [120, 1024], strides = [1, 1]} : vector<120x1152xbf16> to vector<120x1024xbf16>
    %cst_16 = arith.constant dense<0.000000e+00> : vector<48x1024xf32>
    %24 = tpu.matmul %22, %23, %cst_16 {dimension_numbers = #tpu.dot_dimension_numbers<[1], [0], [0], [1], [0, 0, 1, 1], [], []>} : vector<48x120xbf16>, vector<120x1024xbf16>, vector<48x1024xf32> -> vector<48x1024xf32>
    %25 = arith.addf %20, %24 : vector<48x1024xf32>
    %c0_17 = arith.constant 0 : index
    %c0_18 = arith.constant 0 : index
    %26 = vector.load %arg3[%c0_17, %c0_18] : memref<48x1xf32, #tpu.memory_space<vmem>>, vector<48x1xf32>
    %27 = vector.broadcast %26 : vector<48x1xf32> to vector<48x1024xf32>
    %28 = arith.addf %25, %27 : vector<48x1024xf32>
    %cst_19 = arith.constant 0.000000e+00 : f32
    %29 = vector.broadcast %cst_19 : f32 to vector<48x1024xf32>
    %30 = arith.maximumf %28, %29 : vector<48x1024xf32>
    %31 = arith.truncf %30 : vector<48x1024xf32> to vector<48x1024xbf16>
    %32 = vector.extract_strided_slice %31 {offsets = [0, 0], sizes = [48, 896], strides = [1, 1]} : vector<48x1024xbf16> to vector<48x896xbf16>
    %33 = vector.extract_strided_slice %31 {offsets = [0, 1], sizes = [48, 896], strides = [1, 1]} : vector<48x1024xbf16> to vector<48x896xbf16>
    %34 = arith.maximumf %32, %33 : vector<48x896xbf16>
    %35 = vector.extract_strided_slice %31 {offsets = [0, 32], sizes = [48, 896], strides = [1, 1]} : vector<48x1024xbf16> to vector<48x896xbf16>
    %36 = vector.extract_strided_slice %31 {offsets = [0, 33], sizes = [48, 896], strides = [1, 1]} : vector<48x1024xbf16> to vector<48x896xbf16>
    %37 = arith.maximumf %35, %36 : vector<48x896xbf16>
    %38 = arith.maximumf %34, %37 : vector<48x896xbf16>
    %c0_20 = arith.constant 0 : index
    %c0_21 = arith.constant 0 : index
    %39 = vector.load %arg4[%c0_20, %c0_21] : memref<896x256xbf16, #tpu.memory_space<vmem>>, vector<896x256xbf16>
    %cst_22 = arith.constant dense<0.000000e+00> : vector<48x256xf32>
    %40 = tpu.matmul %38, %39, %cst_22 {dimension_numbers = #tpu.dot_dimension_numbers<[1], [0], [0], [1], [0, 0, 1, 1], [], []>} : vector<48x896xbf16>, vector<896x256xbf16>, vector<48x256xf32> -> vector<48x256xf32>
    %41 = arith.truncf %40 : vector<48x256xf32> to vector<48x256xbf16>
    %42 = vector.extract_strided_slice %41 {offsets = [0, 0], sizes = [48, 200], strides = [1, 1]} : vector<48x256xbf16> to vector<48x200xbf16>
    %43 = vector.extract_strided_slice %41 {offsets = [0, 1], sizes = [48, 200], strides = [1, 1]} : vector<48x256xbf16> to vector<48x200xbf16>
    %44 = vector.extract_strided_slice %41 {offsets = [0, 2], sizes = [48, 200], strides = [1, 1]} : vector<48x256xbf16> to vector<48x200xbf16>
    %45 = vector.extract_strided_slice %41 {offsets = [0, 3], sizes = [48, 200], strides = [1, 1]} : vector<48x256xbf16> to vector<48x200xbf16>
    %46 = vector.extract_strided_slice %41 {offsets = [0, 4], sizes = [48, 200], strides = [1, 1]} : vector<48x256xbf16> to vector<48x200xbf16>
    %47 = tpu.concatenate %42, %43, %44, %45, %46 in 0 : vector<48x200xbf16>, vector<48x200xbf16>, vector<48x200xbf16>, vector<48x200xbf16>, vector<48x200xbf16> -> vector<240x200xbf16>
    %c0_23 = arith.constant 0 : index
    %c0_24 = arith.constant 0 : index
    %c0_25 = arith.constant 0 : index
    %48 = vector.load %arg5[%c0_23, %c0_24, %c0_25] : memref<5x128x240xbf16, #tpu.memory_space<vmem>>, vector<1x128x240xbf16>
    %49 = vector.shape_cast %48 : vector<1x128x240xbf16> to vector<128x240xbf16>
    %50 = vector.extract_strided_slice %47 {offsets = [0, 0], sizes = [240, 144], strides = [1, 1]} : vector<240x200xbf16> to vector<240x144xbf16>
    %cst_26 = arith.constant dense<0.000000e+00> : vector<128x144xf32>
    %51 = tpu.matmul %49, %50, %cst_26 {dimension_numbers = #tpu.dot_dimension_numbers<[1], [0], [0], [1], [0, 0, 1, 1], [], []>} : vector<128x240xbf16>, vector<240x144xbf16>, vector<128x144xf32> -> vector<128x144xf32>
    %c1_27 = arith.constant 1 : index
    %c0_28 = arith.constant 0 : index
    %c0_29 = arith.constant 0 : index
    %52 = vector.load %arg5[%c1_27, %c0_28, %c0_29] : memref<5x128x240xbf16, #tpu.memory_space<vmem>>, vector<1x128x240xbf16>
    %53 = vector.shape_cast %52 : vector<1x128x240xbf16> to vector<128x240xbf16>
    %54 = vector.extract_strided_slice %47 {offsets = [0, 14], sizes = [240, 144], strides = [1, 1]} : vector<240x200xbf16> to vector<240x144xbf16>
    %cst_30 = arith.constant dense<0.000000e+00> : vector<128x144xf32>
    %55 = tpu.matmul %53, %54, %cst_30 {dimension_numbers = #tpu.dot_dimension_numbers<[1], [0], [0], [1], [0, 0, 1, 1], [], []>} : vector<128x240xbf16>, vector<240x144xbf16>, vector<128x144xf32> -> vector<128x144xf32>
    %56 = arith.addf %51, %55 : vector<128x144xf32>
    %c2_31 = arith.constant 2 : index
    %c0_32 = arith.constant 0 : index
    %c0_33 = arith.constant 0 : index
    %57 = vector.load %arg5[%c2_31, %c0_32, %c0_33] : memref<5x128x240xbf16, #tpu.memory_space<vmem>>, vector<1x128x240xbf16>
    %58 = vector.shape_cast %57 : vector<1x128x240xbf16> to vector<128x240xbf16>
    %59 = vector.extract_strided_slice %47 {offsets = [0, 28], sizes = [240, 144], strides = [1, 1]} : vector<240x200xbf16> to vector<240x144xbf16>
    %cst_34 = arith.constant dense<0.000000e+00> : vector<128x144xf32>
    %60 = tpu.matmul %58, %59, %cst_34 {dimension_numbers = #tpu.dot_dimension_numbers<[1], [0], [0], [1], [0, 0, 1, 1], [], []>} : vector<128x240xbf16>, vector<240x144xbf16>, vector<128x144xf32> -> vector<128x144xf32>
    %61 = arith.addf %56, %60 : vector<128x144xf32>
    %c3_35 = arith.constant 3 : index
    %c0_36 = arith.constant 0 : index
    %c0_37 = arith.constant 0 : index
    %62 = vector.load %arg5[%c3_35, %c0_36, %c0_37] : memref<5x128x240xbf16, #tpu.memory_space<vmem>>, vector<1x128x240xbf16>
    %63 = vector.shape_cast %62 : vector<1x128x240xbf16> to vector<128x240xbf16>
    %64 = vector.extract_strided_slice %47 {offsets = [0, 42], sizes = [240, 144], strides = [1, 1]} : vector<240x200xbf16> to vector<240x144xbf16>
    %cst_38 = arith.constant dense<0.000000e+00> : vector<128x144xf32>
    %65 = tpu.matmul %63, %64, %cst_38 {dimension_numbers = #tpu.dot_dimension_numbers<[1], [0], [0], [1], [0, 0, 1, 1], [], []>} : vector<128x240xbf16>, vector<240x144xbf16>, vector<128x144xf32> -> vector<128x144xf32>
    %66 = arith.addf %61, %65 : vector<128x144xf32>
    %c4_39 = arith.constant 4 : index
    %c0_40 = arith.constant 0 : index
    %c0_41 = arith.constant 0 : index
    %67 = vector.load %arg5[%c4_39, %c0_40, %c0_41] : memref<5x128x240xbf16, #tpu.memory_space<vmem>>, vector<1x128x240xbf16>
    %68 = vector.shape_cast %67 : vector<1x128x240xbf16> to vector<128x240xbf16>
    %69 = vector.extract_strided_slice %47 {offsets = [0, 56], sizes = [240, 144], strides = [1, 1]} : vector<240x200xbf16> to vector<240x144xbf16>
    %cst_42 = arith.constant dense<0.000000e+00> : vector<128x144xf32>
    %70 = tpu.matmul %68, %69, %cst_42 {dimension_numbers = #tpu.dot_dimension_numbers<[1], [0], [0], [1], [0, 0, 1, 1], [], []>} : vector<128x240xbf16>, vector<240x144xbf16>, vector<128x144xf32> -> vector<128x144xf32>
    %71 = arith.addf %66, %70 : vector<128x144xf32>
    %c0_43 = arith.constant 0 : index
    %c0_44 = arith.constant 0 : index
    %72 = vector.load %arg6[%c0_43, %c0_44] : memref<128x1xf32, #tpu.memory_space<vmem>>, vector<128x1xf32>
    %73 = vector.broadcast %72 : vector<128x1xf32> to vector<128x144xf32>
    %74 = arith.addf %71, %73 : vector<128x144xf32>
    %cst_45 = arith.constant 0.000000e+00 : f32
    %75 = vector.broadcast %cst_45 : f32 to vector<128x144xf32>
    %76 = arith.maximumf %74, %75 : vector<128x144xf32>
    %77 = arith.truncf %76 : vector<128x144xf32> to vector<128x144xbf16>
    %78 = vector.extract_strided_slice %77 {offsets = [0, 0], sizes = [128, 128], strides = [1, 1]} : vector<128x144xbf16> to vector<128x128xbf16>
    %79 = vector.extract_strided_slice %77 {offsets = [0, 1], sizes = [128, 128], strides = [1, 1]} : vector<128x144xbf16> to vector<128x128xbf16>
    %80 = arith.maximumf %78, %79 : vector<128x128xbf16>
    %81 = vector.extract_strided_slice %77 {offsets = [0, 14], sizes = [128, 128], strides = [1, 1]} : vector<128x144xbf16> to vector<128x128xbf16>
    %82 = vector.extract_strided_slice %77 {offsets = [0, 15], sizes = [128, 128], strides = [1, 1]} : vector<128x144xbf16> to vector<128x128xbf16>
    %83 = arith.maximumf %81, %82 : vector<128x128xbf16>
    %84 = arith.maximumf %80, %83 : vector<128x128xbf16>
    %85 = vector.extract_strided_slice %84 {offsets = [0, 0], sizes = [8, 128], strides = [1, 1]} : vector<128x128xbf16> to vector<8x128xbf16>
    %c0_46 = arith.constant 0 : index
    %c0_47 = arith.constant 0 : index
    %c0_48 = arith.constant 0 : index
    %86 = vector.load %arg7[%c0_46, %c0_47, %c0_48] : memref<16x128x128xbf16, #tpu.memory_space<vmem>>, vector<1x128x128xbf16>
    %87 = vector.shape_cast %86 : vector<1x128x128xbf16> to vector<128x128xbf16>
    %cst_49 = arith.constant dense<0.000000e+00> : vector<8x128xf32>
    %88 = tpu.matmul %85, %87, %cst_49 {dimension_numbers = #tpu.dot_dimension_numbers<[1], [0], [0], [1], [0, 0, 1, 1], [], []>} : vector<8x128xbf16>, vector<128x128xbf16>, vector<8x128xf32> -> vector<8x128xf32>
    %89 = vector.extract_strided_slice %84 {offsets = [8, 0], sizes = [8, 128], strides = [1, 1]} : vector<128x128xbf16> to vector<8x128xbf16>
    %c1_50 = arith.constant 1 : index
    %c0_51 = arith.constant 0 : index
    %c0_52 = arith.constant 0 : index
    %90 = vector.load %arg7[%c1_50, %c0_51, %c0_52] : memref<16x128x128xbf16, #tpu.memory_space<vmem>>, vector<1x128x128xbf16>
    %91 = vector.shape_cast %90 : vector<1x128x128xbf16> to vector<128x128xbf16>
    %cst_53 = arith.constant dense<0.000000e+00> : vector<8x128xf32>
    %92 = tpu.matmul %89, %91, %cst_53 {dimension_numbers = #tpu.dot_dimension_numbers<[1], [0], [0], [1], [0, 0, 1, 1], [], []>} : vector<8x128xbf16>, vector<128x128xbf16>, vector<8x128xf32> -> vector<8x128xf32>
    %93 = arith.addf %88, %92 : vector<8x128xf32>
    %94 = vector.extract_strided_slice %84 {offsets = [16, 0], sizes = [8, 128], strides = [1, 1]} : vector<128x128xbf16> to vector<8x128xbf16>
    %c2_54 = arith.constant 2 : index
    %c0_55 = arith.constant 0 : index
    %c0_56 = arith.constant 0 : index
    %95 = vector.load %arg7[%c2_54, %c0_55, %c0_56] : memref<16x128x128xbf16, #tpu.memory_space<vmem>>, vector<1x128x128xbf16>
    %96 = vector.shape_cast %95 : vector<1x128x128xbf16> to vector<128x128xbf16>
    %cst_57 = arith.constant dense<0.000000e+00> : vector<8x128xf32>
    %97 = tpu.matmul %94, %96, %cst_57 {dimension_numbers = #tpu.dot_dimension_numbers<[1], [0], [0], [1], [0, 0, 1, 1], [], []>} : vector<8x128xbf16>, vector<128x128xbf16>, vector<8x128xf32> -> vector<8x128xf32>
    %98 = arith.addf %93, %97 : vector<8x128xf32>
    %99 = vector.extract_strided_slice %84 {offsets = [24, 0], sizes = [8, 128], strides = [1, 1]} : vector<128x128xbf16> to vector<8x128xbf16>
    %c3_58 = arith.constant 3 : index
    %c0_59 = arith.constant 0 : index
    %c0_60 = arith.constant 0 : index
    %100 = vector.load %arg7[%c3_58, %c0_59, %c0_60] : memref<16x128x128xbf16, #tpu.memory_space<vmem>>, vector<1x128x128xbf16>
    %101 = vector.shape_cast %100 : vector<1x128x128xbf16> to vector<128x128xbf16>
    %cst_61 = arith.constant dense<0.000000e+00> : vector<8x128xf32>
    %102 = tpu.matmul %99, %101, %cst_61 {dimension_numbers = #tpu.dot_dimension_numbers<[1], [0], [0], [1], [0, 0, 1, 1], [], []>} : vector<8x128xbf16>, vector<128x128xbf16>, vector<8x128xf32> -> vector<8x128xf32>
    %103 = arith.addf %98, %102 : vector<8x128xf32>
    %104 = vector.extract_strided_slice %84 {offsets = [32, 0], sizes = [8, 128], strides = [1, 1]} : vector<128x128xbf16> to vector<8x128xbf16>
    %c4_62 = arith.constant 4 : index
    %c0_63 = arith.constant 0 : index
    %c0_64 = arith.constant 0 : index
    %105 = vector.load %arg7[%c4_62, %c0_63, %c0_64] : memref<16x128x128xbf16, #tpu.memory_space<vmem>>, vector<1x128x128xbf16>
    %106 = vector.shape_cast %105 : vector<1x128x128xbf16> to vector<128x128xbf16>
    %cst_65 = arith.constant dense<0.000000e+00> : vector<8x128xf32>
    %107 = tpu.matmul %104, %106, %cst_65 {dimension_numbers = #tpu.dot_dimension_numbers<[1], [0], [0], [1], [0, 0, 1, 1], [], []>} : vector<8x128xbf16>, vector<128x128xbf16>, vector<8x128xf32> -> vector<8x128xf32>
    %108 = arith.addf %103, %107 : vector<8x128xf32>
    %109 = vector.extract_strided_slice %84 {offsets = [40, 0], sizes = [8, 128], strides = [1, 1]} : vector<128x128xbf16> to vector<8x128xbf16>
    %c5 = arith.constant 5 : index
    %c0_66 = arith.constant 0 : index
    %c0_67 = arith.constant 0 : index
    %110 = vector.load %arg7[%c5, %c0_66, %c0_67] : memref<16x128x128xbf16, #tpu.memory_space<vmem>>, vector<1x128x128xbf16>
    %111 = vector.shape_cast %110 : vector<1x128x128xbf16> to vector<128x128xbf16>
    %cst_68 = arith.constant dense<0.000000e+00> : vector<8x128xf32>
    %112 = tpu.matmul %109, %111, %cst_68 {dimension_numbers = #tpu.dot_dimension_numbers<[1], [0], [0], [1], [0, 0, 1, 1], [], []>} : vector<8x128xbf16>, vector<128x128xbf16>, vector<8x128xf32> -> vector<8x128xf32>
    %113 = arith.addf %108, %112 : vector<8x128xf32>
    %114 = vector.extract_strided_slice %84 {offsets = [48, 0], sizes = [8, 128], strides = [1, 1]} : vector<128x128xbf16> to vector<8x128xbf16>
    %c6 = arith.constant 6 : index
    %c0_69 = arith.constant 0 : index
    %c0_70 = arith.constant 0 : index
    %115 = vector.load %arg7[%c6, %c0_69, %c0_70] : memref<16x128x128xbf16, #tpu.memory_space<vmem>>, vector<1x128x128xbf16>
    %116 = vector.shape_cast %115 : vector<1x128x128xbf16> to vector<128x128xbf16>
    %cst_71 = arith.constant dense<0.000000e+00> : vector<8x128xf32>
    %117 = tpu.matmul %114, %116, %cst_71 {dimension_numbers = #tpu.dot_dimension_numbers<[1], [0], [0], [1], [0, 0, 1, 1], [], []>} : vector<8x128xbf16>, vector<128x128xbf16>, vector<8x128xf32> -> vector<8x128xf32>
    %118 = arith.addf %113, %117 : vector<8x128xf32>
    %119 = vector.extract_strided_slice %84 {offsets = [56, 0], sizes = [8, 128], strides = [1, 1]} : vector<128x128xbf16> to vector<8x128xbf16>
    %c7 = arith.constant 7 : index
    %c0_72 = arith.constant 0 : index
    %c0_73 = arith.constant 0 : index
    %120 = vector.load %arg7[%c7, %c0_72, %c0_73] : memref<16x128x128xbf16, #tpu.memory_space<vmem>>, vector<1x128x128xbf16>
    %121 = vector.shape_cast %120 : vector<1x128x128xbf16> to vector<128x128xbf16>
    %cst_74 = arith.constant dense<0.000000e+00> : vector<8x128xf32>
    %122 = tpu.matmul %119, %121, %cst_74 {dimension_numbers = #tpu.dot_dimension_numbers<[1], [0], [0], [1], [0, 0, 1, 1], [], []>} : vector<8x128xbf16>, vector<128x128xbf16>, vector<8x128xf32> -> vector<8x128xf32>
    %123 = arith.addf %118, %122 : vector<8x128xf32>
    %124 = vector.extract_strided_slice %84 {offsets = [64, 0], sizes = [8, 128], strides = [1, 1]} : vector<128x128xbf16> to vector<8x128xbf16>
    %c8 = arith.constant 8 : index
    %c0_75 = arith.constant 0 : index
    %c0_76 = arith.constant 0 : index
    %125 = vector.load %arg7[%c8, %c0_75, %c0_76] : memref<16x128x128xbf16, #tpu.memory_space<vmem>>, vector<1x128x128xbf16>
    %126 = vector.shape_cast %125 : vector<1x128x128xbf16> to vector<128x128xbf16>
    %cst_77 = arith.constant dense<0.000000e+00> : vector<8x128xf32>
    %127 = tpu.matmul %124, %126, %cst_77 {dimension_numbers = #tpu.dot_dimension_numbers<[1], [0], [0], [1], [0, 0, 1, 1], [], []>} : vector<8x128xbf16>, vector<128x128xbf16>, vector<8x128xf32> -> vector<8x128xf32>
    %128 = arith.addf %123, %127 : vector<8x128xf32>
    %129 = vector.extract_strided_slice %84 {offsets = [72, 0], sizes = [8, 128], strides = [1, 1]} : vector<128x128xbf16> to vector<8x128xbf16>
    %c9 = arith.constant 9 : index
    %c0_78 = arith.constant 0 : index
    %c0_79 = arith.constant 0 : index
    %130 = vector.load %arg7[%c9, %c0_78, %c0_79] : memref<16x128x128xbf16, #tpu.memory_space<vmem>>, vector<1x128x128xbf16>
    %131 = vector.shape_cast %130 : vector<1x128x128xbf16> to vector<128x128xbf16>
    %cst_80 = arith.constant dense<0.000000e+00> : vector<8x128xf32>
    %132 = tpu.matmul %129, %131, %cst_80 {dimension_numbers = #tpu.dot_dimension_numbers<[1], [0], [0], [1], [0, 0, 1, 1], [], []>} : vector<8x128xbf16>, vector<128x128xbf16>, vector<8x128xf32> -> vector<8x128xf32>
    %133 = arith.addf %128, %132 : vector<8x128xf32>
    %134 = vector.extract_strided_slice %84 {offsets = [80, 0], sizes = [8, 128], strides = [1, 1]} : vector<128x128xbf16> to vector<8x128xbf16>
    %c10 = arith.constant 10 : index
    %c0_81 = arith.constant 0 : index
    %c0_82 = arith.constant 0 : index
    %135 = vector.load %arg7[%c10, %c0_81, %c0_82] : memref<16x128x128xbf16, #tpu.memory_space<vmem>>, vector<1x128x128xbf16>
    %136 = vector.shape_cast %135 : vector<1x128x128xbf16> to vector<128x128xbf16>
    %cst_83 = arith.constant dense<0.000000e+00> : vector<8x128xf32>
    %137 = tpu.matmul %134, %136, %cst_83 {dimension_numbers = #tpu.dot_dimension_numbers<[1], [0], [0], [1], [0, 0, 1, 1], [], []>} : vector<8x128xbf16>, vector<128x128xbf16>, vector<8x128xf32> -> vector<8x128xf32>
    %138 = arith.addf %133, %137 : vector<8x128xf32>
    %139 = vector.extract_strided_slice %84 {offsets = [88, 0], sizes = [8, 128], strides = [1, 1]} : vector<128x128xbf16> to vector<8x128xbf16>
    %c11 = arith.constant 11 : index
    %c0_84 = arith.constant 0 : index
    %c0_85 = arith.constant 0 : index
    %140 = vector.load %arg7[%c11, %c0_84, %c0_85] : memref<16x128x128xbf16, #tpu.memory_space<vmem>>, vector<1x128x128xbf16>
    %141 = vector.shape_cast %140 : vector<1x128x128xbf16> to vector<128x128xbf16>
    %cst_86 = arith.constant dense<0.000000e+00> : vector<8x128xf32>
    %142 = tpu.matmul %139, %141, %cst_86 {dimension_numbers = #tpu.dot_dimension_numbers<[1], [0], [0], [1], [0, 0, 1, 1], [], []>} : vector<8x128xbf16>, vector<128x128xbf16>, vector<8x128xf32> -> vector<8x128xf32>
    %143 = arith.addf %138, %142 : vector<8x128xf32>
    %144 = vector.extract_strided_slice %84 {offsets = [96, 0], sizes = [8, 128], strides = [1, 1]} : vector<128x128xbf16> to vector<8x128xbf16>
    %c12 = arith.constant 12 : index
    %c0_87 = arith.constant 0 : index
    %c0_88 = arith.constant 0 : index
    %145 = vector.load %arg7[%c12, %c0_87, %c0_88] : memref<16x128x128xbf16, #tpu.memory_space<vmem>>, vector<1x128x128xbf16>
    %146 = vector.shape_cast %145 : vector<1x128x128xbf16> to vector<128x128xbf16>
    %cst_89 = arith.constant dense<0.000000e+00> : vector<8x128xf32>
    %147 = tpu.matmul %144, %146, %cst_89 {dimension_numbers = #tpu.dot_dimension_numbers<[1], [0], [0], [1], [0, 0, 1, 1], [], []>} : vector<8x128xbf16>, vector<128x128xbf16>, vector<8x128xf32> -> vector<8x128xf32>
    %148 = arith.addf %143, %147 : vector<8x128xf32>
    %149 = vector.extract_strided_slice %84 {offsets = [104, 0], sizes = [8, 128], strides = [1, 1]} : vector<128x128xbf16> to vector<8x128xbf16>
    %c13 = arith.constant 13 : index
    %c0_90 = arith.constant 0 : index
    %c0_91 = arith.constant 0 : index
    %150 = vector.load %arg7[%c13, %c0_90, %c0_91] : memref<16x128x128xbf16, #tpu.memory_space<vmem>>, vector<1x128x128xbf16>
    %151 = vector.shape_cast %150 : vector<1x128x128xbf16> to vector<128x128xbf16>
    %cst_92 = arith.constant dense<0.000000e+00> : vector<8x128xf32>
    %152 = tpu.matmul %149, %151, %cst_92 {dimension_numbers = #tpu.dot_dimension_numbers<[1], [0], [0], [1], [0, 0, 1, 1], [], []>} : vector<8x128xbf16>, vector<128x128xbf16>, vector<8x128xf32> -> vector<8x128xf32>
    %153 = arith.addf %148, %152 : vector<8x128xf32>
    %154 = vector.extract_strided_slice %84 {offsets = [112, 0], sizes = [8, 128], strides = [1, 1]} : vector<128x128xbf16> to vector<8x128xbf16>
    %c14 = arith.constant 14 : index
    %c0_93 = arith.constant 0 : index
    %c0_94 = arith.constant 0 : index
    %155 = vector.load %arg7[%c14, %c0_93, %c0_94] : memref<16x128x128xbf16, #tpu.memory_space<vmem>>, vector<1x128x128xbf16>
    %156 = vector.shape_cast %155 : vector<1x128x128xbf16> to vector<128x128xbf16>
    %cst_95 = arith.constant dense<0.000000e+00> : vector<8x128xf32>
    %157 = tpu.matmul %154, %156, %cst_95 {dimension_numbers = #tpu.dot_dimension_numbers<[1], [0], [0], [1], [0, 0, 1, 1], [], []>} : vector<8x128xbf16>, vector<128x128xbf16>, vector<8x128xf32> -> vector<8x128xf32>
    %158 = arith.addf %153, %157 : vector<8x128xf32>
    %159 = vector.extract_strided_slice %84 {offsets = [120, 0], sizes = [8, 128], strides = [1, 1]} : vector<128x128xbf16> to vector<8x128xbf16>
    %c15 = arith.constant 15 : index
    %c0_96 = arith.constant 0 : index
    %c0_97 = arith.constant 0 : index
    %160 = vector.load %arg7[%c15, %c0_96, %c0_97] : memref<16x128x128xbf16, #tpu.memory_space<vmem>>, vector<1x128x128xbf16>
    %161 = vector.shape_cast %160 : vector<1x128x128xbf16> to vector<128x128xbf16>
    %cst_98 = arith.constant dense<0.000000e+00> : vector<8x128xf32>
    %162 = tpu.matmul %159, %161, %cst_98 {dimension_numbers = #tpu.dot_dimension_numbers<[1], [0], [0], [1], [0, 0, 1, 1], [], []>} : vector<8x128xbf16>, vector<128x128xbf16>, vector<8x128xf32> -> vector<8x128xf32>
    %163 = arith.addf %158, %162 : vector<8x128xf32>
    %c0_99 = arith.constant 0 : index
    %c0_100 = arith.constant 0 : index
    %164 = vector.load %arg8[%c0_99, %c0_100] : memref<1x128xf32, #tpu.memory_space<vmem>>, vector<1x128xf32>
    %165 = vector.broadcast %164 : vector<1x128xf32> to vector<8x128xf32>
    %166 = arith.addf %163, %165 : vector<8x128xf32>
    %cst_101 = arith.constant 0.000000e+00 : f32
    %167 = vector.broadcast %cst_101 : f32 to vector<8x128xf32>
    %168 = arith.maximumf %166, %167 : vector<8x128xf32>
    %169 = arith.truncf %168 : vector<8x128xf32> to vector<8x128xbf16>
    %c0_102 = arith.constant 0 : index
    %c0_103 = arith.constant 0 : index
    %170 = vector.load %arg9[%c0_102, %c0_103] : memref<128x128xbf16, #tpu.memory_space<vmem>>, vector<128x128xbf16>
    %cst_104 = arith.constant dense<0.000000e+00> : vector<8x128xf32>
    %171 = tpu.matmul %169, %170, %cst_104 {dimension_numbers = #tpu.dot_dimension_numbers<[1], [0], [0], [1], [0, 0, 1, 1], [], []>} : vector<8x128xbf16>, vector<128x128xbf16>, vector<8x128xf32> -> vector<8x128xf32>
    %c0_105 = arith.constant 0 : index
    %c0_106 = arith.constant 0 : index
    %172 = vector.load %arg10[%c0_105, %c0_106] : memref<1x128xf32, #tpu.memory_space<vmem>>, vector<1x128xf32>
    %173 = vector.broadcast %172 : vector<1x128xf32> to vector<8x128xf32>
    %174 = arith.addf %171, %173 : vector<8x128xf32>
    %cst_107 = arith.constant 0.000000e+00 : f32
    %175 = vector.broadcast %cst_107 : f32 to vector<8x128xf32>
    %176 = arith.maximumf %174, %175 : vector<8x128xf32>
    %177 = arith.truncf %176 : vector<8x128xf32> to vector<8x128xbf16>
    %c0_108 = arith.constant 0 : index
    %c0_109 = arith.constant 0 : index
    %178 = vector.load %arg11[%c0_108, %c0_109] : memref<128x128xbf16, #tpu.memory_space<vmem>>, vector<128x128xbf16>
    %cst_110 = arith.constant dense<0.000000e+00> : vector<8x128xf32>
    %179 = tpu.matmul %177, %178, %cst_110 {dimension_numbers = #tpu.dot_dimension_numbers<[1], [0], [0], [1], [0, 0, 1, 1], [], []>} : vector<8x128xbf16>, vector<128x128xbf16>, vector<8x128xf32> -> vector<8x128xf32>
    %c0_111 = arith.constant 0 : index
    %c0_112 = arith.constant 0 : index
    %180 = vector.load %arg12[%c0_111, %c0_112] : memref<1x128xf32, #tpu.memory_space<vmem>>, vector<1x128xf32>
    %181 = vector.broadcast %180 : vector<1x128xf32> to vector<8x128xf32>
    %182 = arith.addf %179, %181 : vector<8x128xf32>
    %c0_113 = arith.constant 0 : index
    %c0_114 = arith.constant 0 : index
    %183 = vector.load %arg13[%c0_113, %c0_114] : memref<8x128xf32, #tpu.memory_space<vmem>>, vector<8x128xf32>
    tpu.vector_store %arg13[%c0_113, %c0_114], %182 {strides = array<i32>} : memref<8x128xf32, #tpu.memory_space<vmem>>, vector<8x128xf32>,
    return
  }
  func.func @transform_0(%arg0: i32) -> (i32, i32, i32) {
    %c0_i32 = arith.constant 0 : i32
    %c0_i32_0 = arith.constant 0 : i32
    %c0_i32_1 = arith.constant 0 : i32
    return %arg0, %c0_i32, %c0_i32_0 : i32, i32, i32
  }
  func.func @transform_1(%arg0: i32) -> (i32, i32, i32) {
    %c0_i32 = arith.constant 0 : i32
    %c0_i32_0 = arith.constant 0 : i32
    %c0_i32_1 = arith.constant 0 : i32
    %c0_i32_2 = arith.constant 0 : i32
    return %c0_i32, %c0_i32_0, %c0_i32_1 : i32, i32, i32
  }
  func.func @transform_2(%arg0: i32) -> (i32, i32) {
    %c0_i32 = arith.constant 0 : i32
    %c0_i32_0 = arith.constant 0 : i32
    %c0_i32_1 = arith.constant 0 : i32
    return %c0_i32, %c0_i32_0 : i32, i32
  }
  func.func @transform_3(%arg0: i32) -> (i32, i32) {
    %c0_i32 = arith.constant 0 : i32
    %c0_i32_0 = arith.constant 0 : i32
    %c0_i32_1 = arith.constant 0 : i32
    return %c0_i32, %c0_i32_0 : i32, i32
  }
  func.func @transform_4(%arg0: i32) -> (i32, i32, i32) {
    %c0_i32 = arith.constant 0 : i32
    %c0_i32_0 = arith.constant 0 : i32
    %c0_i32_1 = arith.constant 0 : i32
    %c0_i32_2 = arith.constant 0 : i32
    return %c0_i32, %c0_i32_0, %c0_i32_1 : i32, i32, i32
  }
  func.func @transform_5(%arg0: i32) -> (i32, i32) {
    %c0_i32 = arith.constant 0 : i32
    %c0_i32_0 = arith.constant 0 : i32
    %c0_i32_1 = arith.constant 0 : i32
    return %c0_i32, %c0_i32_0 : i32, i32
  }
  func.func @transform_6(%arg0: i32) -> (i32, i32, i32) {
    %c0_i32 = arith.constant 0 : i32
    %c0_i32_0 = arith.constant 0 : i32
    %c0_i32_1 = arith.constant 0 : i32
    %c0_i32_2 = arith.constant 0 : i32
    return %c0_i32, %c0_i32_0, %c0_i32_1 : i32, i32, i32
  }
  func.func @transform_7(%arg0: i32) -> (i32, i32) {
    %c0_i32 = arith.constant 0 : i32
    %c0_i32_0 = arith.constant 0 : i32
    %c0_i32_1 = arith.constant 0 : i32
    return %c0_i32, %c0_i32_0 : i32, i32
  }
  func.func @transform_8(%arg0: i32) -> (i32, i32) {
    %c0_i32 = arith.constant 0 : i32
    %c0_i32_0 = arith.constant 0 : i32
    %c0_i32_1 = arith.constant 0 : i32
    return %c0_i32, %c0_i32_0 : i32, i32
  }
  func.func @transform_9(%arg0: i32) -> (i32, i32) {
    %c0_i32 = arith.constant 0 : i32
    %c0_i32_0 = arith.constant 0 : i32
    %c0_i32_1 = arith.constant 0 : i32
    return %c0_i32, %c0_i32_0 : i32, i32
  }
  func.func @transform_10(%arg0: i32) -> (i32, i32) {
    %c0_i32 = arith.constant 0 : i32
    %c0_i32_0 = arith.constant 0 : i32
    %c0_i32_1 = arith.constant 0 : i32
    return %c0_i32, %c0_i32_0 : i32, i32
  }
  func.func @transform_11(%arg0: i32) -> (i32, i32) {
    %c0_i32 = arith.constant 0 : i32
    %c0_i32_0 = arith.constant 0 : i32
    %c0_i32_1 = arith.constant 0 : i32
    return %c0_i32, %c0_i32_0 : i32, i32
  }
  func.func @transform_12(%arg0: i32) -> (i32, i32) {
    %c0_i32 = arith.constant 0 : i32
    %c0_i32_0 = arith.constant 0 : i32
    return %arg0, %c0_i32 : i32, i32
  }
}

</mosaic_0001>

<llo_original>
// kernel: cnn_model1_forward.1
$region0: #{cnn_model1_forward.1}
  #allocation0 [shape = 'u32[]', space=smem, size = 0x4, offset = 0x4, fixed_abs, tag = 'smem constant byte address 0x4 - core index']
  #allocation1 [shape = 'u32[144,128]{1,0:T(1,128)}', space=vmem, size = 0x12000, scoped, tag = 'internal scratch']
  %s0 = inlined_call_operand.vmem [shape: bf16[1,120,1152], index: 0, kind: input, shape index: {}]
  %s1 = inlined_call_operand.vmem [shape: bf16[5,48,120], index: 1, kind: input, shape index: {}]
  %s2 = inlined_call_operand.vmem [shape: f32[48,1], index: 2, kind: input, shape index: {}]
  %s3 = inlined_call_operand.vmem [shape: bf16[896,256], index: 3, kind: input, shape index: {}]
  %s4 = inlined_call_operand.vmem [shape: bf16[5,128,240], index: 4, kind: input, shape index: {}]
  %s5 = inlined_call_operand.vmem [shape: f32[128,1], index: 5, kind: input, shape index: {}]
  %s6 = inlined_call_operand.vmem [shape: bf16[16,128,128], index: 6, kind: input, shape index: {}]
  %s7 = inlined_call_operand.vmem [shape: f32[1,128], index: 7, kind: input, shape index: {}]
  %s8 = inlined_call_operand.vmem [shape: bf16[128,128], index: 8, kind: input, shape index: {}]
  %s9 = inlined_call_operand.vmem [shape: f32[1,128], index: 9, kind: input, shape index: {}]
  %s10 = inlined_call_operand.vmem [shape: bf16[128,128], index: 10, kind: input, shape index: {}]
  %s11 = inlined_call_operand.vmem [shape: f32[1,128], index: 11, kind: input, shape index: {}]
  %s12 = inlined_call_operand.vmem [shape: f32[8,128], index: 12, kind: output, shape index: {}]
  %s13 = sld [smem:[#allocation0]]
  $region58: #{cnn_model1_forward.1} parent=0
    _
  %s15 = ssub.s32 1, %s13
  %s16 = scalar_select 0, %s15, %s13
  // Predicated region
  $region2: #{cnn_model1_forward.1} parent=0 // pred_check
    _
  $region3: #{cnn_model1_forward.1} parent=0 // pred_check_branch
    %18 = sbr.rel (0) target = $region5
  $region4: #{cnn_model1_forward.1} parent=0 // pred_region
    _
  $region5: #{cnn_model1_forward.1} parent=0 // pred_fallthru
    _
  // Predicated region
  $region6: #{cnn_model1_forward.1} parent=0 // pred_check
    _
  $region7: #{cnn_model1_forward.1} parent=0 // pred_check_branch
    %20 = sbr.rel (0) target = $region9
  $region8: #{cnn_model1_forward.1} parent=0 // pred_region
    _
  $region9: #{cnn_model1_forward.1} parent=0 // pred_fallthru
    _
  // Predicated region
  $region10: #{cnn_model1_forward.1} parent=0 // pred_check
    _
  $region11: #{cnn_model1_forward.1} parent=0 // pred_check_branch
    %22 = sbr.rel (0) target = $region13
  $region12: #{cnn_model1_forward.1} parent=0 // pred_region
    _
  $region13: #{cnn_model1_forward.1} parent=0 // pred_fallthru
    _
  // Predicated region
  $region14: #{cnn_model1_forward.1} parent=0 // pred_check
    _
  $region15: #{cnn_model1_forward.1} parent=0 // pred_check_branch
    %24 = sbr.rel (0) target = $region17
  $region16: #{cnn_model1_forward.1} parent=0 // pred_region
    _
  $region17: #{cnn_model1_forward.1} parent=0 // pred_fallthru
    _
  // Predicated region
  $region18: #{cnn_model1_forward.1} parent=0 // pred_check
    _
  $region19: #{cnn_model1_forward.1} parent=0 // pred_check_branch
    %26 = sbr.rel (0) target = $region21
  $region20: #{cnn_model1_forward.1} parent=0 // pred_region
    _
  $region21: #{cnn_model1_forward.1} parent=0 // pred_fallthru
    _
  // Predicated region
  $region22: #{cnn_model1_forward.1} parent=0 // pred_check
    _
  $region23: #{cnn_model1_forward.1} parent=0 // pred_check_branch
    %28 = sbr.rel (0) target = $region25
  $region24: #{cnn_model1_forward.1} parent=0 // pred_region
    _
  $region25: #{cnn_model1_forward.1} parent=0 // pred_fallthru
    _
  // Predicated region
  $region26: #{cnn_model1_forward.1} parent=0 // pred_check
    _
  $region27: #{cnn_model1_forward.1} parent=0 // pred_check_branch
    %30 = sbr.rel (0) target = $region29
  $region28: #{cnn_model1_forward.1} parent=0 // pred_region
    _
  $region29: #{cnn_model1_forward.1} parent=0 // pred_fallthru
    _
  // Predicated region
  $region30: #{cnn_model1_forward.1} parent=0 // pred_check
    _
  $region31: #{cnn_model1_forward.1} parent=0 // pred_check_branch
    %32 = sbr.rel (0) target = $region33
  $region32: #{cnn_model1_forward.1} parent=0 // pred_region
    _
  $region33: #{cnn_model1_forward.1} parent=0 // pred_fallthru
    _
  // Predicated region
  $region34: #{cnn_model1_forward.1} parent=0 // pred_check
    _
  $region35: #{cnn_model1_forward.1} parent=0 // pred_check_branch
    %34 = sbr.rel (0) target = $region37
  $region36: #{cnn_model1_forward.1} parent=0 // pred_region
    _
  $region37: #{cnn_model1_forward.1} parent=0 // pred_fallthru
    _
  // Predicated region
  $region38: #{cnn_model1_forward.1} parent=0 // pred_check
    _
  $region39: #{cnn_model1_forward.1} parent=0 // pred_check_branch
    %36 = sbr.rel (0) target = $region41
  $region40: #{cnn_model1_forward.1} parent=0 // pred_region
    _
  $region41: #{cnn_model1_forward.1} parent=0 // pred_fallthru
    _
  // Predicated region
  $region42: #{cnn_model1_forward.1} parent=0 // pred_check
    _
  $region43: #{cnn_model1_forward.1} parent=0 // pred_check_branch
    %38 = sbr.rel (0) target = $region45
  $region44: #{cnn_model1_forward.1} parent=0 // pred_region
    _
  $region45: #{cnn_model1_forward.1} parent=0 // pred_fallthru
    _
  // Predicated region
  $region46: #{cnn_model1_forward.1} parent=0 // pred_check
    _
  $region47: #{cnn_model1_forward.1} parent=0 // pred_check_branch
    %40 = sbr.rel (0) target = $region49
  $region48: #{cnn_model1_forward.1} parent=0 // pred_region
    _
  $region49: #{cnn_model1_forward.1} parent=0 // pred_fallthru
    _
  %v42 = vld [vmem:[%s0] sm:$0xff]
  %v43 = vld [vmem:[%s0 + $0x8] sm:$0xff]
  %v44 = vld [vmem:[%s0 + $0x10] sm:$0xff]
  %v45 = vld [vmem:[%s0 + $0x18] sm:$0xff]
  %v46 = vld [vmem:[%s0 + $0x20] sm:$0xf]
  %v47 = vld [vmem:[%s0 + $0x24] sm:$0xff]
  %v48 = vld [vmem:[%s0 + $0x2c] sm:$0xff]
  %v49 = vld [vmem:[%s0 + $0x34] sm:$0xff]
  %v50 = vld [vmem:[%s0 + $0x3c] sm:$0xff]
  %v51 = vld [vmem:[%s0 + $0x44] sm:$0xf]
  %v52 = vld [vmem:[%s0 + $0x48] sm:$0xff]
  %v53 = vld [vmem:[%s0 + $0x50] sm:$0xff]
  %v54 = vld [vmem:[%s0 + $0x58] sm:$0xff]
  %v55 = vld [vmem:[%s0 + $0x60] sm:$0xff]
  %v56 = vld [vmem:[%s0 + $0x68] sm:$0xf]
  %v57 = vld [vmem:[%s0 + $0x6c] sm:$0xff]
  %v58 = vld [vmem:[%s0 + $0x74] sm:$0xff]
  %v59 = vld [vmem:[%s0 + $0x7c] sm:$0xff]
  %v60 = vld [vmem:[%s0 + $0x84] sm:$0xff]
  %v61 = vld [vmem:[%s0 + $0x8c] sm:$0xf]
  %v62 = vld [vmem:[%s0 + $0x90] sm:$0xff]
  %v63 = vld [vmem:[%s0 + $0x98] sm:$0xff]
  %v64 = vld [vmem:[%s0 + $0xa0] sm:$0xff]
  %v65 = vld [vmem:[%s0 + $0xa8] sm:$0xff]
  %v66 = vld [vmem:[%s0 + $0xb0] sm:$0xf]
  %v67 = vld [vmem:[%s0 + $0xb4] sm:$0xff]
  %v68 = vld [vmem:[%s0 + $0xbc] sm:$0xff]
  %v69 = vld [vmem:[%s0 + $0xc4] sm:$0xff]
  %v70 = vld [vmem:[%s0 + $0xcc] sm:$0xff]
  %v71 = vld [vmem:[%s0 + $0xd4] sm:$0xf]
  %v72 = vld [vmem:[%s0 + $0xd8] sm:$0xff]
  %v73 = vld [vmem:[%s0 + $0xe0] sm:$0xff]
  %v74 = vld [vmem:[%s0 + $0xe8] sm:$0xff]
  %v75 = vld [vmem:[%s0 + $0xf0] sm:$0xff]
  %v76 = vld [vmem:[%s0 + $0xf8] sm:$0xf]
  %v77 = vld [vmem:[%s0 + $0xfc] sm:$0xff]
  %v78 = vld [vmem:[%s0 + $0x104] sm:$0xff]
  %v79 = vld [vmem:[%s0 + $0x10c] sm:$0xff]
  %v80 = vld [vmem:[%s0 + $0x114] sm:$0xff]
  %v81 = vld [vmem:[%s0 + $0x11c] sm:$0xf]
  %v82 = vld [vmem:[%s0 + $0x120] sm:$0xff]
  %v83 = vld [vmem:[%s0 + $0x128] sm:$0xff]
  %v84 = vld [vmem:[%s0 + $0x130] sm:$0xff]
  %v85 = vld [vmem:[%s0 + $0x138] sm:$0xff]
  %v86 = vld [vmem:[%s0 + $0x140] sm:$0xf]
  %v87 = vld [vmem:[%s0 + $0x144] sm:$0xff]
  %v88 = vld [vmem:[%s0 + $0x14c] sm:$0xff]
  %v89 = vld [vmem:[%s0 + $0x154] sm:$0xff]
  %v90 = vld [vmem:[%s0 + $0x15c] sm:$0xff]
  %v91 = vld [vmem:[%s0 + $0x164] sm:$0xf]
  %v92 = vld [vmem:[%s0 + $0x168] sm:$0xff]
  %v93 = vld [vmem:[%s0 + $0x170] sm:$0xff]
  %v94 = vld [vmem:[%s0 + $0x178] sm:$0xff]
  %v95 = vld [vmem:[%s0 + $0x180] sm:$0xff]
  %v96 = vld [vmem:[%s0 + $0x188] sm:$0xf]
  %v97 = vld [vmem:[%s0 + $0x18c] sm:$0xff]
  %v98 = vld [vmem:[%s0 + $0x194] sm:$0xff]
  %v99 = vld [vmem:[%s0 + $0x19c] sm:$0xff]
  %v100 = vld [vmem:[%s0 + $0x1a4] sm:$0xff]
  %v101 = vld [vmem:[%s0 + $0x1ac] sm:$0xf]
  %v102 = vld [vmem:[%s0 + $0x1b0] sm:$0xff]
  %v103 = vld [vmem:[%s0 + $0x1b8] sm:$0xff]
  %v104 = vld [vmem:[%s0 + $0x1c0] sm:$0xff]
  %v105 = vld [vmem:[%s0 + $0x1c8] sm:$0xff]
  %v106 = vld [vmem:[%s0 + $0x1d0] sm:$0xf]
  %v107 = vld [vmem:[%s0 + $0x1d4] sm:$0xff]
  %v108 = vld [vmem:[%s0 + $0x1dc] sm:$0xff]
  %v109 = vld [vmem:[%s0 + $0x1e4] sm:$0xff]
  %v110 = vld [vmem:[%s0 + $0x1ec] sm:$0xff]
  %v111 = vld [vmem:[%s0 + $0x1f4] sm:$0xf]
  %v112 = vld [vmem:[%s0 + $0x1f8] sm:$0xff]
  %v113 = vld [vmem:[%s0 + $0x200] sm:$0xff]
  %v114 = vld [vmem:[%s0 + $0x208] sm:$0xff]
  %v115 = vld [vmem:[%s0 + $0x210] sm:$0xff]
  %v116 = vld [vmem:[%s0 + $0x218] sm:$0xf]
  %v117 = vld [vmem:[%s1] sm:$0xf]
  %v118 = vld [vmem:[%s1 + $0x4] sm:$0xf]
  %v119 = vld [vmem:[%s1 + $0x8] sm:$0xf]
  %v120 = vld [vmem:[%s1 + $0xc] sm:$0xf]
  %v121 = vld [vmem:[%s1 + $0x10] sm:$0xf]
  %v122 = vld [vmem:[%s1 + $0x14] sm:$0xf]
  %s123 = scalar_lea.vmem %s1, 24
  %v124 = vld [vmem:[%s123] sm:$0xf]
  %v125 = vld [vmem:[%s123 + $0x4] sm:$0xf]
  %v126 = vld [vmem:[%s123 + $0x8] sm:$0xf]
  %v127 = vld [vmem:[%s123 + $0xc] sm:$0xf]
  %v128 = vld [vmem:[%s123 + $0x10] sm:$0xf]
  %v129 = vld [vmem:[%s123 + $0x14] sm:$0xf]
  %v136 = vunpack.c.l.b16 %v124
  %v137 = vunpack.c.l.b16 %v125
  %v138 = vunpack.c.l.b16 %v126
  %v139 = vunpack.c.l.b16 %v127
  %v140 = vunpack.c.l.b16 %v128
  %v141 = vunpack.c.l.b16 %v129
  %v142 = vpack.c.b16 %v137, %v136
  %v143 = vpack.c.b16 %v139, %v138
  %v144 = vpack.c.b16 %v141, %v140
  %v220 = vunpack.c.l.b16 %v42
  %v221 = vunpack.c.h.b16 %v42
  %v222 = vunpack.c.l.b16 %v43
  %v223 = vunpack.c.h.b16 %v43
  %v224 = vunpack.c.l.b16 %v44
  %v225 = vunpack.c.h.b16 %v44
  %v226 = vunpack.c.l.b16 %v45
  %v227 = vunpack.c.h.b16 %v45
  %v228 = vunpack.c.l.b16 %v46
  %v229 = vunpack.c.l.b16 %v47
  %v230 = vunpack.c.h.b16 %v47
  %v231 = vunpack.c.l.b16 %v48
  %v232 = vunpack.c.h.b16 %v48
  %v233 = vunpack.c.l.b16 %v49
  %v234 = vunpack.c.h.b16 %v49
  %v235 = vunpack.c.l.b16 %v50
  %v236 = vunpack.c.h.b16 %v50
  %v237 = vunpack.c.l.b16 %v51
  %v238 = vunpack.c.l.b16 %v52
  %v239 = vunpack.c.h.b16 %v52
  %v240 = vunpack.c.l.b16 %v53
  %v241 = vunpack.c.h.b16 %v53
  %v242 = vunpack.c.l.b16 %v54
  %v243 = vunpack.c.h.b16 %v54
  %v244 = vunpack.c.l.b16 %v55
  %v245 = vunpack.c.h.b16 %v55
  %v246 = vunpack.c.l.b16 %v56
  %v247 = vunpack.c.l.b16 %v57
  %v248 = vunpack.c.h.b16 %v57
  %v249 = vunpack.c.l.b16 %v58
  %v250 = vunpack.c.h.b16 %v58
  %v251 = vunpack.c.l.b16 %v59
  %v252 = vunpack.c.h.b16 %v59
  %v253 = vunpack.c.l.b16 %v60
  %v254 = vunpack.c.h.b16 %v60
  %v255 = vunpack.c.l.b16 %v61
  %v256 = vunpack.c.l.b16 %v62
  %v257 = vunpack.c.h.b16 %v62
  %v258 = vunpack.c.l.b16 %v63
  %v259 = vunpack.c.h.b16 %v63
  %v260 = vunpack.c.l.b16 %v64
  %v261 = vunpack.c.h.b16 %v64
  %v262 = vunpack.c.l.b16 %v65
  %v263 = vunpack.c.h.b16 %v65
  %v264 = vunpack.c.l.b16 %v66
  %v265 = vunpack.c.l.b16 %v67
  %v266 = vunpack.c.h.b16 %v67
  %v267 = vunpack.c.l.b16 %v68
  %v268 = vunpack.c.h.b16 %v68
  %v269 = vunpack.c.l.b16 %v69
  %v270 = vunpack.c.h.b16 %v69
  %v271 = vunpack.c.l.b16 %v70
  %v272 = vunpack.c.h.b16 %v70
  %v273 = vunpack.c.l.b16 %v71
  %v274 = vunpack.c.l.b16 %v72
  %v275 = vunpack.c.h.b16 %v72
  %v276 = vunpack.c.l.b16 %v73
  %v277 = vunpack.c.h.b16 %v73
  %v278 = vunpack.c.l.b16 %v74
  %v279 = vunpack.c.h.b16 %v74
  %v280 = vunpack.c.l.b16 %v75
  %v281 = vunpack.c.h.b16 %v75
  %v282 = vunpack.c.l.b16 %v76
  %v283 = vunpack.c.l.b16 %v77
  %v284 = vunpack.c.h.b16 %v77
  %v285 = vunpack.c.l.b16 %v78
  %v286 = vunpack.c.h.b16 %v78
  %v287 = vunpack.c.l.b16 %v79
  %v288 = vunpack.c.h.b16 %v79
  %v289 = vunpack.c.l.b16 %v80
  %v290 = vunpack.c.h.b16 %v80
  %v291 = vunpack.c.l.b16 %v81
  %v292 = vunpack.c.l.b16 %v82
  %v293 = vunpack.c.h.b16 %v82
  %v294 = vunpack.c.l.b16 %v83
  %v295 = vunpack.c.h.b16 %v83
  %v296 = vunpack.c.l.b16 %v84
  %v297 = vunpack.c.h.b16 %v84
  %v298 = vunpack.c.l.b16 %v85
  %v299 = vunpack.c.h.b16 %v85
  %v300 = vunpack.c.l.b16 %v86
  %v301 = vunpack.c.l.b16 %v87
  %v302 = vunpack.c.h.b16 %v87
  %v303 = vunpack.c.l.b16 %v88
  %v304 = vunpack.c.h.b16 %v88
  %v305 = vunpack.c.l.b16 %v89
  %v306 = vunpack.c.h.b16 %v89
  %v307 = vunpack.c.l.b16 %v90
  %v308 = vunpack.c.h.b16 %v90
  %v309 = vunpack.c.l.b16 %v91
  %v310 = vunpack.c.l.b16 %v92
  %v311 = vunpack.c.h.b16 %v92
  %v312 = vunpack.c.l.b16 %v93
  %v313 = vunpack.c.h.b16 %v93
  %v314 = vunpack.c.l.b16 %v94
  %v315 = vunpack.c.h.b16 %v94
  %v316 = vunpack.c.l.b16 %v95
  %v317 = vunpack.c.h.b16 %v95
  %v318 = vunpack.c.l.b16 %v96
  %v319 = vunpack.c.l.b16 %v97
  %v320 = vunpack.c.h.b16 %v97
  %v321 = vunpack.c.l.b16 %v98
  %v322 = vunpack.c.h.b16 %v98
  %v323 = vunpack.c.l.b16 %v99
  %v324 = vunpack.c.h.b16 %v99
  %v325 = vunpack.c.l.b16 %v100
  %v326 = vunpack.c.h.b16 %v100
  %v327 = vunpack.c.l.b16 %v101
  %v328 = vunpack.c.l.b16 %v102
  %v329 = vunpack.c.h.b16 %v102
  %v330 = vunpack.c.l.b16 %v103
  %v331 = vunpack.c.h.b16 %v103
  %v332 = vunpack.c.l.b16 %v104
  %v333 = vunpack.c.h.b16 %v104
  %v334 = vunpack.c.l.b16 %v105
  %v335 = vunpack.c.h.b16 %v105
  %v336 = vunpack.c.l.b16 %v106
  %v337 = vunpack.c.l.b16 %v107
  %v338 = vunpack.c.h.b16 %v107
  %v339 = vunpack.c.l.b16 %v108
  %v340 = vunpack.c.h.b16 %v108
  %v341 = vunpack.c.l.b16 %v109
  %v342 = vunpack.c.h.b16 %v109
  %v343 = vunpack.c.l.b16 %v110
  %v344 = vunpack.c.h.b16 %v110
  %v345 = vunpack.c.l.b16 %v111
  %v346 = vunpack.c.l.b16 %v112
  %v347 = vunpack.c.h.b16 %v112
  %v348 = vunpack.c.l.b16 %v113
  %v349 = vunpack.c.h.b16 %v113
  %v350 = vunpack.c.l.b16 %v114
  %v351 = vunpack.c.h.b16 %v114
  %v352 = vunpack.c.l.b16 %v115
  %v353 = vunpack.c.h.b16 %v115
  %v354 = vunpack.c.l.b16 %v116
  %v355 = vpack.c.b16 %v229, %v220
  %v356 = vpack.c.b16 %v230, %v221
  %v357 = vpack.c.b16 %v231, %v222
  %v358 = vpack.c.b16 %v232, %v223
  %v359 = vpack.c.b16 %v233, %v224
  %v360 = vpack.c.b16 %v234, %v225
  %v361 = vpack.c.b16 %v235, %v226
  %v362 = vpack.c.b16 %v236, %v227
  %v363 = vpack.c.b16 %v237, %v228
  %v364 = vpack.c.b16 %v247, %v238
  %v365 = vpack.c.b16 %v248, %v239
  %v366 = vpack.c.b16 %v249, %v240
  %v367 = vpack.c.b16 %v250, %v241
  %v368 = vpack.c.b16 %v251, %v242
  %v369 = vpack.c.b16 %v252, %v243
  %v370 = vpack.c.b16 %v253, %v244
  %v371 = vpack.c.b16 %v254, %v245
  %v372 = vpack.c.b16 %v255, %v246
  %v373 = vpack.c.b16 %v265, %v256
  %v374 = vpack.c.b16 %v266, %v257
  %v375 = vpack.c.b16 %v267, %v258
  %v376 = vpack.c.b16 %v268, %v259
  %v377 = vpack.c.b16 %v269, %v260
  %v378 = vpack.c.b16 %v270, %v261
  %v379 = vpack.c.b16 %v271, %v262
  %v380 = vpack.c.b16 %v272, %v263
  %v381 = vpack.c.b16 %v273, %v264
  %v382 = vpack.c.b16 %v283, %v274
  %v383 = vpack.c.b16 %v284, %v275
  %v384 = vpack.c.b16 %v285, %v276
  %v385 = vpack.c.b16 %v286, %v277
  %v386 = vpack.c.b16 %v287, %v278
  %v387 = vpack.c.b16 %v288, %v279
  %v388 = vpack.c.b16 %v289, %v280
  %v389 = vpack.c.b16 %v290, %v281
  %v390 = vpack.c.b16 %v291, %v282
  %v391 = vpack.c.b16 %v301, %v292
  %v392 = vpack.c.b16 %v302, %v293
  %v393 = vpack.c.b16 %v303, %v294
  %v394 = vpack.c.b16 %v304, %v295
  %v395 = vpack.c.b16 %v305, %v296
  %v396 = vpack.c.b16 %v306, %v297
  %v397 = vpack.c.b16 %v307, %v298
  %v398 = vpack.c.b16 %v308, %v299
  %v399 = vpack.c.b16 %v309, %v300
  %v400 = vpack.c.b16 %v319, %v310
  %v401 = vpack.c.b16 %v320, %v311
  %v402 = vpack.c.b16 %v321, %v312
  %v403 = vpack.c.b16 %v322, %v313
  %v404 = vpack.c.b16 %v323, %v314
  %v405 = vpack.c.b16 %v324, %v315
  %v406 = vpack.c.b16 %v325, %v316
  %v407 = vpack.c.b16 %v326, %v317
  %v408 = vpack.c.b16 %v327, %v318
  %v409 = vpack.c.b16 %v337, %v328
  %v410 = vpack.c.b16 %v338, %v329
  %v411 = vpack.c.b16 %v339, %v330
  %v412 = vpack.c.b16 %v340, %v331
  %v413 = vpack.c.b16 %v341, %v332
  %v414 = vpack.c.b16 %v342, %v333
  %v415 = vpack.c.b16 %v343, %v334
  %v416 = vpack.c.b16 %v344, %v335
  %v417 = vpack.c.b16 %v345, %v336
  %v418 = vpack.c.b16 %v346, %v346
  %v419 = vpack.c.b16 %v347, %v347
  %v420 = vpack.c.b16 %v348, %v348
  %v421 = vpack.c.b16 %v349, %v349
  %v422 = vpack.c.b16 %v350, %v350
  %v423 = vpack.c.b16 %v351, %v351
  %v424 = vpack.c.b16 %v352, %v352
  %v425 = vpack.c.b16 %v353, %v353
  %v426 = vpack.c.b16 %v354, %v354
  %427 = vrot.lane.b32.xlu0 %v355, 96
  %v428 = vpop.permute.xlu0 %427
  %429 = vrot.lane.b32.xlu0 %v356, 96
  %v430 = vpop.permute.xlu0 %429
  %431 = vrot.lane.b32.xlu0 %v357, 96
  %v432 = vpop.permute.xlu0 %431
  %433 = vrot.lane.b32.xlu0 %v358, 96
  %v434 = vpop.permute.xlu0 %433
  %435 = vrot.lane.b32.xlu0 %v359, 96
  %v436 = vpop.permute.xlu0 %435
  %437 = vrot.lane.b32.xlu0 %v360, 96
  %v438 = vpop.permute.xlu0 %437
  %439 = vrot.lane.b32.xlu0 %v361, 96
  %v440 = vpop.permute.xlu0 %439
  %441 = vrot.lane.b32.xlu0 %v362, 96
  %v442 = vpop.permute.xlu0 %441
  %443 = vrot.lane.b32.xlu0 %v363, 96
  %v444 = vpop.permute.xlu0 %443
  %445 = vrot.lane.b32.xlu0 %v364, 96
  %v446 = vpop.permute.xlu0 %445
  %447 = vrot.lane.b32.xlu0 %v365, 96
  %v448 = vpop.permute.xlu0 %447
  %449 = vrot.lane.b32.xlu0 %v366, 96
  %v450 = vpop.permute.xlu0 %449
  %451 = vrot.lane.b32.xlu0 %v367, 96
  %v452 = vpop.permute.xlu0 %451
  %453 = vrot.lane.b32.xlu0 %v368, 96
  %v454 = vpop.permute.xlu0 %453
  %455 = vrot.lane.b32.xlu0 %v369, 96
  %v456 = vpop.permute.xlu0 %455
  %457 = vrot.lane.b32.xlu0 %v370, 96
  %v458 = vpop.permute.xlu0 %457
  %459 = vrot.lane.b32.xlu0 %v371, 96
  %v460 = vpop.permute.xlu0 %459
  %461 = vrot.lane.b32.xlu0 %v372, 96
  %v462 = vpop.permute.xlu0 %461
  %463 = vrot.lane.b32.xlu0 %v373, 96
  %v464 = vpop.permute.xlu0 %463
  %465 = vrot.lane.b32.xlu0 %v374, 96
  %v466 = vpop.permute.xlu0 %465
  %467 = vrot.lane.b32.xlu0 %v375, 96
  %v468 = vpop.permute.xlu0 %467
  %469 = vrot.lane.b32.xlu0 %v376, 96
  %v470 = vpop.permute.xlu0 %469
  %471 = vrot.lane.b32.xlu0 %v377, 96
  %v472 = vpop.permute.xlu0 %471
  %473 = vrot.lane.b32.xlu0 %v378, 96
  %v474 = vpop.permute.xlu0 %473
  %475 = vrot.lane.b32.xlu0 %v379, 96
  %v476 = vpop.permute.xlu0 %475
  %477 = vrot.lane.b32.xlu0 %v380, 96
  %v478 = vpop.permute.xlu0 %477
  %479 = vrot.lane.b32.xlu0 %v381, 96
  %v480 = vpop.permute.xlu0 %479
  %481 = vrot.lane.b32.xlu0 %v382, 96
  %v482 = vpop.permute.xlu0 %481
  %483 = vrot.lane.b32.xlu0 %v383, 96
  %v484 = vpop.permute.xlu0 %483
  %485 = vrot.lane.b32.xlu0 %v384, 96
  %v486 = vpop.permute.xlu0 %485
  %487 = vrot.lane.b32.xlu0 %v385, 96
  %v488 = vpop.permute.xlu0 %487
  %489 = vrot.lane.b32.xlu0 %v386, 96
  %v490 = vpop.permute.xlu0 %489
  %491 = vrot.lane.b32.xlu0 %v387, 96
  %v492 = vpop.permute.xlu0 %491
  %493 = vrot.lane.b32.xlu0 %v388, 96
  %v494 = vpop.permute.xlu0 %493
  %495 = vrot.lane.b32.xlu0 %v389, 96
  %v496 = vpop.permute.xlu0 %495
  %497 = vrot.lane.b32.xlu0 %v390, 96
  %v498 = vpop.permute.xlu0 %497
  %499 = vrot.lane.b32.xlu0 %v391, 96
  %v500 = vpop.permute.xlu0 %499
  %501 = vrot.lane.b32.xlu0 %v392, 96
  %v502 = vpop.permute.xlu0 %501
  %503 = vrot.lane.b32.xlu0 %v393, 96
  %v504 = vpop.permute.xlu0 %503
  %505 = vrot.lane.b32.xlu0 %v394, 96
  %v506 = vpop.permute.xlu0 %505
  %507 = vrot.lane.b32.xlu0 %v395, 96
  %v508 = vpop.permute.xlu0 %507
  %509 = vrot.lane.b32.xlu0 %v396, 96
  %v510 = vpop.permute.xlu0 %509
  %511 = vrot.lane.b32.xlu0 %v397, 96
  %v512 = vpop.permute.xlu0 %511
  %513 = vrot.lane.b32.xlu0 %v398, 96
  %v514 = vpop.permute.xlu0 %513
  %515 = vrot.lane.b32.xlu0 %v399, 96
  %v516 = vpop.permute.xlu0 %515
  %517 = vrot.lane.b32.xlu0 %v400, 96
  %v518 = vpop.permute.xlu0 %517
  %519 = vrot.lane.b32.xlu0 %v401, 96
  %v520 = vpop.permute.xlu0 %519
  %521 = vrot.lane.b32.xlu0 %v402, 96
  %v522 = vpop.permute.xlu0 %521
  %523 = vrot.lane.b32.xlu0 %v403, 96
  %v524 = vpop.permute.xlu0 %523
  %525 = vrot.lane.b32.xlu0 %v404, 96
  %v526 = vpop.permute.xlu0 %525
  %527 = vrot.lane.b32.xlu0 %v405, 96
  %v528 = vpop.permute.xlu0 %527
  %529 = vrot.lane.b32.xlu0 %v406, 96
  %v530 = vpop.permute.xlu0 %529
  %531 = vrot.lane.b32.xlu0 %v407, 96
  %v532 = vpop.permute.xlu0 %531
  %533 = vrot.lane.b32.xlu0 %v408, 96
  %v534 = vpop.permute.xlu0 %533
  %535 = vrot.lane.b32.xlu0 %v409, 96
  %v536 = vpop.permute.xlu0 %535
  %537 = vrot.lane.b32.xlu0 %v410, 96
  %v538 = vpop.permute.xlu0 %537
  %539 = vrot.lane.b32.xlu0 %v411, 96
  %v540 = vpop.permute.xlu0 %539
  %541 = vrot.lane.b32.xlu0 %v412, 96
  %v542 = vpop.permute.xlu0 %541
  %543 = vrot.lane.b32.xlu0 %v413, 96
  %v544 = vpop.permute.xlu0 %543
  %545 = vrot.lane.b32.xlu0 %v414, 96
  %v546 = vpop.permute.xlu0 %545
  %547 = vrot.lane.b32.xlu0 %v415, 96
  %v548 = vpop.permute.xlu0 %547
  %549 = vrot.lane.b32.xlu0 %v416, 96
  %v550 = vpop.permute.xlu0 %549
  %551 = vrot.lane.b32.xlu0 %v417, 96
  %v552 = vpop.permute.xlu0 %551
  %553 = vrot.lane.b32.xlu0 %v418, 96
  %v554 = vpop.permute.xlu0 %553
  %555 = vrot.lane.b32.xlu0 %v419, 96
  %v556 = vpop.permute.xlu0 %555
  %557 = vrot.lane.b32.xlu0 %v420, 96
  %v558 = vpop.permute.xlu0 %557
  %559 = vrot.lane.b32.xlu0 %v421, 96
  %v560 = vpop.permute.xlu0 %559
  %561 = vrot.lane.b32.xlu0 %v422, 96
  %v562 = vpop.permute.xlu0 %561
  %563 = vrot.lane.b32.xlu0 %v423, 96
  %v564 = vpop.permute.xlu0 %563
  %565 = vrot.lane.b32.xlu0 %v424, 96
  %v566 = vpop.permute.xlu0 %565
  %567 = vrot.lane.b32.xlu0 %v425, 96
  %v568 = vpop.permute.xlu0 %567
  %569 = vrot.lane.b32.xlu0 %v426, 96
  %v570 = vpop.permute.xlu0 %569
  %vm571 = vcmask 785408
  %v572 = vsel %vm571, %v428, %v430
  %v573 = vsel %vm571, %v430, %v432
  %v574 = vsel %vm571, %v432, %v434
  %v575 = vsel %vm571, %v434, %v436
  %v576 = vsel %vm571, %v436, %v438
  %v577 = vsel %vm571, %v438, %v440
  %v578 = vsel %vm571, %v440, %v442
  %v579 = vsel %vm571, %v442, %v444
  %v580 = vsel %vm571, %v446, %v448
  %v581 = vsel %vm571, %v448, %v450
  %v582 = vsel %vm571, %v450, %v452
  %v583 = vsel %vm571, %v452, %v454
  %v584 = vsel %vm571, %v454, %v456
  %v585 = vsel %vm571, %v456, %v458
  %v586 = vsel %vm571, %v458, %v460
  %v587 = vsel %vm571, %v460, %v462
  %v588 = vsel %vm571, %v464, %v466
  %v589 = vsel %vm571, %v466, %v468
  %v590 = vsel %vm571, %v468, %v470
  %v591 = vsel %vm571, %v470, %v472
  %v592 = vsel %vm571, %v472, %v474
  %v593 = vsel %vm571, %v474, %v476
  %v594 = vsel %vm571, %v476, %v478
  %v595 = vsel %vm571, %v478, %v480
  %v596 = vsel %vm571, %v482, %v484
  %v597 = vsel %vm571, %v484, %v486
  %v598 = vsel %vm571, %v486, %v488
  %v599 = vsel %vm571, %v488, %v490
  %v600 = vsel %vm571, %v490, %v492
  %v601 = vsel %vm571, %v492, %v494
  %v602 = vsel %vm571, %v494, %v496
  %v603 = vsel %vm571, %v496, %v498
  %v604 = vsel %vm571, %v500, %v502
  %v605 = vsel %vm571, %v502, %v504
  %v606 = vsel %vm571, %v504, %v506
  %v607 = vsel %vm571, %v506, %v508
  %v608 = vsel %vm571, %v508, %v510
  %v609 = vsel %vm571, %v510, %v512
  %v610 = vsel %vm571, %v512, %v514
  %v611 = vsel %vm571, %v514, %v516
  %v612 = vsel %vm571, %v518, %v520
  %v613 = vsel %vm571, %v520, %v522
  %v614 = vsel %vm571, %v522, %v524
  %v615 = vsel %vm571, %v524, %v526
  %v616 = vsel %vm571, %v526, %v528
  %v617 = vsel %vm571, %v528, %v530
  %v618 = vsel %vm571, %v530, %v532
  %v619 = vsel %vm571, %v532, %v534
  %v620 = vsel %vm571, %v536, %v538
  %v621 = vsel %vm571, %v538, %v540
  %v622 = vsel %vm571, %v540, %v542
  %v623 = vsel %vm571, %v542, %v544
  %v624 = vsel %vm571, %v544, %v546
  %v625 = vsel %vm571, %v546, %v548
  %v626 = vsel %vm571, %v548, %v550
  %v627 = vsel %vm571, %v550, %v552
  %v628 = vsel %vm571, %v554, %v556
  %v629 = vsel %vm571, %v556, %v558
  %v630 = vsel %vm571, %v558, %v560
  %v631 = vsel %vm571, %v560, %v562
  %v632 = vsel %vm571, %v562, %v564
  %v633 = vsel %vm571, %v564, %v566
  %v634 = vsel %vm571, %v566, %v568
  %v635 = vsel %vm571, %v568, %v570
  %vm692 = vcmask 982016
  %v694 = vsel %vm692, %v142, 0
  %v697 = vsel %vm692, %v143, 0
  %v700 = vsel %vm692, %v144, 0
  %vm702 = vcmask 1043456
  %v704 = vsel %vm702, %v628, 0
  %v707 = vsel %vm702, %v629, 0
  %v710 = vsel %vm702, %v630, 0
  %v713 = vsel %vm702, %v631, 0
  %v716 = vsel %vm702, %v632, 0
  %v719 = vsel %vm702, %v633, 0
  %v722 = vsel %vm702, %v634, 0
  %v725 = vsel %vm702, %v635, 0
  %727 = vmatprep.subr.bf16.mxu0 %v573
  %728 = vmatpush1.bf16.msra.mxu0 %v572
  %729 = vmatprep.subr.bf16.mxu0 %v581
  %730 = vmatpush1.bf16.msra.mxu0 %v580
  %731 = vmatprep.subr.bf16.mxu0 %v589
  %732 = vmatpush1.bf16.msra.mxu0 %v588
  %733 = vmatprep.subr.bf16.mxu0 %v597
  %734 = vmatpush1.bf16.msra.mxu0 %v596
  %735 = vmatprep.subr.bf16.mxu0 %v605
  %736 = vmatpush1.bf16.msra.mxu0 %v604
  %737 = vmatprep.subr.bf16.mxu0 %v613
  %738 = vmatpush1.bf16.msra.mxu0 %v612
  %739 = vmatprep.subr.bf16.mxu0 %v621
  %740 = vmatpush1.bf16.msra.mxu0 %v620
  %741 = vmatprep.subr.bf16.mxu0 %v707
  %742 = vmatpush1.bf16.msra.mxu0 %v704
  %743 = vmatprep.subr.bf16.mxu0 0
  %744 = vmatpush1.bf16.msra.mxu0 0
  %745 = vmatprep.subr.bf16.mxu0 0
  %746 = vmatpush1.bf16.msra.mxu0 0
  %747 = vmatprep.subr.bf16.mxu0 0
  %748 = vmatpush1.bf16.msra.mxu0 0
  %749 = vmatprep.subr.bf16.mxu0 0
  %750 = vmatpush1.bf16.msra.mxu0 0
  %751 = vmatprep.subr.bf16.mxu0 0
  %752 = vmatpush1.bf16.msra.mxu0 0
  %753 = vmatprep.subr.bf16.mxu0 0
  %754 = vmatpush1.bf16.msra.mxu0 0
  %755 = vmatprep.subr.bf16.mxu0 0
  %756 = vmatpush1.bf16.msra.mxu0 0
  %757 = vmatprep.subr.bf16.mxu0 0
  %758 = vmatpush1.bf16.msra.mxu0 0
  %759 = vmatprep.mubr.bf16.mxu0 0
  %760 = vmatmul.mubr.bf16.gmra.mrb[0].mxu0 %v694
  %v761 = vpop.f32.mrb[0].mxu0
  %v762 = vadd.f32 0.0, %v761
  %v763 = vpop.f32.mrb[0].mxu0
  %v764 = vadd.f32 0.0, %v763
  %v765 = vpop.f32.mrb[0].mxu0
  %v766 = vadd.f32 0.0, %v765
  %v767 = vpop.f32.mrb[0].mxu0
  %v768 = vadd.f32 0.0, %v767
  %769 = vmatprep.mubr.bf16.mxu0 0
  %770 = vmatmul.mubr.bf16.gmra.mrb[0].mxu0 %v697
  %v771 = vpop.f32.mrb[0].mxu0
  %v772 = vadd.f32 0.0, %v771
  %v773 = vpop.f32.mrb[0].mxu0
  %v774 = vadd.f32 0.0, %v773
  %v775 = vpop.f32.mrb[0].mxu0
  %v776 = vadd.f32 0.0, %v775
  %v777 = vpop.f32.mrb[0].mxu0
  %v778 = vadd.f32 0.0, %v777
  %779 = vmatprep.mubr.bf16.mxu0 0
  %780 = vmatmul.mubr.bf16.gmra.mrb[0].mxu0 %v700
  %v781 = vpop.f32.mrb[0].mxu0
  %v782 = vadd.f32 0.0, %v781
  %v783 = vpop.f32.mrb[0].mxu0
  %v784 = vadd.f32 0.0, %v783
  %v785 = vpop.f32.mrb[0].mxu0
  %v786 = vadd.f32 0.0, %v785
  %v787 = vpop.f32.mrb[0].mxu0
  %v788 = vadd.f32 0.0, %v787
  %789 = vdwg.mxu0
  %790 = vmatprep.subr.bf16.mxu0 %v575
  %791 = vmatpush1.bf16.msra.mxu0 %v574
  %792 = vmatprep.subr.bf16.mxu0 %v583
  %793 = vmatpush1.bf16.msra.mxu0 %v582
  %794 = vmatprep.subr.bf16.mxu0 %v591
  %795 = vmatpush1.bf16.msra.mxu0 %v590
  %796 = vmatprep.subr.bf16.mxu0 %v599
  %797 = vmatpush1.bf16.msra.mxu0 %v598
  %798 = vmatprep.subr.bf16.mxu0 %v607
  %799 = vmatpush1.bf16.msra.mxu0 %v606
  %800 = vmatprep.subr.bf16.mxu0 %v615
  %801 = vmatpush1.bf16.msra.mxu0 %v614
  %802 = vmatprep.subr.bf16.mxu0 %v623
  %803 = vmatpush1.bf16.msra.mxu0 %v622
  %804 = vmatprep.subr.bf16.mxu0 %v713
  %805 = vmatpush1.bf16.msra.mxu0 %v710
  %806 = vmatprep.subr.bf16.mxu0 0
  %807 = vmatpush1.bf16.msra.mxu0 0
  %808 = vmatprep.subr.bf16.mxu0 0
  %809 = vmatpush1.bf16.msra.mxu0 0
  %810 = vmatprep.subr.bf16.mxu0 0
  %811 = vmatpush1.bf16.msra.mxu0 0
  %812 = vmatprep.subr.bf16.mxu0 0
  %813 = vmatpush1.bf16.msra.mxu0 0
  %814 = vmatprep.subr.bf16.mxu0 0
  %815 = vmatpush1.bf16.msra.mxu0 0
  %816 = vmatprep.subr.bf16.mxu0 0
  %817 = vmatpush1.bf16.msra.mxu0 0
  %818 = vmatprep.subr.bf16.mxu0 0
  %819 = vmatpush1.bf16.msra.mxu0 0
  %820 = vmatprep.subr.bf16.mxu0 0
  %821 = vmatpush1.bf16.msra.mxu0 0
  %822 = vmatprep.mubr.bf16.mxu0 0
  %823 = vmatmul.mubr.bf16.gmra.mrb[0].mxu0 %v694
  %v824 = vpop.f32.mrb[0].mxu0
  %v825 = vadd.f32 0.0, %v824
  %v826 = vpop.f32.mrb[0].mxu0
  %v827 = vadd.f32 0.0, %v826
  %v828 = vpop.f32.mrb[0].mxu0
  %v829 = vadd.f32 0.0, %v828
  %v830 = vpop.f32.mrb[0].mxu0
  %v831 = vadd.f32 0.0, %v830
  %832 = vmatprep.mubr.bf16.mxu0 0
  %833 = vmatmul.mubr.bf16.gmra.mrb[0].mxu0 %v697
  %v834 = vpop.f32.mrb[0].mxu0
  %v835 = vadd.f32 0.0, %v834
  %v836 = vpop.f32.mrb[0].mxu0
  %v837 = vadd.f32 0.0, %v836
  %v838 = vpop.f32.mrb[0].mxu0
  %v839 = vadd.f32 0.0, %v838
  %v840 = vpop.f32.mrb[0].mxu0
  %v841 = vadd.f32 0.0, %v840
  %842 = vmatprep.mubr.bf16.mxu0 0
  %843 = vmatmul.mubr.bf16.gmra.mrb[0].mxu0 %v700
  %v844 = vpop.f32.mrb[0].mxu0
  %v845 = vadd.f32 0.0, %v844
  %v846 = vpop.f32.mrb[0].mxu0
  %v847 = vadd.f32 0.0, %v846
  %v848 = vpop.f32.mrb[0].mxu0
  %v849 = vadd.f32 0.0, %v848
  %v850 = vpop.f32.mrb[0].mxu0
  %v851 = vadd.f32 0.0, %v850
  %852 = vdwg.mxu0
  %853 = vmatprep.subr.bf16.mxu0 %v577
  %854 = vmatpush1.bf16.msra.mxu0 %v576
  %855 = vmatprep.subr.bf16.mxu0 %v585
  %856 = vmatpush1.bf16.msra.mxu0 %v584
  %857 = vmatprep.subr.bf16.mxu0 %v593
  %858 = vmatpush1.bf16.msra.mxu0 %v592
  %859 = vmatprep.subr.bf16.mxu0 %v601
  %860 = vmatpush1.bf16.msra.mxu0 %v600
  %861 = vmatprep.subr.bf16.mxu0 %v609
  %862 = vmatpush1.bf16.msra.mxu0 %v608
  %863 = vmatprep.subr.bf16.mxu0 %v617
  %864 = vmatpush1.bf16.msra.mxu0 %v616
  %865 = vmatprep.subr.bf16.mxu0 %v625
  %866 = vmatpush1.bf16.msra.mxu0 %v624
  %867 = vmatprep.subr.bf16.mxu0 %v719
  %868 = vmatpush1.bf16.msra.mxu0 %v716
  %869 = vmatprep.subr.bf16.mxu0 0
  %870 = vmatpush1.bf16.msra.mxu0 0
  %871 = vmatprep.subr.bf16.mxu0 0
  %872 = vmatpush1.bf16.msra.mxu0 0
  %873 = vmatprep.subr.bf16.mxu0 0
  %874 = vmatpush1.bf16.msra.mxu0 0
  %875 = vmatprep.subr.bf16.mxu0 0
  %876 = vmatpush1.bf16.msra.mxu0 0
  %877 = vmatprep.subr.bf16.mxu0 0
  %878 = vmatpush1.bf16.msra.mxu0 0
  %879 = vmatprep.subr.bf16.mxu0 0
  %880 = vmatpush1.bf16.msra.mxu0 0
  %881 = vmatprep.subr.bf16.mxu0 0
  %882 = vmatpush1.bf16.msra.mxu0 0
  %883 = vmatprep.subr.bf16.mxu0 0
  %884 = vmatpush1.bf16.msra.mxu0 0
  %885 = vmatprep.mubr.bf16.mxu0 0
  %886 = vmatmul.mubr.bf16.gmra.mrb[0].mxu0 %v694
  %v887 = vpop.f32.mrb[0].mxu0
  %v888 = vadd.f32 0.0, %v887
  %v889 = vpop.f32.mrb[0].mxu0
  %v890 = vadd.f32 0.0, %v889
  %v891 = vpop.f32.mrb[0].mxu0
  %v892 = vadd.f32 0.0, %v891
  %v893 = vpop.f32.mrb[0].mxu0
  %v894 = vadd.f32 0.0, %v893
  %895 = vmatprep.mubr.bf16.mxu0 0
  %896 = vmatmul.mubr.bf16.gmra.mrb[0].mxu0 %v697
  %v897 = vpop.f32.mrb[0].mxu0
  %v898 = vadd.f32 0.0, %v897
  %v899 = vpop.f32.mrb[0].mxu0
  %v900 = vadd.f32 0.0, %v899
  %v901 = vpop.f32.mrb[0].mxu0
  %v902 = vadd.f32 0.0, %v901
  %v903 = vpop.f32.mrb[0].mxu0
  %v904 = vadd.f32 0.0, %v903
  %905 = vmatprep.mubr.bf16.mxu0 0
  %906 = vmatmul.mubr.bf16.gmra.mrb[0].mxu0 %v700
  %v907 = vpop.f32.mrb[0].mxu0
  %v908 = vadd.f32 0.0, %v907
  %v909 = vpop.f32.mrb[0].mxu0
  %v910 = vadd.f32 0.0, %v909
  %v911 = vpop.f32.mrb[0].mxu0
  %v912 = vadd.f32 0.0, %v911
  %v913 = vpop.f32.mrb[0].mxu0
  %v914 = vadd.f32 0.0, %v913
  %915 = vdwg.mxu0
  %916 = vmatprep.subr.bf16.mxu0 %v579
  %917 = vmatpush1.bf16.msra.mxu0 %v578
  %918 = vmatprep.subr.bf16.mxu0 %v587
  %919 = vmatpush1.bf16.msra.mxu0 %v586
  %920 = vmatprep.subr.bf16.mxu0 %v595
  %921 = vmatpush1.bf16.msra.mxu0 %v594
  %922 = vmatprep.subr.bf16.mxu0 %v603
  %923 = vmatpush1.bf16.msra.mxu0 %v602
  %924 = vmatprep.subr.bf16.mxu0 %v611
  %925 = vmatpush1.bf16.msra.mxu0 %v610
  %926 = vmatprep.subr.bf16.mxu0 %v619
  %927 = vmatpush1.bf16.msra.mxu0 %v618
  %928 = vmatprep.subr.bf16.mxu0 %v627
  %929 = vmatpush1.bf16.msra.mxu0 %v626
  %930 = vmatprep.subr.bf16.mxu0 %v725
  %931 = vmatpush1.bf16.msra.mxu0 %v722
  %932 = vmatprep.subr.bf16.mxu0 0
  %933 = vmatpush1.bf16.msra.mxu0 0
  %934 = vmatprep.subr.bf16.mxu0 0
  %935 = vmatpush1.bf16.msra.mxu0 0
  %936 = vmatprep.subr.bf16.mxu0 0
  %937 = vmatpush1.bf16.msra.mxu0 0
  %938 = vmatprep.subr.bf16.mxu0 0
  %939 = vmatpush1.bf16.msra.mxu0 0
  %940 = vmatprep.subr.bf16.mxu0 0
  %941 = vmatpush1.bf16.msra.mxu0 0
  %942 = vmatprep.subr.bf16.mxu0 0
  %943 = vmatpush1.bf16.msra.mxu0 0
  %944 = vmatprep.subr.bf16.mxu0 0
  %945 = vmatpush1.bf16.msra.mxu0 0
  %946 = vmatprep.subr.bf16.mxu0 0
  %947 = vmatpush1.bf16.msra.mxu0 0
  %948 = vmatprep.mubr.bf16.mxu0 0
  %949 = vmatmul.mubr.bf16.gmra.mrb[0].mxu0 %v694
  %v950 = vpop.f32.mrb[0].mxu0
  %v951 = vadd.f32 0.0, %v950
  %v952 = vpop.f32.mrb[0].mxu0
  %v953 = vadd.f32 0.0, %v952
  %v954 = vpop.f32.mrb[0].mxu0
  %v955 = vadd.f32 0.0, %v954
  %v956 = vpop.f32.mrb[0].mxu0
  %v957 = vadd.f32 0.0, %v956
  %958 = vmatprep.mubr.bf16.mxu0 0
  %959 = vmatmul.mubr.bf16.gmra.mrb[0].mxu0 %v697
  %v960 = vpop.f32.mrb[0].mxu0
  %v961 = vadd.f32 0.0, %v960
  %v962 = vpop.f32.mrb[0].mxu0
  %v963 = vadd.f32 0.0, %v962
  %v964 = vpop.f32.mrb[0].mxu0
  %v965 = vadd.f32 0.0, %v964
  %v966 = vpop.f32.mrb[0].mxu0
  %v967 = vadd.f32 0.0, %v966
  %968 = vmatprep.mubr.bf16.mxu0 0
  %969 = vmatmul.mubr.bf16.gmra.mrb[0].mxu0 %v700
  %v970 = vpop.f32.mrb[0].mxu0
  %v971 = vadd.f32 0.0, %v970
  %v972 = vpop.f32.mrb[0].mxu0
  %v973 = vadd.f32 0.0, %v972
  %v974 = vpop.f32.mrb[0].mxu0
  %v975 = vadd.f32 0.0, %v974
  %v976 = vpop.f32.mrb[0].mxu0
  %v977 = vadd.f32 0.0, %v976
  %978 = vdwg.mxu0
  %v985 = vunpack.c.l.b16 %v117
  %v986 = vunpack.c.l.b16 %v118
  %v987 = vunpack.c.l.b16 %v119
  %v988 = vunpack.c.l.b16 %v120
  %v989 = vunpack.c.l.b16 %v121
  %v990 = vunpack.c.l.b16 %v122
  %v991 = vpack.c.b16 %v986, %v985
  %v992 = vpack.c.b16 %v988, %v987
  %v993 = vpack.c.b16 %v990, %v989
  %v1051 = vsel %vm692, %v991, 0
  %v1054 = vsel %vm692, %v992, 0
  %v1057 = vsel %vm692, %v993, 0
  %v1060 = vsel %vm702, %v418, 0
  %v1063 = vsel %vm702, %v419, 0
  %v1066 = vsel %vm702, %v420, 0
  %v1069 = vsel %vm702, %v421, 0
  %v1072 = vsel %vm702, %v422, 0
  %v1075 = vsel %vm702, %v423, 0
  %v1078 = vsel %vm702, %v424, 0
  %v1081 = vsel %vm702, %v425, 0
  %1083 = vmatprep.subr.bf16.mxu0 %v356
  %1084 = vmatpush1.bf16.msra.mxu0 %v355
  %1085 = vmatprep.subr.bf16.mxu0 %v365
  %1086 = vmatpush1.bf16.msra.mxu0 %v364
  %1087 = vmatprep.subr.bf16.mxu0 %v374
  %1088 = vmatpush1.bf16.msra.mxu0 %v373
  %1089 = vmatprep.subr.bf16.mxu0 %v383
  %1090 = vmatpush1.bf16.msra.mxu0 %v382
  %1091 = vmatprep.subr.bf16.mxu0 %v392
  %1092 = vmatpush1.bf16.msra.mxu0 %v391
  %1093 = vmatprep.subr.bf16.mxu0 %v401
  %1094 = vmatpush1.bf16.msra.mxu0 %v400
  %1095 = vmatprep.subr.bf16.mxu0 %v410
  %1096 = vmatpush1.bf16.msra.mxu0 %v409
  %1097 = vmatprep.subr.bf16.mxu0 %v1063
  %1098 = vmatpush1.bf16.msra.mxu0 %v1060
  %1099 = vmatprep.subr.bf16.mxu0 0
  %1100 = vmatpush1.bf16.msra.mxu0 0
  %1101 = vmatprep.subr.bf16.mxu0 0
  %1102 = vmatpush1.bf16.msra.mxu0 0
  %1103 = vmatprep.subr.bf16.mxu0 0
  %1104 = vmatpush1.bf16.msra.mxu0 0
  %1105 = vmatprep.subr.bf16.mxu0 0
  %1106 = vmatpush1.bf16.msra.mxu0 0
  %1107 = vmatprep.subr.bf16.mxu0 0
  %1108 = vmatpush1.bf16.msra.mxu0 0
  %1109 = vmatprep.subr.bf16.mxu0 0
  %1110 = vmatpush1.bf16.msra.mxu0 0
  %1111 = vmatprep.subr.bf16.mxu0 0
  %1112 = vmatpush1.bf16.msra.mxu0 0
  %1113 = vmatprep.subr.bf16.mxu0 0
  %1114 = vmatpush1.bf16.msra.mxu0 0
  %1115 = vmatprep.mubr.bf16.mxu0 0
  %1116 = vmatmul.mubr.bf16.gmra.mrb[0].mxu0 %v1051
  %v1117 = vpop.f32.mrb[0].mxu0
  %v1118 = vadd.f32 %v762, %v1117
  %v1119 = vpop.f32.mrb[0].mxu0
  %v1120 = vadd.f32 %v764, %v1119
  %v1121 = vpop.f32.mrb[0].mxu0
  %v1122 = vadd.f32 %v766, %v1121
  %v1123 = vpop.f32.mrb[0].mxu0
  %v1124 = vadd.f32 %v768, %v1123
  %1125 = vmatprep.mubr.bf16.mxu0 0
  %1126 = vmatmul.mubr.bf16.gmra.mrb[0].mxu0 %v1054
  %v1127 = vpop.f32.mrb[0].mxu0
  %v1128 = vadd.f32 %v772, %v1127
  %v1129 = vpop.f32.mrb[0].mxu0
  %v1130 = vadd.f32 %v774, %v1129
  %v1131 = vpop.f32.mrb[0].mxu0
  %v1132 = vadd.f32 %v776, %v1131
  %v1133 = vpop.f32.mrb[0].mxu0
  %v1134 = vadd.f32 %v778, %v1133
  %1135 = vmatprep.mubr.bf16.mxu0 0
  %1136 = vmatmul.mubr.bf16.gmra.mrb[0].mxu0 %v1057
  %v1137 = vpop.f32.mrb[0].mxu0
  %v1138 = vadd.f32 %v782, %v1137
  %v1139 = vpop.f32.mrb[0].mxu0
  %v1140 = vadd.f32 %v784, %v1139
  %v1141 = vpop.f32.mrb[0].mxu0
  %v1142 = vadd.f32 %v786, %v1141
  %v1143 = vpop.f32.mrb[0].mxu0
  %v1144 = vadd.f32 %v788, %v1143
  %1145 = vdwg.mxu0
  %1146 = vmatprep.subr.bf16.mxu0 %v358
  %1147 = vmatpush1.bf16.msra.mxu0 %v357
  %1148 = vmatprep.subr.bf16.mxu0 %v367
  %1149 = vmatpush1.bf16.msra.mxu0 %v366
  %1150 = vmatprep.subr.bf16.mxu0 %v376
  %1151 = vmatpush1.bf16.msra.mxu0 %v375
  %1152 = vmatprep.subr.bf16.mxu0 %v385
  %1153 = vmatpush1.bf16.msra.mxu0 %v384
  %1154 = vmatprep.subr.bf16.mxu0 %v394
  %1155 = vmatpush1.bf16.msra.mxu0 %v393
  %1156 = vmatprep.subr.bf16.mxu0 %v403
  %1157 = vmatpush1.bf16.msra.mxu0 %v402
  %1158 = vmatprep.subr.bf16.mxu0 %v412
  %1159 = vmatpush1.bf16.msra.mxu0 %v411
  %1160 = vmatprep.subr.bf16.mxu0 %v1069
  %1161 = vmatpush1.bf16.msra.mxu0 %v1066
  %1162 = vmatprep.subr.bf16.mxu0 0
  %1163 = vmatpush1.bf16.msra.mxu0 0
  %1164 = vmatprep.subr.bf16.mxu0 0
  %1165 = vmatpush1.bf16.msra.mxu0 0
  %1166 = vmatprep.subr.bf16.mxu0 0
  %1167 = vmatpush1.bf16.msra.mxu0 0
  %1168 = vmatprep.subr.bf16.mxu0 0
  %1169 = vmatpush1.bf16.msra.mxu0 0
  %1170 = vmatprep.subr.bf16.mxu0 0
  %1171 = vmatpush1.bf16.msra.mxu0 0
  %1172 = vmatprep.subr.bf16.mxu0 0
  %1173 = vmatpush1.bf16.msra.mxu0 0
  %1174 = vmatprep.subr.bf16.mxu0 0
  %1175 = vmatpush1.bf16.msra.mxu0 0
  %1176 = vmatprep.subr.bf16.mxu0 0
  %1177 = vmatpush1.bf16.msra.mxu0 0
  %1178 = vmatprep.mubr.bf16.mxu0 0
  %1179 = vmatmul.mubr.bf16.gmra.mrb[0].mxu0 %v1051
  %v1180 = vpop.f32.mrb[0].mxu0
  %v1181 = vadd.f32 %v825, %v1180
  %v1182 = vpop.f32.mrb[0].mxu0
  %v1183 = vadd.f32 %v827, %v1182
  %v1184 = vpop.f32.mrb[0].mxu0
  %v1185 = vadd.f32 %v829, %v1184
  %v1186 = vpop.f32.mrb[0].mxu0
  %v1187 = vadd.f32 %v831, %v1186
  %1188 = vmatprep.mubr.bf16.mxu0 0
  %1189 = vmatmul.mubr.bf16.gmra.mrb[0].mxu0 %v1054
  %v1190 = vpop.f32.mrb[0].mxu0
  %v1191 = vadd.f32 %v835, %v1190
  %v1192 = vpop.f32.mrb[0].mxu0
  %v1193 = vadd.f32 %v837, %v1192
  %v1194 = vpop.f32.mrb[0].mxu0
  %v1195 = vadd.f32 %v839, %v1194
  %v1196 = vpop.f32.mrb[0].mxu0
  %v1197 = vadd.f32 %v841, %v1196
  %1198 = vmatprep.mubr.bf16.mxu0 0
  %1199 = vmatmul.mubr.bf16.gmra.mrb[0].mxu0 %v1057
  %v1200 = vpop.f32.mrb[0].mxu0
  %v1201 = vadd.f32 %v845, %v1200
  %v1202 = vpop.f32.mrb[0].mxu0
  %v1203 = vadd.f32 %v847, %v1202
  %v1204 = vpop.f32.mrb[0].mxu0
  %v1205 = vadd.f32 %v849, %v1204
  %v1206 = vpop.f32.mrb[0].mxu0
  %v1207 = vadd.f32 %v851, %v1206
  %1208 = vdwg.mxu0
  %1209 = vmatprep.subr.bf16.mxu0 %v360
  %1210 = vmatpush1.bf16.msra.mxu0 %v359
  %1211 = vmatprep.subr.bf16.mxu0 %v369
  %1212 = vmatpush1.bf16.msra.mxu0 %v368
  %1213 = vmatprep.subr.bf16.mxu0 %v378
  %1214 = vmatpush1.bf16.msra.mxu0 %v377
  %1215 = vmatprep.subr.bf16.mxu0 %v387
  %1216 = vmatpush1.bf16.msra.mxu0 %v386
  %1217 = vmatprep.subr.bf16.mxu0 %v396
  %1218 = vmatpush1.bf16.msra.mxu0 %v395
  %1219 = vmatprep.subr.bf16.mxu0 %v405
  %1220 = vmatpush1.bf16.msra.mxu0 %v404
  %1221 = vmatprep.subr.bf16.mxu0 %v414
  %1222 = vmatpush1.bf16.msra.mxu0 %v413
  %1223 = vmatprep.subr.bf16.mxu0 %v1075
  %1224 = vmatpush1.bf16.msra.mxu0 %v1072
  %1225 = vmatprep.subr.bf16.mxu0 0
  %1226 = vmatpush1.bf16.msra.mxu0 0
  %1227 = vmatprep.subr.bf16.mxu0 0
  %1228 = vmatpush1.bf16.msra.mxu0 0
  %1229 = vmatprep.subr.bf16.mxu0 0
  %1230 = vmatpush1.bf16.msra.mxu0 0
  %1231 = vmatprep.subr.bf16.mxu0 0
  %1232 = vmatpush1.bf16.msra.mxu0 0
  %1233 = vmatprep.subr.bf16.mxu0 0
  %1234 = vmatpush1.bf16.msra.mxu0 0
  %1235 = vmatprep.subr.bf16.mxu0 0
  %1236 = vmatpush1.bf16.msra.mxu0 0
  %1237 = vmatprep.subr.bf16.mxu0 0
  %1238 = vmatpush1.bf16.msra.mxu0 0
  %1239 = vmatprep.subr.bf16.mxu0 0
  %1240 = vmatpush1.bf16.msra.mxu0 0
  %1241 = vmatprep.mubr.bf16.mxu0 0
  %1242 = vmatmul.mubr.bf16.gmra.mrb[0].mxu0 %v1051
  %v1243 = vpop.f32.mrb[0].mxu0
  %v1244 = vadd.f32 %v888, %v1243
  %v1245 = vpop.f32.mrb[0].mxu0
  %v1246 = vadd.f32 %v890, %v1245
  %v1247 = vpop.f32.mrb[0].mxu0
  %v1248 = vadd.f32 %v892, %v1247
  %v1249 = vpop.f32.mrb[0].mxu0
  %v1250 = vadd.f32 %v894, %v1249
  %1251 = vmatprep.mubr.bf16.mxu0 0
  %1252 = vmatmul.mubr.bf16.gmra.mrb[0].mxu0 %v1054
  %v1253 = vpop.f32.mrb[0].mxu0
  %v1254 = vadd.f32 %v898, %v1253
  %v1255 = vpop.f32.mrb[0].mxu0
  %v1256 = vadd.f32 %v900, %v1255
  %v1257 = vpop.f32.mrb[0].mxu0
  %v1258 = vadd.f32 %v902, %v1257
  %v1259 = vpop.f32.mrb[0].mxu0
  %v1260 = vadd.f32 %v904, %v1259
  %1261 = vmatprep.mubr.bf16.mxu0 0
  %1262 = vmatmul.mubr.bf16.gmra.mrb[0].mxu0 %v1057
  %v1263 = vpop.f32.mrb[0].mxu0
  %v1264 = vadd.f32 %v908, %v1263
  %v1265 = vpop.f32.mrb[0].mxu0
  %v1266 = vadd.f32 %v910, %v1265
  %v1267 = vpop.f32.mrb[0].mxu0
  %v1268 = vadd.f32 %v912, %v1267
  %v1269 = vpop.f32.mrb[0].mxu0
  %v1270 = vadd.f32 %v914, %v1269
  %1271 = vdwg.mxu0
  %1272 = vmatprep.subr.bf16.mxu0 %v362
  %1273 = vmatpush1.bf16.msra.mxu0 %v361
  %1274 = vmatprep.subr.bf16.mxu0 %v371
  %1275 = vmatpush1.bf16.msra.mxu0 %v370
  %1276 = vmatprep.subr.bf16.mxu0 %v380
  %1277 = vmatpush1.bf16.msra.mxu0 %v379
  %1278 = vmatprep.subr.bf16.mxu0 %v389
  %1279 = vmatpush1.bf16.msra.mxu0 %v388
  %1280 = vmatprep.subr.bf16.mxu0 %v398
  %1281 = vmatpush1.bf16.msra.mxu0 %v397
  %1282 = vmatprep.subr.bf16.mxu0 %v407
  %1283 = vmatpush1.bf16.msra.mxu0 %v406
  %1284 = vmatprep.subr.bf16.mxu0 %v416
  %1285 = vmatpush1.bf16.msra.mxu0 %v415
  %1286 = vmatprep.subr.bf16.mxu0 %v1081
  %1287 = vmatpush1.bf16.msra.mxu0 %v1078
  %1288 = vmatprep.subr.bf16.mxu0 0
  %1289 = vmatpush1.bf16.msra.mxu0 0
  %1290 = vmatprep.subr.bf16.mxu0 0
  %1291 = vmatpush1.bf16.msra.mxu0 0
  %1292 = vmatprep.subr.bf16.mxu0 0
  %1293 = vmatpush1.bf16.msra.mxu0 0
  %1294 = vmatprep.subr.bf16.mxu0 0
  %1295 = vmatpush1.bf16.msra.mxu0 0
  %1296 = vmatprep.subr.bf16.mxu0 0
  %1297 = vmatpush1.bf16.msra.mxu0 0
  %1298 = vmatprep.subr.bf16.mxu0 0
  %1299 = vmatpush1.bf16.msra.mxu0 0
  %1300 = vmatprep.subr.bf16.mxu0 0
  %1301 = vmatpush1.bf16.msra.mxu0 0
  %1302 = vmatprep.subr.bf16.mxu0 0
  %1303 = vmatpush1.bf16.msra.mxu0 0
  %1304 = vmatprep.mubr.bf16.mxu0 0
  %1305 = vmatmul.mubr.bf16.gmra.mrb[0].mxu0 %v1051
  %v1306 = vpop.f32.mrb[0].mxu0
  %v1307 = vadd.f32 %v951, %v1306
  %v1308 = vpop.f32.mrb[0].mxu0
  %v1309 = vadd.f32 %v953, %v1308
  %v1310 = vpop.f32.mrb[0].mxu0
  %v1311 = vadd.f32 %v955, %v1310
  %v1312 = vpop.f32.mrb[0].mxu0
  %v1313 = vadd.f32 %v957, %v1312
  %1314 = vmatprep.mubr.bf16.mxu0 0
  %1315 = vmatmul.mubr.bf16.gmra.mrb[0].mxu0 %v1054
  %v1316 = vpop.f32.mrb[0].mxu0
  %v1317 = vadd.f32 %v961, %v1316
  %v1318 = vpop.f32.mrb[0].mxu0
  %v1319 = vadd.f32 %v963, %v1318
  %v1320 = vpop.f32.mrb[0].mxu0
  %v1321 = vadd.f32 %v965, %v1320
  %v1322 = vpop.f32.mrb[0].mxu0
  %v1323 = vadd.f32 %v967, %v1322
  %1324 = vmatprep.mubr.bf16.mxu0 0
  %1325 = vmatmul.mubr.bf16.gmra.mrb[0].mxu0 %v1057
  %v1326 = vpop.f32.mrb[0].mxu0
  %v1327 = vadd.f32 %v971, %v1326
  %v1328 = vpop.f32.mrb[0].mxu0
  %v1329 = vadd.f32 %v973, %v1328
  %v1330 = vpop.f32.mrb[0].mxu0
  %v1331 = vadd.f32 %v975, %v1330
  %v1332 = vpop.f32.mrb[0].mxu0
  %v1333 = vadd.f32 %v977, %v1332
  %1334 = vdwg.mxu0
  %s1335 = scalar_lea.vmem %s1, 48
  %v1336 = vld [vmem:[%s1335] sm:$0xf]
  %v1337 = vld [vmem:[%s1335 + $0x4] sm:$0xf]
  %v1338 = vld [vmem:[%s1335 + $0x8] sm:$0xf]
  %v1339 = vld [vmem:[%s1335 + $0xc] sm:$0xf]
  %v1340 = vld [vmem:[%s1335 + $0x10] sm:$0xf]
  %v1341 = vld [vmem:[%s1335 + $0x14] sm:$0xf]
  %v1348 = vunpack.c.l.b16 %v1336
  %v1349 = vunpack.c.l.b16 %v1337
  %v1350 = vunpack.c.l.b16 %v1338
  %v1351 = vunpack.c.l.b16 %v1339
  %v1352 = vunpack.c.l.b16 %v1340
  %v1353 = vunpack.c.l.b16 %v1341
  %v1354 = vpack.c.b16 %v1349, %v1348
  %v1355 = vpack.c.b16 %v1351, %v1350
  %v1356 = vpack.c.b16 %v1353, %v1352
  %1357 = vrot.lane.b32.xlu0 %v355, 64
  %v1358 = vpop.permute.xlu0 %1357
  %1359 = vrot.lane.b32.xlu0 %v356, 64
  %v1360 = vpop.permute.xlu0 %1359
  %1361 = vrot.lane.b32.xlu0 %v357, 64
  %v1362 = vpop.permute.xlu0 %1361
  %1363 = vrot.lane.b32.xlu0 %v358, 64
  %v1364 = vpop.permute.xlu0 %1363
  %1365 = vrot.lane.b32.xlu0 %v359, 64
  %v1366 = vpop.permute.xlu0 %1365
  %1367 = vrot.lane.b32.xlu0 %v360, 64
  %v1368 = vpop.permute.xlu0 %1367
  %1369 = vrot.lane.b32.xlu0 %v361, 64
  %v1370 = vpop.permute.xlu0 %1369
  %1371 = vrot.lane.b32.xlu0 %v362, 64
  %v1372 = vpop.permute.xlu0 %1371
  %1373 = vrot.lane.b32.xlu0 %v363, 64
  %v1374 = vpop.permute.xlu0 %1373
  %1375 = vrot.lane.b32.xlu0 %v364, 64
  %v1376 = vpop.permute.xlu0 %1375
  %1377 = vrot.lane.b32.xlu0 %v365, 64
  %v1378 = vpop.permute.xlu0 %1377
  %1379 = vrot.lane.b32.xlu0 %v366, 64
  %v1380 = vpop.permute.xlu0 %1379
  %1381 = vrot.lane.b32.xlu0 %v367, 64
  %v1382 = vpop.permute.xlu0 %1381
  %1383 = vrot.lane.b32.xlu0 %v368, 64
  %v1384 = vpop.permute.xlu0 %1383
  %1385 = vrot.lane.b32.xlu0 %v369, 64
  %v1386 = vpop.permute.xlu0 %1385
  %1387 = vrot.lane.b32.xlu0 %v370, 64
  %v1388 = vpop.permute.xlu0 %1387
  %1389 = vrot.lane.b32.xlu0 %v371, 64
  %v1390 = vpop.permute.xlu0 %1389
  %1391 = vrot.lane.b32.xlu0 %v372, 64
  %v1392 = vpop.permute.xlu0 %1391
  %1393 = vrot.lane.b32.xlu0 %v373, 64
  %v1394 = vpop.permute.xlu0 %1393
  %1395 = vrot.lane.b32.xlu0 %v374, 64
  %v1396 = vpop.permute.xlu0 %1395
  %1397 = vrot.lane.b32.xlu0 %v375, 64
  %v1398 = vpop.permute.xlu0 %1397
  %1399 = vrot.lane.b32.xlu0 %v376, 64
  %v1400 = vpop.permute.xlu0 %1399
  %1401 = vrot.lane.b32.xlu0 %v377, 64
  %v1402 = vpop.permute.xlu0 %1401
  %1403 = vrot.lane.b32.xlu0 %v378, 64
  %v1404 = vpop.permute.xlu0 %1403
  %1405 = vrot.lane.b32.xlu0 %v379, 64
  %v1406 = vpop.permute.xlu0 %1405
  %1407 = vrot.lane.b32.xlu0 %v380, 64
  %v1408 = vpop.permute.xlu0 %1407
  %1409 = vrot.lane.b32.xlu0 %v381, 64
  %v1410 = vpop.permute.xlu0 %1409
  %1411 = vrot.lane.b32.xlu0 %v382, 64
  %v1412 = vpop.permute.xlu0 %1411
  %1413 = vrot.lane.b32.xlu0 %v383, 64
  %v1414 = vpop.permute.xlu0 %1413
  %1415 = vrot.lane.b32.xlu0 %v384, 64
  %v1416 = vpop.permute.xlu0 %1415
  %1417 = vrot.lane.b32.xlu0 %v385, 64
  %v1418 = vpop.permute.xlu0 %1417
  %1419 = vrot.lane.b32.xlu0 %v386, 64
  %v1420 = vpop.permute.xlu0 %1419
  %1421 = vrot.lane.b32.xlu0 %v387, 64
  %v1422 = vpop.permute.xlu0 %1421
  %1423 = vrot.lane.b32.xlu0 %v388, 64
  %v1424 = vpop.permute.xlu0 %1423
  %1425 = vrot.lane.b32.xlu0 %v389, 64
  %v1426 = vpop.permute.xlu0 %1425
  %1427 = vrot.lane.b32.xlu0 %v390, 64
  %v1428 = vpop.permute.xlu0 %1427
  %1429 = vrot.lane.b32.xlu0 %v391, 64
  %v1430 = vpop.permute.xlu0 %1429
  %1431 = vrot.lane.b32.xlu0 %v392, 64
  %v1432 = vpop.permute.xlu0 %1431
  %1433 = vrot.lane.b32.xlu0 %v393, 64
  %v1434 = vpop.permute.xlu0 %1433
  %1435 = vrot.lane.b32.xlu0 %v394, 64
  %v1436 = vpop.permute.xlu0 %1435
  %1437 = vrot.lane.b32.xlu0 %v395, 64
  %v1438 = vpop.permute.xlu0 %1437
  %1439 = vrot.lane.b32.xlu0 %v396, 64
  %v1440 = vpop.permute.xlu0 %1439
  %1441 = vrot.lane.b32.xlu0 %v397, 64
  %v1442 = vpop.permute.xlu0 %1441
  %1443 = vrot.lane.b32.xlu0 %v398, 64
  %v1444 = vpop.permute.xlu0 %1443
  %1445 = vrot.lane.b32.xlu0 %v399, 64
  %v1446 = vpop.permute.xlu0 %1445
  %1447 = vrot.lane.b32.xlu0 %v400, 64
  %v1448 = vpop.permute.xlu0 %1447
  %1449 = vrot.lane.b32.xlu0 %v401, 64
  %v1450 = vpop.permute.xlu0 %1449
  %1451 = vrot.lane.b32.xlu0 %v402, 64
  %v1452 = vpop.permute.xlu0 %1451
  %1453 = vrot.lane.b32.xlu0 %v403, 64
  %v1454 = vpop.permute.xlu0 %1453
  %1455 = vrot.lane.b32.xlu0 %v404, 64
  %v1456 = vpop.permute.xlu0 %1455
  %1457 = vrot.lane.b32.xlu0 %v405, 64
  %v1458 = vpop.permute.xlu0 %1457
  %1459 = vrot.lane.b32.xlu0 %v406, 64
  %v1460 = vpop.permute.xlu0 %1459
  %1461 = vrot.lane.b32.xlu0 %v407, 64
  %v1462 = vpop.permute.xlu0 %1461
  %1463 = vrot.lane.b32.xlu0 %v408, 64
  %v1464 = vpop.permute.xlu0 %1463
  %1465 = vrot.lane.b32.xlu0 %v409, 64
  %v1466 = vpop.permute.xlu0 %1465
  %1467 = vrot.lane.b32.xlu0 %v410, 64
  %v1468 = vpop.permute.xlu0 %1467
  %1469 = vrot.lane.b32.xlu0 %v411, 64
  %v1470 = vpop.permute.xlu0 %1469
  %1471 = vrot.lane.b32.xlu0 %v412, 64
  %v1472 = vpop.permute.xlu0 %1471
  %1473 = vrot.lane.b32.xlu0 %v413, 64
  %v1474 = vpop.permute.xlu0 %1473
  %1475 = vrot.lane.b32.xlu0 %v414, 64
  %v1476 = vpop.permute.xlu0 %1475
  %1477 = vrot.lane.b32.xlu0 %v415, 64
  %v1478 = vpop.permute.xlu0 %1477
  %1479 = vrot.lane.b32.xlu0 %v416, 64
  %v1480 = vpop.permute.xlu0 %1479
  %1481 = vrot.lane.b32.xlu0 %v417, 64
  %v1482 = vpop.permute.xlu0 %1481
  %1483 = vrot.lane.b32.xlu0 %v418, 64
  %v1484 = vpop.permute.xlu0 %1483
  %1485 = vrot.lane.b32.xlu0 %v419, 64
  %v1486 = vpop.permute.xlu0 %1485
  %1487 = vrot.lane.b32.xlu0 %v420, 64
  %v1488 = vpop.permute.xlu0 %1487
  %1489 = vrot.lane.b32.xlu0 %v421, 64
  %v1490 = vpop.permute.xlu0 %1489
  %1491 = vrot.lane.b32.xlu0 %v422, 64
  %v1492 = vpop.permute.xlu0 %1491
  %1493 = vrot.lane.b32.xlu0 %v423, 64
  %v1494 = vpop.permute.xlu0 %1493
  %1495 = vrot.lane.b32.xlu0 %v424, 64
  %v1496 = vpop.permute.xlu0 %1495
  %1497 = vrot.lane.b32.xlu0 %v425, 64
  %v1498 = vpop.permute.xlu0 %1497
  %1499 = vrot.lane.b32.xlu0 %v426, 64
  %v1500 = vpop.permute.xlu0 %1499
  %vm1501 = vcmask 523264
  %v1502 = vsel %vm1501, %v1358, %v1360
  %v1503 = vsel %vm1501, %v1360, %v1362
  %v1504 = vsel %vm1501, %v1362, %v1364
  %v1505 = vsel %vm1501, %v1364, %v1366
  %v1506 = vsel %vm1501, %v1366, %v1368
  %v1507 = vsel %vm1501, %v1368, %v1370
  %v1508 = vsel %vm1501, %v1370, %v1372
  %v1509 = vsel %vm1501, %v1372, %v1374
  %v1510 = vsel %vm1501, %v1376, %v1378
  %v1511 = vsel %vm1501, %v1378, %v1380
  %v1512 = vsel %vm1501, %v1380, %v1382
  %v1513 = vsel %vm1501, %v1382, %v1384
  %v1514 = vsel %vm1501, %v1384, %v1386
  %v1515 = vsel %vm1501, %v1386, %v1388
  %v1516 = vsel %vm1501, %v1388, %v1390
  %v1517 = vsel %vm1501, %v1390, %v1392
  %v1518 = vsel %vm1501, %v1394, %v1396
  %v1519 = vsel %vm1501, %v1396, %v1398
  %v1520 = vsel %vm1501, %v1398, %v1400
  %v1521 = vsel %vm1501, %v1400, %v1402
  %v1522 = vsel %vm1501, %v1402, %v1404
  %v1523 = vsel %vm1501, %v1404, %v1406
  %v1524 = vsel %vm1501, %v1406, %v1408
  %v1525 = vsel %vm1501, %v1408, %v1410
  %v1526 = vsel %vm1501, %v1412, %v1414
  %v1527 = vsel %vm1501, %v1414, %v1416
  %v1528 = vsel %vm1501, %v1416, %v1418
  %v1529 = vsel %vm1501, %v1418, %v1420
  %v1530 = vsel %vm1501, %v1420, %v1422
  %v1531 = vsel %vm1501, %v1422, %v1424
  %v1532 = vsel %vm1501, %v1424, %v1426
  %v1533 = vsel %vm1501, %v1426, %v1428
  %v1534 = vsel %vm1501, %v1430, %v1432
  %v1535 = vsel %vm1501, %v1432, %v1434
  %v1536 = vsel %vm1501, %v1434, %v1436
  %v1537 = vsel %vm1501, %v1436, %v1438
  %v1538 = vsel %vm1501, %v1438, %v1440
  %v1539 = vsel %vm1501, %v1440, %v1442
  %v1540 = vsel %vm1501, %v1442, %v1444
  %v1541 = vsel %vm1501, %v1444, %v1446
  %v1542 = vsel %vm1501, %v1448, %v1450
  %v1543 = vsel %vm1501, %v1450, %v1452
  %v1544 = vsel %vm1501, %v1452, %v1454
  %v1545 = vsel %vm1501, %v1454, %v1456
  %v1546 = vsel %vm1501, %v1456, %v1458
  %v1547 = vsel %vm1501, %v1458, %v1460
  %v1548 = vsel %vm1501, %v1460, %v1462
  %v1549 = vsel %vm1501, %v1462, %v1464
  %v1550 = vsel %vm1501, %v1466, %v1468
  %v1551 = vsel %vm1501, %v1468, %v1470
  %v1552 = vsel %vm1501, %v1470, %v1472
  %v1553 = vsel %vm1501, %v1472, %v1474
  %v1554 = vsel %vm1501, %v1474, %v1476
  %v1555 = vsel %vm1501, %v1476, %v1478
  %v1556 = vsel %vm1501, %v1478, %v1480
  %v1557 = vsel %vm1501, %v1480, %v1482
  %v1558 = vsel %vm1501, %v1484, %v1486
  %v1559 = vsel %vm1501, %v1486, %v1488
  %v1560 = vsel %vm1501, %v1488, %v1490
  %v1561 = vsel %vm1501, %v1490, %v1492
  %v1562 = vsel %vm1501, %v1492, %v1494
  %v1563 = vsel %vm1501, %v1494, %v1496
  %v1564 = vsel %vm1501, %v1496, %v1498
  %v1565 = vsel %vm1501, %v1498, %v1500
  %v1623 = vsel %vm692, %v1354, 0
  %v1626 = vsel %vm692, %v1355, 0
  %v1629 = vsel %vm692, %v1356, 0
  %v1632 = vsel %vm702, %v1558, 0
  %v1635 = vsel %vm702, %v1559, 0
  %v1638 = vsel %vm702, %v1560, 0
  %v1641 = vsel %vm702, %v1561, 0
  %v1644 = vsel %vm702, %v1562, 0
  %v1647 = vsel %vm702, %v1563, 0
  %v1650 = vsel %vm702, %v1564, 0
  %v1653 = vsel %vm702, %v1565, 0
  %1655 = vmatprep.subr.bf16.mxu0 %v1503
  %1656 = vmatpush1.bf16.msra.mxu0 %v1502
  %1657 = vmatprep.subr.bf16.mxu0 %v1511
  %1658 = vmatpush1.bf16.msra.mxu0 %v1510
  %1659 = vmatprep.subr.bf16.mxu0 %v1519
  %1660 = vmatpush1.bf16.msra.mxu0 %v1518
  %1661 = vmatprep.subr.bf16.mxu0 %v1527
  %1662 = vmatpush1.bf16.msra.mxu0 %v1526
  %1663 = vmatprep.subr.bf16.mxu0 %v1535
  %1664 = vmatpush1.bf16.msra.mxu0 %v1534
  %1665 = vmatprep.subr.bf16.mxu0 %v1543
  %1666 = vmatpush1.bf16.msra.mxu0 %v1542
  %1667 = vmatprep.subr.bf16.mxu0 %v1551
  %1668 = vmatpush1.bf16.msra.mxu0 %v1550
  %1669 = vmatprep.subr.bf16.mxu0 %v1635
  %1670 = vmatpush1.bf16.msra.mxu0 %v1632
  %1671 = vmatprep.subr.bf16.mxu0 0
  %1672 = vmatpush1.bf16.msra.mxu0 0
  %1673 = vmatprep.subr.bf16.mxu0 0
  %1674 = vmatpush1.bf16.msra.mxu0 0
  %1675 = vmatprep.subr.bf16.mxu0 0
  %1676 = vmatpush1.bf16.msra.mxu0 0
  %1677 = vmatprep.subr.bf16.mxu0 0
  %1678 = vmatpush1.bf16.msra.mxu0 0
  %1679 = vmatprep.subr.bf16.mxu0 0
  %1680 = vmatpush1.bf16.msra.mxu0 0
  %1681 = vmatprep.subr.bf16.mxu0 0
  %1682 = vmatpush1.bf16.msra.mxu0 0
  %1683 = vmatprep.subr.bf16.mxu0 0
  %1684 = vmatpush1.bf16.msra.mxu0 0
  %1685 = vmatprep.subr.bf16.mxu0 0
  %1686 = vmatpush1.bf16.msra.mxu0 0
  %1687 = vmatprep.mubr.bf16.mxu0 0
  %1688 = vmatmul.mubr.bf16.gmra.mrb[0].mxu0 %v1623
  %v1689 = vpop.f32.mrb[0].mxu0
  %v1690 = vadd.f32 0.0, %v1689
  %v1691 = vpop.f32.mrb[0].mxu0
  %v1692 = vadd.f32 0.0, %v1691
  %v1693 = vpop.f32.mrb[0].mxu0
  %v1694 = vadd.f32 0.0, %v1693
  %v1695 = vpop.f32.mrb[0].mxu0
  %v1696 = vadd.f32 0.0, %v1695
  %1697 = vmatprep.mubr.bf16.mxu0 0
  %1698 = vmatmul.mubr.bf16.gmra.mrb[0].mxu0 %v1626
  %v1699 = vpop.f32.mrb[0].mxu0
  %v1700 = vadd.f32 0.0, %v1699
  %v1701 = vpop.f32.mrb[0].mxu0
  %v1702 = vadd.f32 0.0, %v1701
  %v1703 = vpop.f32.mrb[0].mxu0
  %v1704 = vadd.f32 0.0, %v1703
  %v1705 = vpop.f32.mrb[0].mxu0
  %v1706 = vadd.f32 0.0, %v1705
  %1707 = vmatprep.mubr.bf16.mxu0 0
  %1708 = vmatmul.mubr.bf16.gmra.mrb[0].mxu0 %v1629
  %v1709 = vpop.f32.mrb[0].mxu0
  %v1710 = vadd.f32 0.0, %v1709
  %v1711 = vpop.f32.mrb[0].mxu0
  %v1712 = vadd.f32 0.0, %v1711
  %v1713 = vpop.f32.mrb[0].mxu0
  %v1714 = vadd.f32 0.0, %v1713
  %v1715 = vpop.f32.mrb[0].mxu0
  %v1716 = vadd.f32 0.0, %v1715
  %1717 = vdwg.mxu0
  %1718 = vmatprep.subr.bf16.mxu0 %v1505
  %1719 = vmatpush1.bf16.msra.mxu0 %v1504
  %1720 = vmatprep.subr.bf16.mxu0 %v1513
  %1721 = vmatpush1.bf16.msra.mxu0 %v1512
  %1722 = vmatprep.subr.bf16.mxu0 %v1521
  %1723 = vmatpush1.bf16.msra.mxu0 %v1520
  %1724 = vmatprep.subr.bf16.mxu0 %v1529
  %1725 = vmatpush1.bf16.msra.mxu0 %v1528
  %1726 = vmatprep.subr.bf16.mxu0 %v1537
  %1727 = vmatpush1.bf16.msra.mxu0 %v1536
  %1728 = vmatprep.subr.bf16.mxu0 %v1545
  %1729 = vmatpush1.bf16.msra.mxu0 %v1544
  %1730 = vmatprep.subr.bf16.mxu0 %v1553
  %1731 = vmatpush1.bf16.msra.mxu0 %v1552
  %1732 = vmatprep.subr.bf16.mxu0 %v1641
  %1733 = vmatpush1.bf16.msra.mxu0 %v1638
  %1734 = vmatprep.subr.bf16.mxu0 0
  %1735 = vmatpush1.bf16.msra.mxu0 0
  %1736 = vmatprep.subr.bf16.mxu0 0
  %1737 = vmatpush1.bf16.msra.mxu0 0
  %1738 = vmatprep.subr.bf16.mxu0 0
  %1739 = vmatpush1.bf16.msra.mxu0 0
  %1740 = vmatprep.subr.bf16.mxu0 0
  %1741 = vmatpush1.bf16.msra.mxu0 0
  %1742 = vmatprep.subr.bf16.mxu0 0
  %1743 = vmatpush1.bf16.msra.mxu0 0
  %1744 = vmatprep.subr.bf16.mxu0 0
  %1745 = vmatpush1.bf16.msra.mxu0 0
  %1746 = vmatprep.subr.bf16.mxu0 0
  %1747 = vmatpush1.bf16.msra.mxu0 0
  %1748 = vmatprep.subr.bf16.mxu0 0
  %1749 = vmatpush1.bf16.msra.mxu0 0
  %1750 = vmatprep.mubr.bf16.mxu0 0
  %1751 = vmatmul.mubr.bf16.gmra.mrb[0].mxu0 %v1623
  %v1752 = vpop.f32.mrb[0].mxu0
  %v1753 = vadd.f32 0.0, %v1752
  %v1754 = vpop.f32.mrb[0].mxu0
  %v1755 = vadd.f32 0.0, %v1754
  %v1756 = vpop.f32.mrb[0].mxu0
  %v1757 = vadd.f32 0.0, %v1756
  %v1758 = vpop.f32.mrb[0].mxu0
  %v1759 = vadd.f32 0.0, %v1758
  %1760 = vmatprep.mubr.bf16.mxu0 0
  %1761 = vmatmul.mubr.bf16.gmra.mrb[0].mxu0 %v1626
  %v1762 = vpop.f32.mrb[0].mxu0
  %v1763 = vadd.f32 0.0, %v1762
  %v1764 = vpop.f32.mrb[0].mxu0
  %v1765 = vadd.f32 0.0, %v1764
  %v1766 = vpop.f32.mrb[0].mxu0
  %v1767 = vadd.f32 0.0, %v1766
  %v1768 = vpop.f32.mrb[0].mxu0
  %v1769 = vadd.f32 0.0, %v1768
  %1770 = vmatprep.mubr.bf16.mxu0 0
  %1771 = vmatmul.mubr.bf16.gmra.mrb[0].mxu0 %v1629
  %v1772 = vpop.f32.mrb[0].mxu0
  %v1773 = vadd.f32 0.0, %v1772
  %v1774 = vpop.f32.mrb[0].mxu0
  %v1775 = vadd.f32 0.0, %v1774
  %v1776 = vpop.f32.mrb[0].mxu0
  %v1777 = vadd.f32 0.0, %v1776
  %v1778 = vpop.f32.mrb[0].mxu0
  %v1779 = vadd.f32 0.0, %v1778
  %1780 = vdwg.mxu0
  %1781 = vmatprep.subr.bf16.mxu0 %v1507
  %1782 = vmatpush1.bf16.msra.mxu0 %v1506
  %1783 = vmatprep.subr.bf16.mxu0 %v1515
  %1784 = vmatpush1.bf16.msra.mxu0 %v1514
  %1785 = vmatprep.subr.bf16.mxu0 %v1523
  %1786 = vmatpush1.bf16.msra.mxu0 %v1522
  %1787 = vmatprep.subr.bf16.mxu0 %v1531
  %1788 = vmatpush1.bf16.msra.mxu0 %v1530
  %1789 = vmatprep.subr.bf16.mxu0 %v1539
  %1790 = vmatpush1.bf16.msra.mxu0 %v1538
  %1791 = vmatprep.subr.bf16.mxu0 %v1547
  %1792 = vmatpush1.bf16.msra.mxu0 %v1546
  %1793 = vmatprep.subr.bf16.mxu0 %v1555
  %1794 = vmatpush1.bf16.msra.mxu0 %v1554
  %1795 = vmatprep.subr.bf16.mxu0 %v1647
  %1796 = vmatpush1.bf16.msra.mxu0 %v1644
  %1797 = vmatprep.subr.bf16.mxu0 0
  %1798 = vmatpush1.bf16.msra.mxu0 0
  %1799 = vmatprep.subr.bf16.mxu0 0
  %1800 = vmatpush1.bf16.msra.mxu0 0
  %1801 = vmatprep.subr.bf16.mxu0 0
  %1802 = vmatpush1.bf16.msra.mxu0 0
  %1803 = vmatprep.subr.bf16.mxu0 0
  %1804 = vmatpush1.bf16.msra.mxu0 0
  %1805 = vmatprep.subr.bf16.mxu0 0
  %1806 = vmatpush1.bf16.msra.mxu0 0
  %1807 = vmatprep.subr.bf16.mxu0 0
  %1808 = vmatpush1.bf16.msra.mxu0 0
  %1809 = vmatprep.subr.bf16.mxu0 0
  %1810 = vmatpush1.bf16.msra.mxu0 0
  %1811 = vmatprep.subr.bf16.mxu0 0
  %1812 = vmatpush1.bf16.msra.mxu0 0
  %1813 = vmatprep.mubr.bf16.mxu0 0
  %1814 = vmatmul.mubr.bf16.gmra.mrb[0].mxu0 %v1623
  %v1815 = vpop.f32.mrb[0].mxu0
  %v1816 = vadd.f32 0.0, %v1815
  %v1817 = vpop.f32.mrb[0].mxu0
  %v1818 = vadd.f32 0.0, %v1817
  %v1819 = vpop.f32.mrb[0].mxu0
  %v1820 = vadd.f32 0.0, %v1819
  %v1821 = vpop.f32.mrb[0].mxu0
  %v1822 = vadd.f32 0.0, %v1821
  %1823 = vmatprep.mubr.bf16.mxu0 0
  %1824 = vmatmul.mubr.bf16.gmra.mrb[0].mxu0 %v1626
  %v1825 = vpop.f32.mrb[0].mxu0
  %v1826 = vadd.f32 0.0, %v1825
  %v1827 = vpop.f32.mrb[0].mxu0
  %v1828 = vadd.f32 0.0, %v1827
  %v1829 = vpop.f32.mrb[0].mxu0
  %v1830 = vadd.f32 0.0, %v1829
  %v1831 = vpop.f32.mrb[0].mxu0
  %v1832 = vadd.f32 0.0, %v1831
  %1833 = vmatprep.mubr.bf16.mxu0 0
  %1834 = vmatmul.mubr.bf16.gmra.mrb[0].mxu0 %v1629
  %v1835 = vpop.f32.mrb[0].mxu0
  %v1836 = vadd.f32 0.0, %v1835
  %v1837 = vpop.f32.mrb[0].mxu0
  %v1838 = vadd.f32 0.0, %v1837
  %v1839 = vpop.f32.mrb[0].mxu0
  %v1840 = vadd.f32 0.0, %v1839
  %v1841 = vpop.f32.mrb[0].mxu0
  %v1842 = vadd.f32 0.0, %v1841
  %1843 = vdwg.mxu0
  %1844 = vmatprep.subr.bf16.mxu0 %v1509
  %1845 = vmatpush1.bf16.msra.mxu0 %v1508
  %1846 = vmatprep.subr.bf16.mxu0 %v1517
  %1847 = vmatpush1.bf16.msra.mxu0 %v1516
  %1848 = vmatprep.subr.bf16.mxu0 %v1525
  %1849 = vmatpush1.bf16.msra.mxu0 %v1524
  %1850 = vmatprep.subr.bf16.mxu0 %v1533
  %1851 = vmatpush1.bf16.msra.mxu0 %v1532
  %1852 = vmatprep.subr.bf16.mxu0 %v1541
  %1853 = vmatpush1.bf16.msra.mxu0 %v1540
  %1854 = vmatprep.subr.bf16.mxu0 %v1549
  %1855 = vmatpush1.bf16.msra.mxu0 %v1548
  %1856 = vmatprep.subr.bf16.mxu0 %v1557
  %1857 = vmatpush1.bf16.msra.mxu0 %v1556
  %1858 = vmatprep.subr.bf16.mxu0 %v1653
  %1859 = vmatpush1.bf16.msra.mxu0 %v1650
  %1860 = vmatprep.subr.bf16.mxu0 0
  %1861 = vmatpush1.bf16.msra.mxu0 0
  %1862 = vmatprep.subr.bf16.mxu0 0
  %1863 = vmatpush1.bf16.msra.mxu0 0
  %1864 = vmatprep.subr.bf16.mxu0 0
  %1865 = vmatpush1.bf16.msra.mxu0 0
  %1866 = vmatprep.subr.bf16.mxu0 0
  %1867 = vmatpush1.bf16.msra.mxu0 0
  %1868 = vmatprep.subr.bf16.mxu0 0
  %1869 = vmatpush1.bf16.msra.mxu0 0
  %1870 = vmatprep.subr.bf16.mxu0 0
  %1871 = vmatpush1.bf16.msra.mxu0 0
  %1872 = vmatprep.subr.bf16.mxu0 0
  %1873 = vmatpush1.bf16.msra.mxu0 0
  %1874 = vmatprep.subr.bf16.mxu0 0
  %1875 = vmatpush1.bf16.msra.mxu0 0
  %1876 = vmatprep.mubr.bf16.mxu0 0
  %1877 = vmatmul.mubr.bf16.gmra.mrb[0].mxu0 %v1623
  %v1878 = vpop.f32.mrb[0].mxu0
  %v1879 = vadd.f32 0.0, %v1878
  %v1880 = vpop.f32.mrb[0].mxu0
  %v1881 = vadd.f32 0.0, %v1880
  %v1882 = vpop.f32.mrb[0].mxu0
  %v1883 = vadd.f32 0.0, %v1882
  %v1884 = vpop.f32.mrb[0].mxu0
  %v1885 = vadd.f32 0.0, %v1884
  %1886 = vmatprep.mubr.bf16.mxu0 0
  %1887 = vmatmul.mubr.bf16.gmra.mrb[0].mxu0 %v1626
  %v1888 = vpop.f32.mrb[0].mxu0
  %v1889 = vadd.f32 0.0, %v1888
  %v1890 = vpop.f32.mrb[0].mxu0
  %v1891 = vadd.f32 0.0, %v1890
  %v1892 = vpop.f32.mrb[0].mxu0
  %v1893 = vadd.f32 0.0, %v1892
  %v1894 = vpop.f32.mrb[0].mxu0
  %v1895 = vadd.f32 0.0, %v1894
  %1896 = vmatprep.mubr.bf16.mxu0 0
  %1897 = vmatmul.mubr.bf16.gmra.mrb[0].mxu0 %v1629
  %v1898 = vpop.f32.mrb[0].mxu0
  %v1899 = vadd.f32 0.0, %v1898
  %v1900 = vpop.f32.mrb[0].mxu0
  %v1901 = vadd.f32 0.0, %v1900
  %v1902 = vpop.f32.mrb[0].mxu0
  %v1903 = vadd.f32 0.0, %v1902
  %v1904 = vpop.f32.mrb[0].mxu0
  %v1905 = vadd.f32 0.0, %v1904
  %1906 = vdwg.mxu0
  %v1907 = vadd.f32 %v1118, %v1690
  %v1908 = vadd.f32 %v1120, %v1692
  %v1909 = vadd.f32 %v1181, %v1753
  %v1910 = vadd.f32 %v1183, %v1755
  %v1911 = vadd.f32 %v1244, %v1816
  %v1912 = vadd.f32 %v1246, %v1818
  %v1913 = vadd.f32 %v1307, %v1879
  %v1914 = vadd.f32 %v1309, %v1881
  %v1915 = vadd.f32 %v1122, %v1694
  %v1916 = vadd.f32 %v1124, %v1696
  %v1917 = vadd.f32 %v1185, %v1757
  %v1918 = vadd.f32 %v1187, %v1759
  %v1919 = vadd.f32 %v1248, %v1820
  %v1920 = vadd.f32 %v1250, %v1822
  %v1921 = vadd.f32 %v1311, %v1883
  %v1922 = vadd.f32 %v1313, %v1885
  %v1923 = vadd.f32 %v1128, %v1700
  %v1924 = vadd.f32 %v1130, %v1702
  %v1925 = vadd.f32 %v1191, %v1763
  %v1926 = vadd.f32 %v1193, %v1765
  %v1927 = vadd.f32 %v1254, %v1826
  %v1928 = vadd.f32 %v1256, %v1828
  %v1929 = vadd.f32 %v1317, %v1889
  %v1930 = vadd.f32 %v1319, %v1891
  %v1931 = vadd.f32 %v1132, %v1704
  %v1932 = vadd.f32 %v1134, %v1706
  %v1933 = vadd.f32 %v1195, %v1767
  %v1934 = vadd.f32 %v1197, %v1769
  %v1935 = vadd.f32 %v1258, %v1830
  %v1936 = vadd.f32 %v1260, %v1832
  %v1937 = vadd.f32 %v1321, %v1893
  %v1938 = vadd.f32 %v1323, %v1895
  %v1939 = vadd.f32 %v1138, %v1710
  %v1940 = vadd.f32 %v1140, %v1712
  %v1941 = vadd.f32 %v1201, %v1773
  %v1942 = vadd.f32 %v1203, %v1775
  %v1943 = vadd.f32 %v1264, %v1836
  %v1944 = vadd.f32 %v1266, %v1838
  %v1945 = vadd.f32 %v1327, %v1899
  %v1946 = vadd.f32 %v1329, %v1901
  %v1947 = vadd.f32 %v1142, %v1714
  %v1948 = vadd.f32 %v1144, %v1716
  %v1949 = vadd.f32 %v1205, %v1777
  %v1950 = vadd.f32 %v1207, %v1779
  %v1951 = vadd.f32 %v1268, %v1840
  %v1952 = vadd.f32 %v1270, %v1842
  %v1953 = vadd.f32 %v1331, %v1903
  %v1954 = vadd.f32 %v1333, %v1905
  %s1955 = scalar_lea.vmem %s1, 72
  %v1956 = vld [vmem:[%s1955] sm:$0xf]
  %v1957 = vld [vmem:[%s1955 + $0x4] sm:$0xf]
  %v1958 = vld [vmem:[%s1955 + $0x8] sm:$0xf]
  %v1959 = vld [vmem:[%s1955 + $0xc] sm:$0xf]
  %v1960 = vld [vmem:[%s1955 + $0x10] sm:$0xf]
  %v1961 = vld [vmem:[%s1955 + $0x14] sm:$0xf]
  %v1968 = vunpack.c.l.b16 %v1956
  %v1969 = vunpack.c.l.b16 %v1957
  %v1970 = vunpack.c.l.b16 %v1958
  %v1971 = vunpack.c.l.b16 %v1959
  %v1972 = vunpack.c.l.b16 %v1960
  %v1973 = vunpack.c.l.b16 %v1961
  %v1974 = vpack.c.b16 %v1969, %v1968
  %v1975 = vpack.c.b16 %v1971, %v1970
  %v1976 = vpack.c.b16 %v1973, %v1972
  %1977 = vrot.lane.b32.xlu0 %v355, 32
  %v1978 = vpop.permute.xlu0 %1977
  %1979 = vrot.lane.b32.xlu0 %v356, 32
  %v1980 = vpop.permute.xlu0 %1979
  %1981 = vrot.lane.b32.xlu0 %v357, 32
  %v1982 = vpop.permute.xlu0 %1981
  %1983 = vrot.lane.b32.xlu0 %v358, 32
  %v1984 = vpop.permute.xlu0 %1983
  %1985 = vrot.lane.b32.xlu0 %v359, 32
  %v1986 = vpop.permute.xlu0 %1985
  %1987 = vrot.lane.b32.xlu0 %v360, 32
  %v1988 = vpop.permute.xlu0 %1987
  %1989 = vrot.lane.b32.xlu0 %v361, 32
  %v1990 = vpop.permute.xlu0 %1989
  %1991 = vrot.lane.b32.xlu0 %v362, 32
  %v1992 = vpop.permute.xlu0 %1991
  %1993 = vrot.lane.b32.xlu0 %v363, 32
  %v1994 = vpop.permute.xlu0 %1993
  %1995 = vrot.lane.b32.xlu0 %v364, 32
  %v1996 = vpop.permute.xlu0 %1995
  %1997 = vrot.lane.b32.xlu0 %v365, 32
  %v1998 = vpop.permute.xlu0 %1997
  %1999 = vrot.lane.b32.xlu0 %v366, 32
  %v2000 = vpop.permute.xlu0 %1999
  %2001 = vrot.lane.b32.xlu0 %v367, 32
  %v2002 = vpop.permute.xlu0 %2001
  %2003 = vrot.lane.b32.xlu0 %v368, 32
  %v2004 = vpop.permute.xlu0 %2003
  %2005 = vrot.lane.b32.xlu0 %v369, 32
  %v2006 = vpop.permute.xlu0 %2005
  %2007 = vrot.lane.b32.xlu0 %v370, 32
  %v2008 = vpop.permute.xlu0 %2007
  %2009 = vrot.lane.b32.xlu0 %v371, 32
  %v2010 = vpop.permute.xlu0 %2009
  %2011 = vrot.lane.b32.xlu0 %v372, 32
  %v2012 = vpop.permute.xlu0 %2011
  %2013 = vrot.lane.b32.xlu0 %v373, 32
  %v2014 = vpop.permute.xlu0 %2013
  %2015 = vrot.lane.b32.xlu0 %v374, 32
  %v2016 = vpop.permute.xlu0 %2015
  %2017 = vrot.lane.b32.xlu0 %v375, 32
  %v2018 = vpop.permute.xlu0 %2017
  %2019 = vrot.lane.b32.xlu0 %v376, 32
  %v2020 = vpop.permute.xlu0 %2019
  %2021 = vrot.lane.b32.xlu0 %v377, 32
  %v2022 = vpop.permute.xlu0 %2021
  %2023 = vrot.lane.b32.xlu0 %v378, 32
  %v2024 = vpop.permute.xlu0 %2023
  %2025 = vrot.lane.b32.xlu0 %v379, 32
  %v2026 = vpop.permute.xlu0 %2025
  %2027 = vrot.lane.b32.xlu0 %v380, 32
  %v2028 = vpop.permute.xlu0 %2027
  %2029 = vrot.lane.b32.xlu0 %v381, 32
  %v2030 = vpop.permute.xlu0 %2029
  %2031 = vrot.lane.b32.xlu0 %v382, 32
  %v2032 = vpop.permute.xlu0 %2031
  %2033 = vrot.lane.b32.xlu0 %v383, 32
  %v2034 = vpop.permute.xlu0 %2033
  %2035 = vrot.lane.b32.xlu0 %v384, 32
  %v2036 = vpop.permute.xlu0 %2035
  %2037 = vrot.lane.b32.xlu0 %v385, 32
  %v2038 = vpop.permute.xlu0 %2037
  %2039 = vrot.lane.b32.xlu0 %v386, 32
  %v2040 = vpop.permute.xlu0 %2039
  %2041 = vrot.lane.b32.xlu0 %v387, 32
  %v2042 = vpop.permute.xlu0 %2041
  %2043 = vrot.lane.b32.xlu0 %v388, 32
  %v2044 = vpop.permute.xlu0 %2043
  %2045 = vrot.lane.b32.xlu0 %v389, 32
  %v2046 = vpop.permute.xlu0 %2045
  %2047 = vrot.lane.b32.xlu0 %v390, 32
  %v2048 = vpop.permute.xlu0 %2047
  %2049 = vrot.lane.b32.xlu0 %v391, 32
  %v2050 = vpop.permute.xlu0 %2049
  %2051 = vrot.lane.b32.xlu0 %v392, 32
  %v2052 = vpop.permute.xlu0 %2051
  %2053 = vrot.lane.b32.xlu0 %v393, 32
  %v2054 = vpop.permute.xlu0 %2053
  %2055 = vrot.lane.b32.xlu0 %v394, 32
  %v2056 = vpop.permute.xlu0 %2055
  %2057 = vrot.lane.b32.xlu0 %v395, 32
  %v2058 = vpop.permute.xlu0 %2057
  %2059 = vrot.lane.b32.xlu0 %v396, 32
  %v2060 = vpop.permute.xlu0 %2059
  %2061 = vrot.lane.b32.xlu0 %v397, 32
  %v2062 = vpop.permute.xlu0 %2061
  %2063 = vrot.lane.b32.xlu0 %v398, 32
  %v2064 = vpop.permute.xlu0 %2063
  %2065 = vrot.lane.b32.xlu0 %v399, 32
  %v2066 = vpop.permute.xlu0 %2065
  %2067 = vrot.lane.b32.xlu0 %v400, 32
  %v2068 = vpop.permute.xlu0 %2067
  %2069 = vrot.lane.b32.xlu0 %v401, 32
  %v2070 = vpop.permute.xlu0 %2069
  %2071 = vrot.lane.b32.xlu0 %v402, 32
  %v2072 = vpop.permute.xlu0 %2071
  %2073 = vrot.lane.b32.xlu0 %v403, 32
  %v2074 = vpop.permute.xlu0 %2073
  %2075 = vrot.lane.b32.xlu0 %v404, 32
  %v2076 = vpop.permute.xlu0 %2075
  %2077 = vrot.lane.b32.xlu0 %v405, 32
  %v2078 = vpop.permute.xlu0 %2077
  %2079 = vrot.lane.b32.xlu0 %v406, 32
  %v2080 = vpop.permute.xlu0 %2079
  %2081 = vrot.lane.b32.xlu0 %v407, 32
  %v2082 = vpop.permute.xlu0 %2081
  %2083 = vrot.lane.b32.xlu0 %v408, 32
  %v2084 = vpop.permute.xlu0 %2083
  %2085 = vrot.lane.b32.xlu0 %v409, 32
  %v2086 = vpop.permute.xlu0 %2085
  %2087 = vrot.lane.b32.xlu0 %v410, 32
  %v2088 = vpop.permute.xlu0 %2087
  %2089 = vrot.lane.b32.xlu0 %v411, 32
  %v2090 = vpop.permute.xlu0 %2089
  %2091 = vrot.lane.b32.xlu0 %v412, 32
  %v2092 = vpop.permute.xlu0 %2091
  %2093 = vrot.lane.b32.xlu0 %v413, 32
  %v2094 = vpop.permute.xlu0 %2093
  %2095 = vrot.lane.b32.xlu0 %v414, 32
  %v2096 = vpop.permute.xlu0 %2095
  %2097 = vrot.lane.b32.xlu0 %v415, 32
  %v2098 = vpop.permute.xlu0 %2097
  %2099 = vrot.lane.b32.xlu0 %v416, 32
  %v2100 = vpop.permute.xlu0 %2099
  %2101 = vrot.lane.b32.xlu0 %v417, 32
  %v2102 = vpop.permute.xlu0 %2101
  %2103 = vrot.lane.b32.xlu0 %v418, 32
  %v2104 = vpop.permute.xlu0 %2103
  %2105 = vrot.lane.b32.xlu0 %v419, 32
  %v2106 = vpop.permute.xlu0 %2105
  %2107 = vrot.lane.b32.xlu0 %v420, 32
  %v2108 = vpop.permute.xlu0 %2107
  %2109 = vrot.lane.b32.xlu0 %v421, 32
  %v2110 = vpop.permute.xlu0 %2109
  %2111 = vrot.lane.b32.xlu0 %v422, 32
  %v2112 = vpop.permute.xlu0 %2111
  %2113 = vrot.lane.b32.xlu0 %v423, 32
  %v2114 = vpop.permute.xlu0 %2113
  %2115 = vrot.lane.b32.xlu0 %v424, 32
  %v2116 = vpop.permute.xlu0 %2115
  %2117 = vrot.lane.b32.xlu0 %v425, 32
  %v2118 = vpop.permute.xlu0 %2117
  %2119 = vrot.lane.b32.xlu0 %v426, 32
  %v2120 = vpop.permute.xlu0 %2119
  %vm2121 = vcmask 261120
  %v2122 = vsel %vm2121, %v1978, %v1980
  %v2123 = vsel %vm2121, %v1980, %v1982
  %v2124 = vsel %vm2121, %v1982, %v1984
  %v2125 = vsel %vm2121, %v1984, %v1986
  %v2126 = vsel %vm2121, %v1986, %v1988
  %v2127 = vsel %vm2121, %v1988, %v1990
  %v2128 = vsel %vm2121, %v1990, %v1992
  %v2129 = vsel %vm2121, %v1992, %v1994
  %v2130 = vsel %vm2121, %v1996, %v1998
  %v2131 = vsel %vm2121, %v1998, %v2000
  %v2132 = vsel %vm2121, %v2000, %v2002
  %v2133 = vsel %vm2121, %v2002, %v2004
  %v2134 = vsel %vm2121, %v2004, %v2006
  %v2135 = vsel %vm2121, %v2006, %v2008
  %v2136 = vsel %vm2121, %v2008, %v2010
  %v2137 = vsel %vm2121, %v2010, %v2012
  %v2138 = vsel %vm2121, %v2014, %v2016
  %v2139 = vsel %vm2121, %v2016, %v2018
  %v2140 = vsel %vm2121, %v2018, %v2020
  %v2141 = vsel %vm2121, %v2020, %v2022
  %v2142 = vsel %vm2121, %v2022, %v2024
  %v2143 = vsel %vm2121, %v2024, %v2026
  %v2144 = vsel %vm2121, %v2026, %v2028
  %v2145 = vsel %vm2121, %v2028, %v2030
  %v2146 = vsel %vm2121, %v2032, %v2034
  %v2147 = vsel %vm2121, %v2034, %v2036
  %v2148 = vsel %vm2121, %v2036, %v2038
  %v2149 = vsel %vm2121, %v2038, %v2040
  %v2150 = vsel %vm2121, %v2040, %v2042
  %v2151 = vsel %vm2121, %v2042, %v2044
  %v2152 = vsel %vm2121, %v2044, %v2046
  %v2153 = vsel %vm2121, %v2046, %v2048
  %v2154 = vsel %vm2121, %v2050, %v2052
  %v2155 = vsel %vm2121, %v2052, %v2054
  %v2156 = vsel %vm2121, %v2054, %v2056
  %v2157 = vsel %vm2121, %v2056, %v2058
  %v2158 = vsel %vm2121, %v2058, %v2060
  %v2159 = vsel %vm2121, %v2060, %v2062
  %v2160 = vsel %vm2121, %v2062, %v2064
  %v2161 = vsel %vm2121, %v2064, %v2066
  %v2162 = vsel %vm2121, %v2068, %v2070
  %v2163 = vsel %vm2121, %v2070, %v2072
  %v2164 = vsel %vm2121, %v2072, %v2074
  %v2165 = vsel %vm2121, %v2074, %v2076
  %v2166 = vsel %vm2121, %v2076, %v2078
  %v2167 = vsel %vm2121, %v2078, %v2080
  %v2168 = vsel %vm2121, %v2080, %v2082
  %v2169 = vsel %vm2121, %v2082, %v2084
  %v2170 = vsel %vm2121, %v2086, %v2088
  %v2171 = vsel %vm2121, %v2088, %v2090
  %v2172 = vsel %vm2121, %v2090, %v2092
  %v2173 = vsel %vm2121, %v2092, %v2094
  %v2174 = vsel %vm2121, %v2094, %v2096
  %v2175 = vsel %vm2121, %v2096, %v2098
  %v2176 = vsel %vm2121, %v2098, %v2100
  %v2177 = vsel %vm2121, %v2100, %v2102
  %v2178 = vsel %vm2121, %v2104, %v2106
  %v2179 = vsel %vm2121, %v2106, %v2108
  %v2180 = vsel %vm2121, %v2108, %v2110
  %v2181 = vsel %vm2121, %v2110, %v2112
  %v2182 = vsel %vm2121, %v2112, %v2114
  %v2183 = vsel %vm2121, %v2114, %v2116
  %v2184 = vsel %vm2121, %v2116, %v2118
  %v2185 = vsel %vm2121, %v2118, %v2120
  %v2243 = vsel %vm692, %v1974, 0
  %v2246 = vsel %vm692, %v1975, 0
  %v2249 = vsel %vm692, %v1976, 0
  %v2252 = vsel %vm702, %v2178, 0
  %v2255 = vsel %vm702, %v2179, 0
  %v2258 = vsel %vm702, %v2180, 0
  %v2261 = vsel %vm702, %v2181, 0
  %v2264 = vsel %vm702, %v2182, 0
  %v2267 = vsel %vm702, %v2183, 0
  %v2270 = vsel %vm702, %v2184, 0
  %v2273 = vsel %vm702, %v2185, 0
  %2275 = vmatprep.subr.bf16.mxu0 %v2123
  %2276 = vmatpush1.bf16.msra.mxu0 %v2122
  %2277 = vmatprep.subr.bf16.mxu0 %v2131
  %2278 = vmatpush1.bf16.msra.mxu0 %v2130
  %2279 = vmatprep.subr.bf16.mxu0 %v2139
  %2280 = vmatpush1.bf16.msra.mxu0 %v2138
  %2281 = vmatprep.subr.bf16.mxu0 %v2147
  %2282 = vmatpush1.bf16.msra.mxu0 %v2146
  %2283 = vmatprep.subr.bf16.mxu0 %v2155
  %2284 = vmatpush1.bf16.msra.mxu0 %v2154
  %2285 = vmatprep.subr.bf16.mxu0 %v2163
  %2286 = vmatpush1.bf16.msra.mxu0 %v2162
  %2287 = vmatprep.subr.bf16.mxu0 %v2171
  %2288 = vmatpush1.bf16.msra.mxu0 %v2170
  %2289 = vmatprep.subr.bf16.mxu0 %v2255
  %2290 = vmatpush1.bf16.msra.mxu0 %v2252
  %2291 = vmatprep.subr.bf16.mxu0 0
  %2292 = vmatpush1.bf16.msra.mxu0 0
  %2293 = vmatprep.subr.bf16.mxu0 0
  %2294 = vmatpush1.bf16.msra.mxu0 0
  %2295 = vmatprep.subr.bf16.mxu0 0
  %2296 = vmatpush1.bf16.msra.mxu0 0
  %2297 = vmatprep.subr.bf16.mxu0 0
  %2298 = vmatpush1.bf16.msra.mxu0 0
  %2299 = vmatprep.subr.bf16.mxu0 0
  %2300 = vmatpush1.bf16.msra.mxu0 0
  %2301 = vmatprep.subr.bf16.mxu0 0
  %2302 = vmatpush1.bf16.msra.mxu0 0
  %2303 = vmatprep.subr.bf16.mxu0 0
  %2304 = vmatpush1.bf16.msra.mxu0 0
  %2305 = vmatprep.subr.bf16.mxu0 0
  %2306 = vmatpush1.bf16.msra.mxu0 0
  %2307 = vmatprep.mubr.bf16.mxu0 0
  %2308 = vmatmul.mubr.bf16.gmra.mrb[0].mxu0 %v2243
  %v2309 = vpop.f32.mrb[0].mxu0
  %v2310 = vadd.f32 0.0, %v2309
  %v2311 = vpop.f32.mrb[0].mxu0
  %v2312 = vadd.f32 0.0, %v2311
  %v2313 = vpop.f32.mrb[0].mxu0
  %v2314 = vadd.f32 0.0, %v2313
  %v2315 = vpop.f32.mrb[0].mxu0
  %v2316 = vadd.f32 0.0, %v2315
  %2317 = vmatprep.mubr.bf16.mxu0 0
  %2318 = vmatmul.mubr.bf16.gmra.mrb[0].mxu0 %v2246
  %v2319 = vpop.f32.mrb[0].mxu0
  %v2320 = vadd.f32 0.0, %v2319
  %v2321 = vpop.f32.mrb[0].mxu0
  %v2322 = vadd.f32 0.0, %v2321
  %v2323 = vpop.f32.mrb[0].mxu0
  %v2324 = vadd.f32 0.0, %v2323
  %v2325 = vpop.f32.mrb[0].mxu0
  %v2326 = vadd.f32 0.0, %v2325
  %2327 = vmatprep.mubr.bf16.mxu0 0
  %2328 = vmatmul.mubr.bf16.gmra.mrb[0].mxu0 %v2249
  %v2329 = vpop.f32.mrb[0].mxu0
  %v2330 = vadd.f32 0.0, %v2329
  %v2331 = vpop.f32.mrb[0].mxu0
  %v2332 = vadd.f32 0.0, %v2331
  %v2333 = vpop.f32.mrb[0].mxu0
  %v2334 = vadd.f32 0.0, %v2333
  %v2335 = vpop.f32.mrb[0].mxu0
  %v2336 = vadd.f32 0.0, %v2335
  %2337 = vdwg.mxu0
  %2338 = vmatprep.subr.bf16.mxu0 %v2125
  %2339 = vmatpush1.bf16.msra.mxu0 %v2124
  %2340 = vmatprep.subr.bf16.mxu0 %v2133
  %2341 = vmatpush1.bf16.msra.mxu0 %v2132
  %2342 = vmatprep.subr.bf16.mxu0 %v2141
  %2343 = vmatpush1.bf16.msra.mxu0 %v2140
  %2344 = vmatprep.subr.bf16.mxu0 %v2149
  %2345 = vmatpush1.bf16.msra.mxu0 %v2148
  %2346 = vmatprep.subr.bf16.mxu0 %v2157
  %2347 = vmatpush1.bf16.msra.mxu0 %v2156
  %2348 = vmatprep.subr.bf16.mxu0 %v2165
  %2349 = vmatpush1.bf16.msra.mxu0 %v2164
  %2350 = vmatprep.subr.bf16.mxu0 %v2173
  %2351 = vmatpush1.bf16.msra.mxu0 %v2172
  %2352 = vmatprep.subr.bf16.mxu0 %v2261
  %2353 = vmatpush1.bf16.msra.mxu0 %v2258
  %2354 = vmatprep.subr.bf16.mxu0 0
  %2355 = vmatpush1.bf16.msra.mxu0 0
  %2356 = vmatprep.subr.bf16.mxu0 0
  %2357 = vmatpush1.bf16.msra.mxu0 0
  %2358 = vmatprep.subr.bf16.mxu0 0
  %2359 = vmatpush1.bf16.msra.mxu0 0
  %2360 = vmatprep.subr.bf16.mxu0 0
  %2361 = vmatpush1.bf16.msra.mxu0 0
  %2362 = vmatprep.subr.bf16.mxu0 0
  %2363 = vmatpush1.bf16.msra.mxu0 0
  %2364 = vmatprep.subr.bf16.mxu0 0
  %2365 = vmatpush1.bf16.msra.mxu0 0
  %2366 = vmatprep.subr.bf16.mxu0 0
  %2367 = vmatpush1.bf16.msra.mxu0 0
  %2368 = vmatprep.subr.bf16.mxu0 0
  %2369 = vmatpush1.bf16.msra.mxu0 0
  %2370 = vmatprep.mubr.bf16.mxu0 0
  %2371 = vmatmul.mubr.bf16.gmra.mrb[0].mxu0 %v2243
  %v2372 = vpop.f32.mrb[0].mxu0
  %v2373 = vadd.f32 0.0, %v2372
  %v2374 = vpop.f32.mrb[0].mxu0
  %v2375 = vadd.f32 0.0, %v2374
  %v2376 = vpop.f32.mrb[0].mxu0
  %v2377 = vadd.f32 0.0, %v2376
  %v2378 = vpop.f32.mrb[0].mxu0
  %v2379 = vadd.f32 0.0, %v2378
  %2380 = vmatprep.mubr.bf16.mxu0 0
  %2381 = vmatmul.mubr.bf16.gmra.mrb[0].mxu0 %v2246
  %v2382 = vpop.f32.mrb[0].mxu0
  %v2383 = vadd.f32 0.0, %v2382
  %v2384 = vpop.f32.mrb[0].mxu0
  %v2385 = vadd.f32 0.0, %v2384
  %v2386 = vpop.f32.mrb[0].mxu0
  %v2387 = vadd.f32 0.0, %v2386
  %v2388 = vpop.f32.mrb[0].mxu0
  %v2389 = vadd.f32 0.0, %v2388
  %2390 = vmatprep.mubr.bf16.mxu0 0
  %2391 = vmatmul.mubr.bf16.gmra.mrb[0].mxu0 %v2249
  %v2392 = vpop.f32.mrb[0].mxu0
  %v2393 = vadd.f32 0.0, %v2392
  %v2394 = vpop.f32.mrb[0].mxu0
  %v2395 = vadd.f32 0.0, %v2394
  %v2396 = vpop.f32.mrb[0].mxu0
  %v2397 = vadd.f32 0.0, %v2396
  %v2398 = vpop.f32.mrb[0].mxu0
  %v2399 = vadd.f32 0.0, %v2398
  %2400 = vdwg.mxu0
  %2401 = vmatprep.subr.bf16.mxu0 %v2127
  %2402 = vmatpush1.bf16.msra.mxu0 %v2126
  %2403 = vmatprep.subr.bf16.mxu0 %v2135
  %2404 = vmatpush1.bf16.msra.mxu0 %v2134
  %2405 = vmatprep.subr.bf16.mxu0 %v2143
  %2406 = vmatpush1.bf16.msra.mxu0 %v2142
  %2407 = vmatprep.subr.bf16.mxu0 %v2151
  %2408 = vmatpush1.bf16.msra.mxu0 %v2150
  %2409 = vmatprep.subr.bf16.mxu0 %v2159
  %2410 = vmatpush1.bf16.msra.mxu0 %v2158
  %2411 = vmatprep.subr.bf16.mxu0 %v2167
  %2412 = vmatpush1.bf16.msra.mxu0 %v2166
  %2413 = vmatprep.subr.bf16.mxu0 %v2175
  %2414 = vmatpush1.bf16.msra.mxu0 %v2174
  %2415 = vmatprep.subr.bf16.mxu0 %v2267
  %2416 = vmatpush1.bf16.msra.mxu0 %v2264
  %2417 = vmatprep.subr.bf16.mxu0 0
  %2418 = vmatpush1.bf16.msra.mxu0 0
  %2419 = vmatprep.subr.bf16.mxu0 0
  %2420 = vmatpush1.bf16.msra.mxu0 0
  %2421 = vmatprep.subr.bf16.mxu0 0
  %2422 = vmatpush1.bf16.msra.mxu0 0
  %2423 = vmatprep.subr.bf16.mxu0 0
  %2424 = vmatpush1.bf16.msra.mxu0 0
  %2425 = vmatprep.subr.bf16.mxu0 0
  %2426 = vmatpush1.bf16.msra.mxu0 0
  %2427 = vmatprep.subr.bf16.mxu0 0
  %2428 = vmatpush1.bf16.msra.mxu0 0
  %2429 = vmatprep.subr.bf16.mxu0 0
  %2430 = vmatpush1.bf16.msra.mxu0 0
  %2431 = vmatprep.subr.bf16.mxu0 0
  %2432 = vmatpush1.bf16.msra.mxu0 0
  %2433 = vmatprep.mubr.bf16.mxu0 0
  %2434 = vmatmul.mubr.bf16.gmra.mrb[0].mxu0 %v2243
  %v2435 = vpop.f32.mrb[0].mxu0
  %v2436 = vadd.f32 0.0, %v2435
  %v2437 = vpop.f32.mrb[0].mxu0
  %v2438 = vadd.f32 0.0, %v2437
  %v2439 = vpop.f32.mrb[0].mxu0
  %v2440 = vadd.f32 0.0, %v2439
  %v2441 = vpop.f32.mrb[0].mxu0
  %v2442 = vadd.f32 0.0, %v2441
  %2443 = vmatprep.mubr.bf16.mxu0 0
  %2444 = vmatmul.mubr.bf16.gmra.mrb[0].mxu0 %v2246
  %v2445 = vpop.f32.mrb[0].mxu0
  %v2446 = vadd.f32 0.0, %v2445
  %v2447 = vpop.f32.mrb[0].mxu0
  %v2448 = vadd.f32 0.0, %v2447
  %v2449 = vpop.f32.mrb[0].mxu0
  %v2450 = vadd.f32 0.0, %v2449
  %v2451 = vpop.f32.mrb[0].mxu0
  %v2452 = vadd.f32 0.0, %v2451
  %2453 = vmatprep.mubr.bf16.mxu0 0
  %2454 = vmatmul.mubr.bf16.gmra.mrb[0].mxu0 %v2249
  %v2455 = vpop.f32.mrb[0].mxu0
  %v2456 = vadd.f32 0.0, %v2455
  %v2457 = vpop.f32.mrb[0].mxu0
  %v2458 = vadd.f32 0.0, %v2457
  %v2459 = vpop.f32.mrb[0].mxu0
  %v2460 = vadd.f32 0.0, %v2459
  %v2461 = vpop.f32.mrb[0].mxu0
  %v2462 = vadd.f32 0.0, %v2461
  %2463 = vdwg.mxu0
  %2464 = vmatprep.subr.bf16.mxu0 %v2129
  %2465 = vmatpush1.bf16.msra.mxu0 %v2128
  %2466 = vmatprep.subr.bf16.mxu0 %v2137
  %2467 = vmatpush1.bf16.msra.mxu0 %v2136
  %2468 = vmatprep.subr.bf16.mxu0 %v2145
  %2469 = vmatpush1.bf16.msra.mxu0 %v2144
  %2470 = vmatprep.subr.bf16.mxu0 %v2153
  %2471 = vmatpush1.bf16.msra.mxu0 %v2152
  %2472 = vmatprep.subr.bf16.mxu0 %v2161
  %2473 = vmatpush1.bf16.msra.mxu0 %v2160
  %2474 = vmatprep.subr.bf16.mxu0 %v2169
  %2475 = vmatpush1.bf16.msra.mxu0 %v2168
  %2476 = vmatprep.subr.bf16.mxu0 %v2177
  %2477 = vmatpush1.bf16.msra.mxu0 %v2176
  %2478 = vmatprep.subr.bf16.mxu0 %v2273
  %2479 = vmatpush1.bf16.msra.mxu0 %v2270
  %2480 = vmatprep.subr.bf16.mxu0 0
  %2481 = vmatpush1.bf16.msra.mxu0 0
  %2482 = vmatprep.subr.bf16.mxu0 0
  %2483 = vmatpush1.bf16.msra.mxu0 0
  %2484 = vmatprep.subr.bf16.mxu0 0
  %2485 = vmatpush1.bf16.msra.mxu0 0
  %2486 = vmatprep.subr.bf16.mxu0 0
  %2487 = vmatpush1.bf16.msra.mxu0 0
  %2488 = vmatprep.subr.bf16.mxu0 0
  %2489 = vmatpush1.bf16.msra.mxu0 0
  %2490 = vmatprep.subr.bf16.mxu0 0
  %2491 = vmatpush1.bf16.msra.mxu0 0
  %2492 = vmatprep.subr.bf16.mxu0 0
  %2493 = vmatpush1.bf16.msra.mxu0 0
  %2494 = vmatprep.subr.bf16.mxu0 0
  %2495 = vmatpush1.bf16.msra.mxu0 0
  %2496 = vmatprep.mubr.bf16.mxu0 0
  %2497 = vmatmul.mubr.bf16.gmra.mrb[0].mxu0 %v2243
  %v2498 = vpop.f32.mrb[0].mxu0
  %v2499 = vadd.f32 0.0, %v2498
  %v2500 = vpop.f32.mrb[0].mxu0
  %v2501 = vadd.f32 0.0, %v2500
  %v2502 = vpop.f32.mrb[0].mxu0
  %v2503 = vadd.f32 0.0, %v2502
  %v2504 = vpop.f32.mrb[0].mxu0
  %v2505 = vadd.f32 0.0, %v2504
  %2506 = vmatprep.mubr.bf16.mxu0 0
  %2507 = vmatmul.mubr.bf16.gmra.mrb[0].mxu0 %v2246
  %v2508 = vpop.f32.mrb[0].mxu0
  %v2509 = vadd.f32 0.0, %v2508
  %v2510 = vpop.f32.mrb[0].mxu0
  %v2511 = vadd.f32 0.0, %v2510
  %v2512 = vpop.f32.mrb[0].mxu0
  %v2513 = vadd.f32 0.0, %v2512
  %v2514 = vpop.f32.mrb[0].mxu0
  %v2515 = vadd.f32 0.0, %v2514
  %2516 = vmatprep.mubr.bf16.mxu0 0
  %2517 = vmatmul.mubr.bf16.gmra.mrb[0].mxu0 %v2249
  %v2518 = vpop.f32.mrb[0].mxu0
  %v2519 = vadd.f32 0.0, %v2518
  %v2520 = vpop.f32.mrb[0].mxu0
  %v2521 = vadd.f32 0.0, %v2520
  %v2522 = vpop.f32.mrb[0].mxu0
  %v2523 = vadd.f32 0.0, %v2522
  %v2524 = vpop.f32.mrb[0].mxu0
  %v2525 = vadd.f32 0.0, %v2524
  %2526 = vdwg.mxu0
  %v2527 = vadd.f32 %v1907, %v2310
  %v2528 = vadd.f32 %v1908, %v2312
  %v2529 = vadd.f32 %v1909, %v2373
  %v2530 = vadd.f32 %v1910, %v2375
  %v2531 = vadd.f32 %v1911, %v2436
  %v2532 = vadd.f32 %v1912, %v2438
  %v2533 = vadd.f32 %v1913, %v2499
  %v2534 = vadd.f32 %v1914, %v2501
  %v2535 = vadd.f32 %v1915, %v2314
  %v2536 = vadd.f32 %v1916, %v2316
  %v2537 = vadd.f32 %v1917, %v2377
  %v2538 = vadd.f32 %v1918, %v2379
  %v2539 = vadd.f32 %v1919, %v2440
  %v2540 = vadd.f32 %v1920, %v2442
  %v2541 = vadd.f32 %v1921, %v2503
  %v2542 = vadd.f32 %v1922, %v2505
  %v2543 = vadd.f32 %v1923, %v2320
  %v2544 = vadd.f32 %v1924, %v2322
  %v2545 = vadd.f32 %v1925, %v2383
  %v2546 = vadd.f32 %v1926, %v2385
  %v2547 = vadd.f32 %v1927, %v2446
  %v2548 = vadd.f32 %v1928, %v2448
  %v2549 = vadd.f32 %v1929, %v2509
  %v2550 = vadd.f32 %v1930, %v2511
  %v2551 = vadd.f32 %v1931, %v2324
  %v2552 = vadd.f32 %v1932, %v2326
  %v2553 = vadd.f32 %v1933, %v2387
  %v2554 = vadd.f32 %v1934, %v2389
  %v2555 = vadd.f32 %v1935, %v2450
  %v2556 = vadd.f32 %v1936, %v2452
  %v2557 = vadd.f32 %v1937, %v2513
  %v2558 = vadd.f32 %v1938, %v2515
  %v2559 = vadd.f32 %v1939, %v2330
  %v2560 = vadd.f32 %v1940, %v2332
  %v2561 = vadd.f32 %v1941, %v2393
  %v2562 = vadd.f32 %v1942, %v2395
  %v2563 = vadd.f32 %v1943, %v2456
  %v2564 = vadd.f32 %v1944, %v2458
  %v2565 = vadd.f32 %v1945, %v2519
  %v2566 = vadd.f32 %v1946, %v2521
  %v2567 = vadd.f32 %v1947, %v2334
  %v2568 = vadd.f32 %v1948, %v2336
  %v2569 = vadd.f32 %v1949, %v2397
  %v2570 = vadd.f32 %v1950, %v2399
  %v2571 = vadd.f32 %v1951, %v2460
  %v2572 = vadd.f32 %v1952, %v2462
  %v2573 = vadd.f32 %v1953, %v2523
  %v2574 = vadd.f32 %v1954, %v2525
  %s2575 = scalar_lea.vmem %s1, 96
  %v2576 = vld [vmem:[%s2575] sm:$0xf]
  %v2577 = vld [vmem:[%s2575 + $0x4] sm:$0xf]
  %v2578 = vld [vmem:[%s2575 + $0x8] sm:$0xf]
  %v2579 = vld [vmem:[%s2575 + $0xc] sm:$0xf]
  %v2580 = vld [vmem:[%s2575 + $0x10] sm:$0xf]
  %v2581 = vld [vmem:[%s2575 + $0x14] sm:$0xf]
  %v2588 = vunpack.c.l.b16 %v2576
  %v2589 = vunpack.c.l.b16 %v2577
  %v2590 = vunpack.c.l.b16 %v2578
  %v2591 = vunpack.c.l.b16 %v2579
  %v2592 = vunpack.c.l.b16 %v2580
  %v2593 = vunpack.c.l.b16 %v2581
  %v2594 = vpack.c.b16 %v2589, %v2588
  %v2595 = vpack.c.b16 %v2591, %v2590
  %v2596 = vpack.c.b16 %v2593, %v2592
  %v2605 = vsel %vm692, %v2594, 0
  %v2608 = vsel %vm692, %v2595, 0
  %v2611 = vsel %vm692, %v2596, 0
  %v2614 = vsel %vm702, %v426, 0
  %2616 = vmatprep.subr.bf16.mxu0 %v357
  %2617 = vmatpush1.bf16.msra.mxu0 %v356
  %2618 = vmatprep.subr.bf16.mxu0 %v366
  %2619 = vmatpush1.bf16.msra.mxu0 %v365
  %2620 = vmatprep.subr.bf16.mxu0 %v375
  %2621 = vmatpush1.bf16.msra.mxu0 %v374
  %2622 = vmatprep.subr.bf16.mxu0 %v384
  %2623 = vmatpush1.bf16.msra.mxu0 %v383
  %2624 = vmatprep.subr.bf16.mxu0 %v393
  %2625 = vmatpush1.bf16.msra.mxu0 %v392
  %2626 = vmatprep.subr.bf16.mxu0 %v402
  %2627 = vmatpush1.bf16.msra.mxu0 %v401
  %2628 = vmatprep.subr.bf16.mxu0 %v411
  %2629 = vmatpush1.bf16.msra.mxu0 %v410
  %2630 = vmatprep.subr.bf16.mxu0 %v1066
  %2631 = vmatpush1.bf16.msra.mxu0 %v1063
  %2632 = vmatprep.subr.bf16.mxu0 0
  %2633 = vmatpush1.bf16.msra.mxu0 0
  %2634 = vmatprep.subr.bf16.mxu0 0
  %2635 = vmatpush1.bf16.msra.mxu0 0
  %2636 = vmatprep.subr.bf16.mxu0 0
  %2637 = vmatpush1.bf16.msra.mxu0 0
  %2638 = vmatprep.subr.bf16.mxu0 0
  %2639 = vmatpush1.bf16.msra.mxu0 0
  %2640 = vmatprep.subr.bf16.mxu0 0
  %2641 = vmatpush1.bf16.msra.mxu0 0
  %2642 = vmatprep.subr.bf16.mxu0 0
  %2643 = vmatpush1.bf16.msra.mxu0 0
  %2644 = vmatprep.subr.bf16.mxu0 0
  %2645 = vmatpush1.bf16.msra.mxu0 0
  %2646 = vmatprep.subr.bf16.mxu0 0
  %2647 = vmatpush1.bf16.msra.mxu0 0
  %2648 = vmatprep.mubr.bf16.mxu0 0
  %2649 = vmatmul.mubr.bf16.gmra.mrb[0].mxu0 %v2605
  %v2650 = vpop.f32.mrb[0].mxu0
  %v2651 = vadd.f32 0.0, %v2650
  %v2652 = vpop.f32.mrb[0].mxu0
  %v2653 = vadd.f32 0.0, %v2652
  %v2654 = vpop.f32.mrb[0].mxu0
  %v2655 = vadd.f32 0.0, %v2654
  %v2656 = vpop.f32.mrb[0].mxu0
  %v2657 = vadd.f32 0.0, %v2656
  %2658 = vmatprep.mubr.bf16.mxu0 0
  %2659 = vmatmul.mubr.bf16.gmra.mrb[0].mxu0 %v2608
  %v2660 = vpop.f32.mrb[0].mxu0
  %v2661 = vadd.f32 0.0, %v2660
  %v2662 = vpop.f32.mrb[0].mxu0
  %v2663 = vadd.f32 0.0, %v2662
  %v2664 = vpop.f32.mrb[0].mxu0
  %v2665 = vadd.f32 0.0, %v2664
  %v2666 = vpop.f32.mrb[0].mxu0
  %v2667 = vadd.f32 0.0, %v2666
  %2668 = vmatprep.mubr.bf16.mxu0 0
  %2669 = vmatmul.mubr.bf16.gmra.mrb[0].mxu0 %v2611
  %v2670 = vpop.f32.mrb[0].mxu0
  %v2671 = vadd.f32 0.0, %v2670
  %v2672 = vpop.f32.mrb[0].mxu0
  %v2673 = vadd.f32 0.0, %v2672
  %v2674 = vpop.f32.mrb[0].mxu0
  %v2675 = vadd.f32 0.0, %v2674
  %v2676 = vpop.f32.mrb[0].mxu0
  %v2677 = vadd.f32 0.0, %v2676
  %2678 = vdwg.mxu0
  %2679 = vmatprep.subr.bf16.mxu0 %v359
  %2680 = vmatpush1.bf16.msra.mxu0 %v358
  %2681 = vmatprep.subr.bf16.mxu0 %v368
  %2682 = vmatpush1.bf16.msra.mxu0 %v367
  %2683 = vmatprep.subr.bf16.mxu0 %v377
  %2684 = vmatpush1.bf16.msra.mxu0 %v376
  %2685 = vmatprep.subr.bf16.mxu0 %v386
  %2686 = vmatpush1.bf16.msra.mxu0 %v385
  %2687 = vmatprep.subr.bf16.mxu0 %v395
  %2688 = vmatpush1.bf16.msra.mxu0 %v394
  %2689 = vmatprep.subr.bf16.mxu0 %v404
  %2690 = vmatpush1.bf16.msra.mxu0 %v403
  %2691 = vmatprep.subr.bf16.mxu0 %v413
  %2692 = vmatpush1.bf16.msra.mxu0 %v412
  %2693 = vmatprep.subr.bf16.mxu0 %v1072
  %2694 = vmatpush1.bf16.msra.mxu0 %v1069
  %2695 = vmatprep.subr.bf16.mxu0 0
  %2696 = vmatpush1.bf16.msra.mxu0 0
  %2697 = vmatprep.subr.bf16.mxu0 0
  %2698 = vmatpush1.bf16.msra.mxu0 0
  %2699 = vmatprep.subr.bf16.mxu0 0
  %2700 = vmatpush1.bf16.msra.mxu0 0
  %2701 = vmatprep.subr.bf16.mxu0 0
  %2702 = vmatpush1.bf16.msra.mxu0 0
  %2703 = vmatprep.subr.bf16.mxu0 0
  %2704 = vmatpush1.bf16.msra.mxu0 0
  %2705 = vmatprep.subr.bf16.mxu0 0
  %2706 = vmatpush1.bf16.msra.mxu0 0
  %2707 = vmatprep.subr.bf16.mxu0 0
  %2708 = vmatpush1.bf16.msra.mxu0 0
  %2709 = vmatprep.subr.bf16.mxu0 0
  %2710 = vmatpush1.bf16.msra.mxu0 0
  %2711 = vmatprep.mubr.bf16.mxu0 0
  %2712 = vmatmul.mubr.bf16.gmra.mrb[0].mxu0 %v2605
  %v2713 = vpop.f32.mrb[0].mxu0
  %v2714 = vadd.f32 0.0, %v2713
  %v2715 = vpop.f32.mrb[0].mxu0
  %v2716 = vadd.f32 0.0, %v2715
  %v2717 = vpop.f32.mrb[0].mxu0
  %v2718 = vadd.f32 0.0, %v2717
  %v2719 = vpop.f32.mrb[0].mxu0
  %v2720 = vadd.f32 0.0, %v2719
  %2721 = vmatprep.mubr.bf16.mxu0 0
  %2722 = vmatmul.mubr.bf16.gmra.mrb[0].mxu0 %v2608
  %v2723 = vpop.f32.mrb[0].mxu0
  %v2724 = vadd.f32 0.0, %v2723
  %v2725 = vpop.f32.mrb[0].mxu0
  %v2726 = vadd.f32 0.0, %v2725
  %v2727 = vpop.f32.mrb[0].mxu0
  %v2728 = vadd.f32 0.0, %v2727
  %v2729 = vpop.f32.mrb[0].mxu0
  %v2730 = vadd.f32 0.0, %v2729
  %2731 = vmatprep.mubr.bf16.mxu0 0
  %2732 = vmatmul.mubr.bf16.gmra.mrb[0].mxu0 %v2611
  %v2733 = vpop.f32.mrb[0].mxu0
  %v2734 = vadd.f32 0.0, %v2733
  %v2735 = vpop.f32.mrb[0].mxu0
  %v2736 = vadd.f32 0.0, %v2735
  %v2737 = vpop.f32.mrb[0].mxu0
  %v2738 = vadd.f32 0.0, %v2737
  %v2739 = vpop.f32.mrb[0].mxu0
  %v2740 = vadd.f32 0.0, %v2739
  %2741 = vdwg.mxu0
  %2742 = vmatprep.subr.bf16.mxu0 %v361
  %2743 = vmatpush1.bf16.msra.mxu0 %v360
  %2744 = vmatprep.subr.bf16.mxu0 %v370
  %2745 = vmatpush1.bf16.msra.mxu0 %v369
  %2746 = vmatprep.subr.bf16.mxu0 %v379
  %2747 = vmatpush1.bf16.msra.mxu0 %v378
  %2748 = vmatprep.subr.bf16.mxu0 %v388
  %2749 = vmatpush1.bf16.msra.mxu0 %v387
  %2750 = vmatprep.subr.bf16.mxu0 %v397
  %2751 = vmatpush1.bf16.msra.mxu0 %v396
  %2752 = vmatprep.subr.bf16.mxu0 %v406
  %2753 = vmatpush1.bf16.msra.mxu0 %v405
  %2754 = vmatprep.subr.bf16.mxu0 %v415
  %2755 = vmatpush1.bf16.msra.mxu0 %v414
  %2756 = vmatprep.subr.bf16.mxu0 %v1078
  %2757 = vmatpush1.bf16.msra.mxu0 %v1075
  %2758 = vmatprep.subr.bf16.mxu0 0
  %2759 = vmatpush1.bf16.msra.mxu0 0
  %2760 = vmatprep.subr.bf16.mxu0 0
  %2761 = vmatpush1.bf16.msra.mxu0 0
  %2762 = vmatprep.subr.bf16.mxu0 0
  %2763 = vmatpush1.bf16.msra.mxu0 0
  %2764 = vmatprep.subr.bf16.mxu0 0
  %2765 = vmatpush1.bf16.msra.mxu0 0
  %2766 = vmatprep.subr.bf16.mxu0 0
  %2767 = vmatpush1.bf16.msra.mxu0 0
  %2768 = vmatprep.subr.bf16.mxu0 0
  %2769 = vmatpush1.bf16.msra.mxu0 0
  %2770 = vmatprep.subr.bf16.mxu0 0
  %2771 = vmatpush1.bf16.msra.mxu0 0
  %2772 = vmatprep.subr.bf16.mxu0 0
  %2773 = vmatpush1.bf16.msra.mxu0 0
  %2774 = vmatprep.mubr.bf16.mxu0 0
  %2775 = vmatmul.mubr.bf16.gmra.mrb[0].mxu0 %v2605
  %v2776 = vpop.f32.mrb[0].mxu0
  %v2777 = vadd.f32 0.0, %v2776
  %v2778 = vpop.f32.mrb[0].mxu0
  %v2779 = vadd.f32 0.0, %v2778
  %v2780 = vpop.f32.mrb[0].mxu0
  %v2781 = vadd.f32 0.0, %v2780
  %v2782 = vpop.f32.mrb[0].mxu0
  %v2783 = vadd.f32 0.0, %v2782
  %2784 = vmatprep.mubr.bf16.mxu0 0
  %2785 = vmatmul.mubr.bf16.gmra.mrb[0].mxu0 %v2608
  %v2786 = vpop.f32.mrb[0].mxu0
  %v2787 = vadd.f32 0.0, %v2786
  %v2788 = vpop.f32.mrb[0].mxu0
  %v2789 = vadd.f32 0.0, %v2788
  %v2790 = vpop.f32.mrb[0].mxu0
  %v2791 = vadd.f32 0.0, %v2790
  %v2792 = vpop.f32.mrb[0].mxu0
  %v2793 = vadd.f32 0.0, %v2792
  %2794 = vmatprep.mubr.bf16.mxu0 0
  %2795 = vmatmul.mubr.bf16.gmra.mrb[0].mxu0 %v2611
  %v2796 = vpop.f32.mrb[0].mxu0
  %v2797 = vadd.f32 0.0, %v2796
  %v2798 = vpop.f32.mrb[0].mxu0
  %v2799 = vadd.f32 0.0, %v2798
  %v2800 = vpop.f32.mrb[0].mxu0
  %v2801 = vadd.f32 0.0, %v2800
  %v2802 = vpop.f32.mrb[0].mxu0
  %v2803 = vadd.f32 0.0, %v2802
  %2804 = vdwg.mxu0
  %2805 = vmatprep.subr.bf16.mxu0 %v363
  %2806 = vmatpush1.bf16.msra.mxu0 %v362
  %2807 = vmatprep.subr.bf16.mxu0 %v372
  %2808 = vmatpush1.bf16.msra.mxu0 %v371
  %2809 = vmatprep.subr.bf16.mxu0 %v381
  %2810 = vmatpush1.bf16.msra.mxu0 %v380
  %2811 = vmatprep.subr.bf16.mxu0 %v390
  %2812 = vmatpush1.bf16.msra.mxu0 %v389
  %2813 = vmatprep.subr.bf16.mxu0 %v399
  %2814 = vmatpush1.bf16.msra.mxu0 %v398
  %2815 = vmatprep.subr.bf16.mxu0 %v408
  %2816 = vmatpush1.bf16.msra.mxu0 %v407
  %2817 = vmatprep.subr.bf16.mxu0 %v417
  %2818 = vmatpush1.bf16.msra.mxu0 %v416
  %2819 = vmatprep.subr.bf16.mxu0 %v2614
  %2820 = vmatpush1.bf16.msra.mxu0 %v1081
  %2821 = vmatprep.subr.bf16.mxu0 0
  %2822 = vmatpush1.bf16.msra.mxu0 0
  %2823 = vmatprep.subr.bf16.mxu0 0
  %2824 = vmatpush1.bf16.msra.mxu0 0
  %2825 = vmatprep.subr.bf16.mxu0 0
  %2826 = vmatpush1.bf16.msra.mxu0 0
  %2827 = vmatprep.subr.bf16.mxu0 0
  %2828 = vmatpush1.bf16.msra.mxu0 0
  %2829 = vmatprep.subr.bf16.mxu0 0
  %2830 = vmatpush1.bf16.msra.mxu0 0
  %2831 = vmatprep.subr.bf16.mxu0 0
  %2832 = vmatpush1.bf16.msra.mxu0 0
  %2833 = vmatprep.subr.bf16.mxu0 0
  %2834 = vmatpush1.bf16.msra.mxu0 0
  %2835 = vmatprep.subr.bf16.mxu0 0
  %2836 = vmatpush1.bf16.msra.mxu0 0
  %2837 = vmatprep.mubr.bf16.mxu0 0
  %2838 = vmatmul.mubr.bf16.gmra.mrb[0].mxu0 %v2605
  %v2839 = vpop.f32.mrb[0].mxu0
  %v2840 = vadd.f32 0.0, %v2839
  %v2841 = vpop.f32.mrb[0].mxu0
  %v2842 = vadd.f32 0.0, %v2841
  %v2843 = vpop.f32.mrb[0].mxu0
  %v2844 = vadd.f32 0.0, %v2843
  %v2845 = vpop.f32.mrb[0].mxu0
  %v2846 = vadd.f32 0.0, %v2845
  %2847 = vmatprep.mubr.bf16.mxu0 0
  %2848 = vmatmul.mubr.bf16.gmra.mrb[0].mxu0 %v2608
  %v2849 = vpop.f32.mrb[0].mxu0
  %v2850 = vadd.f32 0.0, %v2849
  %v2851 = vpop.f32.mrb[0].mxu0
  %v2852 = vadd.f32 0.0, %v2851
  %v2853 = vpop.f32.mrb[0].mxu0
  %v2854 = vadd.f32 0.0, %v2853
  %v2855 = vpop.f32.mrb[0].mxu0
  %v2856 = vadd.f32 0.0, %v2855
  %2857 = vmatprep.mubr.bf16.mxu0 0
  %2858 = vmatmul.mubr.bf16.gmra.mrb[0].mxu0 %v2611
  %v2859 = vpop.f32.mrb[0].mxu0
  %v2860 = vadd.f32 0.0, %v2859
  %v2861 = vpop.f32.mrb[0].mxu0
  %v2862 = vadd.f32 0.0, %v2861
  %v2863 = vpop.f32.mrb[0].mxu0
  %v2864 = vadd.f32 0.0, %v2863
  %v2865 = vpop.f32.mrb[0].mxu0
  %v2866 = vadd.f32 0.0, %v2865
  %2867 = vdwg.mxu0
  %v2868 = vadd.f32 %v2527, %v2651
  %v2869 = vadd.f32 %v2528, %v2653
  %v2870 = vadd.f32 %v2529, %v2714
  %v2871 = vadd.f32 %v2530, %v2716
  %v2872 = vadd.f32 %v2531, %v2777
  %v2873 = vadd.f32 %v2532, %v2779
  %v2874 = vadd.f32 %v2533, %v2840
  %v2875 = vadd.f32 %v2534, %v2842
  %v2876 = vadd.f32 %v2535, %v2655
  %v2877 = vadd.f32 %v2536, %v2657
  %v2878 = vadd.f32 %v2537, %v2718
  %v2879 = vadd.f32 %v2538, %v2720
  %v2880 = vadd.f32 %v2539, %v2781
  %v2881 = vadd.f32 %v2540, %v2783
  %v2882 = vadd.f32 %v2541, %v2844
  %v2883 = vadd.f32 %v2542, %v2846
  %v2884 = vadd.f32 %v2543, %v2661
  %v2885 = vadd.f32 %v2544, %v2663
  %v2886 = vadd.f32 %v2545, %v2724
  %v2887 = vadd.f32 %v2546, %v2726
  %v2888 = vadd.f32 %v2547, %v2787
  %v2889 = vadd.f32 %v2548, %v2789
  %v2890 = vadd.f32 %v2549, %v2850
  %v2891 = vadd.f32 %v2550, %v2852
  %v2892 = vadd.f32 %v2551, %v2665
  %v2893 = vadd.f32 %v2552, %v2667
  %v2894 = vadd.f32 %v2553, %v2728
  %v2895 = vadd.f32 %v2554, %v2730
  %v2896 = vadd.f32 %v2555, %v2791
  %v2897 = vadd.f32 %v2556, %v2793
  %v2898 = vadd.f32 %v2557, %v2854
  %v2899 = vadd.f32 %v2558, %v2856
  %v2900 = vadd.f32 %v2559, %v2671
  %v2901 = vadd.f32 %v2560, %v2673
  %v2902 = vadd.f32 %v2561, %v2734
  %v2903 = vadd.f32 %v2562, %v2736
  %v2904 = vadd.f32 %v2563, %v2797
  %v2905 = vadd.f32 %v2564, %v2799
  %v2906 = vadd.f32 %v2565, %v2860
  %v2907 = vadd.f32 %v2566, %v2862
  %v2908 = vadd.f32 %v2567, %v2675
  %v2909 = vadd.f32 %v2568, %v2677
  %v2910 = vadd.f32 %v2569, %v2738
  %v2911 = vadd.f32 %v2570, %v2740
  %v2912 = vadd.f32 %v2571, %v2801
  %v2913 = vadd.f32 %v2572, %v2803
  %v2914 = vadd.f32 %v2573, %v2864
  %v2915 = vadd.f32 %v2574, %v2866
  %v2916 = vld [vmem:[%s2] sm:$0xff]
  %v2917 = vld [vmem:[%s2 + $0x8] sm:$0xff]
  %v2918 = vld [vmem:[%s2 + $0x10] sm:$0xff]
  %v2919 = vld [vmem:[%s2 + $0x18] sm:$0xff]
  %v2920 = vld [vmem:[%s2 + $0x20] sm:$0xff]
  %v2921 = vld [vmem:[%s2 + $0x28] sm:$0xff]
  %2923 = vset.pattern.permute.xlu0 0
  %2924 = vperm.xlu0 %2923, %v2916
  %v2925 = vpop.permute.xlu0 %2924
  %2928 = vset.pattern.permute.xlu0 0
  %2929 = vperm.xlu0 %2928, %v2917
  %v2930 = vpop.permute.xlu0 %2929
  %2933 = vset.pattern.permute.xlu0 0
  %2934 = vperm.xlu0 %2933, %v2918
  %v2935 = vpop.permute.xlu0 %2934
  %2938 = vset.pattern.permute.xlu0 0
  %2939 = vperm.xlu0 %2938, %v2919
  %v2940 = vpop.permute.xlu0 %2939
  %2943 = vset.pattern.permute.xlu0 0
  %2944 = vperm.xlu0 %2943, %v2920
  %v2945 = vpop.permute.xlu0 %2944
  %2948 = vset.pattern.permute.xlu0 0
  %2949 = vperm.xlu0 %2948, %v2921
  %v2950 = vpop.permute.xlu0 %2949
  %v2952 = vadd.f32 %v2868, %v2925
  %v2953 = vadd.f32 %v2869, %v2925
  %v2954 = vadd.f32 %v2870, %v2925
  %v2955 = vadd.f32 %v2871, %v2925
  %v2956 = vadd.f32 %v2872, %v2925
  %v2957 = vadd.f32 %v2873, %v2925
  %v2958 = vadd.f32 %v2874, %v2925
  %v2959 = vadd.f32 %v2875, %v2925
  %v2960 = vadd.f32 %v2876, %v2930
  %v2961 = vadd.f32 %v2877, %v2930
  %v2962 = vadd.f32 %v2878, %v2930
  %v2963 = vadd.f32 %v2879, %v2930
  %v2964 = vadd.f32 %v2880, %v2930
  %v2965 = vadd.f32 %v2881, %v2930
  %v2966 = vadd.f32 %v2882, %v2930
  %v2967 = vadd.f32 %v2883, %v2930
  %v2968 = vadd.f32 %v2884, %v2935
  %v2969 = vadd.f32 %v2885, %v2935
  %v2970 = vadd.f32 %v2886, %v2935
  %v2971 = vadd.f32 %v2887, %v2935
  %v2972 = vadd.f32 %v2888, %v2935
  %v2973 = vadd.f32 %v2889, %v2935
  %v2974 = vadd.f32 %v2890, %v2935
  %v2975 = vadd.f32 %v2891, %v2935
  %v2976 = vadd.f32 %v2892, %v2940
  %v2977 = vadd.f32 %v2893, %v2940
  %v2978 = vadd.f32 %v2894, %v2940
  %v2979 = vadd.f32 %v2895, %v2940
  %v2980 = vadd.f32 %v2896, %v2940
  %v2981 = vadd.f32 %v2897, %v2940
  %v2982 = vadd.f32 %v2898, %v2940
  %v2983 = vadd.f32 %v2899, %v2940
  %v2984 = vadd.f32 %v2900, %v2945
  %v2985 = vadd.f32 %v2901, %v2945
  %v2986 = vadd.f32 %v2902, %v2945
  %v2987 = vadd.f32 %v2903, %v2945
  %v2988 = vadd.f32 %v2904, %v2945
  %v2989 = vadd.f32 %v2905, %v2945
  %v2990 = vadd.f32 %v2906, %v2945
  %v2991 = vadd.f32 %v2907, %v2945
  %v2992 = vadd.f32 %v2908, %v2950
  %v2993 = vadd.f32 %v2909, %v2950
  %v2994 = vadd.f32 %v2910, %v2950
  %v2995 = vadd.f32 %v2911, %v2950
  %v2996 = vadd.f32 %v2912, %v2950
  %v2997 = vadd.f32 %v2913, %v2950
  %v2998 = vadd.f32 %v2914, %v2950
  %v2999 = vadd.f32 %v2915, %v2950
  %v3000 = vmax.f32 %v2952, 0.0
  %v3001 = vmax.f32 %v2953, 0.0
  %v3002 = vmax.f32 %v2954, 0.0
  %v3003 = vmax.f32 %v2955, 0.0
  %v3004 = vmax.f32 %v2956, 0.0
  %v3005 = vmax.f32 %v2957, 0.0
  %v3006 = vmax.f32 %v2958, 0.0
  %v3007 = vmax.f32 %v2959, 0.0
  %v3008 = vmax.f32 %v2960, 0.0
  %v3009 = vmax.f32 %v2961, 0.0
  %v3010 = vmax.f32 %v2962, 0.0
  %v3011 = vmax.f32 %v2963, 0.0
  %v3012 = vmax.f32 %v2964, 0.0
  %v3013 = vmax.f32 %v2965, 0.0
  %v3014 = vmax.f32 %v2966, 0.0
  %v3015 = vmax.f32 %v2967, 0.0
  %v3016 = vmax.f32 %v2968, 0.0
  %v3017 = vmax.f32 %v2969, 0.0
  %v3018 = vmax.f32 %v2970, 0.0
  %v3019 = vmax.f32 %v2971, 0.0
  %v3020 = vmax.f32 %v2972, 0.0
  %v3021 = vmax.f32 %v2973, 0.0
  %v3022 = vmax.f32 %v2974, 0.0
  %v3023 = vmax.f32 %v2975, 0.0
  %v3024 = vmax.f32 %v2976, 0.0
  %v3025 = vmax.f32 %v2977, 0.0
  %v3026 = vmax.f32 %v2978, 0.0
  %v3027 = vmax.f32 %v2979, 0.0
  %v3028 = vmax.f32 %v2980, 0.0
  %v3029 = vmax.f32 %v2981, 0.0
  %v3030 = vmax.f32 %v2982, 0.0
  %v3031 = vmax.f32 %v2983, 0.0
  %v3032 = vmax.f32 %v2984, 0.0
  %v3033 = vmax.f32 %v2985, 0.0
  %v3034 = vmax.f32 %v2986, 0.0
  %v3035 = vmax.f32 %v2987, 0.0
  %v3036 = vmax.f32 %v2988, 0.0
  %v3037 = vmax.f32 %v2989, 0.0
  %v3038 = vmax.f32 %v2990, 0.0
  %v3039 = vmax.f32 %v2991, 0.0
  %v3040 = vmax.f32 %v2992, 0.0
  %v3041 = vmax.f32 %v2993, 0.0
  %v3042 = vmax.f32 %v2994, 0.0
  %v3043 = vmax.f32 %v2995, 0.0
  %v3044 = vmax.f32 %v2996, 0.0
  %v3045 = vmax.f32 %v2997, 0.0
  %v3046 = vmax.f32 %v2998, 0.0
  %v3047 = vmax.f32 %v2999, 0.0
  %v3048 = vpack.c.bf16 %v3008, %v3000
  %v3049 = vpack.c.bf16 %v3009, %v3001
  %v3050 = vpack.c.bf16 %v3010, %v3002
  %v3051 = vpack.c.bf16 %v3011, %v3003
  %v3052 = vpack.c.bf16 %v3012, %v3004
  %v3053 = vpack.c.bf16 %v3013, %v3005
  %v3054 = vpack.c.bf16 %v3014, %v3006
  %v3055 = vpack.c.bf16 %v3015, %v3007
  %v3056 = vpack.c.bf16 %v3024, %v3016
  %v3057 = vpack.c.bf16 %v3025, %v3017
  %v3058 = vpack.c.bf16 %v3026, %v3018
  %v3059 = vpack.c.bf16 %v3027, %v3019
  %v3060 = vpack.c.bf16 %v3028, %v3020
  %v3061 = vpack.c.bf16 %v3029, %v3021
  %v3062 = vpack.c.bf16 %v3030, %v3022
  %v3063 = vpack.c.bf16 %v3031, %v3023
  %v3064 = vpack.c.bf16 %v3040, %v3032
  %v3065 = vpack.c.bf16 %v3041, %v3033
  %v3066 = vpack.c.bf16 %v3042, %v3034
  %v3067 = vpack.c.bf16 %v3043, %v3035
  %v3068 = vpack.c.bf16 %v3044, %v3036
  %v3069 = vpack.c.bf16 %v3045, %v3037
  %v3070 = vpack.c.bf16 %v3046, %v3038
  %v3071 = vpack.c.bf16 %v3047, %v3039
  %3096 = vrot.lane.b32.xlu0 %v3048, 127
  %v3097 = vpop.permute.xlu0 %3096
  %3098 = vrot.lane.b32.xlu0 %v3049, 127
  %v3099 = vpop.permute.xlu0 %3098
  %3100 = vrot.lane.b32.xlu0 %v3050, 127
  %v3101 = vpop.permute.xlu0 %3100
  %3102 = vrot.lane.b32.xlu0 %v3051, 127
  %v3103 = vpop.permute.xlu0 %3102
  %3104 = vrot.lane.b32.xlu0 %v3052, 127
  %v3105 = vpop.permute.xlu0 %3104
  %3106 = vrot.lane.b32.xlu0 %v3053, 127
  %v3107 = vpop.permute.xlu0 %3106
  %3108 = vrot.lane.b32.xlu0 %v3054, 127
  %v3109 = vpop.permute.xlu0 %3108
  %3110 = vrot.lane.b32.xlu0 %v3055, 127
  %v3111 = vpop.permute.xlu0 %3110
  %3112 = vrot.lane.b32.xlu0 %v3056, 127
  %v3113 = vpop.permute.xlu0 %3112
  %3114 = vrot.lane.b32.xlu0 %v3057, 127
  %v3115 = vpop.permute.xlu0 %3114
  %3116 = vrot.lane.b32.xlu0 %v3058, 127
  %v3117 = vpop.permute.xlu0 %3116
  %3118 = vrot.lane.b32.xlu0 %v3059, 127
  %v3119 = vpop.permute.xlu0 %3118
  %3120 = vrot.lane.b32.xlu0 %v3060, 127
  %v3121 = vpop.permute.xlu0 %3120
  %3122 = vrot.lane.b32.xlu0 %v3061, 127
  %v3123 = vpop.permute.xlu0 %3122
  %3124 = vrot.lane.b32.xlu0 %v3062, 127
  %v3125 = vpop.permute.xlu0 %3124
  %3126 = vrot.lane.b32.xlu0 %v3063, 127
  %v3127 = vpop.permute.xlu0 %3126
  %3128 = vrot.lane.b32.xlu0 %v3064, 127
  %v3129 = vpop.permute.xlu0 %3128
  %3130 = vrot.lane.b32.xlu0 %v3065, 127
  %v3131 = vpop.permute.xlu0 %3130
  %3132 = vrot.lane.b32.xlu0 %v3066, 127
  %v3133 = vpop.permute.xlu0 %3132
  %3134 = vrot.lane.b32.xlu0 %v3067, 127
  %v3135 = vpop.permute.xlu0 %3134
  %3136 = vrot.lane.b32.xlu0 %v3068, 127
  %v3137 = vpop.permute.xlu0 %3136
  %3138 = vrot.lane.b32.xlu0 %v3069, 127
  %v3139 = vpop.permute.xlu0 %3138
  %3140 = vrot.lane.b32.xlu0 %v3070, 127
  %v3141 = vpop.permute.xlu0 %3140
  %3142 = vrot.lane.b32.xlu0 %v3071, 127
  %v3143 = vpop.permute.xlu0 %3142
  %vm3144 = vcmask 1039360
  %v3145 = vsel %vm3144, %v3097, %v3099
  %v3146 = vsel %vm3144, %v3099, %v3101
  %v3147 = vsel %vm3144, %v3101, %v3103
  %v3148 = vsel %vm3144, %v3103, %v3105
  %v3149 = vsel %vm3144, %v3105, %v3107
  %v3150 = vsel %vm3144, %v3107, %v3109
  %v3151 = vsel %vm3144, %v3109, %v3111
  %v3152 = vsel %vm3144, %v3113, %v3115
  %v3153 = vsel %vm3144, %v3115, %v3117
  %v3154 = vsel %vm3144, %v3117, %v3119
  %v3155 = vsel %vm3144, %v3119, %v3121
  %v3156 = vsel %vm3144, %v3121, %v3123
  %v3157 = vsel %vm3144, %v3123, %v3125
  %v3158 = vsel %vm3144, %v3125, %v3127
  %v3159 = vsel %vm3144, %v3129, %v3131
  %v3160 = vsel %vm3144, %v3131, %v3133
  %v3161 = vsel %vm3144, %v3133, %v3135
  %v3162 = vsel %vm3144, %v3135, %v3137
  %v3163 = vsel %vm3144, %v3137, %v3139
  %v3164 = vsel %vm3144, %v3139, %v3141
  %v3165 = vsel %vm3144, %v3141, %v3143
  %v3187 = vmax.bf16 %v3048, %v3145
  %v3188 = vmax.bf16 %v3049, %v3146
  %v3189 = vmax.bf16 %v3050, %v3147
  %v3190 = vmax.bf16 %v3051, %v3148
  %v3191 = vmax.bf16 %v3052, %v3149
  %v3192 = vmax.bf16 %v3053, %v3150
  %v3193 = vmax.bf16 %v3054, %v3151
  %v3194 = vmax.bf16 %v3056, %v3152
  %v3195 = vmax.bf16 %v3057, %v3153
  %v3196 = vmax.bf16 %v3058, %v3154
  %v3197 = vmax.bf16 %v3059, %v3155
  %v3198 = vmax.bf16 %v3060, %v3156
  %v3199 = vmax.bf16 %v3061, %v3157
  %v3200 = vmax.bf16 %v3062, %v3158
  %v3201 = vmax.bf16 %v3064, %v3159
  %v3202 = vmax.bf16 %v3065, %v3160
  %v3203 = vmax.bf16 %v3066, %v3161
  %v3204 = vmax.bf16 %v3067, %v3162
  %v3205 = vmax.bf16 %v3068, %v3163
  %v3206 = vmax.bf16 %v3069, %v3164
  %v3207 = vmax.bf16 %v3070, %v3165
  %v3211 = vmax.bf16 %v3055, %v3111
  %v3212 = vmax.bf16 %v3063, %v3127
  %v3213 = vmax.bf16 %v3071, %v3143
  %3238 = vrot.lane.b32.xlu0 %v3187, 96
  %v3239 = vpop.permute.xlu0 %3238
  %3240 = vrot.lane.b32.xlu0 %v3188, 96
  %v3241 = vpop.permute.xlu0 %3240
  %3242 = vrot.lane.b32.xlu0 %v3189, 96
  %v3243 = vpop.permute.xlu0 %3242
  %3244 = vrot.lane.b32.xlu0 %v3190, 96
  %v3245 = vpop.permute.xlu0 %3244
  %3246 = vrot.lane.b32.xlu0 %v3191, 96
  %v3247 = vpop.permute.xlu0 %3246
  %3248 = vrot.lane.b32.xlu0 %v3192, 96
  %v3249 = vpop.permute.xlu0 %3248
  %3250 = vrot.lane.b32.xlu0 %v3193, 96
  %v3251 = vpop.permute.xlu0 %3250
  %3252 = vrot.lane.b32.xlu0 %v3211, 96
  %v3253 = vpop.permute.xlu0 %3252
  %3254 = vrot.lane.b32.xlu0 %v3194, 96
  %v3255 = vpop.permute.xlu0 %3254
  %3256 = vrot.lane.b32.xlu0 %v3195, 96
  %v3257 = vpop.permute.xlu0 %3256
  %3258 = vrot.lane.b32.xlu0 %v3196, 96
  %v3259 = vpop.permute.xlu0 %3258
  %3260 = vrot.lane.b32.xlu0 %v3197, 96
  %v3261 = vpop.permute.xlu0 %3260
  %3262 = vrot.lane.b32.xlu0 %v3198, 96
  %v3263 = vpop.permute.xlu0 %3262
  %3264 = vrot.lane.b32.xlu0 %v3199, 96
  %v3265 = vpop.permute.xlu0 %3264
  %3266 = vrot.lane.b32.xlu0 %v3200, 96
  %v3267 = vpop.permute.xlu0 %3266
  %3268 = vrot.lane.b32.xlu0 %v3212, 96
  %v3269 = vpop.permute.xlu0 %3268
  %3270 = vrot.lane.b32.xlu0 %v3201, 96
  %v3271 = vpop.permute.xlu0 %3270
  %3272 = vrot.lane.b32.xlu0 %v3202, 96
  %v3273 = vpop.permute.xlu0 %3272
  %3274 = vrot.lane.b32.xlu0 %v3203, 96
  %v3275 = vpop.permute.xlu0 %3274
  %3276 = vrot.lane.b32.xlu0 %v3204, 96
  %v3277 = vpop.permute.xlu0 %3276
  %3278 = vrot.lane.b32.xlu0 %v3205, 96
  %v3279 = vpop.permute.xlu0 %3278
  %3280 = vrot.lane.b32.xlu0 %v3206, 96
  %v3281 = vpop.permute.xlu0 %3280
  %3282 = vrot.lane.b32.xlu0 %v3207, 96
  %v3283 = vpop.permute.xlu0 %3282
  %3284 = vrot.lane.b32.xlu0 %v3213, 96
  %v3285 = vpop.permute.xlu0 %3284
  %v3286 = vsel %vm571, %v3239, %v3241
  %v3287 = vsel %vm571, %v3241, %v3243
  %v3288 = vsel %vm571, %v3243, %v3245
  %v3289 = vsel %vm571, %v3245, %v3247
  %v3290 = vsel %vm571, %v3247, %v3249
  %v3291 = vsel %vm571, %v3249, %v3251
  %v3292 = vsel %vm571, %v3251, %v3253
  %v3293 = vsel %vm571, %v3255, %v3257
  %v3294 = vsel %vm571, %v3257, %v3259
  %v3295 = vsel %vm571, %v3259, %v3261
  %v3296 = vsel %vm571, %v3261, %v3263
  %v3297 = vsel %vm571, %v3263, %v3265
  %v3298 = vsel %vm571, %v3265, %v3267
  %v3299 = vsel %vm571, %v3267, %v3269
  %v3300 = vsel %vm571, %v3271, %v3273
  %v3301 = vsel %vm571, %v3273, %v3275
  %v3302 = vsel %vm571, %v3275, %v3277
  %v3303 = vsel %vm571, %v3277, %v3279
  %v3304 = vsel %vm571, %v3279, %v3281
  %v3305 = vsel %vm571, %v3281, %v3283
  %v3306 = vsel %vm571, %v3283, %v3285
  %v3328 = vmax.bf16 %v3187, %v3286
  %v3329 = vmax.bf16 %v3188, %v3287
  %v3330 = vmax.bf16 %v3189, %v3288
  %v3331 = vmax.bf16 %v3190, %v3289
  %v3332 = vmax.bf16 %v3191, %v3290
  %v3333 = vmax.bf16 %v3192, %v3291
  %v3334 = vmax.bf16 %v3193, %v3292
  %v3335 = vmax.bf16 %v3194, %v3293
  %v3336 = vmax.bf16 %v3195, %v3294
  %v3337 = vmax.bf16 %v3196, %v3295
  %v3338 = vmax.bf16 %v3197, %v3296
  %v3339 = vmax.bf16 %v3198, %v3297
  %v3340 = vmax.bf16 %v3199, %v3298
  %v3341 = vmax.bf16 %v3200, %v3299
  %v3342 = vmax.bf16 %v3201, %v3300
  %v3343 = vmax.bf16 %v3202, %v3301
  %v3344 = vmax.bf16 %v3203, %v3302
  %v3345 = vmax.bf16 %v3204, %v3303
  %v3346 = vmax.bf16 %v3205, %v3304
  %v3347 = vmax.bf16 %v3206, %v3305
  %v3348 = vmax.bf16 %v3207, %v3306
  %v3349 = vld [vmem:[%s3] sm:$0xff]
  %v3350 = vld [vmem:[%s3 + $0x8] sm:$0xff]
  %v3351 = vld [vmem:[%s3 + $0x10] sm:$0xff]
  %v3352 = vld [vmem:[%s3 + $0x18] sm:$0xff]
  %v3353 = vld [vmem:[%s3 + $0x20] sm:$0xff]
  %v3354 = vld [vmem:[%s3 + $0x28] sm:$0xff]
  %v3355 = vld [vmem:[%s3 + $0x30] sm:$0xff]
  %v3356 = vld [vmem:[%s3 + $0x38] sm:$0xff]
  %v3357 = vld [vmem:[%s3 + $0x40] sm:$0xff]
  %v3358 = vld [vmem:[%s3 + $0x48] sm:$0xff]
  %v3359 = vld [vmem:[%s3 + $0x50] sm:$0xff]
  %v3360 = vld [vmem:[%s3 + $0x58] sm:$0xff]
  %v3361 = vld [vmem:[%s3 + $0x60] sm:$0xff]
  %v3362 = vld [vmem:[%s3 + $0x68] sm:$0xff]
  %v3363 = vld [vmem:[%s3 + $0x70] sm:$0xff]
  %v3364 = vld [vmem:[%s3 + $0x78] sm:$0xff]
  %v3365 = vld [vmem:[%s3 + $0x80] sm:$0xff]
  %v3366 = vld [vmem:[%s3 + $0x88] sm:$0xff]
  %v3367 = vld [vmem:[%s3 + $0x90] sm:$0xff]
  %v3368 = vld [vmem:[%s3 + $0x98] sm:$0xff]
  %v3369 = vld [vmem:[%s3 + $0xa0] sm:$0xff]
  %v3370 = vld [vmem:[%s3 + $0xa8] sm:$0xff]
  %v3371 = vld [vmem:[%s3 + $0xb0] sm:$0xff]
  %v3372 = vld [vmem:[%s3 + $0xb8] sm:$0xff]
  %v3373 = vld [vmem:[%s3 + $0xc0] sm:$0xff]
  %v3374 = vld [vmem:[%s3 + $0xc8] sm:$0xff]
  %v3375 = vld [vmem:[%s3 + $0xd0] sm:$0xff]
  %v3376 = vld [vmem:[%s3 + $0xd8] sm:$0xff]
  %v3377 = vld [vmem:[%s3 + $0xe0] sm:$0xff]
  %v3378 = vld [vmem:[%s3 + $0xe8] sm:$0xff]
  %v3379 = vld [vmem:[%s3 + $0xf0] sm:$0xff]
  %v3380 = vld [vmem:[%s3 + $0xf8] sm:$0xff]
  %v3381 = vld [vmem:[%s3 + $0x100] sm:$0xff]
  %v3382 = vld [vmem:[%s3 + $0x108] sm:$0xff]
  %v3383 = vld [vmem:[%s3 + $0x110] sm:$0xff]
  %v3384 = vld [vmem:[%s3 + $0x118] sm:$0xff]
  %v3385 = vld [vmem:[%s3 + $0x120] sm:$0xff]
  %v3386 = vld [vmem:[%s3 + $0x128] sm:$0xff]
  %v3387 = vld [vmem:[%s3 + $0x130] sm:$0xff]
  %v3388 = vld [vmem:[%s3 + $0x138] sm:$0xff]
  %v3389 = vld [vmem:[%s3 + $0x140] sm:$0xff]
  %v3390 = vld [vmem:[%s3 + $0x148] sm:$0xff]
  %v3391 = vld [vmem:[%s3 + $0x150] sm:$0xff]
  %v3392 = vld [vmem:[%s3 + $0x158] sm:$0xff]
  %v3393 = vld [vmem:[%s3 + $0x160] sm:$0xff]
  %v3394 = vld [vmem:[%s3 + $0x168] sm:$0xff]
  %v3395 = vld [vmem:[%s3 + $0x170] sm:$0xff]
  %v3396 = vld [vmem:[%s3 + $0x178] sm:$0xff]
  %v3397 = vld [vmem:[%s3 + $0x180] sm:$0xff]
  %v3398 = vld [vmem:[%s3 + $0x188] sm:$0xff]
  %v3399 = vld [vmem:[%s3 + $0x190] sm:$0xff]
  %v3400 = vld [vmem:[%s3 + $0x198] sm:$0xff]
  %v3401 = vld [vmem:[%s3 + $0x1a0] sm:$0xff]
  %v3402 = vld [vmem:[%s3 + $0x1a8] sm:$0xff]
  %v3403 = vld [vmem:[%s3 + $0x1b0] sm:$0xff]
  %v3404 = vld [vmem:[%s3 + $0x1b8] sm:$0xff]
  %v3405 = vld [vmem:[%s3 + $0x1c0] sm:$0xff]
  %v3406 = vld [vmem:[%s3 + $0x1c8] sm:$0xff]
  %v3407 = vld [vmem:[%s3 + $0x1d0] sm:$0xff]
  %v3408 = vld [vmem:[%s3 + $0x1d8] sm:$0xff]
  %v3409 = vld [vmem:[%s3 + $0x1e0] sm:$0xff]
  %v3410 = vld [vmem:[%s3 + $0x1e8] sm:$0xff]
  %v3411 = vld [vmem:[%s3 + $0x1f0] sm:$0xff]
  %v3412 = vld [vmem:[%s3 + $0x1f8] sm:$0xff]
  %v3413 = vld [vmem:[%s3 + $0x200] sm:$0xff]
  %v3414 = vld [vmem:[%s3 + $0x208] sm:$0xff]
  %v3415 = vld [vmem:[%s3 + $0x210] sm:$0xff]
  %v3416 = vld [vmem:[%s3 + $0x218] sm:$0xff]
  %v3417 = vld [vmem:[%s3 + $0x220] sm:$0xff]
  %v3418 = vld [vmem:[%s3 + $0x228] sm:$0xff]
  %v3419 = vld [vmem:[%s3 + $0x230] sm:$0xff]
  %v3420 = vld [vmem:[%s3 + $0x238] sm:$0xff]
  %v3421 = vld [vmem:[%s3 + $0x240] sm:$0xff]
  %v3422 = vld [vmem:[%s3 + $0x248] sm:$0xff]
  %v3423 = vld [vmem:[%s3 + $0x250] sm:$0xff]
  %v3424 = vld [vmem:[%s3 + $0x258] sm:$0xff]
  %v3425 = vld [vmem:[%s3 + $0x260] sm:$0xff]
  %v3426 = vld [vmem:[%s3 + $0x268] sm:$0xff]
  %v3427 = vld [vmem:[%s3 + $0x270] sm:$0xff]
  %v3428 = vld [vmem:[%s3 + $0x278] sm:$0xff]
  %v3429 = vld [vmem:[%s3 + $0x280] sm:$0xff]
  %v3430 = vld [vmem:[%s3 + $0x288] sm:$0xff]
  %v3431 = vld [vmem:[%s3 + $0x290] sm:$0xff]
  %v3432 = vld [vmem:[%s3 + $0x298] sm:$0xff]
  %v3433 = vld [vmem:[%s3 + $0x2a0] sm:$0xff]
  %v3434 = vld [vmem:[%s3 + $0x2a8] sm:$0xff]
  %v3435 = vld [vmem:[%s3 + $0x2b0] sm:$0xff]
  %v3436 = vld [vmem:[%s3 + $0x2b8] sm:$0xff]
  %v3437 = vld [vmem:[%s3 + $0x2c0] sm:$0xff]
  %v3438 = vld [vmem:[%s3 + $0x2c8] sm:$0xff]
  %v3439 = vld [vmem:[%s3 + $0x2d0] sm:$0xff]
  %v3440 = vld [vmem:[%s3 + $0x2d8] sm:$0xff]
  %v3441 = vld [vmem:[%s3 + $0x2e0] sm:$0xff]
  %v3442 = vld [vmem:[%s3 + $0x2e8] sm:$0xff]
  %v3443 = vld [vmem:[%s3 + $0x2f0] sm:$0xff]
  %v3444 = vld [vmem:[%s3 + $0x2f8] sm:$0xff]
  %v3445 = vld [vmem:[%s3 + $0x300] sm:$0xff]
  %v3446 = vld [vmem:[%s3 + $0x308] sm:$0xff]
  %v3447 = vld [vmem:[%s3 + $0x310] sm:$0xff]
  %v3448 = vld [vmem:[%s3 + $0x318] sm:$0xff]
  %v3449 = vld [vmem:[%s3 + $0x320] sm:$0xff]
  %v3450 = vld [vmem:[%s3 + $0x328] sm:$0xff]
  %v3451 = vld [vmem:[%s3 + $0x330] sm:$0xff]
  %v3452 = vld [vmem:[%s3 + $0x338] sm:$0xff]
  %v3453 = vld [vmem:[%s3 + $0x340] sm:$0xff]
  %v3454 = vld [vmem:[%s3 + $0x348] sm:$0xff]
  %v3455 = vld [vmem:[%s3 + $0x350] sm:$0xff]
  %v3456 = vld [vmem:[%s3 + $0x358] sm:$0xff]
  %v3457 = vld [vmem:[%s3 + $0x360] sm:$0xff]
  %v3458 = vld [vmem:[%s3 + $0x368] sm:$0xff]
  %v3459 = vld [vmem:[%s3 + $0x370] sm:$0xff]
  %v3460 = vld [vmem:[%s3 + $0x378] sm:$0xff]
  %v3573 = vunpack.c.l.b16 %v3349
  %v3574 = vunpack.c.h.b16 %v3349
  %v3575 = vunpack.c.l.b16 %v3350
  %v3576 = vunpack.c.h.b16 %v3350
  %v3577 = vunpack.c.l.b16 %v3351
  %v3578 = vunpack.c.h.b16 %v3351
  %v3579 = vunpack.c.l.b16 %v3352
  %v3580 = vunpack.c.h.b16 %v3352
  %v3581 = vunpack.c.l.b16 %v3353
  %v3582 = vunpack.c.h.b16 %v3353
  %v3583 = vunpack.c.l.b16 %v3354
  %v3584 = vunpack.c.h.b16 %v3354
  %v3585 = vunpack.c.l.b16 %v3355
  %v3586 = vunpack.c.h.b16 %v3355
  %v3587 = vunpack.c.l.b16 %v3356
  %v3588 = vunpack.c.h.b16 %v3356
  %v3589 = vunpack.c.l.b16 %v3357
  %v3590 = vunpack.c.h.b16 %v3357
  %v3591 = vunpack.c.l.b16 %v3358
  %v3592 = vunpack.c.h.b16 %v3358
  %v3593 = vunpack.c.l.b16 %v3359
  %v3594 = vunpack.c.h.b16 %v3359
  %v3595 = vunpack.c.l.b16 %v3360
  %v3596 = vunpack.c.h.b16 %v3360
  %v3597 = vunpack.c.l.b16 %v3361
  %v3598 = vunpack.c.h.b16 %v3361
  %v3599 = vunpack.c.l.b16 %v3362
  %v3600 = vunpack.c.h.b16 %v3362
  %v3601 = vunpack.c.l.b16 %v3363
  %v3602 = vunpack.c.h.b16 %v3363
  %v3603 = vunpack.c.l.b16 %v3364
  %v3604 = vunpack.c.h.b16 %v3364
  %v3605 = vunpack.c.l.b16 %v3365
  %v3606 = vunpack.c.h.b16 %v3365
  %v3607 = vunpack.c.l.b16 %v3366
  %v3608 = vunpack.c.h.b16 %v3366
  %v3609 = vunpack.c.l.b16 %v3367
  %v3610 = vunpack.c.h.b16 %v3367
  %v3611 = vunpack.c.l.b16 %v3368
  %v3612 = vunpack.c.h.b16 %v3368
  %v3613 = vunpack.c.l.b16 %v3369
  %v3614 = vunpack.c.h.b16 %v3369
  %v3615 = vunpack.c.l.b16 %v3370
  %v3616 = vunpack.c.h.b16 %v3370
  %v3617 = vunpack.c.l.b16 %v3371
  %v3618 = vunpack.c.h.b16 %v3371
  %v3619 = vunpack.c.l.b16 %v3372
  %v3620 = vunpack.c.h.b16 %v3372
  %v3621 = vunpack.c.l.b16 %v3373
  %v3622 = vunpack.c.h.b16 %v3373
  %v3623 = vunpack.c.l.b16 %v3374
  %v3624 = vunpack.c.h.b16 %v3374
  %v3625 = vunpack.c.l.b16 %v3375
  %v3626 = vunpack.c.h.b16 %v3375
  %v3627 = vunpack.c.l.b16 %v3376
  %v3628 = vunpack.c.h.b16 %v3376
  %v3629 = vunpack.c.l.b16 %v3377
  %v3630 = vunpack.c.h.b16 %v3377
  %v3631 = vunpack.c.l.b16 %v3378
  %v3632 = vunpack.c.h.b16 %v3378
  %v3633 = vunpack.c.l.b16 %v3379
  %v3634 = vunpack.c.h.b16 %v3379
  %v3635 = vunpack.c.l.b16 %v3380
  %v3636 = vunpack.c.h.b16 %v3380
  %v3637 = vunpack.c.l.b16 %v3381
  %v3638 = vunpack.c.h.b16 %v3381
  %v3639 = vunpack.c.l.b16 %v3382
  %v3640 = vunpack.c.h.b16 %v3382
  %v3641 = vunpack.c.l.b16 %v3383
  %v3642 = vunpack.c.h.b16 %v3383
  %v3643 = vunpack.c.l.b16 %v3384
  %v3644 = vunpack.c.h.b16 %v3384
  %v3645 = vunpack.c.l.b16 %v3385
  %v3646 = vunpack.c.h.b16 %v3385
  %v3647 = vunpack.c.l.b16 %v3386
  %v3648 = vunpack.c.h.b16 %v3386
  %v3649 = vunpack.c.l.b16 %v3387
  %v3650 = vunpack.c.h.b16 %v3387
  %v3651 = vunpack.c.l.b16 %v3388
  %v3652 = vunpack.c.h.b16 %v3388
  %v3653 = vunpack.c.l.b16 %v3389
  %v3654 = vunpack.c.h.b16 %v3389
  %v3655 = vunpack.c.l.b16 %v3390
  %v3656 = vunpack.c.h.b16 %v3390
  %v3657 = vunpack.c.l.b16 %v3391
  %v3658 = vunpack.c.h.b16 %v3391
  %v3659 = vunpack.c.l.b16 %v3392
  %v3660 = vunpack.c.h.b16 %v3392
  %v3661 = vunpack.c.l.b16 %v3393
  %v3662 = vunpack.c.h.b16 %v3393
  %v3663 = vunpack.c.l.b16 %v3394
  %v3664 = vunpack.c.h.b16 %v3394
  %v3665 = vunpack.c.l.b16 %v3395
  %v3666 = vunpack.c.h.b16 %v3395
  %v3667 = vunpack.c.l.b16 %v3396
  %v3668 = vunpack.c.h.b16 %v3396
  %v3669 = vunpack.c.l.b16 %v3397
  %v3670 = vunpack.c.h.b16 %v3397
  %v3671 = vunpack.c.l.b16 %v3398
  %v3672 = vunpack.c.h.b16 %v3398
  %v3673 = vunpack.c.l.b16 %v3399
  %v3674 = vunpack.c.h.b16 %v3399
  %v3675 = vunpack.c.l.b16 %v3400
  %v3676 = vunpack.c.h.b16 %v3400
  %v3677 = vunpack.c.l.b16 %v3401
  %v3678 = vunpack.c.h.b16 %v3401
  %v3679 = vunpack.c.l.b16 %v3402
  %v3680 = vunpack.c.h.b16 %v3402
  %v3681 = vunpack.c.l.b16 %v3403
  %v3682 = vunpack.c.h.b16 %v3403
  %v3683 = vunpack.c.l.b16 %v3404
  %v3684 = vunpack.c.h.b16 %v3404
  %v3685 = vunpack.c.l.b16 %v3405
  %v3686 = vunpack.c.h.b16 %v3405
  %v3687 = vunpack.c.l.b16 %v3406
  %v3688 = vunpack.c.h.b16 %v3406
  %v3689 = vunpack.c.l.b16 %v3407
  %v3690 = vunpack.c.h.b16 %v3407
  %v3691 = vunpack.c.l.b16 %v3408
  %v3692 = vunpack.c.h.b16 %v3408
  %v3693 = vunpack.c.l.b16 %v3409
  %v3694 = vunpack.c.h.b16 %v3409
  %v3695 = vunpack.c.l.b16 %v3410
  %v3696 = vunpack.c.h.b16 %v3410
  %v3697 = vunpack.c.l.b16 %v3411
  %v3698 = vunpack.c.h.b16 %v3411
  %v3699 = vunpack.c.l.b16 %v3412
  %v3700 = vunpack.c.h.b16 %v3412
  %v3701 = vunpack.c.l.b16 %v3413
  %v3702 = vunpack.c.h.b16 %v3413
  %v3703 = vunpack.c.l.b16 %v3414
  %v3704 = vunpack.c.h.b16 %v3414
  %v3705 = vunpack.c.l.b16 %v3415
  %v3706 = vunpack.c.h.b16 %v3415
  %v3707 = vunpack.c.l.b16 %v3416
  %v3708 = vunpack.c.h.b16 %v3416
  %v3709 = vunpack.c.l.b16 %v3417
  %v3710 = vunpack.c.h.b16 %v3417
  %v3711 = vunpack.c.l.b16 %v3418
  %v3712 = vunpack.c.h.b16 %v3418
  %v3713 = vunpack.c.l.b16 %v3419
  %v3714 = vunpack.c.h.b16 %v3419
  %v3715 = vunpack.c.l.b16 %v3420
  %v3716 = vunpack.c.h.b16 %v3420
  %v3717 = vunpack.c.l.b16 %v3421
  %v3718 = vunpack.c.h.b16 %v3421
  %v3719 = vunpack.c.l.b16 %v3422
  %v3720 = vunpack.c.h.b16 %v3422
  %v3721 = vunpack.c.l.b16 %v3423
  %v3722 = vunpack.c.h.b16 %v3423
  %v3723 = vunpack.c.l.b16 %v3424
  %v3724 = vunpack.c.h.b16 %v3424
  %v3725 = vunpack.c.l.b16 %v3425
  %v3726 = vunpack.c.h.b16 %v3425
  %v3727 = vunpack.c.l.b16 %v3426
  %v3728 = vunpack.c.h.b16 %v3426
  %v3729 = vunpack.c.l.b16 %v3427
  %v3730 = vunpack.c.h.b16 %v3427
  %v3731 = vunpack.c.l.b16 %v3428
  %v3732 = vunpack.c.h.b16 %v3428
  %v3733 = vunpack.c.l.b16 %v3429
  %v3734 = vunpack.c.h.b16 %v3429
  %v3735 = vunpack.c.l.b16 %v3430
  %v3736 = vunpack.c.h.b16 %v3430
  %v3737 = vunpack.c.l.b16 %v3431
  %v3738 = vunpack.c.h.b16 %v3431
  %v3739 = vunpack.c.l.b16 %v3432
  %v3740 = vunpack.c.h.b16 %v3432
  %v3741 = vunpack.c.l.b16 %v3433
  %v3742 = vunpack.c.h.b16 %v3433
  %v3743 = vunpack.c.l.b16 %v3434
  %v3744 = vunpack.c.h.b16 %v3434
  %v3745 = vunpack.c.l.b16 %v3435
  %v3746 = vunpack.c.h.b16 %v3435
  %v3747 = vunpack.c.l.b16 %v3436
  %v3748 = vunpack.c.h.b16 %v3436
  %v3749 = vunpack.c.l.b16 %v3437
  %v3750 = vunpack.c.h.b16 %v3437
  %v3751 = vunpack.c.l.b16 %v3438
  %v3752 = vunpack.c.h.b16 %v3438
  %v3753 = vunpack.c.l.b16 %v3439
  %v3754 = vunpack.c.h.b16 %v3439
  %v3755 = vunpack.c.l.b16 %v3440
  %v3756 = vunpack.c.h.b16 %v3440
  %v3757 = vunpack.c.l.b16 %v3441
  %v3758 = vunpack.c.h.b16 %v3441
  %v3759 = vunpack.c.l.b16 %v3442
  %v3760 = vunpack.c.h.b16 %v3442
  %v3761 = vunpack.c.l.b16 %v3443
  %v3762 = vunpack.c.h.b16 %v3443
  %v3763 = vunpack.c.l.b16 %v3444
  %v3764 = vunpack.c.h.b16 %v3444
  %v3765 = vunpack.c.l.b16 %v3445
  %v3766 = vunpack.c.h.b16 %v3445
  %v3767 = vunpack.c.l.b16 %v3446
  %v3768 = vunpack.c.h.b16 %v3446
  %v3769 = vunpack.c.l.b16 %v3447
  %v3770 = vunpack.c.h.b16 %v3447
  %v3771 = vunpack.c.l.b16 %v3448
  %v3772 = vunpack.c.h.b16 %v3448
  %v3773 = vunpack.c.l.b16 %v3449
  %v3774 = vunpack.c.h.b16 %v3449
  %v3775 = vunpack.c.l.b16 %v3450
  %v3776 = vunpack.c.h.b16 %v3450
  %v3777 = vunpack.c.l.b16 %v3451
  %v3778 = vunpack.c.h.b16 %v3451
  %v3779 = vunpack.c.l.b16 %v3452
  %v3780 = vunpack.c.h.b16 %v3452
  %v3781 = vunpack.c.l.b16 %v3453
  %v3782 = vunpack.c.h.b16 %v3453
  %v3783 = vunpack.c.l.b16 %v3454
  %v3784 = vunpack.c.h.b16 %v3454
  %v3785 = vunpack.c.l.b16 %v3455
  %v3786 = vunpack.c.h.b16 %v3455
  %v3787 = vunpack.c.l.b16 %v3456
  %v3788 = vunpack.c.h.b16 %v3456
  %v3789 = vunpack.c.l.b16 %v3457
  %v3790 = vunpack.c.h.b16 %v3457
  %v3791 = vunpack.c.l.b16 %v3458
  %v3792 = vunpack.c.h.b16 %v3458
  %v3793 = vunpack.c.l.b16 %v3459
  %v3794 = vunpack.c.h.b16 %v3459
  %v3795 = vunpack.c.l.b16 %v3460
  %v3796 = vunpack.c.h.b16 %v3460
  %v3797 = vpack.c.b16 %v3575, %v3573
  %v3798 = vpack.c.b16 %v3576, %v3574
  %v3799 = vpack.c.b16 %v3579, %v3577
  %v3800 = vpack.c.b16 %v3580, %v3578
  %v3801 = vpack.c.b16 %v3583, %v3581
  %v3802 = vpack.c.b16 %v3584, %v3582
  %v3803 = vpack.c.b16 %v3587, %v3585
  %v3804 = vpack.c.b16 %v3588, %v3586
  %v3805 = vpack.c.b16 %v3591, %v3589
  %v3806 = vpack.c.b16 %v3592, %v3590
  %v3807 = vpack.c.b16 %v3595, %v3593
  %v3808 = vpack.c.b16 %v3596, %v3594
  %v3809 = vpack.c.b16 %v3599, %v3597
  %v3810 = vpack.c.b16 %v3600, %v3598
  %v3811 = vpack.c.b16 %v3603, %v3601
  %v3812 = vpack.c.b16 %v3604, %v3602
  %v3813 = vpack.c.b16 %v3607, %v3605
  %v3814 = vpack.c.b16 %v3608, %v3606
  %v3815 = vpack.c.b16 %v3611, %v3609
  %v3816 = vpack.c.b16 %v3612, %v3610
  %v3817 = vpack.c.b16 %v3615, %v3613
  %v3818 = vpack.c.b16 %v3616, %v3614
  %v3819 = vpack.c.b16 %v3619, %v3617
  %v3820 = vpack.c.b16 %v3620, %v3618
  %v3821 = vpack.c.b16 %v3623, %v3621
  %v3822 = vpack.c.b16 %v3624, %v3622
  %v3823 = vpack.c.b16 %v3627, %v3625
  %v3824 = vpack.c.b16 %v3628, %v3626
  %v3825 = vpack.c.b16 %v3631, %v3629
  %v3826 = vpack.c.b16 %v3632, %v3630
  %v3827 = vpack.c.b16 %v3635, %v3633
  %v3828 = vpack.c.b16 %v3636, %v3634
  %v3829 = vpack.c.b16 %v3639, %v3637
  %v3830 = vpack.c.b16 %v3640, %v3638
  %v3831 = vpack.c.b16 %v3643, %v3641
  %v3832 = vpack.c.b16 %v3644, %v3642
  %v3833 = vpack.c.b16 %v3647, %v3645
  %v3834 = vpack.c.b16 %v3648, %v3646
  %v3835 = vpack.c.b16 %v3651, %v3649
  %v3836 = vpack.c.b16 %v3652, %v3650
  %v3837 = vpack.c.b16 %v3655, %v3653
  %v3838 = vpack.c.b16 %v3656, %v3654
  %v3839 = vpack.c.b16 %v3659, %v3657
  %v3840 = vpack.c.b16 %v3660, %v3658
  %v3841 = vpack.c.b16 %v3663, %v3661
  %v3842 = vpack.c.b16 %v3664, %v3662
  %v3843 = vpack.c.b16 %v3667, %v3665
  %v3844 = vpack.c.b16 %v3668, %v3666
  %v3845 = vpack.c.b16 %v3671, %v3669
  %v3846 = vpack.c.b16 %v3672, %v3670
  %v3847 = vpack.c.b16 %v3675, %v3673
  %v3848 = vpack.c.b16 %v3676, %v3674
  %v3849 = vpack.c.b16 %v3679, %v3677
  %v3850 = vpack.c.b16 %v3680, %v3678
  %v3851 = vpack.c.b16 %v3683, %v3681
  %v3852 = vpack.c.b16 %v3684, %v3682
  %v3853 = vpack.c.b16 %v3687, %v3685
  %v3854 = vpack.c.b16 %v3688, %v3686
  %v3855 = vpack.c.b16 %v3691, %v3689
  %v3856 = vpack.c.b16 %v3692, %v3690
  %v3857 = vpack.c.b16 %v3695, %v3693
  %v3858 = vpack.c.b16 %v3696, %v3694
  %v3859 = vpack.c.b16 %v3699, %v3697
  %v3860 = vpack.c.b16 %v3700, %v3698
  %v3861 = vpack.c.b16 %v3703, %v3701
  %v3862 = vpack.c.b16 %v3704, %v3702
  %v3863 = vpack.c.b16 %v3707, %v3705
  %v3864 = vpack.c.b16 %v3708, %v3706
  %v3865 = vpack.c.b16 %v3711, %v3709
  %v3866 = vpack.c.b16 %v3712, %v3710
  %v3867 = vpack.c.b16 %v3715, %v3713
  %v3868 = vpack.c.b16 %v3716, %v3714
  %v3869 = vpack.c.b16 %v3719, %v3717
  %v3870 = vpack.c.b16 %v3720, %v3718
  %v3871 = vpack.c.b16 %v3723, %v3721
  %v3872 = vpack.c.b16 %v3724, %v3722
  %v3873 = vpack.c.b16 %v3727, %v3725
  %v3874 = vpack.c.b16 %v3728, %v3726
  %v3875 = vpack.c.b16 %v3731, %v3729
  %v3876 = vpack.c.b16 %v3732, %v3730
  %v3877 = vpack.c.b16 %v3735, %v3733
  %v3878 = vpack.c.b16 %v3736, %v3734
  %v3879 = vpack.c.b16 %v3739, %v3737
  %v3880 = vpack.c.b16 %v3740, %v3738
  %v3881 = vpack.c.b16 %v3743, %v3741
  %v3882 = vpack.c.b16 %v3744, %v3742
  %v3883 = vpack.c.b16 %v3747, %v3745
  %v3884 = vpack.c.b16 %v3748, %v3746
  %v3885 = vpack.c.b16 %v3751, %v3749
  %v3886 = vpack.c.b16 %v3752, %v3750
  %v3887 = vpack.c.b16 %v3755, %v3753
  %v3888 = vpack.c.b16 %v3756, %v3754
  %v3889 = vpack.c.b16 %v3759, %v3757
  %v3890 = vpack.c.b16 %v3760, %v3758
  %v3891 = vpack.c.b16 %v3763, %v3761
  %v3892 = vpack.c.b16 %v3764, %v3762
  %v3893 = vpack.c.b16 %v3767, %v3765
  %v3894 = vpack.c.b16 %v3768, %v3766
  %v3895 = vpack.c.b16 %v3771, %v3769
  %v3896 = vpack.c.b16 %v3772, %v3770
  %v3897 = vpack.c.b16 %v3775, %v3773
  %v3898 = vpack.c.b16 %v3776, %v3774
  %v3899 = vpack.c.b16 %v3779, %v3777
  %v3900 = vpack.c.b16 %v3780, %v3778
  %v3901 = vpack.c.b16 %v3783, %v3781
  %v3902 = vpack.c.b16 %v3784, %v3782
  %v3903 = vpack.c.b16 %v3787, %v3785
  %v3904 = vpack.c.b16 %v3788, %v3786
  %v3905 = vpack.c.b16 %v3791, %v3789
  %v3906 = vpack.c.b16 %v3792, %v3790
  %v3907 = vpack.c.b16 %v3795, %v3793
  %v3908 = vpack.c.b16 %v3796, %v3794
  %4021 = vmatprep.subr.bf16.mxu0 %v3798
  %4022 = vmatpush1.bf16.msra.mxu0 %v3797
  %4023 = vmatprep.subr.bf16.mxu0 %v3800
  %4024 = vmatpush1.bf16.msra.mxu0 %v3799
  %4025 = vmatprep.subr.bf16.mxu0 %v3802
  %4026 = vmatpush1.bf16.msra.mxu0 %v3801
  %4027 = vmatprep.subr.bf16.mxu0 %v3804
  %4028 = vmatpush1.bf16.msra.mxu0 %v3803
  %4029 = vmatprep.subr.bf16.mxu0 %v3806
  %4030 = vmatpush1.bf16.msra.mxu0 %v3805
  %4031 = vmatprep.subr.bf16.mxu0 %v3808
  %4032 = vmatpush1.bf16.msra.mxu0 %v3807
  %4033 = vmatprep.subr.bf16.mxu0 %v3810
  %4034 = vmatpush1.bf16.msra.mxu0 %v3809
  %4035 = vmatprep.subr.bf16.mxu0 %v3812
  %4036 = vmatpush1.bf16.msra.mxu0 %v3811
  %4037 = vmatprep.subr.bf16.mxu0 %v3814
  %4038 = vmatpush1.bf16.msra.mxu0 %v3813
  %4039 = vmatprep.subr.bf16.mxu0 %v3816
  %4040 = vmatpush1.bf16.msra.mxu0 %v3815
  %4041 = vmatprep.subr.bf16.mxu0 %v3818
  %4042 = vmatpush1.bf16.msra.mxu0 %v3817
  %4043 = vmatprep.subr.bf16.mxu0 %v3820
  %4044 = vmatpush1.bf16.msra.mxu0 %v3819
  %4045 = vmatprep.subr.bf16.mxu0 %v3822
  %4046 = vmatpush1.bf16.msra.mxu0 %v3821
  %4047 = vmatprep.subr.bf16.mxu0 %v3824
  %4048 = vmatpush1.bf16.msra.mxu0 %v3823
  %4049 = vmatprep.subr.bf16.mxu0 %v3826
  %4050 = vmatpush1.bf16.msra.mxu0 %v3825
  %4051 = vmatprep.subr.bf16.mxu0 %v3828
  %4052 = vmatpush1.bf16.msra.mxu0 %v3827
  %4053 = vmatprep.mubr.bf16.mxu0 %v3329
  %4054 = vmatmul.mubr.bf16.gmra.mrb[0].mxu0 %v3328
  %v4055 = vpop.f32.mrb[0].mxu0
  %v4056 = vadd.f32 0.0, %v4055
  %v4057 = vpop.f32.mrb[0].mxu0
  %v4058 = vadd.f32 0.0, %v4057
  %v4059 = vpop.f32.mrb[0].mxu0
  %v4060 = vadd.f32 0.0, %v4059
  %v4061 = vpop.f32.mrb[0].mxu0
  %v4062 = vadd.f32 0.0, %v4061
  %4063 = vmatprep.mubr.bf16.mxu0 %v3336
  %4064 = vmatmul.mubr.bf16.gmra.mrb[0].mxu0 %v3335
  %v4065 = vpop.f32.mrb[0].mxu0
  %v4066 = vadd.f32 0.0, %v4065
  %v4067 = vpop.f32.mrb[0].mxu0
  %v4068 = vadd.f32 0.0, %v4067
  %v4069 = vpop.f32.mrb[0].mxu0
  %v4070 = vadd.f32 0.0, %v4069
  %v4071 = vpop.f32.mrb[0].mxu0
  %v4072 = vadd.f32 0.0, %v4071
  %4073 = vmatprep.mubr.bf16.mxu0 %v3343
  %4074 = vmatmul.mubr.bf16.gmra.mrb[0].mxu0 %v3342
  %v4075 = vpop.f32.mrb[0].mxu0
  %v4076 = vadd.f32 0.0, %v4075
  %v4077 = vpop.f32.mrb[0].mxu0
  %v4078 = vadd.f32 0.0, %v4077
  %v4079 = vpop.f32.mrb[0].mxu0
  %v4080 = vadd.f32 0.0, %v4079
  %v4081 = vpop.f32.mrb[0].mxu0
  %v4082 = vadd.f32 0.0, %v4081
  %4083 = vdwg.mxu0
  %4084 = vmatprep.subr.bf16.mxu0 %v3830
  %4085 = vmatpush1.bf16.msra.mxu0 %v3829
  %4086 = vmatprep.subr.bf16.mxu0 %v3832
  %4087 = vmatpush1.bf16.msra.mxu0 %v3831
  %4088 = vmatprep.subr.bf16.mxu0 %v3834
  %4089 = vmatpush1.bf16.msra.mxu0 %v3833
  %4090 = vmatprep.subr.bf16.mxu0 %v3836
  %4091 = vmatpush1.bf16.msra.mxu0 %v3835
  %4092 = vmatprep.subr.bf16.mxu0 %v3838
  %4093 = vmatpush1.bf16.msra.mxu0 %v3837
  %4094 = vmatprep.subr.bf16.mxu0 %v3840
  %4095 = vmatpush1.bf16.msra.mxu0 %v3839
  %4096 = vmatprep.subr.bf16.mxu0 %v3842
  %4097 = vmatpush1.bf16.msra.mxu0 %v3841
  %4098 = vmatprep.subr.bf16.mxu0 %v3844
  %4099 = vmatpush1.bf16.msra.mxu0 %v3843
  %4100 = vmatprep.subr.bf16.mxu0 %v3846
  %4101 = vmatpush1.bf16.msra.mxu0 %v3845
  %4102 = vmatprep.subr.bf16.mxu0 %v3848
  %4103 = vmatpush1.bf16.msra.mxu0 %v3847
  %4104 = vmatprep.subr.bf16.mxu0 %v3850
  %4105 = vmatpush1.bf16.msra.mxu0 %v3849
  %4106 = vmatprep.subr.bf16.mxu0 %v3852
  %4107 = vmatpush1.bf16.msra.mxu0 %v3851
  %4108 = vmatprep.subr.bf16.mxu0 %v3854
  %4109 = vmatpush1.bf16.msra.mxu0 %v3853
  %4110 = vmatprep.subr.bf16.mxu0 %v3856
  %4111 = vmatpush1.bf16.msra.mxu0 %v3855
  %4112 = vmatprep.subr.bf16.mxu0 %v3858
  %4113 = vmatpush1.bf16.msra.mxu0 %v3857
  %4114 = vmatprep.subr.bf16.mxu0 %v3860
  %4115 = vmatpush1.bf16.msra.mxu0 %v3859
  %4116 = vmatprep.mubr.bf16.mxu0 %v3331
  %4117 = vmatmul.mubr.bf16.gmra.mrb[0].mxu0 %v3330
  %v4118 = vpop.f32.mrb[0].mxu0
  %v4119 = vadd.f32 %v4056, %v4118
  %v4120 = vpop.f32.mrb[0].mxu0
  %v4121 = vadd.f32 %v4058, %v4120
  %v4122 = vpop.f32.mrb[0].mxu0
  %v4123 = vadd.f32 %v4060, %v4122
  %v4124 = vpop.f32.mrb[0].mxu0
  %v4125 = vadd.f32 %v4062, %v4124
  %4126 = vmatprep.mubr.bf16.mxu0 %v3338
  %4127 = vmatmul.mubr.bf16.gmra.mrb[0].mxu0 %v3337
  %v4128 = vpop.f32.mrb[0].mxu0
  %v4129 = vadd.f32 %v4066, %v4128
  %v4130 = vpop.f32.mrb[0].mxu0
  %v4131 = vadd.f32 %v4068, %v4130
  %v4132 = vpop.f32.mrb[0].mxu0
  %v4133 = vadd.f32 %v4070, %v4132
  %v4134 = vpop.f32.mrb[0].mxu0
  %v4135 = vadd.f32 %v4072, %v4134
  %4136 = vmatprep.mubr.bf16.mxu0 %v3345
  %4137 = vmatmul.mubr.bf16.gmra.mrb[0].mxu0 %v3344
  %v4138 = vpop.f32.mrb[0].mxu0
  %v4139 = vadd.f32 %v4076, %v4138
  %v4140 = vpop.f32.mrb[0].mxu0
  %v4141 = vadd.f32 %v4078, %v4140
  %v4142 = vpop.f32.mrb[0].mxu0
  %v4143 = vadd.f32 %v4080, %v4142
  %v4144 = vpop.f32.mrb[0].mxu0
  %v4145 = vadd.f32 %v4082, %v4144
  %4146 = vdwg.mxu0
  %4147 = vmatprep.subr.bf16.mxu0 %v3862
  %4148 = vmatpush1.bf16.msra.mxu0 %v3861
  %4149 = vmatprep.subr.bf16.mxu0 %v3864
  %4150 = vmatpush1.bf16.msra.mxu0 %v3863
  %4151 = vmatprep.subr.bf16.mxu0 %v3866
  %4152 = vmatpush1.bf16.msra.mxu0 %v3865
  %4153 = vmatprep.subr.bf16.mxu0 %v3868
  %4154 = vmatpush1.bf16.msra.mxu0 %v3867
  %4155 = vmatprep.subr.bf16.mxu0 %v3870
  %4156 = vmatpush1.bf16.msra.mxu0 %v3869
  %4157 = vmatprep.subr.bf16.mxu0 %v3872
  %4158 = vmatpush1.bf16.msra.mxu0 %v3871
  %4159 = vmatprep.subr.bf16.mxu0 %v3874
  %4160 = vmatpush1.bf16.msra.mxu0 %v3873
  %4161 = vmatprep.subr.bf16.mxu0 %v3876
  %4162 = vmatpush1.bf16.msra.mxu0 %v3875
  %4163 = vmatprep.subr.bf16.mxu0 %v3878
  %4164 = vmatpush1.bf16.msra.mxu0 %v3877
  %4165 = vmatprep.subr.bf16.mxu0 %v3880
  %4166 = vmatpush1.bf16.msra.mxu0 %v3879
  %4167 = vmatprep.subr.bf16.mxu0 %v3882
  %4168 = vmatpush1.bf16.msra.mxu0 %v3881
  %4169 = vmatprep.subr.bf16.mxu0 %v3884
  %4170 = vmatpush1.bf16.msra.mxu0 %v3883
  %4171 = vmatprep.subr.bf16.mxu0 %v3886
  %4172 = vmatpush1.bf16.msra.mxu0 %v3885
  %4173 = vmatprep.subr.bf16.mxu0 %v3888
  %4174 = vmatpush1.bf16.msra.mxu0 %v3887
  %4175 = vmatprep.subr.bf16.mxu0 %v3890
  %4176 = vmatpush1.bf16.msra.mxu0 %v3889
  %4177 = vmatprep.subr.bf16.mxu0 %v3892
  %4178 = vmatpush1.bf16.msra.mxu0 %v3891
  %4179 = vmatprep.mubr.bf16.mxu0 %v3333
  %4180 = vmatmul.mubr.bf16.gmra.mrb[0].mxu0 %v3332
  %v4181 = vpop.f32.mrb[0].mxu0
  %v4182 = vadd.f32 %v4119, %v4181
  %v4183 = vpop.f32.mrb[0].mxu0
  %v4184 = vadd.f32 %v4121, %v4183
  %v4185 = vpop.f32.mrb[0].mxu0
  %v4186 = vadd.f32 %v4123, %v4185
  %v4187 = vpop.f32.mrb[0].mxu0
  %v4188 = vadd.f32 %v4125, %v4187
  %4189 = vmatprep.mubr.bf16.mxu0 %v3340
  %4190 = vmatmul.mubr.bf16.gmra.mrb[0].mxu0 %v3339
  %v4191 = vpop.f32.mrb[0].mxu0
  %v4192 = vadd.f32 %v4129, %v4191
  %v4193 = vpop.f32.mrb[0].mxu0
  %v4194 = vadd.f32 %v4131, %v4193
  %v4195 = vpop.f32.mrb[0].mxu0
  %v4196 = vadd.f32 %v4133, %v4195
  %v4197 = vpop.f32.mrb[0].mxu0
  %v4198 = vadd.f32 %v4135, %v4197
  %4199 = vmatprep.mubr.bf16.mxu0 %v3347
  %4200 = vmatmul.mubr.bf16.gmra.mrb[0].mxu0 %v3346
  %v4201 = vpop.f32.mrb[0].mxu0
  %v4202 = vadd.f32 %v4139, %v4201
  %v4203 = vpop.f32.mrb[0].mxu0
  %v4204 = vadd.f32 %v4141, %v4203
  %v4205 = vpop.f32.mrb[0].mxu0
  %v4206 = vadd.f32 %v4143, %v4205
  %v4207 = vpop.f32.mrb[0].mxu0
  %v4208 = vadd.f32 %v4145, %v4207
  %4209 = vdwg.mxu0
  %4210 = vmatprep.subr.bf16.mxu0 %v3894
  %4211 = vmatpush1.bf16.msra.mxu0 %v3893
  %4212 = vmatprep.subr.bf16.mxu0 %v3896
  %4213 = vmatpush1.bf16.msra.mxu0 %v3895
  %4214 = vmatprep.subr.bf16.mxu0 %v3898
  %4215 = vmatpush1.bf16.msra.mxu0 %v3897
  %4216 = vmatprep.subr.bf16.mxu0 %v3900
  %4217 = vmatpush1.bf16.msra.mxu0 %v3899
  %4218 = vmatprep.subr.bf16.mxu0 %v3902
  %4219 = vmatpush1.bf16.msra.mxu0 %v3901
  %4220 = vmatprep.subr.bf16.mxu0 %v3904
  %4221 = vmatpush1.bf16.msra.mxu0 %v3903
  %4222 = vmatprep.subr.bf16.mxu0 %v3906
  %4223 = vmatpush1.bf16.msra.mxu0 %v3905
  %4224 = vmatprep.subr.bf16.mxu0 %v3908
  %4225 = vmatpush1.bf16.msra.mxu0 %v3907
  %4226 = vmatprep.subr.bf16.mxu0 0
  %4227 = vmatpush1.bf16.msra.mxu0 0
  %4228 = vmatprep.subr.bf16.mxu0 0
  %4229 = vmatpush1.bf16.msra.mxu0 0
  %4230 = vmatprep.subr.bf16.mxu0 0
  %4231 = vmatpush1.bf16.msra.mxu0 0
  %4232 = vmatprep.subr.bf16.mxu0 0
  %4233 = vmatpush1.bf16.msra.mxu0 0
  %4234 = vmatprep.subr.bf16.mxu0 0
  %4235 = vmatpush1.bf16.msra.mxu0 0
  %4236 = vmatprep.subr.bf16.mxu0 0
  %4237 = vmatpush1.bf16.msra.mxu0 0
  %4238 = vmatprep.subr.bf16.mxu0 0
  %4239 = vmatpush1.bf16.msra.mxu0 0
  %4240 = vmatprep.subr.bf16.mxu0 0
  %4241 = vmatpush1.bf16.msra.mxu0 0
  %4242 = vmatprep.mubr.bf16.mxu0 0
  %4243 = vmatmul.mubr.bf16.gmra.mrb[0].mxu0 %v3334
  %v4244 = vpop.f32.mrb[0].mxu0
  %v4245 = vadd.f32 %v4182, %v4244
  %v4246 = vpop.f32.mrb[0].mxu0
  %v4247 = vadd.f32 %v4184, %v4246
  %v4248 = vpop.f32.mrb[0].mxu0
  %v4249 = vadd.f32 %v4186, %v4248
  %v4250 = vpop.f32.mrb[0].mxu0
  %v4251 = vadd.f32 %v4188, %v4250
  %4252 = vmatprep.mubr.bf16.mxu0 0
  %4253 = vmatmul.mubr.bf16.gmra.mrb[0].mxu0 %v3341
  %v4254 = vpop.f32.mrb[0].mxu0
  %v4255 = vadd.f32 %v4192, %v4254
  %v4256 = vpop.f32.mrb[0].mxu0
  %v4257 = vadd.f32 %v4194, %v4256
  %v4258 = vpop.f32.mrb[0].mxu0
  %v4259 = vadd.f32 %v4196, %v4258
  %v4260 = vpop.f32.mrb[0].mxu0
  %v4261 = vadd.f32 %v4198, %v4260
  %4262 = vmatprep.mubr.bf16.mxu0 0
  %4263 = vmatmul.mubr.bf16.gmra.mrb[0].mxu0 %v3348
  %v4264 = vpop.f32.mrb[0].mxu0
  %v4265 = vadd.f32 %v4202, %v4264
  %v4266 = vpop.f32.mrb[0].mxu0
  %v4267 = vadd.f32 %v4204, %v4266
  %v4268 = vpop.f32.mrb[0].mxu0
  %v4269 = vadd.f32 %v4206, %v4268
  %v4270 = vpop.f32.mrb[0].mxu0
  %v4271 = vadd.f32 %v4208, %v4270
  %4272 = vdwg.mxu0
  %v4273 = vpack.c.bf16 %v4249, %v4245
  %v4274 = vpack.c.bf16 %v4251, %v4247
  %v4275 = vpack.c.bf16 %v4259, %v4255
  %v4276 = vpack.c.bf16 %v4261, %v4257
  %v4277 = vpack.c.bf16 %v4269, %v4265
  %v4278 = vpack.c.bf16 %v4271, %v4267
  %4285 = vrot.lane.b32.xlu0 %v4273, 127
  %v4286 = vpop.permute.xlu0 %4285
  %4287 = vrot.lane.b32.xlu0 %v4274, 127
  %v4288 = vpop.permute.xlu0 %4287
  %4289 = vrot.lane.b32.xlu0 %v4275, 127
  %v4290 = vpop.permute.xlu0 %4289
  %4291 = vrot.lane.b32.xlu0 %v4276, 127
  %v4292 = vpop.permute.xlu0 %4291
  %4293 = vrot.lane.b32.xlu0 %v4277, 127
  %v4294 = vpop.permute.xlu0 %4293
  %4295 = vrot.lane.b32.xlu0 %v4278, 127
  %v4296 = vpop.permute.xlu0 %4295
  %v4297 = vsel %vm3144, %v4286, %v4288
  %v4298 = vsel %vm3144, %v4290, %v4292
  %v4299 = vsel %vm3144, %v4294, %v4296
  %4306 = vrot.lane.b32.xlu0 %v4273, 126
  %v4307 = vpop.permute.xlu0 %4306
  %4308 = vrot.lane.b32.xlu0 %v4274, 126
  %v4309 = vpop.permute.xlu0 %4308
  %4310 = vrot.lane.b32.xlu0 %v4275, 126
  %v4311 = vpop.permute.xlu0 %4310
  %4312 = vrot.lane.b32.xlu0 %v4276, 126
  %v4313 = vpop.permute.xlu0 %4312
  %4314 = vrot.lane.b32.xlu0 %v4277, 126
  %v4315 = vpop.permute.xlu0 %4314
  %4316 = vrot.lane.b32.xlu0 %v4278, 126
  %v4317 = vpop.permute.xlu0 %4316
  %vm4318 = vcmask 1031168
  %v4319 = vsel %vm4318, %v4307, %v4309
  %v4320 = vsel %vm4318, %v4311, %v4313
  %v4321 = vsel %vm4318, %v4315, %v4317
  %4328 = vrot.lane.b32.xlu0 %v4273, 125
  %v4329 = vpop.permute.xlu0 %4328
  %4330 = vrot.lane.b32.xlu0 %v4274, 125
  %v4331 = vpop.permute.xlu0 %4330
  %4332 = vrot.lane.b32.xlu0 %v4275, 125
  %v4333 = vpop.permute.xlu0 %4332
  %4334 = vrot.lane.b32.xlu0 %v4276, 125
  %v4335 = vpop.permute.xlu0 %4334
  %4336 = vrot.lane.b32.xlu0 %v4277, 125
  %v4337 = vpop.permute.xlu0 %4336
  %4338 = vrot.lane.b32.xlu0 %v4278, 125
  %v4339 = vpop.permute.xlu0 %4338
  %vm4340 = vcmask 1022976
  %v4341 = vsel %vm4340, %v4329, %v4331
  %v4342 = vsel %vm4340, %v4333, %v4335
  %v4343 = vsel %vm4340, %v4337, %v4339
  %4350 = vrot.lane.b32.xlu0 %v4273, 124
  %v4351 = vpop.permute.xlu0 %4350
  %4352 = vrot.lane.b32.xlu0 %v4274, 124
  %v4353 = vpop.permute.xlu0 %4352
  %4354 = vrot.lane.b32.xlu0 %v4275, 124
  %v4355 = vpop.permute.xlu0 %4354
  %4356 = vrot.lane.b32.xlu0 %v4276, 124
  %v4357 = vpop.permute.xlu0 %4356
  %4358 = vrot.lane.b32.xlu0 %v4277, 124
  %v4359 = vpop.permute.xlu0 %4358
  %4360 = vrot.lane.b32.xlu0 %v4278, 124
  %v4361 = vpop.permute.xlu0 %4360
  %vm4362 = vcmask 1014784
  %v4363 = vsel %vm4362, %v4351, %v4353
  %v4364 = vsel %vm4362, %v4355, %v4357
  %v4365 = vsel %vm4362, %v4359, %v4361
  %v4372 = vld [vmem:[%s4] sm:$0xff]
  %v4373 = vld [vmem:[%s4 + $0x8] sm:$0xff]
  %v4374 = vld [vmem:[%s4 + $0x10] sm:$0xff]
  %v4375 = vld [vmem:[%s4 + $0x18] sm:$0xff]
  %v4376 = vld [vmem:[%s4 + $0x20] sm:$0xff]
  %v4377 = vld [vmem:[%s4 + $0x28] sm:$0xff]
  %v4378 = vld [vmem:[%s4 + $0x30] sm:$0xff]
  %v4379 = vld [vmem:[%s4 + $0x38] sm:$0xff]
  %v4380 = vld [vmem:[%s4 + $0x40] sm:$0xff]
  %v4381 = vld [vmem:[%s4 + $0x48] sm:$0xff]
  %v4382 = vld [vmem:[%s4 + $0x50] sm:$0xff]
  %v4383 = vld [vmem:[%s4 + $0x58] sm:$0xff]
  %v4384 = vld [vmem:[%s4 + $0x60] sm:$0xff]
  %v4385 = vld [vmem:[%s4 + $0x68] sm:$0xff]
  %v4386 = vld [vmem:[%s4 + $0x70] sm:$0xff]
  %v4387 = vld [vmem:[%s4 + $0x78] sm:$0xff]
  %s4388 = scalar_lea.vmem %s4, 128
  %v4389 = vld [vmem:[%s4388] sm:$0xff]
  %v4390 = vld [vmem:[%s4388 + $0x8] sm:$0xff]
  %v4391 = vld [vmem:[%s4388 + $0x10] sm:$0xff]
  %v4392 = vld [vmem:[%s4388 + $0x18] sm:$0xff]
  %v4393 = vld [vmem:[%s4388 + $0x20] sm:$0xff]
  %v4394 = vld [vmem:[%s4388 + $0x28] sm:$0xff]
  %v4395 = vld [vmem:[%s4388 + $0x30] sm:$0xff]
  %v4396 = vld [vmem:[%s4388 + $0x38] sm:$0xff]
  %v4397 = vld [vmem:[%s4388 + $0x40] sm:$0xff]
  %v4398 = vld [vmem:[%s4388 + $0x48] sm:$0xff]
  %v4399 = vld [vmem:[%s4388 + $0x50] sm:$0xff]
  %v4400 = vld [vmem:[%s4388 + $0x58] sm:$0xff]
  %v4401 = vld [vmem:[%s4388 + $0x60] sm:$0xff]
  %v4402 = vld [vmem:[%s4388 + $0x68] sm:$0xff]
  %v4403 = vld [vmem:[%s4388 + $0x70] sm:$0xff]
  %v4404 = vld [vmem:[%s4388 + $0x78] sm:$0xff]
  %v4421 = vunpack.c.l.b16 %v4389
  %v4422 = vunpack.c.h.b16 %v4389
  %v4423 = vunpack.c.l.b16 %v4390
  %v4424 = vunpack.c.h.b16 %v4390
  %v4425 = vunpack.c.l.b16 %v4391
  %v4426 = vunpack.c.h.b16 %v4391
  %v4427 = vunpack.c.l.b16 %v4392
  %v4428 = vunpack.c.h.b16 %v4392
  %v4429 = vunpack.c.l.b16 %v4393
  %v4430 = vunpack.c.h.b16 %v4393
  %v4431 = vunpack.c.l.b16 %v4394
  %v4432 = vunpack.c.h.b16 %v4394
  %v4433 = vunpack.c.l.b16 %v4395
  %v4434 = vunpack.c.h.b16 %v4395
  %v4435 = vunpack.c.l.b16 %v4396
  %v4436 = vunpack.c.h.b16 %v4396
  %v4437 = vunpack.c.l.b16 %v4397
  %v4438 = vunpack.c.h.b16 %v4397
  %v4439 = vunpack.c.l.b16 %v4398
  %v4440 = vunpack.c.h.b16 %v4398
  %v4441 = vunpack.c.l.b16 %v4399
  %v4442 = vunpack.c.h.b16 %v4399
  %v4443 = vunpack.c.l.b16 %v4400
  %v4444 = vunpack.c.h.b16 %v4400
  %v4445 = vunpack.c.l.b16 %v4401
  %v4446 = vunpack.c.h.b16 %v4401
  %v4447 = vunpack.c.l.b16 %v4402
  %v4448 = vunpack.c.h.b16 %v4402
  %v4449 = vunpack.c.l.b16 %v4403
  %v4450 = vunpack.c.h.b16 %v4403
  %v4451 = vunpack.c.l.b16 %v4404
  %v4452 = vunpack.c.h.b16 %v4404
  %v4453 = vpack.c.b16 %v4423, %v4421
  %v4454 = vpack.c.b16 %v4424, %v4422
  %v4455 = vpack.c.b16 %v4427, %v4425
  %v4456 = vpack.c.b16 %v4428, %v4426
  %v4457 = vpack.c.b16 %v4431, %v4429
  %v4458 = vpack.c.b16 %v4432, %v4430
  %v4459 = vpack.c.b16 %v4435, %v4433
  %v4460 = vpack.c.b16 %v4436, %v4434
  %v4461 = vpack.c.b16 %v4439, %v4437
  %v4462 = vpack.c.b16 %v4440, %v4438
  %v4463 = vpack.c.b16 %v4443, %v4441
  %v4464 = vpack.c.b16 %v4444, %v4442
  %v4465 = vpack.c.b16 %v4447, %v4445
  %v4466 = vpack.c.b16 %v4448, %v4446
  %v4467 = vpack.c.b16 %v4451, %v4449
  %v4468 = vpack.c.b16 %v4452, %v4450
  %4477 = vrot.lane.b32.xlu0 %v4273, 114
  %v4478 = vpop.permute.xlu0 %4477
  %4479 = vrot.lane.b32.xlu0 %v4274, 114
  %v4480 = vpop.permute.xlu0 %4479
  %4481 = vrot.lane.b32.xlu0 %v4275, 114
  %v4482 = vpop.permute.xlu0 %4481
  %4483 = vrot.lane.b32.xlu0 %v4276, 114
  %v4484 = vpop.permute.xlu0 %4483
  %4485 = vrot.lane.b32.xlu0 %v4277, 114
  %v4486 = vpop.permute.xlu0 %4485
  %4487 = vrot.lane.b32.xlu0 %v4278, 114
  %v4488 = vpop.permute.xlu0 %4487
  %4489 = vrot.lane.b32.xlu0 %v4297, 114
  %v4490 = vpop.permute.xlu0 %4489
  %4491 = vrot.lane.b32.xlu0 %v4288, 114
  %v4492 = vpop.permute.xlu0 %4491
  %4493 = vrot.lane.b32.xlu0 %v4298, 114
  %v4494 = vpop.permute.xlu0 %4493
  %4495 = vrot.lane.b32.xlu0 %v4292, 114
  %v4496 = vpop.permute.xlu0 %4495
  %4497 = vrot.lane.b32.xlu0 %v4299, 114
  %v4498 = vpop.permute.xlu0 %4497
  %4499 = vrot.lane.b32.xlu0 %v4296, 114
  %v4500 = vpop.permute.xlu0 %4499
  %4501 = vrot.lane.b32.xlu0 %v4319, 114
  %v4502 = vpop.permute.xlu0 %4501
  %4503 = vrot.lane.b32.xlu0 %v4309, 114
  %v4504 = vpop.permute.xlu0 %4503
  %4505 = vrot.lane.b32.xlu0 %v4320, 114
  %v4506 = vpop.permute.xlu0 %4505
  %4507 = vrot.lane.b32.xlu0 %v4313, 114
  %v4508 = vpop.permute.xlu0 %4507
  %4509 = vrot.lane.b32.xlu0 %v4321, 114
  %v4510 = vpop.permute.xlu0 %4509
  %4511 = vrot.lane.b32.xlu0 %v4317, 114
  %v4512 = vpop.permute.xlu0 %4511
  %4513 = vrot.lane.b32.xlu0 %v4341, 114
  %v4514 = vpop.permute.xlu0 %4513
  %4515 = vrot.lane.b32.xlu0 %v4331, 114
  %v4516 = vpop.permute.xlu0 %4515
  %4517 = vrot.lane.b32.xlu0 %v4342, 114
  %v4518 = vpop.permute.xlu0 %4517
  %4519 = vrot.lane.b32.xlu0 %v4335, 114
  %v4520 = vpop.permute.xlu0 %4519
  %4521 = vrot.lane.b32.xlu0 %v4343, 114
  %v4522 = vpop.permute.xlu0 %4521
  %4523 = vrot.lane.b32.xlu0 %v4339, 114
  %v4524 = vpop.permute.xlu0 %4523
  %4525 = vrot.lane.b32.xlu0 %v4363, 114
  %v4526 = vpop.permute.xlu0 %4525
  %4527 = vrot.lane.b32.xlu0 %v4353, 114
  %v4528 = vpop.permute.xlu0 %4527
  %4529 = vrot.lane.b32.xlu0 %v4364, 114
  %v4530 = vpop.permute.xlu0 %4529
  %4531 = vrot.lane.b32.xlu0 %v4357, 114
  %v4532 = vpop.permute.xlu0 %4531
  %4533 = vrot.lane.b32.xlu0 %v4365, 114
  %v4534 = vpop.permute.xlu0 %4533
  %4535 = vrot.lane.b32.xlu0 %v4361, 114
  %v4536 = vpop.permute.xlu0 %4535
  %vm4537 = vcmask 932864
  %v4538 = vsel %vm4537, %v4478, %v4480
  %v4539 = vsel %vm4537, %v4482, %v4484
  %v4540 = vsel %vm4537, %v4486, %v4488
  %v4541 = vsel %vm4537, %v4490, %v4492
  %v4542 = vsel %vm4537, %v4494, %v4496
  %v4543 = vsel %vm4537, %v4498, %v4500
  %v4544 = vsel %vm4537, %v4502, %v4504
  %v4545 = vsel %vm4537, %v4506, %v4508
  %v4546 = vsel %vm4537, %v4510, %v4512
  %v4547 = vsel %vm4537, %v4514, %v4516
  %v4548 = vsel %vm4537, %v4518, %v4520
  %v4549 = vsel %vm4537, %v4522, %v4524
  %v4550 = vsel %vm4537, %v4526, %v4528
  %v4551 = vsel %vm4537, %v4530, %v4532
  %v4552 = vsel %vm4537, %v4534, %v4536
  %vm4583 = vcmask 916480
  %v4585 = vsel %vm4583, %v4454, 0
  %v4588 = vsel %vm4583, %v4456, 0
  %v4591 = vsel %vm4583, %v4458, 0
  %v4594 = vsel %vm4583, %v4460, 0
  %v4597 = vsel %vm4583, %v4462, 0
  %v4600 = vsel %vm4583, %v4464, 0
  %v4603 = vsel %vm4583, %v4466, 0
  %v4606 = vsel %vm4583, %v4468, 0
  %4608 = vmatprep.subr.bf16.mxu0 %v4480
  %4609 = vmatpush1.bf16.msra.mxu0 %v4538
  %4610 = vmatprep.subr.bf16.mxu0 %v4484
  %4611 = vmatpush1.bf16.msra.mxu0 %v4539
  %4612 = vmatprep.subr.bf16.mxu0 %v4488
  %4613 = vmatpush1.bf16.msra.mxu0 %v4540
  %4614 = vmatprep.subr.bf16.mxu0 %v4492
  %4615 = vmatpush1.bf16.msra.mxu0 %v4541
  %4616 = vmatprep.subr.bf16.mxu0 %v4496
  %4617 = vmatpush1.bf16.msra.mxu0 %v4542
  %4618 = vmatprep.subr.bf16.mxu0 %v4500
  %4619 = vmatpush1.bf16.msra.mxu0 %v4543
  %4620 = vmatprep.subr.bf16.mxu0 %v4504
  %4621 = vmatpush1.bf16.msra.mxu0 %v4544
  %4622 = vmatprep.subr.bf16.mxu0 %v4508
  %4623 = vmatpush1.bf16.msra.mxu0 %v4545
  %4624 = vmatprep.subr.bf16.mxu0 %v4512
  %4625 = vmatpush1.bf16.msra.mxu0 %v4546
  %4626 = vmatprep.subr.bf16.mxu0 %v4516
  %4627 = vmatpush1.bf16.msra.mxu0 %v4547
  %4628 = vmatprep.subr.bf16.mxu0 %v4520
  %4629 = vmatpush1.bf16.msra.mxu0 %v4548
  %4630 = vmatprep.subr.bf16.mxu0 %v4524
  %4631 = vmatpush1.bf16.msra.mxu0 %v4549
  %4632 = vmatprep.subr.bf16.mxu0 %v4528
  %4633 = vmatpush1.bf16.msra.mxu0 %v4550
  %4634 = vmatprep.subr.bf16.mxu0 %v4532
  %4635 = vmatpush1.bf16.msra.mxu0 %v4551
  %4636 = vmatprep.subr.bf16.mxu0 %v4536
  %4637 = vmatpush1.bf16.msra.mxu0 %v4552
  %4638 = vmatprep.subr.bf16.mxu0 0
  %4639 = vmatpush1.bf16.msra.mxu0 0
  %4640 = vmatprep.mubr.bf16.mxu0 %v4585
  %4641 = vmatmul.mubr.bf16.gmra.mrb[0].mxu0 %v4453
  %v4642 = vpop.f32.mrb[0].mxu0
  %v4643 = vadd.f32 0.0, %v4642
  %v4644 = vpop.f32.mrb[0].mxu0
  %v4645 = vadd.f32 0.0, %v4644
  %v4646 = vpop.f32.mrb[0].mxu0
  %v4647 = vadd.f32 0.0, %v4646
  %v4648 = vpop.f32.mrb[0].mxu0
  %v4649 = vadd.f32 0.0, %v4648
  %4650 = vmatprep.mubr.bf16.mxu0 %v4588
  %4651 = vmatmul.mubr.bf16.gmra.mrb[0].mxu0 %v4455
  %v4652 = vpop.f32.mrb[0].mxu0
  %v4653 = vadd.f32 0.0, %v4652
  %v4654 = vpop.f32.mrb[0].mxu0
  %v4655 = vadd.f32 0.0, %v4654
  %v4656 = vpop.f32.mrb[0].mxu0
  %v4657 = vadd.f32 0.0, %v4656
  %v4658 = vpop.f32.mrb[0].mxu0
  %v4659 = vadd.f32 0.0, %v4658
  %4660 = vmatprep.mubr.bf16.mxu0 %v4591
  %4661 = vmatmul.mubr.bf16.gmra.mrb[0].mxu0 %v4457
  %v4662 = vpop.f32.mrb[0].mxu0
  %v4663 = vadd.f32 0.0, %v4662
  %v4664 = vpop.f32.mrb[0].mxu0
  %v4665 = vadd.f32 0.0, %v4664
  %v4666 = vpop.f32.mrb[0].mxu0
  %v4667 = vadd.f32 0.0, %v4666
  %v4668 = vpop.f32.mrb[0].mxu0
  %v4669 = vadd.f32 0.0, %v4668
  %4670 = vmatprep.mubr.bf16.mxu0 %v4594
  %4671 = vmatmul.mubr.bf16.gmra.mrb[0].mxu0 %v4459
  %v4672 = vpop.f32.mrb[0].mxu0
  %v4673 = vadd.f32 0.0, %v4672
  %v4674 = vpop.f32.mrb[0].mxu0
  %v4675 = vadd.f32 0.0, %v4674
  %v4676 = vpop.f32.mrb[0].mxu0
  %v4677 = vadd.f32 0.0, %v4676
  %v4678 = vpop.f32.mrb[0].mxu0
  %v4679 = vadd.f32 0.0, %v4678
  %4680 = vmatprep.mubr.bf16.mxu0 %v4597
  %4681 = vmatmul.mubr.bf16.gmra.mrb[0].mxu0 %v4461
  %v4682 = vpop.f32.mrb[0].mxu0
  %v4683 = vadd.f32 0.0, %v4682
  %v4684 = vpop.f32.mrb[0].mxu0
  %v4685 = vadd.f32 0.0, %v4684
  %v4686 = vpop.f32.mrb[0].mxu0
  %v4687 = vadd.f32 0.0, %v4686
  %v4688 = vpop.f32.mrb[0].mxu0
  %v4689 = vadd.f32 0.0, %v4688
  %4690 = vmatprep.mubr.bf16.mxu0 %v4600
  %4691 = vmatmul.mubr.bf16.gmra.mrb[0].mxu0 %v4463
  %v4692 = vpop.f32.mrb[0].mxu0
  %v4693 = vadd.f32 0.0, %v4692
  %v4694 = vpop.f32.mrb[0].mxu0
  %v4695 = vadd.f32 0.0, %v4694
  %v4696 = vpop.f32.mrb[0].mxu0
  %v4697 = vadd.f32 0.0, %v4696
  %v4698 = vpop.f32.mrb[0].mxu0
  %v4699 = vadd.f32 0.0, %v4698
  %4700 = vmatprep.mubr.bf16.mxu0 %v4603
  %4701 = vmatmul.mubr.bf16.gmra.mrb[0].mxu0 %v4465
  %v4702 = vpop.f32.mrb[0].mxu0
  %v4703 = vadd.f32 0.0, %v4702
  %v4704 = vpop.f32.mrb[0].mxu0
  %v4705 = vadd.f32 0.0, %v4704
  %v4706 = vpop.f32.mrb[0].mxu0
  %v4707 = vadd.f32 0.0, %v4706
  %v4708 = vpop.f32.mrb[0].mxu0
  %v4709 = vadd.f32 0.0, %v4708
  %4710 = vmatprep.mubr.bf16.mxu0 %v4606
  %4711 = vmatmul.mubr.bf16.gmra.mrb[0].mxu0 %v4467
  %v4712 = vpop.f32.mrb[0].mxu0
  %v4713 = vadd.f32 0.0, %v4712
  %v4714 = vpop.f32.mrb[0].mxu0
  %v4715 = vadd.f32 0.0, %v4714
  %v4716 = vpop.f32.mrb[0].mxu0
  %v4717 = vadd.f32 0.0, %v4716
  %v4718 = vpop.f32.mrb[0].mxu0
  %v4719 = vadd.f32 0.0, %v4718
  %4720 = vdwg.mxu0
  %v4737 = vunpack.c.l.b16 %v4372
  %v4738 = vunpack.c.h.b16 %v4372
  %v4739 = vunpack.c.l.b16 %v4373
  %v4740 = vunpack.c.h.b16 %v4373
  %v4741 = vunpack.c.l.b16 %v4374
  %v4742 = vunpack.c.h.b16 %v4374
  %v4743 = vunpack.c.l.b16 %v4375
  %v4744 = vunpack.c.h.b16 %v4375
  %v4745 = vunpack.c.l.b16 %v4376
  %v4746 = vunpack.c.h.b16 %v4376
  %v4747 = vunpack.c.l.b16 %v4377
  %v4748 = vunpack.c.h.b16 %v4377
  %v4749 = vunpack.c.l.b16 %v4378
  %v4750 = vunpack.c.h.b16 %v4378
  %v4751 = vunpack.c.l.b16 %v4379
  %v4752 = vunpack.c.h.b16 %v4379
  %v4753 = vunpack.c.l.b16 %v4380
  %v4754 = vunpack.c.h.b16 %v4380
  %v4755 = vunpack.c.l.b16 %v4381
  %v4756 = vunpack.c.h.b16 %v4381
  %v4757 = vunpack.c.l.b16 %v4382
  %v4758 = vunpack.c.h.b16 %v4382
  %v4759 = vunpack.c.l.b16 %v4383
  %v4760 = vunpack.c.h.b16 %v4383
  %v4761 = vunpack.c.l.b16 %v4384
  %v4762 = vunpack.c.h.b16 %v4384
  %v4763 = vunpack.c.l.b16 %v4385
  %v4764 = vunpack.c.h.b16 %v4385
  %v4765 = vunpack.c.l.b16 %v4386
  %v4766 = vunpack.c.h.b16 %v4386
  %v4767 = vunpack.c.l.b16 %v4387
  %v4768 = vunpack.c.h.b16 %v4387
  %v4769 = vpack.c.b16 %v4739, %v4737
  %v4770 = vpack.c.b16 %v4740, %v4738
  %v4771 = vpack.c.b16 %v4743, %v4741
  %v4772 = vpack.c.b16 %v4744, %v4742
  %v4773 = vpack.c.b16 %v4747, %v4745
  %v4774 = vpack.c.b16 %v4748, %v4746
  %v4775 = vpack.c.b16 %v4751, %v4749
  %v4776 = vpack.c.b16 %v4752, %v4750
  %v4777 = vpack.c.b16 %v4755, %v4753
  %v4778 = vpack.c.b16 %v4756, %v4754
  %v4779 = vpack.c.b16 %v4759, %v4757
  %v4780 = vpack.c.b16 %v4760, %v4758
  %v4781 = vpack.c.b16 %v4763, %v4761
  %v4782 = vpack.c.b16 %v4764, %v4762
  %v4783 = vpack.c.b16 %v4767, %v4765
  %v4784 = vpack.c.b16 %v4768, %v4766
  %v4794 = vsel %vm4583, %v4770, 0
  %v4797 = vsel %vm4583, %v4772, 0
  %v4800 = vsel %vm4583, %v4774, 0
  %v4803 = vsel %vm4583, %v4776, 0
  %v4806 = vsel %vm4583, %v4778, 0
  %v4809 = vsel %vm4583, %v4780, 0
  %v4812 = vsel %vm4583, %v4782, 0
  %v4815 = vsel %vm4583, %v4784, 0
  %4817 = vmatprep.subr.bf16.mxu0 %v4274
  %4818 = vmatpush1.bf16.msra.mxu0 %v4273
  %4819 = vmatprep.subr.bf16.mxu0 %v4276
  %4820 = vmatpush1.bf16.msra.mxu0 %v4275
  %4821 = vmatprep.subr.bf16.mxu0 %v4278
  %4822 = vmatpush1.bf16.msra.mxu0 %v4277
  %4823 = vmatprep.subr.bf16.mxu0 %v4288
  %4824 = vmatpush1.bf16.msra.mxu0 %v4297
  %4825 = vmatprep.subr.bf16.mxu0 %v4292
  %4826 = vmatpush1.bf16.msra.mxu0 %v4298
  %4827 = vmatprep.subr.bf16.mxu0 %v4296
  %4828 = vmatpush1.bf16.msra.mxu0 %v4299
  %4829 = vmatprep.subr.bf16.mxu0 %v4309
  %4830 = vmatpush1.bf16.msra.mxu0 %v4319
  %4831 = vmatprep.subr.bf16.mxu0 %v4313
  %4832 = vmatpush1.bf16.msra.mxu0 %v4320
  %4833 = vmatprep.subr.bf16.mxu0 %v4317
  %4834 = vmatpush1.bf16.msra.mxu0 %v4321
  %4835 = vmatprep.subr.bf16.mxu0 %v4331
  %4836 = vmatpush1.bf16.msra.mxu0 %v4341
  %4837 = vmatprep.subr.bf16.mxu0 %v4335
  %4838 = vmatpush1.bf16.msra.mxu0 %v4342
  %4839 = vmatprep.subr.bf16.mxu0 %v4339
  %4840 = vmatpush1.bf16.msra.mxu0 %v4343
  %4841 = vmatprep.subr.bf16.mxu0 %v4353
  %4842 = vmatpush1.bf16.msra.mxu0 %v4363
  %4843 = vmatprep.subr.bf16.mxu0 %v4357
  %4844 = vmatpush1.bf16.msra.mxu0 %v4364
  %4845 = vmatprep.subr.bf16.mxu0 %v4361
  %4846 = vmatpush1.bf16.msra.mxu0 %v4365
  %4847 = vmatprep.subr.bf16.mxu0 0
  %4848 = vmatpush1.bf16.msra.mxu0 0
  %4849 = vmatprep.mubr.bf16.mxu0 %v4794
  %4850 = vmatmul.mubr.bf16.gmra.mrb[0].mxu0 %v4769
  %v4851 = vpop.f32.mrb[0].mxu0
  %v4852 = vadd.f32 %v4643, %v4851
  %v4853 = vpop.f32.mrb[0].mxu0
  %v4854 = vadd.f32 %v4645, %v4853
  %v4855 = vpop.f32.mrb[0].mxu0
  %v4856 = vadd.f32 %v4647, %v4855
  %v4857 = vpop.f32.mrb[0].mxu0
  %v4858 = vadd.f32 %v4649, %v4857
  %4859 = vmatprep.mubr.bf16.mxu0 %v4797
  %4860 = vmatmul.mubr.bf16.gmra.mrb[0].mxu0 %v4771
  %v4861 = vpop.f32.mrb[0].mxu0
  %v4862 = vadd.f32 %v4653, %v4861
  %v4863 = vpop.f32.mrb[0].mxu0
  %v4864 = vadd.f32 %v4655, %v4863
  %v4865 = vpop.f32.mrb[0].mxu0
  %v4866 = vadd.f32 %v4657, %v4865
  %v4867 = vpop.f32.mrb[0].mxu0
  %v4868 = vadd.f32 %v4659, %v4867
  %4869 = vmatprep.mubr.bf16.mxu0 %v4800
  %4870 = vmatmul.mubr.bf16.gmra.mrb[0].mxu0 %v4773
  %v4871 = vpop.f32.mrb[0].mxu0
  %v4872 = vadd.f32 %v4663, %v4871
  %v4873 = vpop.f32.mrb[0].mxu0
  %v4874 = vadd.f32 %v4665, %v4873
  %v4875 = vpop.f32.mrb[0].mxu0
  %v4876 = vadd.f32 %v4667, %v4875
  %v4877 = vpop.f32.mrb[0].mxu0
  %v4878 = vadd.f32 %v4669, %v4877
  %4879 = vmatprep.mubr.bf16.mxu0 %v4803
  %4880 = vmatmul.mubr.bf16.gmra.mrb[0].mxu0 %v4775
  %v4881 = vpop.f32.mrb[0].mxu0
  %v4882 = vadd.f32 %v4673, %v4881
  %v4883 = vpop.f32.mrb[0].mxu0
  %v4884 = vadd.f32 %v4675, %v4883
  %v4885 = vpop.f32.mrb[0].mxu0
  %v4886 = vadd.f32 %v4677, %v4885
  %v4887 = vpop.f32.mrb[0].mxu0
  %v4888 = vadd.f32 %v4679, %v4887
  %4889 = vmatprep.mubr.bf16.mxu0 %v4806
  %4890 = vmatmul.mubr.bf16.gmra.mrb[0].mxu0 %v4777
  %v4891 = vpop.f32.mrb[0].mxu0
  %v4892 = vadd.f32 %v4683, %v4891
  %v4893 = vpop.f32.mrb[0].mxu0
  %v4894 = vadd.f32 %v4685, %v4893
  %v4895 = vpop.f32.mrb[0].mxu0
  %v4896 = vadd.f32 %v4687, %v4895
  %v4897 = vpop.f32.mrb[0].mxu0
  %v4898 = vadd.f32 %v4689, %v4897
  %4899 = vmatprep.mubr.bf16.mxu0 %v4809
  %4900 = vmatmul.mubr.bf16.gmra.mrb[0].mxu0 %v4779
  %v4901 = vpop.f32.mrb[0].mxu0
  %v4902 = vadd.f32 %v4693, %v4901
  %v4903 = vpop.f32.mrb[0].mxu0
  %v4904 = vadd.f32 %v4695, %v4903
  %v4905 = vpop.f32.mrb[0].mxu0
  %v4906 = vadd.f32 %v4697, %v4905
  %v4907 = vpop.f32.mrb[0].mxu0
  %v4908 = vadd.f32 %v4699, %v4907
  %4909 = vmatprep.mubr.bf16.mxu0 %v4812
  %4910 = vmatmul.mubr.bf16.gmra.mrb[0].mxu0 %v4781
  %v4911 = vpop.f32.mrb[0].mxu0
  %v4912 = vadd.f32 %v4703, %v4911
  %v4913 = vpop.f32.mrb[0].mxu0
  %v4914 = vadd.f32 %v4705, %v4913
  %v4915 = vpop.f32.mrb[0].mxu0
  %v4916 = vadd.f32 %v4707, %v4915
  %v4917 = vpop.f32.mrb[0].mxu0
  %v4918 = vadd.f32 %v4709, %v4917
  %4919 = vmatprep.mubr.bf16.mxu0 %v4815
  %4920 = vmatmul.mubr.bf16.gmra.mrb[0].mxu0 %v4783
  %v4921 = vpop.f32.mrb[0].mxu0
  %v4922 = vadd.f32 %v4713, %v4921
  %v4923 = vpop.f32.mrb[0].mxu0
  %v4924 = vadd.f32 %v4715, %v4923
  %v4925 = vpop.f32.mrb[0].mxu0
  %v4926 = vadd.f32 %v4717, %v4925
  %v4927 = vpop.f32.mrb[0].mxu0
  %v4928 = vadd.f32 %v4719, %v4927
  %4929 = vdwg.mxu0
  %s4930 = scalar_lea.vmem %s4, 256
  %v4931 = vld [vmem:[%s4930] sm:$0xff]
  %v4932 = vld [vmem:[%s4930 + $0x8] sm:$0xff]
  %v4933 = vld [vmem:[%s4930 + $0x10] sm:$0xff]
  %v4934 = vld [vmem:[%s4930 + $0x18] sm:$0xff]
  %v4935 = vld [vmem:[%s4930 + $0x20] sm:$0xff]
  %v4936 = vld [vmem:[%s4930 + $0x28] sm:$0xff]
  %v4937 = vld [vmem:[%s4930 + $0x30] sm:$0xff]
  %v4938 = vld [vmem:[%s4930 + $0x38] sm:$0xff]
  %v4939 = vld [vmem:[%s4930 + $0x40] sm:$0xff]
  %v4940 = vld [vmem:[%s4930 + $0x48] sm:$0xff]
  %v4941 = vld [vmem:[%s4930 + $0x50] sm:$0xff]
  %v4942 = vld [vmem:[%s4930 + $0x58] sm:$0xff]
  %v4943 = vld [vmem:[%s4930 + $0x60] sm:$0xff]
  %v4944 = vld [vmem:[%s4930 + $0x68] sm:$0xff]
  %v4945 = vld [vmem:[%s4930 + $0x70] sm:$0xff]
  %v4946 = vld [vmem:[%s4930 + $0x78] sm:$0xff]
  %v4963 = vunpack.c.l.b16 %v4931
  %v4964 = vunpack.c.h.b16 %v4931
  %v4965 = vunpack.c.l.b16 %v4932
  %v4966 = vunpack.c.h.b16 %v4932
  %v4967 = vunpack.c.l.b16 %v4933
  %v4968 = vunpack.c.h.b16 %v4933
  %v4969 = vunpack.c.l.b16 %v4934
  %v4970 = vunpack.c.h.b16 %v4934
  %v4971 = vunpack.c.l.b16 %v4935
  %v4972 = vunpack.c.h.b16 %v4935
  %v4973 = vunpack.c.l.b16 %v4936
  %v4974 = vunpack.c.h.b16 %v4936
  %v4975 = vunpack.c.l.b16 %v4937
  %v4976 = vunpack.c.h.b16 %v4937
  %v4977 = vunpack.c.l.b16 %v4938
  %v4978 = vunpack.c.h.b16 %v4938
  %v4979 = vunpack.c.l.b16 %v4939
  %v4980 = vunpack.c.h.b16 %v4939
  %v4981 = vunpack.c.l.b16 %v4940
  %v4982 = vunpack.c.h.b16 %v4940
  %v4983 = vunpack.c.l.b16 %v4941
  %v4984 = vunpack.c.h.b16 %v4941
  %v4985 = vunpack.c.l.b16 %v4942
  %v4986 = vunpack.c.h.b16 %v4942
  %v4987 = vunpack.c.l.b16 %v4943
  %v4988 = vunpack.c.h.b16 %v4943
  %v4989 = vunpack.c.l.b16 %v4944
  %v4990 = vunpack.c.h.b16 %v4944
  %v4991 = vunpack.c.l.b16 %v4945
  %v4992 = vunpack.c.h.b16 %v4945
  %v4993 = vunpack.c.l.b16 %v4946
  %v4994 = vunpack.c.h.b16 %v4946
  %v4995 = vpack.c.b16 %v4965, %v4963
  %v4996 = vpack.c.b16 %v4966, %v4964
  %v4997 = vpack.c.b16 %v4969, %v4967
  %v4998 = vpack.c.b16 %v4970, %v4968
  %v4999 = vpack.c.b16 %v4973, %v4971
  %v5000 = vpack.c.b16 %v4974, %v4972
  %v5001 = vpack.c.b16 %v4977, %v4975
  %v5002 = vpack.c.b16 %v4978, %v4976
  %v5003 = vpack.c.b16 %v4981, %v4979
  %v5004 = vpack.c.b16 %v4982, %v4980
  %v5005 = vpack.c.b16 %v4985, %v4983
  %v5006 = vpack.c.b16 %v4986, %v4984
  %v5007 = vpack.c.b16 %v4989, %v4987
  %v5008 = vpack.c.b16 %v4990, %v4988
  %v5009 = vpack.c.b16 %v4993, %v4991
  %v5010 = vpack.c.b16 %v4994, %v4992
  %5019 = vrot.lane.b32.xlu0 %v4273, 100
  %v5020 = vpop.permute.xlu0 %5019
  %5021 = vrot.lane.b32.xlu0 %v4274, 100
  %v5022 = vpop.permute.xlu0 %5021
  %5023 = vrot.lane.b32.xlu0 %v4275, 100
  %v5024 = vpop.permute.xlu0 %5023
  %5025 = vrot.lane.b32.xlu0 %v4276, 100
  %v5026 = vpop.permute.xlu0 %5025
  %5027 = vrot.lane.b32.xlu0 %v4277, 100
  %v5028 = vpop.permute.xlu0 %5027
  %5029 = vrot.lane.b32.xlu0 %v4278, 100
  %v5030 = vpop.permute.xlu0 %5029
  %5031 = vrot.lane.b32.xlu0 %v4297, 100
  %v5032 = vpop.permute.xlu0 %5031
  %5033 = vrot.lane.b32.xlu0 %v4288, 100
  %v5034 = vpop.permute.xlu0 %5033
  %5035 = vrot.lane.b32.xlu0 %v4298, 100
  %v5036 = vpop.permute.xlu0 %5035
  %5037 = vrot.lane.b32.xlu0 %v4292, 100
  %v5038 = vpop.permute.xlu0 %5037
  %5039 = vrot.lane.b32.xlu0 %v4299, 100
  %v5040 = vpop.permute.xlu0 %5039
  %5041 = vrot.lane.b32.xlu0 %v4296, 100
  %v5042 = vpop.permute.xlu0 %5041
  %5043 = vrot.lane.b32.xlu0 %v4319, 100
  %v5044 = vpop.permute.xlu0 %5043
  %5045 = vrot.lane.b32.xlu0 %v4309, 100
  %v5046 = vpop.permute.xlu0 %5045
  %5047 = vrot.lane.b32.xlu0 %v4320, 100
  %v5048 = vpop.permute.xlu0 %5047
  %5049 = vrot.lane.b32.xlu0 %v4313, 100
  %v5050 = vpop.permute.xlu0 %5049
  %5051 = vrot.lane.b32.xlu0 %v4321, 100
  %v5052 = vpop.permute.xlu0 %5051
  %5053 = vrot.lane.b32.xlu0 %v4317, 100
  %v5054 = vpop.permute.xlu0 %5053
  %5055 = vrot.lane.b32.xlu0 %v4341, 100
  %v5056 = vpop.permute.xlu0 %5055
  %5057 = vrot.lane.b32.xlu0 %v4331, 100
  %v5058 = vpop.permute.xlu0 %5057
  %5059 = vrot.lane.b32.xlu0 %v4342, 100
  %v5060 = vpop.permute.xlu0 %5059
  %5061 = vrot.lane.b32.xlu0 %v4335, 100
  %v5062 = vpop.permute.xlu0 %5061
  %5063 = vrot.lane.b32.xlu0 %v4343, 100
  %v5064 = vpop.permute.xlu0 %5063
  %5065 = vrot.lane.b32.xlu0 %v4339, 100
  %v5066 = vpop.permute.xlu0 %5065
  %5067 = vrot.lane.b32.xlu0 %v4363, 100
  %v5068 = vpop.permute.xlu0 %5067
  %5069 = vrot.lane.b32.xlu0 %v4353, 100
  %v5070 = vpop.permute.xlu0 %5069
  %5071 = vrot.lane.b32.xlu0 %v4364, 100
  %v5072 = vpop.permute.xlu0 %5071
  %5073 = vrot.lane.b32.xlu0 %v4357, 100
  %v5074 = vpop.permute.xlu0 %5073
  %5075 = vrot.lane.b32.xlu0 %v4365, 100
  %v5076 = vpop.permute.xlu0 %5075
  %5077 = vrot.lane.b32.xlu0 %v4361, 100
  %v5078 = vpop.permute.xlu0 %5077
  %vm5079 = vcmask 818176
  %v5080 = vsel %vm5079, %v5020, %v5022
  %v5081 = vsel %vm5079, %v5024, %v5026
  %v5082 = vsel %vm5079, %v5028, %v5030
  %v5083 = vsel %vm5079, %v5032, %v5034
  %v5084 = vsel %vm5079, %v5036, %v5038
  %v5085 = vsel %vm5079, %v5040, %v5042
  %v5086 = vsel %vm5079, %v5044, %v5046
  %v5087 = vsel %vm5079, %v5048, %v5050
  %v5088 = vsel %vm5079, %v5052, %v5054
  %v5089 = vsel %vm5079, %v5056, %v5058
  %v5090 = vsel %vm5079, %v5060, %v5062
  %v5091 = vsel %vm5079, %v5064, %v5066
  %v5092 = vsel %vm5079, %v5068, %v5070
  %v5093 = vsel %vm5079, %v5072, %v5074
  %v5094 = vsel %vm5079, %v5076, %v5078
  %v5126 = vsel %vm4583, %v4996, 0
  %v5129 = vsel %vm4583, %v4998, 0
  %v5132 = vsel %vm4583, %v5000, 0
  %v5135 = vsel %vm4583, %v5002, 0
  %v5138 = vsel %vm4583, %v5004, 0
  %v5141 = vsel %vm4583, %v5006, 0
  %v5144 = vsel %vm4583, %v5008, 0
  %v5147 = vsel %vm4583, %v5010, 0
  %5149 = vmatprep.subr.bf16.mxu0 %v5022
  %5150 = vmatpush1.bf16.msra.mxu0 %v5080
  %5151 = vmatprep.subr.bf16.mxu0 %v5026
  %5152 = vmatpush1.bf16.msra.mxu0 %v5081
  %5153 = vmatprep.subr.bf16.mxu0 %v5030
  %5154 = vmatpush1.bf16.msra.mxu0 %v5082
  %5155 = vmatprep.subr.bf16.mxu0 %v5034
  %5156 = vmatpush1.bf16.msra.mxu0 %v5083
  %5157 = vmatprep.subr.bf16.mxu0 %v5038
  %5158 = vmatpush1.bf16.msra.mxu0 %v5084
  %5159 = vmatprep.subr.bf16.mxu0 %v5042
  %5160 = vmatpush1.bf16.msra.mxu0 %v5085
  %5161 = vmatprep.subr.bf16.mxu0 %v5046
  %5162 = vmatpush1.bf16.msra.mxu0 %v5086
  %5163 = vmatprep.subr.bf16.mxu0 %v5050
  %5164 = vmatpush1.bf16.msra.mxu0 %v5087
  %5165 = vmatprep.subr.bf16.mxu0 %v5054
  %5166 = vmatpush1.bf16.msra.mxu0 %v5088
  %5167 = vmatprep.subr.bf16.mxu0 %v5058
  %5168 = vmatpush1.bf16.msra.mxu0 %v5089
  %5169 = vmatprep.subr.bf16.mxu0 %v5062
  %5170 = vmatpush1.bf16.msra.mxu0 %v5090
  %5171 = vmatprep.subr.bf16.mxu0 %v5066
  %5172 = vmatpush1.bf16.msra.mxu0 %v5091
  %5173 = vmatprep.subr.bf16.mxu0 %v5070
  %5174 = vmatpush1.bf16.msra.mxu0 %v5092
  %5175 = vmatprep.subr.bf16.mxu0 %v5074
  %5176 = vmatpush1.bf16.msra.mxu0 %v5093
  %5177 = vmatprep.subr.bf16.mxu0 %v5078
  %5178 = vmatpush1.bf16.msra.mxu0 %v5094
  %5179 = vmatprep.subr.bf16.mxu0 0
  %5180 = vmatpush1.bf16.msra.mxu0 0
  %5181 = vmatprep.mubr.bf16.mxu0 %v5126
  %5182 = vmatmul.mubr.bf16.gmra.mrb[0].mxu0 %v4995
  %v5183 = vpop.f32.mrb[0].mxu0
  %v5184 = vadd.f32 0.0, %v5183
  %v5185 = vpop.f32.mrb[0].mxu0
  %v5186 = vadd.f32 0.0, %v5185
  %v5187 = vpop.f32.mrb[0].mxu0
  %v5188 = vadd.f32 0.0, %v5187
  %v5189 = vpop.f32.mrb[0].mxu0
  %v5190 = vadd.f32 0.0, %v5189
  %5191 = vmatprep.mubr.bf16.mxu0 %v5129
  %5192 = vmatmul.mubr.bf16.gmra.mrb[0].mxu0 %v4997
  %v5193 = vpop.f32.mrb[0].mxu0
  %v5194 = vadd.f32 0.0, %v5193
  %v5195 = vpop.f32.mrb[0].mxu0
  %v5196 = vadd.f32 0.0, %v5195
  %v5197 = vpop.f32.mrb[0].mxu0
  %v5198 = vadd.f32 0.0, %v5197
  %v5199 = vpop.f32.mrb[0].mxu0
  %v5200 = vadd.f32 0.0, %v5199
  %5201 = vmatprep.mubr.bf16.mxu0 %v5132
  %5202 = vmatmul.mubr.bf16.gmra.mrb[0].mxu0 %v4999
  %v5203 = vpop.f32.mrb[0].mxu0
  %v5204 = vadd.f32 0.0, %v5203
  %v5205 = vpop.f32.mrb[0].mxu0
  %v5206 = vadd.f32 0.0, %v5205
  %v5207 = vpop.f32.mrb[0].mxu0
  %v5208 = vadd.f32 0.0, %v5207
  %v5209 = vpop.f32.mrb[0].mxu0
  %v5210 = vadd.f32 0.0, %v5209
  %5211 = vmatprep.mubr.bf16.mxu0 %v5135
  %5212 = vmatmul.mubr.bf16.gmra.mrb[0].mxu0 %v5001
  %v5213 = vpop.f32.mrb[0].mxu0
  %v5214 = vadd.f32 0.0, %v5213
  %v5215 = vpop.f32.mrb[0].mxu0
  %v5216 = vadd.f32 0.0, %v5215
  %v5217 = vpop.f32.mrb[0].mxu0
  %v5218 = vadd.f32 0.0, %v5217
  %v5219 = vpop.f32.mrb[0].mxu0
  %v5220 = vadd.f32 0.0, %v5219
  %5221 = vmatprep.mubr.bf16.mxu0 %v5138
  %5222 = vmatmul.mubr.bf16.gmra.mrb[0].mxu0 %v5003
  %v5223 = vpop.f32.mrb[0].mxu0
  %v5224 = vadd.f32 0.0, %v5223
  %v5225 = vpop.f32.mrb[0].mxu0
  %v5226 = vadd.f32 0.0, %v5225
  %v5227 = vpop.f32.mrb[0].mxu0
  %v5228 = vadd.f32 0.0, %v5227
  %v5229 = vpop.f32.mrb[0].mxu0
  %v5230 = vadd.f32 0.0, %v5229
  %5231 = vmatprep.mubr.bf16.mxu0 %v5141
  %5232 = vmatmul.mubr.bf16.gmra.mrb[0].mxu0 %v5005
  %v5233 = vpop.f32.mrb[0].mxu0
  %v5234 = vadd.f32 0.0, %v5233
  %v5235 = vpop.f32.mrb[0].mxu0
  %v5236 = vadd.f32 0.0, %v5235
  %v5237 = vpop.f32.mrb[0].mxu0
  %v5238 = vadd.f32 0.0, %v5237
  %v5239 = vpop.f32.mrb[0].mxu0
  %v5240 = vadd.f32 0.0, %v5239
  %5241 = vmatprep.mubr.bf16.mxu0 %v5144
  %5242 = vmatmul.mubr.bf16.gmra.mrb[0].mxu0 %v5007
  %v5243 = vpop.f32.mrb[0].mxu0
  %v5244 = vadd.f32 0.0, %v5243
  %v5245 = vpop.f32.mrb[0].mxu0
  %v5246 = vadd.f32 0.0, %v5245
  %v5247 = vpop.f32.mrb[0].mxu0
  %v5248 = vadd.f32 0.0, %v5247
  %v5249 = vpop.f32.mrb[0].mxu0
  %v5250 = vadd.f32 0.0, %v5249
  %5251 = vmatprep.mubr.bf16.mxu0 %v5147
  %5252 = vmatmul.mubr.bf16.gmra.mrb[0].mxu0 %v5009
  %v5253 = vpop.f32.mrb[0].mxu0
  %v5254 = vadd.f32 0.0, %v5253
  %v5255 = vpop.f32.mrb[0].mxu0
  %v5256 = vadd.f32 0.0, %v5255
  %v5257 = vpop.f32.mrb[0].mxu0
  %v5258 = vadd.f32 0.0, %v5257
  %v5259 = vpop.f32.mrb[0].mxu0
  %v5260 = vadd.f32 0.0, %v5259
  %5261 = vdwg.mxu0
  %v5262 = vadd.f32 %v4852, %v5184
  %v5263 = vadd.f32 %v4854, %v5186
  %v5264 = vadd.f32 %v4856, %v5188
  %v5265 = vadd.f32 %v4858, %v5190
  %v5266 = vadd.f32 %v4862, %v5194
  %v5267 = vadd.f32 %v4864, %v5196
  %v5268 = vadd.f32 %v4866, %v5198
  %v5269 = vadd.f32 %v4868, %v5200
  %v5270 = vadd.f32 %v4872, %v5204
  %v5271 = vadd.f32 %v4874, %v5206
  %v5272 = vadd.f32 %v4876, %v5208
  %v5273 = vadd.f32 %v4878, %v5210
  %v5274 = vadd.f32 %v4882, %v5214
  %v5275 = vadd.f32 %v4884, %v5216
  %v5276 = vadd.f32 %v4886, %v5218
  %v5277 = vadd.f32 %v4888, %v5220
  %v5278 = vadd.f32 %v4892, %v5224
  %v5279 = vadd.f32 %v4894, %v5226
  %v5280 = vadd.f32 %v4896, %v5228
  %v5281 = vadd.f32 %v4898, %v5230
  %v5282 = vadd.f32 %v4902, %v5234
  %v5283 = vadd.f32 %v4904, %v5236
  %v5284 = vadd.f32 %v4906, %v5238
  %v5285 = vadd.f32 %v4908, %v5240
  %v5286 = vadd.f32 %v4912, %v5244
  %v5287 = vadd.f32 %v4914, %v5246
  %v5288 = vadd.f32 %v4916, %v5248
  %v5289 = vadd.f32 %v4918, %v5250
  %v5290 = vadd.f32 %v4922, %v5254
  %v5291 = vadd.f32 %v4924, %v5256
  %v5292 = vadd.f32 %v4926, %v5258
  %v5293 = vadd.f32 %v4928, %v5260
  %s5294 = scalar_lea.vmem %s4, 384
  %v5295 = vld [vmem:[%s5294] sm:$0xff]
  %v5296 = vld [vmem:[%s5294 + $0x8] sm:$0xff]
  %v5297 = vld [vmem:[%s5294 + $0x10] sm:$0xff]
  %v5298 = vld [vmem:[%s5294 + $0x18] sm:$0xff]
  %v5299 = vld [vmem:[%s5294 + $0x20] sm:$0xff]
  %v5300 = vld [vmem:[%s5294 + $0x28] sm:$0xff]
  %v5301 = vld [vmem:[%s5294 + $0x30] sm:$0xff]
  %v5302 = vld [vmem:[%s5294 + $0x38] sm:$0xff]
  %v5303 = vld [vmem:[%s5294 + $0x40] sm:$0xff]
  %v5304 = vld [vmem:[%s5294 + $0x48] sm:$0xff]
  %v5305 = vld [vmem:[%s5294 + $0x50] sm:$0xff]
  %v5306 = vld [vmem:[%s5294 + $0x58] sm:$0xff]
  %v5307 = vld [vmem:[%s5294 + $0x60] sm:$0xff]
  %v5308 = vld [vmem:[%s5294 + $0x68] sm:$0xff]
  %v5309 = vld [vmem:[%s5294 + $0x70] sm:$0xff]
  %v5310 = vld [vmem:[%s5294 + $0x78] sm:$0xff]
  %v5327 = vunpack.c.l.b16 %v5295
  %v5328 = vunpack.c.h.b16 %v5295
  %v5329 = vunpack.c.l.b16 %v5296
  %v5330 = vunpack.c.h.b16 %v5296
  %v5331 = vunpack.c.l.b16 %v5297
  %v5332 = vunpack.c.h.b16 %v5297
  %v5333 = vunpack.c.l.b16 %v5298
  %v5334 = vunpack.c.h.b16 %v5298
  %v5335 = vunpack.c.l.b16 %v5299
  %v5336 = vunpack.c.h.b16 %v5299
  %v5337 = vunpack.c.l.b16 %v5300
  %v5338 = vunpack.c.h.b16 %v5300
  %v5339 = vunpack.c.l.b16 %v5301
  %v5340 = vunpack.c.h.b16 %v5301
  %v5341 = vunpack.c.l.b16 %v5302
  %v5342 = vunpack.c.h.b16 %v5302
  %v5343 = vunpack.c.l.b16 %v5303
  %v5344 = vunpack.c.h.b16 %v5303
  %v5345 = vunpack.c.l.b16 %v5304
  %v5346 = vunpack.c.h.b16 %v5304
  %v5347 = vunpack.c.l.b16 %v5305
  %v5348 = vunpack.c.h.b16 %v5305
  %v5349 = vunpack.c.l.b16 %v5306
  %v5350 = vunpack.c.h.b16 %v5306
  %v5351 = vunpack.c.l.b16 %v5307
  %v5352 = vunpack.c.h.b16 %v5307
  %v5353 = vunpack.c.l.b16 %v5308
  %v5354 = vunpack.c.h.b16 %v5308
  %v5355 = vunpack.c.l.b16 %v5309
  %v5356 = vunpack.c.h.b16 %v5309
  %v5357 = vunpack.c.l.b16 %v5310
  %v5358 = vunpack.c.h.b16 %v5310
  %v5359 = vpack.c.b16 %v5329, %v5327
  %v5360 = vpack.c.b16 %v5330, %v5328
  %v5361 = vpack.c.b16 %v5333, %v5331
  %v5362 = vpack.c.b16 %v5334, %v5332
  %v5363 = vpack.c.b16 %v5337, %v5335
  %v5364 = vpack.c.b16 %v5338, %v5336
  %v5365 = vpack.c.b16 %v5341, %v5339
  %v5366 = vpack.c.b16 %v5342, %v5340
  %v5367 = vpack.c.b16 %v5345, %v5343
  %v5368 = vpack.c.b16 %v5346, %v5344
  %v5369 = vpack.c.b16 %v5349, %v5347
  %v5370 = vpack.c.b16 %v5350, %v5348
  %v5371 = vpack.c.b16 %v5353, %v5351
  %v5372 = vpack.c.b16 %v5354, %v5352
  %v5373 = vpack.c.b16 %v5357, %v5355
  %v5374 = vpack.c.b16 %v5358, %v5356
  %5383 = vrot.lane.b32.xlu0 %v4273, 86
  %v5384 = vpop.permute.xlu0 %5383
  %5385 = vrot.lane.b32.xlu0 %v4274, 86
  %v5386 = vpop.permute.xlu0 %5385
  %5387 = vrot.lane.b32.xlu0 %v4275, 86
  %v5388 = vpop.permute.xlu0 %5387
  %5389 = vrot.lane.b32.xlu0 %v4276, 86
  %v5390 = vpop.permute.xlu0 %5389
  %5391 = vrot.lane.b32.xlu0 %v4277, 86
  %v5392 = vpop.permute.xlu0 %5391
  %5393 = vrot.lane.b32.xlu0 %v4278, 86
  %v5394 = vpop.permute.xlu0 %5393
  %5395 = vrot.lane.b32.xlu0 %v4297, 86
  %v5396 = vpop.permute.xlu0 %5395
  %5397 = vrot.lane.b32.xlu0 %v4288, 86
  %v5398 = vpop.permute.xlu0 %5397
  %5399 = vrot.lane.b32.xlu0 %v4298, 86
  %v5400 = vpop.permute.xlu0 %5399
  %5401 = vrot.lane.b32.xlu0 %v4292, 86
  %v5402 = vpop.permute.xlu0 %5401
  %5403 = vrot.lane.b32.xlu0 %v4299, 86
  %v5404 = vpop.permute.xlu0 %5403
  %5405 = vrot.lane.b32.xlu0 %v4296, 86
  %v5406 = vpop.permute.xlu0 %5405
  %5407 = vrot.lane.b32.xlu0 %v4319, 86
  %v5408 = vpop.permute.xlu0 %5407
  %5409 = vrot.lane.b32.xlu0 %v4309, 86
  %v5410 = vpop.permute.xlu0 %5409
  %5411 = vrot.lane.b32.xlu0 %v4320, 86
  %v5412 = vpop.permute.xlu0 %5411
  %5413 = vrot.lane.b32.xlu0 %v4313, 86
  %v5414 = vpop.permute.xlu0 %5413
  %5415 = vrot.lane.b32.xlu0 %v4321, 86
  %v5416 = vpop.permute.xlu0 %5415
  %5417 = vrot.lane.b32.xlu0 %v4317, 86
  %v5418 = vpop.permute.xlu0 %5417
  %5419 = vrot.lane.b32.xlu0 %v4341, 86
  %v5420 = vpop.permute.xlu0 %5419
  %5421 = vrot.lane.b32.xlu0 %v4331, 86
  %v5422 = vpop.permute.xlu0 %5421
  %5423 = vrot.lane.b32.xlu0 %v4342, 86
  %v5424 = vpop.permute.xlu0 %5423
  %5425 = vrot.lane.b32.xlu0 %v4335, 86
  %v5426 = vpop.permute.xlu0 %5425
  %5427 = vrot.lane.b32.xlu0 %v4343, 86
  %v5428 = vpop.permute.xlu0 %5427
  %5429 = vrot.lane.b32.xlu0 %v4339, 86
  %v5430 = vpop.permute.xlu0 %5429
  %5431 = vrot.lane.b32.xlu0 %v4363, 86
  %v5432 = vpop.permute.xlu0 %5431
  %5433 = vrot.lane.b32.xlu0 %v4353, 86
  %v5434 = vpop.permute.xlu0 %5433
  %5435 = vrot.lane.b32.xlu0 %v4364, 86
  %v5436 = vpop.permute.xlu0 %5435
  %5437 = vrot.lane.b32.xlu0 %v4357, 86
  %v5438 = vpop.permute.xlu0 %5437
  %5439 = vrot.lane.b32.xlu0 %v4365, 86
  %v5440 = vpop.permute.xlu0 %5439
  %5441 = vrot.lane.b32.xlu0 %v4361, 86
  %v5442 = vpop.permute.xlu0 %5441
  %vm5443 = vcmask 703488
  %v5444 = vsel %vm5443, %v5384, %v5386
  %v5445 = vsel %vm5443, %v5388, %v5390
  %v5446 = vsel %vm5443, %v5392, %v5394
  %v5447 = vsel %vm5443, %v5396, %v5398
  %v5448 = vsel %vm5443, %v5400, %v5402
  %v5449 = vsel %vm5443, %v5404, %v5406
  %v5450 = vsel %vm5443, %v5408, %v5410
  %v5451 = vsel %vm5443, %v5412, %v5414
  %v5452 = vsel %vm5443, %v5416, %v5418
  %v5453 = vsel %vm5443, %v5420, %v5422
  %v5454 = vsel %vm5443, %v5424, %v5426
  %v5455 = vsel %vm5443, %v5428, %v5430
  %v5456 = vsel %vm5443, %v5432, %v5434
  %v5457 = vsel %vm5443, %v5436, %v5438
  %v5458 = vsel %vm5443, %v5440, %v5442
  %v5490 = vsel %vm4583, %v5360, 0
  %v5493 = vsel %vm4583, %v5362, 0
  %v5496 = vsel %vm4583, %v5364, 0
  %v5499 = vsel %vm4583, %v5366, 0
  %v5502 = vsel %vm4583, %v5368, 0
  %v5505 = vsel %vm4583, %v5370, 0
  %v5508 = vsel %vm4583, %v5372, 0
  %v5511 = vsel %vm4583, %v5374, 0
  %5513 = vmatprep.subr.bf16.mxu0 %v5386
  %5514 = vmatpush1.bf16.msra.mxu0 %v5444
  %5515 = vmatprep.subr.bf16.mxu0 %v5390
  %5516 = vmatpush1.bf16.msra.mxu0 %v5445
  %5517 = vmatprep.subr.bf16.mxu0 %v5394
  %5518 = vmatpush1.bf16.msra.mxu0 %v5446
  %5519 = vmatprep.subr.bf16.mxu0 %v5398
  %5520 = vmatpush1.bf16.msra.mxu0 %v5447
  %5521 = vmatprep.subr.bf16.mxu0 %v5402
  %5522 = vmatpush1.bf16.msra.mxu0 %v5448
  %5523 = vmatprep.subr.bf16.mxu0 %v5406
  %5524 = vmatpush1.bf16.msra.mxu0 %v5449
  %5525 = vmatprep.subr.bf16.mxu0 %v5410
  %5526 = vmatpush1.bf16.msra.mxu0 %v5450
  %5527 = vmatprep.subr.bf16.mxu0 %v5414
  %5528 = vmatpush1.bf16.msra.mxu0 %v5451
  %5529 = vmatprep.subr.bf16.mxu0 %v5418
  %5530 = vmatpush1.bf16.msra.mxu0 %v5452
  %5531 = vmatprep.subr.bf16.mxu0 %v5422
  %5532 = vmatpush1.bf16.msra.mxu0 %v5453
  %5533 = vmatprep.subr.bf16.mxu0 %v5426
  %5534 = vmatpush1.bf16.msra.mxu0 %v5454
  %5535 = vmatprep.subr.bf16.mxu0 %v5430
  %5536 = vmatpush1.bf16.msra.mxu0 %v5455
  %5537 = vmatprep.subr.bf16.mxu0 %v5434
  %5538 = vmatpush1.bf16.msra.mxu0 %v5456
  %5539 = vmatprep.subr.bf16.mxu0 %v5438
  %5540 = vmatpush1.bf16.msra.mxu0 %v5457
  %5541 = vmatprep.subr.bf16.mxu0 %v5442
  %5542 = vmatpush1.bf16.msra.mxu0 %v5458
  %5543 = vmatprep.subr.bf16.mxu0 0
  %5544 = vmatpush1.bf16.msra.mxu0 0
  %5545 = vmatprep.mubr.bf16.mxu0 %v5490
  %5546 = vmatmul.mubr.bf16.gmra.mrb[0].mxu0 %v5359
  %v5547 = vpop.f32.mrb[0].mxu0
  %v5548 = vadd.f32 0.0, %v5547
  %v5549 = vpop.f32.mrb[0].mxu0
  %v5550 = vadd.f32 0.0, %v5549
  %v5551 = vpop.f32.mrb[0].mxu0
  %v5552 = vadd.f32 0.0, %v5551
  %v5553 = vpop.f32.mrb[0].mxu0
  %v5554 = vadd.f32 0.0, %v5553
  %5555 = vmatprep.mubr.bf16.mxu0 %v5493
  %5556 = vmatmul.mubr.bf16.gmra.mrb[0].mxu0 %v5361
  %v5557 = vpop.f32.mrb[0].mxu0
  %v5558 = vadd.f32 0.0, %v5557
  %v5559 = vpop.f32.mrb[0].mxu0
  %v5560 = vadd.f32 0.0, %v5559
  %v5561 = vpop.f32.mrb[0].mxu0
  %v5562 = vadd.f32 0.0, %v5561
  %v5563 = vpop.f32.mrb[0].mxu0
  %v5564 = vadd.f32 0.0, %v5563
  %5565 = vmatprep.mubr.bf16.mxu0 %v5496
  %5566 = vmatmul.mubr.bf16.gmra.mrb[0].mxu0 %v5363
  %v5567 = vpop.f32.mrb[0].mxu0
  %v5568 = vadd.f32 0.0, %v5567
  %v5569 = vpop.f32.mrb[0].mxu0
  %v5570 = vadd.f32 0.0, %v5569
  %v5571 = vpop.f32.mrb[0].mxu0
  %v5572 = vadd.f32 0.0, %v5571
  %v5573 = vpop.f32.mrb[0].mxu0
  %v5574 = vadd.f32 0.0, %v5573
  %5575 = vmatprep.mubr.bf16.mxu0 %v5499
  %5576 = vmatmul.mubr.bf16.gmra.mrb[0].mxu0 %v5365
  %v5577 = vpop.f32.mrb[0].mxu0
  %v5578 = vadd.f32 0.0, %v5577
  %v5579 = vpop.f32.mrb[0].mxu0
  %v5580 = vadd.f32 0.0, %v5579
  %v5581 = vpop.f32.mrb[0].mxu0
  %v5582 = vadd.f32 0.0, %v5581
  %v5583 = vpop.f32.mrb[0].mxu0
  %v5584 = vadd.f32 0.0, %v5583
  %5585 = vmatprep.mubr.bf16.mxu0 %v5502
  %5586 = vmatmul.mubr.bf16.gmra.mrb[0].mxu0 %v5367
  %v5587 = vpop.f32.mrb[0].mxu0
  %v5588 = vadd.f32 0.0, %v5587
  %v5589 = vpop.f32.mrb[0].mxu0
  %v5590 = vadd.f32 0.0, %v5589
  %v5591 = vpop.f32.mrb[0].mxu0
  %v5592 = vadd.f32 0.0, %v5591
  %v5593 = vpop.f32.mrb[0].mxu0
  %v5594 = vadd.f32 0.0, %v5593
  %5595 = vmatprep.mubr.bf16.mxu0 %v5505
  %5596 = vmatmul.mubr.bf16.gmra.mrb[0].mxu0 %v5369
  %v5597 = vpop.f32.mrb[0].mxu0
  %v5598 = vadd.f32 0.0, %v5597
  %v5599 = vpop.f32.mrb[0].mxu0
  %v5600 = vadd.f32 0.0, %v5599
  %v5601 = vpop.f32.mrb[0].mxu0
  %v5602 = vadd.f32 0.0, %v5601
  %v5603 = vpop.f32.mrb[0].mxu0
  %v5604 = vadd.f32 0.0, %v5603
  %5605 = vmatprep.mubr.bf16.mxu0 %v5508
  %5606 = vmatmul.mubr.bf16.gmra.mrb[0].mxu0 %v5371
  %v5607 = vpop.f32.mrb[0].mxu0
  %v5608 = vadd.f32 0.0, %v5607
  %v5609 = vpop.f32.mrb[0].mxu0
  %v5610 = vadd.f32 0.0, %v5609
  %v5611 = vpop.f32.mrb[0].mxu0
  %v5612 = vadd.f32 0.0, %v5611
  %v5613 = vpop.f32.mrb[0].mxu0
  %v5614 = vadd.f32 0.0, %v5613
  %5615 = vmatprep.mubr.bf16.mxu0 %v5511
  %5616 = vmatmul.mubr.bf16.gmra.mrb[0].mxu0 %v5373
  %v5617 = vpop.f32.mrb[0].mxu0
  %v5618 = vadd.f32 0.0, %v5617
  %v5619 = vpop.f32.mrb[0].mxu0
  %v5620 = vadd.f32 0.0, %v5619
  %v5621 = vpop.f32.mrb[0].mxu0
  %v5622 = vadd.f32 0.0, %v5621
  %v5623 = vpop.f32.mrb[0].mxu0
  %v5624 = vadd.f32 0.0, %v5623
  %5625 = vdwg.mxu0
  %v5626 = vadd.f32 %v5262, %v5548
  %v5627 = vadd.f32 %v5263, %v5550
  %v5628 = vadd.f32 %v5264, %v5552
  %v5629 = vadd.f32 %v5265, %v5554
  %v5630 = vadd.f32 %v5266, %v5558
  %v5631 = vadd.f32 %v5267, %v5560
  %v5632 = vadd.f32 %v5268, %v5562
  %v5633 = vadd.f32 %v5269, %v5564
  %v5634 = vadd.f32 %v5270, %v5568
  %v5635 = vadd.f32 %v5271, %v5570
  %v5636 = vadd.f32 %v5272, %v5572
  %v5637 = vadd.f32 %v5273, %v5574
  %v5638 = vadd.f32 %v5274, %v5578
  %v5639 = vadd.f32 %v5275, %v5580
  %v5640 = vadd.f32 %v5276, %v5582
  %v5641 = vadd.f32 %v5277, %v5584
  %v5642 = vadd.f32 %v5278, %v5588
  %v5643 = vadd.f32 %v5279, %v5590
  %v5644 = vadd.f32 %v5280, %v5592
  %v5645 = vadd.f32 %v5281, %v5594
  %v5646 = vadd.f32 %v5282, %v5598
  %v5647 = vadd.f32 %v5283, %v5600
  %v5648 = vadd.f32 %v5284, %v5602
  %v5649 = vadd.f32 %v5285, %v5604
  %v5650 = vadd.f32 %v5286, %v5608
  %v5651 = vadd.f32 %v5287, %v5610
  %v5652 = vadd.f32 %v5288, %v5612
  %v5653 = vadd.f32 %v5289, %v5614
  %v5654 = vadd.f32 %v5290, %v5618
  %v5655 = vadd.f32 %v5291, %v5620
  %v5656 = vadd.f32 %v5292, %v5622
  %v5657 = vadd.f32 %v5293, %v5624
  %s5658 = scalar_lea.vmem %s4, 512
  %v5659 = vld [vmem:[%s5658] sm:$0xff]
  %v5660 = vld [vmem:[%s5658 + $0x8] sm:$0xff]
  %v5661 = vld [vmem:[%s5658 + $0x10] sm:$0xff]
  %v5662 = vld [vmem:[%s5658 + $0x18] sm:$0xff]
  %v5663 = vld [vmem:[%s5658 + $0x20] sm:$0xff]
  %v5664 = vld [vmem:[%s5658 + $0x28] sm:$0xff]
  %v5665 = vld [vmem:[%s5658 + $0x30] sm:$0xff]
  %v5666 = vld [vmem:[%s5658 + $0x38] sm:$0xff]
  %v5667 = vld [vmem:[%s5658 + $0x40] sm:$0xff]
  %v5668 = vld [vmem:[%s5658 + $0x48] sm:$0xff]
  %v5669 = vld [vmem:[%s5658 + $0x50] sm:$0xff]
  %v5670 = vld [vmem:[%s5658 + $0x58] sm:$0xff]
  %v5671 = vld [vmem:[%s5658 + $0x60] sm:$0xff]
  %v5672 = vld [vmem:[%s5658 + $0x68] sm:$0xff]
  %v5673 = vld [vmem:[%s5658 + $0x70] sm:$0xff]
  %v5674 = vld [vmem:[%s5658 + $0x78] sm:$0xff]
  %v5691 = vunpack.c.l.b16 %v5659
  %v5692 = vunpack.c.h.b16 %v5659
  %v5693 = vunpack.c.l.b16 %v5660
  %v5694 = vunpack.c.h.b16 %v5660
  %v5695 = vunpack.c.l.b16 %v5661
  %v5696 = vunpack.c.h.b16 %v5661
  %v5697 = vunpack.c.l.b16 %v5662
  %v5698 = vunpack.c.h.b16 %v5662
  %v5699 = vunpack.c.l.b16 %v5663
  %v5700 = vunpack.c.h.b16 %v5663
  %v5701 = vunpack.c.l.b16 %v5664
  %v5702 = vunpack.c.h.b16 %v5664
  %v5703 = vunpack.c.l.b16 %v5665
  %v5704 = vunpack.c.h.b16 %v5665
  %v5705 = vunpack.c.l.b16 %v5666
  %v5706 = vunpack.c.h.b16 %v5666
  %v5707 = vunpack.c.l.b16 %v5667
  %v5708 = vunpack.c.h.b16 %v5667
  %v5709 = vunpack.c.l.b16 %v5668
  %v5710 = vunpack.c.h.b16 %v5668
  %v5711 = vunpack.c.l.b16 %v5669
  %v5712 = vunpack.c.h.b16 %v5669
  %v5713 = vunpack.c.l.b16 %v5670
  %v5714 = vunpack.c.h.b16 %v5670
  %v5715 = vunpack.c.l.b16 %v5671
  %v5716 = vunpack.c.h.b16 %v5671
  %v5717 = vunpack.c.l.b16 %v5672
  %v5718 = vunpack.c.h.b16 %v5672
  %v5719 = vunpack.c.l.b16 %v5673
  %v5720 = vunpack.c.h.b16 %v5673
  %v5721 = vunpack.c.l.b16 %v5674
  %v5722 = vunpack.c.h.b16 %v5674
  %v5723 = vpack.c.b16 %v5693, %v5691
  %v5724 = vpack.c.b16 %v5694, %v5692
  %v5725 = vpack.c.b16 %v5697, %v5695
  %v5726 = vpack.c.b16 %v5698, %v5696
  %v5727 = vpack.c.b16 %v5701, %v5699
  %v5728 = vpack.c.b16 %v5702, %v5700
  %v5729 = vpack.c.b16 %v5705, %v5703
  %v5730 = vpack.c.b16 %v5706, %v5704
  %v5731 = vpack.c.b16 %v5709, %v5707
  %v5732 = vpack.c.b16 %v5710, %v5708
  %v5733 = vpack.c.b16 %v5713, %v5711
  %v5734 = vpack.c.b16 %v5714, %v5712
  %v5735 = vpack.c.b16 %v5717, %v5715
  %v5736 = vpack.c.b16 %v5718, %v5716
  %v5737 = vpack.c.b16 %v5721, %v5719
  %v5738 = vpack.c.b16 %v5722, %v5720
  %5747 = vrot.lane.b32.xlu0 %v4273, 72
  %v5748 = vpop.permute.xlu0 %5747
  %5749 = vrot.lane.b32.xlu0 %v4274, 72
  %v5750 = vpop.permute.xlu0 %5749
  %5751 = vrot.lane.b32.xlu0 %v4275, 72
  %v5752 = vpop.permute.xlu0 %5751
  %5753 = vrot.lane.b32.xlu0 %v4276, 72
  %v5754 = vpop.permute.xlu0 %5753
  %5755 = vrot.lane.b32.xlu0 %v4277, 72
  %v5756 = vpop.permute.xlu0 %5755
  %5757 = vrot.lane.b32.xlu0 %v4278, 72
  %v5758 = vpop.permute.xlu0 %5757
  %5759 = vrot.lane.b32.xlu0 %v4297, 72
  %v5760 = vpop.permute.xlu0 %5759
  %5761 = vrot.lane.b32.xlu0 %v4288, 72
  %v5762 = vpop.permute.xlu0 %5761
  %5763 = vrot.lane.b32.xlu0 %v4298, 72
  %v5764 = vpop.permute.xlu0 %5763
  %5765 = vrot.lane.b32.xlu0 %v4292, 72
  %v5766 = vpop.permute.xlu0 %5765
  %5767 = vrot.lane.b32.xlu0 %v4299, 72
  %v5768 = vpop.permute.xlu0 %5767
  %5769 = vrot.lane.b32.xlu0 %v4296, 72
  %v5770 = vpop.permute.xlu0 %5769
  %5771 = vrot.lane.b32.xlu0 %v4319, 72
  %v5772 = vpop.permute.xlu0 %5771
  %5773 = vrot.lane.b32.xlu0 %v4309, 72
  %v5774 = vpop.permute.xlu0 %5773
  %5775 = vrot.lane.b32.xlu0 %v4320, 72
  %v5776 = vpop.permute.xlu0 %5775
  %5777 = vrot.lane.b32.xlu0 %v4313, 72
  %v5778 = vpop.permute.xlu0 %5777
  %5779 = vrot.lane.b32.xlu0 %v4321, 72
  %v5780 = vpop.permute.xlu0 %5779
  %5781 = vrot.lane.b32.xlu0 %v4317, 72
  %v5782 = vpop.permute.xlu0 %5781
  %5783 = vrot.lane.b32.xlu0 %v4341, 72
  %v5784 = vpop.permute.xlu0 %5783
  %5785 = vrot.lane.b32.xlu0 %v4331, 72
  %v5786 = vpop.permute.xlu0 %5785
  %5787 = vrot.lane.b32.xlu0 %v4342, 72
  %v5788 = vpop.permute.xlu0 %5787
  %5789 = vrot.lane.b32.xlu0 %v4335, 72
  %v5790 = vpop.permute.xlu0 %5789
  %5791 = vrot.lane.b32.xlu0 %v4343, 72
  %v5792 = vpop.permute.xlu0 %5791
  %5793 = vrot.lane.b32.xlu0 %v4339, 72
  %v5794 = vpop.permute.xlu0 %5793
  %5795 = vrot.lane.b32.xlu0 %v4363, 72
  %v5796 = vpop.permute.xlu0 %5795
  %5797 = vrot.lane.b32.xlu0 %v4353, 72
  %v5798 = vpop.permute.xlu0 %5797
  %5799 = vrot.lane.b32.xlu0 %v4364, 72
  %v5800 = vpop.permute.xlu0 %5799
  %5801 = vrot.lane.b32.xlu0 %v4357, 72
  %v5802 = vpop.permute.xlu0 %5801
  %5803 = vrot.lane.b32.xlu0 %v4365, 72
  %v5804 = vpop.permute.xlu0 %5803
  %5805 = vrot.lane.b32.xlu0 %v4361, 72
  %v5806 = vpop.permute.xlu0 %5805
  %vm5807 = vcmask 588800
  %v5808 = vsel %vm5807, %v5748, %v5750
  %v5809 = vsel %vm5807, %v5752, %v5754
  %v5810 = vsel %vm5807, %v5756, %v5758
  %v5811 = vsel %vm5807, %v5760, %v5762
  %v5812 = vsel %vm5807, %v5764, %v5766
  %v5813 = vsel %vm5807, %v5768, %v5770
  %v5814 = vsel %vm5807, %v5772, %v5774
  %v5815 = vsel %vm5807, %v5776, %v5778
  %v5816 = vsel %vm5807, %v5780, %v5782
  %v5817 = vsel %vm5807, %v5784, %v5786
  %v5818 = vsel %vm5807, %v5788, %v5790
  %v5819 = vsel %vm5807, %v5792, %v5794
  %v5820 = vsel %vm5807, %v5796, %v5798
  %v5821 = vsel %vm5807, %v5800, %v5802
  %v5822 = vsel %vm5807, %v5804, %v5806
  %v5854 = vsel %vm4583, %v5724, 0
  %v5857 = vsel %vm4583, %v5726, 0
  %v5860 = vsel %vm4583, %v5728, 0
  %v5863 = vsel %vm4583, %v5730, 0
  %v5866 = vsel %vm4583, %v5732, 0
  %v5869 = vsel %vm4583, %v5734, 0
  %v5872 = vsel %vm4583, %v5736, 0
  %v5875 = vsel %vm4583, %v5738, 0
  %5877 = vmatprep.subr.bf16.mxu0 %v5750
  %5878 = vmatpush1.bf16.msra.mxu0 %v5808
  %5879 = vmatprep.subr.bf16.mxu0 %v5754
  %5880 = vmatpush1.bf16.msra.mxu0 %v5809
  %5881 = vmatprep.subr.bf16.mxu0 %v5758
  %5882 = vmatpush1.bf16.msra.mxu0 %v5810
  %5883 = vmatprep.subr.bf16.mxu0 %v5762
  %5884 = vmatpush1.bf16.msra.mxu0 %v5811
  %5885 = vmatprep.subr.bf16.mxu0 %v5766
  %5886 = vmatpush1.bf16.msra.mxu0 %v5812
  %5887 = vmatprep.subr.bf16.mxu0 %v5770
  %5888 = vmatpush1.bf16.msra.mxu0 %v5813
  %5889 = vmatprep.subr.bf16.mxu0 %v5774
  %5890 = vmatpush1.bf16.msra.mxu0 %v5814
  %5891 = vmatprep.subr.bf16.mxu0 %v5778
  %5892 = vmatpush1.bf16.msra.mxu0 %v5815
  %5893 = vmatprep.subr.bf16.mxu0 %v5782
  %5894 = vmatpush1.bf16.msra.mxu0 %v5816
  %5895 = vmatprep.subr.bf16.mxu0 %v5786
  %5896 = vmatpush1.bf16.msra.mxu0 %v5817
  %5897 = vmatprep.subr.bf16.mxu0 %v5790
  %5898 = vmatpush1.bf16.msra.mxu0 %v5818
  %5899 = vmatprep.subr.bf16.mxu0 %v5794
  %5900 = vmatpush1.bf16.msra.mxu0 %v5819
  %5901 = vmatprep.subr.bf16.mxu0 %v5798
  %5902 = vmatpush1.bf16.msra.mxu0 %v5820
  %5903 = vmatprep.subr.bf16.mxu0 %v5802
  %5904 = vmatpush1.bf16.msra.mxu0 %v5821
  %5905 = vmatprep.subr.bf16.mxu0 %v5806
  %5906 = vmatpush1.bf16.msra.mxu0 %v5822
  %5907 = vmatprep.subr.bf16.mxu0 0
  %5908 = vmatpush1.bf16.msra.mxu0 0
  %5909 = vmatprep.mubr.bf16.mxu0 %v5854
  %5910 = vmatmul.mubr.bf16.gmra.mrb[0].mxu0 %v5723
  %v5911 = vpop.f32.mrb[0].mxu0
  %v5912 = vadd.f32 0.0, %v5911
  %v5913 = vpop.f32.mrb[0].mxu0
  %v5914 = vadd.f32 0.0, %v5913
  %v5915 = vpop.f32.mrb[0].mxu0
  %v5916 = vadd.f32 0.0, %v5915
  %v5917 = vpop.f32.mrb[0].mxu0
  %v5918 = vadd.f32 0.0, %v5917
  %5919 = vmatprep.mubr.bf16.mxu0 %v5857
  %5920 = vmatmul.mubr.bf16.gmra.mrb[0].mxu0 %v5725
  %v5921 = vpop.f32.mrb[0].mxu0
  %v5922 = vadd.f32 0.0, %v5921
  %v5923 = vpop.f32.mrb[0].mxu0
  %v5924 = vadd.f32 0.0, %v5923
  %v5925 = vpop.f32.mrb[0].mxu0
  %v5926 = vadd.f32 0.0, %v5925
  %v5927 = vpop.f32.mrb[0].mxu0
  %v5928 = vadd.f32 0.0, %v5927
  %5929 = vmatprep.mubr.bf16.mxu0 %v5860
  %5930 = vmatmul.mubr.bf16.gmra.mrb[0].mxu0 %v5727
  %v5931 = vpop.f32.mrb[0].mxu0
  %v5932 = vadd.f32 0.0, %v5931
  %v5933 = vpop.f32.mrb[0].mxu0
  %v5934 = vadd.f32 0.0, %v5933
  %v5935 = vpop.f32.mrb[0].mxu0
  %v5936 = vadd.f32 0.0, %v5935
  %v5937 = vpop.f32.mrb[0].mxu0
  %v5938 = vadd.f32 0.0, %v5937
  %5939 = vmatprep.mubr.bf16.mxu0 %v5863
  %5940 = vmatmul.mubr.bf16.gmra.mrb[0].mxu0 %v5729
  %v5941 = vpop.f32.mrb[0].mxu0
  %v5942 = vadd.f32 0.0, %v5941
  %v5943 = vpop.f32.mrb[0].mxu0
  %v5944 = vadd.f32 0.0, %v5943
  %v5945 = vpop.f32.mrb[0].mxu0
  %v5946 = vadd.f32 0.0, %v5945
  %v5947 = vpop.f32.mrb[0].mxu0
  %v5948 = vadd.f32 0.0, %v5947
  %5949 = vmatprep.mubr.bf16.mxu0 %v5866
  %5950 = vmatmul.mubr.bf16.gmra.mrb[0].mxu0 %v5731
  %v5951 = vpop.f32.mrb[0].mxu0
  %v5952 = vadd.f32 0.0, %v5951
  %v5953 = vpop.f32.mrb[0].mxu0
  %v5954 = vadd.f32 0.0, %v5953
  %v5955 = vpop.f32.mrb[0].mxu0
  %v5956 = vadd.f32 0.0, %v5955
  %v5957 = vpop.f32.mrb[0].mxu0
  %v5958 = vadd.f32 0.0, %v5957
  %5959 = vmatprep.mubr.bf16.mxu0 %v5869
  %5960 = vmatmul.mubr.bf16.gmra.mrb[0].mxu0 %v5733
  %v5961 = vpop.f32.mrb[0].mxu0
  %v5962 = vadd.f32 0.0, %v5961
  %v5963 = vpop.f32.mrb[0].mxu0
  %v5964 = vadd.f32 0.0, %v5963
  %v5965 = vpop.f32.mrb[0].mxu0
  %v5966 = vadd.f32 0.0, %v5965
  %v5967 = vpop.f32.mrb[0].mxu0
  %v5968 = vadd.f32 0.0, %v5967
  %5969 = vmatprep.mubr.bf16.mxu0 %v5872
  %5970 = vmatmul.mubr.bf16.gmra.mrb[0].mxu0 %v5735
  %v5971 = vpop.f32.mrb[0].mxu0
  %v5972 = vadd.f32 0.0, %v5971
  %v5973 = vpop.f32.mrb[0].mxu0
  %v5974 = vadd.f32 0.0, %v5973
  %v5975 = vpop.f32.mrb[0].mxu0
  %v5976 = vadd.f32 0.0, %v5975
  %v5977 = vpop.f32.mrb[0].mxu0
  %v5978 = vadd.f32 0.0, %v5977
  %5979 = vmatprep.mubr.bf16.mxu0 %v5875
  %5980 = vmatmul.mubr.bf16.gmra.mrb[0].mxu0 %v5737
  %v5981 = vpop.f32.mrb[0].mxu0
  %v5982 = vadd.f32 0.0, %v5981
  %v5983 = vpop.f32.mrb[0].mxu0
  %v5984 = vadd.f32 0.0, %v5983
  %v5985 = vpop.f32.mrb[0].mxu0
  %v5986 = vadd.f32 0.0, %v5985
  %v5987 = vpop.f32.mrb[0].mxu0
  %v5988 = vadd.f32 0.0, %v5987
  %5989 = vdwg.mxu0
  %v5990 = vadd.f32 %v5626, %v5912
  %v5991 = vadd.f32 %v5627, %v5914
  %v5992 = vadd.f32 %v5628, %v5916
  %v5993 = vadd.f32 %v5629, %v5918
  %v5994 = vadd.f32 %v5630, %v5922
  %v5995 = vadd.f32 %v5631, %v5924
  %v5996 = vadd.f32 %v5632, %v5926
  %v5997 = vadd.f32 %v5633, %v5928
  %v5998 = vadd.f32 %v5634, %v5932
  %v5999 = vadd.f32 %v5635, %v5934
  %v6000 = vadd.f32 %v5636, %v5936
  %v6001 = vadd.f32 %v5637, %v5938
  %v6002 = vadd.f32 %v5638, %v5942
  %v6003 = vadd.f32 %v5639, %v5944
  %v6004 = vadd.f32 %v5640, %v5946
  %v6005 = vadd.f32 %v5641, %v5948
  %v6006 = vadd.f32 %v5642, %v5952
  %v6007 = vadd.f32 %v5643, %v5954
  %v6008 = vadd.f32 %v5644, %v5956
  %v6009 = vadd.f32 %v5645, %v5958
  %v6010 = vadd.f32 %v5646, %v5962
  %v6011 = vadd.f32 %v5647, %v5964
  %v6012 = vadd.f32 %v5648, %v5966
  %v6013 = vadd.f32 %v5649, %v5968
  %v6014 = vadd.f32 %v5650, %v5972
  %v6015 = vadd.f32 %v5651, %v5974
  %v6016 = vadd.f32 %v5652, %v5976
  %v6017 = vadd.f32 %v5653, %v5978
  %v6018 = vadd.f32 %v5654, %v5982
  %v6019 = vadd.f32 %v5655, %v5984
  %v6020 = vadd.f32 %v5656, %v5986
  %v6021 = vadd.f32 %v5657, %v5988
  %v6022 = vld [vmem:[%s5] sm:$0xff]
  %v6023 = vld [vmem:[%s5 + $0x8] sm:$0xff]
  %v6024 = vld [vmem:[%s5 + $0x10] sm:$0xff]
  %v6025 = vld [vmem:[%s5 + $0x18] sm:$0xff]
  %v6026 = vld [vmem:[%s5 + $0x20] sm:$0xff]
  %v6027 = vld [vmem:[%s5 + $0x28] sm:$0xff]
  %v6028 = vld [vmem:[%s5 + $0x30] sm:$0xff]
  %v6029 = vld [vmem:[%s5 + $0x38] sm:$0xff]
  %v6030 = vld [vmem:[%s5 + $0x40] sm:$0xff]
  %v6031 = vld [vmem:[%s5 + $0x48] sm:$0xff]
  %v6032 = vld [vmem:[%s5 + $0x50] sm:$0xff]
  %v6033 = vld [vmem:[%s5 + $0x58] sm:$0xff]
  %v6034 = vld [vmem:[%s5 + $0x60] sm:$0xff]
  %v6035 = vld [vmem:[%s5 + $0x68] sm:$0xff]
  %v6036 = vld [vmem:[%s5 + $0x70] sm:$0xff]
  %v6037 = vld [vmem:[%s5 + $0x78] sm:$0xff]
  %6039 = vset.pattern.permute.xlu0 0
  %6040 = vperm.xlu0 %6039, %v6022
  %v6041 = vpop.permute.xlu0 %6040
  %6044 = vset.pattern.permute.xlu0 0
  %6045 = vperm.xlu0 %6044, %v6023
  %v6046 = vpop.permute.xlu0 %6045
  %6049 = vset.pattern.permute.xlu0 0
  %6050 = vperm.xlu0 %6049, %v6024
  %v6051 = vpop.permute.xlu0 %6050
  %6054 = vset.pattern.permute.xlu0 0
  %6055 = vperm.xlu0 %6054, %v6025
  %v6056 = vpop.permute.xlu0 %6055
  %6059 = vset.pattern.permute.xlu0 0
  %6060 = vperm.xlu0 %6059, %v6026
  %v6061 = vpop.permute.xlu0 %6060
  %6064 = vset.pattern.permute.xlu0 0
  %6065 = vperm.xlu0 %6064, %v6027
  %v6066 = vpop.permute.xlu0 %6065
  %6069 = vset.pattern.permute.xlu0 0
  %6070 = vperm.xlu0 %6069, %v6028
  %v6071 = vpop.permute.xlu0 %6070
  %6074 = vset.pattern.permute.xlu0 0
  %6075 = vperm.xlu0 %6074, %v6029
  %v6076 = vpop.permute.xlu0 %6075
  %6079 = vset.pattern.permute.xlu0 0
  %6080 = vperm.xlu0 %6079, %v6030
  %v6081 = vpop.permute.xlu0 %6080
  %6084 = vset.pattern.permute.xlu0 0
  %6085 = vperm.xlu0 %6084, %v6031
  %v6086 = vpop.permute.xlu0 %6085
  %6089 = vset.pattern.permute.xlu0 0
  %6090 = vperm.xlu0 %6089, %v6032
  %v6091 = vpop.permute.xlu0 %6090
  %6094 = vset.pattern.permute.xlu0 0
  %6095 = vperm.xlu0 %6094, %v6033
  %v6096 = vpop.permute.xlu0 %6095
  %6099 = vset.pattern.permute.xlu0 0
  %6100 = vperm.xlu0 %6099, %v6034
  %v6101 = vpop.permute.xlu0 %6100
  %6104 = vset.pattern.permute.xlu0 0
  %6105 = vperm.xlu0 %6104, %v6035
  %v6106 = vpop.permute.xlu0 %6105
  %6109 = vset.pattern.permute.xlu0 0
  %6110 = vperm.xlu0 %6109, %v6036
  %v6111 = vpop.permute.xlu0 %6110
  %6114 = vset.pattern.permute.xlu0 0
  %6115 = vperm.xlu0 %6114, %v6037
  %v6116 = vpop.permute.xlu0 %6115
  %v6118 = vadd.f32 %v5990, %v6041
  %v6119 = vadd.f32 %v5991, %v6041
  %v6120 = vadd.f32 %v5992, %v6046
  %v6121 = vadd.f32 %v5993, %v6046
  %v6122 = vadd.f32 %v5994, %v6051
  %v6123 = vadd.f32 %v5995, %v6051
  %v6124 = vadd.f32 %v5996, %v6056
  %v6125 = vadd.f32 %v5997, %v6056
  %v6126 = vadd.f32 %v5998, %v6061
  %v6127 = vadd.f32 %v5999, %v6061
  %v6128 = vadd.f32 %v6000, %v6066
  %v6129 = vadd.f32 %v6001, %v6066
  %v6130 = vadd.f32 %v6002, %v6071
  %v6131 = vadd.f32 %v6003, %v6071
  %v6132 = vadd.f32 %v6004, %v6076
  %v6133 = vadd.f32 %v6005, %v6076
  %v6134 = vadd.f32 %v6006, %v6081
  %v6135 = vadd.f32 %v6007, %v6081
  %v6136 = vadd.f32 %v6008, %v6086
  %v6137 = vadd.f32 %v6009, %v6086
  %v6138 = vadd.f32 %v6010, %v6091
  %v6139 = vadd.f32 %v6011, %v6091
  %v6140 = vadd.f32 %v6012, %v6096
  %v6141 = vadd.f32 %v6013, %v6096
  %v6142 = vadd.f32 %v6014, %v6101
  %v6143 = vadd.f32 %v6015, %v6101
  %v6144 = vadd.f32 %v6016, %v6106
  %v6145 = vadd.f32 %v6017, %v6106
  %v6146 = vadd.f32 %v6018, %v6111
  %v6147 = vadd.f32 %v6019, %v6111
  %v6148 = vadd.f32 %v6020, %v6116
  %v6149 = vadd.f32 %v6021, %v6116
  %v6150 = vmax.f32 %v6118, 0.0
  %v6151 = vmax.f32 %v6119, 0.0
  %v6152 = vmax.f32 %v6120, 0.0
  %v6153 = vmax.f32 %v6121, 0.0
  %v6154 = vmax.f32 %v6122, 0.0
  %v6155 = vmax.f32 %v6123, 0.0
  %v6156 = vmax.f32 %v6124, 0.0
  %v6157 = vmax.f32 %v6125, 0.0
  %v6158 = vmax.f32 %v6126, 0.0
  %v6159 = vmax.f32 %v6127, 0.0
  %v6160 = vmax.f32 %v6128, 0.0
  %v6161 = vmax.f32 %v6129, 0.0
  %v6162 = vmax.f32 %v6130, 0.0
  %v6163 = vmax.f32 %v6131, 0.0
  %v6164 = vmax.f32 %v6132, 0.0
  %v6165 = vmax.f32 %v6133, 0.0
  %v6166 = vmax.f32 %v6134, 0.0
  %v6167 = vmax.f32 %v6135, 0.0
  %v6168 = vmax.f32 %v6136, 0.0
  %v6169 = vmax.f32 %v6137, 0.0
  %v6170 = vmax.f32 %v6138, 0.0
  %v6171 = vmax.f32 %v6139, 0.0
  %v6172 = vmax.f32 %v6140, 0.0
  %v6173 = vmax.f32 %v6141, 0.0
  %v6174 = vmax.f32 %v6142, 0.0
  %v6175 = vmax.f32 %v6143, 0.0
  %v6176 = vmax.f32 %v6144, 0.0
  %v6177 = vmax.f32 %v6145, 0.0
  %v6178 = vmax.f32 %v6146, 0.0
  %v6179 = vmax.f32 %v6147, 0.0
  %v6180 = vmax.f32 %v6148, 0.0
  %v6181 = vmax.f32 %v6149, 0.0
  %v6182 = vpack.c.bf16 %v6152, %v6150
  %v6183 = vpack.c.bf16 %v6153, %v6151
  %v6184 = vpack.c.bf16 %v6156, %v6154
  %v6185 = vpack.c.bf16 %v6157, %v6155
  %v6186 = vpack.c.bf16 %v6160, %v6158
  %v6187 = vpack.c.bf16 %v6161, %v6159
  %v6188 = vpack.c.bf16 %v6164, %v6162
  %v6189 = vpack.c.bf16 %v6165, %v6163
  %v6190 = vpack.c.bf16 %v6168, %v6166
  %v6191 = vpack.c.bf16 %v6169, %v6167
  %v6192 = vpack.c.bf16 %v6172, %v6170
  %v6193 = vpack.c.bf16 %v6173, %v6171
  %v6194 = vpack.c.bf16 %v6176, %v6174
  %v6195 = vpack.c.bf16 %v6177, %v6175
  %v6196 = vpack.c.bf16 %v6180, %v6178
  %v6197 = vpack.c.bf16 %v6181, %v6179
  %6214 = vrot.lane.b32.xlu0 %v6182, 127
  %v6215 = vpop.permute.xlu0 %6214
  %6216 = vrot.lane.b32.xlu0 %v6183, 127
  %v6217 = vpop.permute.xlu0 %6216
  %6218 = vrot.lane.b32.xlu0 %v6184, 127
  %v6219 = vpop.permute.xlu0 %6218
  %6220 = vrot.lane.b32.xlu0 %v6185, 127
  %v6221 = vpop.permute.xlu0 %6220
  %6222 = vrot.lane.b32.xlu0 %v6186, 127
  %v6223 = vpop.permute.xlu0 %6222
  %6224 = vrot.lane.b32.xlu0 %v6187, 127
  %v6225 = vpop.permute.xlu0 %6224
  %6226 = vrot.lane.b32.xlu0 %v6188, 127
  %v6227 = vpop.permute.xlu0 %6226
  %6228 = vrot.lane.b32.xlu0 %v6189, 127
  %v6229 = vpop.permute.xlu0 %6228
  %6230 = vrot.lane.b32.xlu0 %v6190, 127
  %v6231 = vpop.permute.xlu0 %6230
  %6232 = vrot.lane.b32.xlu0 %v6191, 127
  %v6233 = vpop.permute.xlu0 %6232
  %6234 = vrot.lane.b32.xlu0 %v6192, 127
  %v6235 = vpop.permute.xlu0 %6234
  %6236 = vrot.lane.b32.xlu0 %v6193, 127
  %v6237 = vpop.permute.xlu0 %6236
  %6238 = vrot.lane.b32.xlu0 %v6194, 127
  %v6239 = vpop.permute.xlu0 %6238
  %6240 = vrot.lane.b32.xlu0 %v6195, 127
  %v6241 = vpop.permute.xlu0 %6240
  %6242 = vrot.lane.b32.xlu0 %v6196, 127
  %v6243 = vpop.permute.xlu0 %6242
  %6244 = vrot.lane.b32.xlu0 %v6197, 127
  %v6245 = vpop.permute.xlu0 %6244
  %v6246 = vsel %vm3144, %v6215, %v6217
  %v6247 = vsel %vm3144, %v6219, %v6221
  %v6248 = vsel %vm3144, %v6223, %v6225
  %v6249 = vsel %vm3144, %v6227, %v6229
  %v6250 = vsel %vm3144, %v6231, %v6233
  %v6251 = vsel %vm3144, %v6235, %v6237
  %v6252 = vsel %vm3144, %v6239, %v6241
  %v6253 = vsel %vm3144, %v6243, %v6245
  %v6262 = vmax.bf16 %v6182, %v6246
  %v6263 = vmax.bf16 %v6184, %v6247
  %v6264 = vmax.bf16 %v6186, %v6248
  %v6265 = vmax.bf16 %v6188, %v6249
  %v6266 = vmax.bf16 %v6190, %v6250
  %v6267 = vmax.bf16 %v6192, %v6251
  %v6268 = vmax.bf16 %v6194, %v6252
  %v6269 = vmax.bf16 %v6196, %v6253
  %v6278 = vmax.bf16 %v6183, %v6217
  %v6279 = vmax.bf16 %v6185, %v6221
  %v6280 = vmax.bf16 %v6187, %v6225
  %v6281 = vmax.bf16 %v6189, %v6229
  %v6282 = vmax.bf16 %v6191, %v6233
  %v6283 = vmax.bf16 %v6193, %v6237
  %v6284 = vmax.bf16 %v6195, %v6241
  %v6285 = vmax.bf16 %v6197, %v6245
  %6302 = vrot.lane.b32.xlu0 %v6262, 114
  %v6303 = vpop.permute.xlu0 %6302
  %6304 = vrot.lane.b32.xlu0 %v6278, 114
  %v6305 = vpop.permute.xlu0 %6304
  %6306 = vrot.lane.b32.xlu0 %v6263, 114
  %v6307 = vpop.permute.xlu0 %6306
  %6308 = vrot.lane.b32.xlu0 %v6279, 114
  %v6309 = vpop.permute.xlu0 %6308
  %6310 = vrot.lane.b32.xlu0 %v6264, 114
  %v6311 = vpop.permute.xlu0 %6310
  %6312 = vrot.lane.b32.xlu0 %v6280, 114
  %v6313 = vpop.permute.xlu0 %6312
  %6314 = vrot.lane.b32.xlu0 %v6265, 114
  %v6315 = vpop.permute.xlu0 %6314
  %6316 = vrot.lane.b32.xlu0 %v6281, 114
  %v6317 = vpop.permute.xlu0 %6316
  %6318 = vrot.lane.b32.xlu0 %v6266, 114
  %v6319 = vpop.permute.xlu0 %6318
  %6320 = vrot.lane.b32.xlu0 %v6282, 114
  %v6321 = vpop.permute.xlu0 %6320
  %6322 = vrot.lane.b32.xlu0 %v6267, 114
  %v6323 = vpop.permute.xlu0 %6322
  %6324 = vrot.lane.b32.xlu0 %v6283, 114
  %v6325 = vpop.permute.xlu0 %6324
  %6326 = vrot.lane.b32.xlu0 %v6268, 114
  %v6327 = vpop.permute.xlu0 %6326
  %6328 = vrot.lane.b32.xlu0 %v6284, 114
  %v6329 = vpop.permute.xlu0 %6328
  %6330 = vrot.lane.b32.xlu0 %v6269, 114
  %v6331 = vpop.permute.xlu0 %6330
  %6332 = vrot.lane.b32.xlu0 %v6285, 114
  %v6333 = vpop.permute.xlu0 %6332
  %v6334 = vsel %vm4537, %v6303, %v6305
  %v6335 = vsel %vm4537, %v6307, %v6309
  %v6336 = vsel %vm4537, %v6311, %v6313
  %v6337 = vsel %vm4537, %v6315, %v6317
  %v6338 = vsel %vm4537, %v6319, %v6321
  %v6339 = vsel %vm4537, %v6323, %v6325
  %v6340 = vsel %vm4537, %v6327, %v6329
  %v6341 = vsel %vm4537, %v6331, %v6333
  %v6350 = vmax.bf16 %v6262, %v6334
  %v6351 = vmax.bf16 %v6263, %v6335
  %v6352 = vmax.bf16 %v6264, %v6336
  %v6353 = vmax.bf16 %v6265, %v6337
  %v6354 = vmax.bf16 %v6266, %v6338
  %v6355 = vmax.bf16 %v6267, %v6339
  %v6356 = vmax.bf16 %v6268, %v6340
  %v6357 = vmax.bf16 %v6269, %v6341
  %v6358 = vld [vmem:[%s6] sm:$0xf]
  %v6359 = vld [vmem:[%s6 + $0x4] sm:$0xf]
  %v6360 = vld [vmem:[%s6 + $0x8] sm:$0xf]
  %v6361 = vld [vmem:[%s6 + $0xc] sm:$0xf]
  %v6362 = vld [vmem:[%s6 + $0x10] sm:$0xf]
  %v6363 = vld [vmem:[%s6 + $0x14] sm:$0xf]
  %v6364 = vld [vmem:[%s6 + $0x18] sm:$0xf]
  %v6365 = vld [vmem:[%s6 + $0x1c] sm:$0xf]
  %v6366 = vld [vmem:[%s6 + $0x20] sm:$0xf]
  %v6367 = vld [vmem:[%s6 + $0x24] sm:$0xf]
  %v6368 = vld [vmem:[%s6 + $0x28] sm:$0xf]
  %v6369 = vld [vmem:[%s6 + $0x2c] sm:$0xf]
  %v6370 = vld [vmem:[%s6 + $0x30] sm:$0xf]
  %v6371 = vld [vmem:[%s6 + $0x34] sm:$0xf]
  %v6372 = vld [vmem:[%s6 + $0x38] sm:$0xf]
  %v6373 = vld [vmem:[%s6 + $0x3c] sm:$0xf]
  %s6374 = scalar_lea.vmem %s6, 64
  %v6375 = vld [vmem:[%s6374] sm:$0xf]
  %v6376 = vld [vmem:[%s6374 + $0x4] sm:$0xf]
  %v6377 = vld [vmem:[%s6374 + $0x8] sm:$0xf]
  %v6378 = vld [vmem:[%s6374 + $0xc] sm:$0xf]
  %v6379 = vld [vmem:[%s6374 + $0x10] sm:$0xf]
  %v6380 = vld [vmem:[%s6374 + $0x14] sm:$0xf]
  %v6381 = vld [vmem:[%s6374 + $0x18] sm:$0xf]
  %v6382 = vld [vmem:[%s6374 + $0x1c] sm:$0xf]
  %v6383 = vld [vmem:[%s6374 + $0x20] sm:$0xf]
  %v6384 = vld [vmem:[%s6374 + $0x24] sm:$0xf]
  %v6385 = vld [vmem:[%s6374 + $0x28] sm:$0xf]
  %v6386 = vld [vmem:[%s6374 + $0x2c] sm:$0xf]
  %v6387 = vld [vmem:[%s6374 + $0x30] sm:$0xf]
  %v6388 = vld [vmem:[%s6374 + $0x34] sm:$0xf]
  %v6389 = vld [vmem:[%s6374 + $0x38] sm:$0xf]
  %v6390 = vld [vmem:[%s6374 + $0x3c] sm:$0xf]
  %v6392 = vrot.slane %v6350, 4
  %v6410 = vunpack.c.l.b16 %v6375
  %v6411 = vunpack.c.l.b16 %v6376
  %v6412 = vunpack.c.l.b16 %v6377
  %v6413 = vunpack.c.l.b16 %v6378
  %v6414 = vunpack.c.l.b16 %v6379
  %v6415 = vunpack.c.l.b16 %v6380
  %v6416 = vunpack.c.l.b16 %v6381
  %v6417 = vunpack.c.l.b16 %v6382
  %v6418 = vunpack.c.l.b16 %v6383
  %v6419 = vunpack.c.l.b16 %v6384
  %v6420 = vunpack.c.l.b16 %v6385
  %v6421 = vunpack.c.l.b16 %v6386
  %v6422 = vunpack.c.l.b16 %v6387
  %v6423 = vunpack.c.l.b16 %v6388
  %v6424 = vunpack.c.l.b16 %v6389
  %v6425 = vunpack.c.l.b16 %v6390
  %v6426 = vpack.c.b16 %v6411, %v6410
  %v6427 = vpack.c.b16 %v6413, %v6412
  %v6428 = vpack.c.b16 %v6415, %v6414
  %v6429 = vpack.c.b16 %v6417, %v6416
  %v6430 = vpack.c.b16 %v6419, %v6418
  %v6431 = vpack.c.b16 %v6421, %v6420
  %v6432 = vpack.c.b16 %v6423, %v6422
  %v6433 = vpack.c.b16 %v6425, %v6424
  %6442 = vmatprep.subr.bf16.mxu0 0
  %6443 = vmatpush1.bf16.msra.mxu0 %v6426
  %6444 = vmatprep.subr.bf16.mxu0 0
  %6445 = vmatpush1.bf16.msra.mxu0 %v6427
  %6446 = vmatprep.subr.bf16.mxu0 0
  %6447 = vmatpush1.bf16.msra.mxu0 %v6428
  %6448 = vmatprep.subr.bf16.mxu0 0
  %6449 = vmatpush1.bf16.msra.mxu0 %v6429
  %6450 = vmatprep.subr.bf16.mxu0 0
  %6451 = vmatpush1.bf16.msra.mxu0 %v6430
  %6452 = vmatprep.subr.bf16.mxu0 0
  %6453 = vmatpush1.bf16.msra.mxu0 %v6431
  %6454 = vmatprep.subr.bf16.mxu0 0
  %6455 = vmatpush1.bf16.msra.mxu0 %v6432
  %6456 = vmatprep.subr.bf16.mxu0 0
  %6457 = vmatpush1.bf16.msra.mxu0 %v6433
  %6458 = vmatprep.subr.bf16.mxu0 0
  %6459 = vmatpush1.bf16.msra.mxu0 0
  %6460 = vmatprep.subr.bf16.mxu0 0
  %6461 = vmatpush1.bf16.msra.mxu0 0
  %6462 = vmatprep.subr.bf16.mxu0 0
  %6463 = vmatpush1.bf16.msra.mxu0 0
  %6464 = vmatprep.subr.bf16.mxu0 0
  %6465 = vmatpush1.bf16.msra.mxu0 0
  %6466 = vmatprep.subr.bf16.mxu0 0
  %6467 = vmatpush1.bf16.msra.mxu0 0
  %6468 = vmatprep.subr.bf16.mxu0 0
  %6469 = vmatpush1.bf16.msra.mxu0 0
  %6470 = vmatprep.subr.bf16.mxu0 0
  %6471 = vmatpush1.bf16.msra.mxu0 0
  %6472 = vmatprep.subr.bf16.mxu0 0
  %6473 = vmatpush1.bf16.msra.mxu0 0
  %6474 = vmatprep.mubr.bf16.mxu0 0
  %6475 = vmatmul.mubr.bf16.gmra.mrb[0].mxu0 %v6392
  %v6476 = vpop.f32.mrb[0].mxu0
  %v6477 = vadd.f32 0.0, %v6476
  %v6478 = vpop.f32.mrb[0].mxu0
  %v6479 = vpop.f32.mrb[0].mxu0
  %v6480 = vpop.f32.mrb[0].mxu0
  %6481 = vdwg.mxu0
  %v6498 = vunpack.c.l.b16 %v6358
  %v6499 = vunpack.c.l.b16 %v6359
  %v6500 = vunpack.c.l.b16 %v6360
  %v6501 = vunpack.c.l.b16 %v6361
  %v6502 = vunpack.c.l.b16 %v6362
  %v6503 = vunpack.c.l.b16 %v6363
  %v6504 = vunpack.c.l.b16 %v6364
  %v6505 = vunpack.c.l.b16 %v6365
  %v6506 = vunpack.c.l.b16 %v6366
  %v6507 = vunpack.c.l.b16 %v6367
  %v6508 = vunpack.c.l.b16 %v6368
  %v6509 = vunpack.c.l.b16 %v6369
  %v6510 = vunpack.c.l.b16 %v6370
  %v6511 = vunpack.c.l.b16 %v6371
  %v6512 = vunpack.c.l.b16 %v6372
  %v6513 = vunpack.c.l.b16 %v6373
  %v6514 = vpack.c.b16 %v6499, %v6498
  %v6515 = vpack.c.b16 %v6501, %v6500
  %v6516 = vpack.c.b16 %v6503, %v6502
  %v6517 = vpack.c.b16 %v6505, %v6504
  %v6518 = vpack.c.b16 %v6507, %v6506
  %v6519 = vpack.c.b16 %v6509, %v6508
  %v6520 = vpack.c.b16 %v6511, %v6510
  %v6521 = vpack.c.b16 %v6513, %v6512
  %6530 = vmatprep.subr.bf16.mxu0 0
  %6531 = vmatpush1.bf16.msra.mxu0 %v6514
  %6532 = vmatprep.subr.bf16.mxu0 0
  %6533 = vmatpush1.bf16.msra.mxu0 %v6515
  %6534 = vmatprep.subr.bf16.mxu0 0
  %6535 = vmatpush1.bf16.msra.mxu0 %v6516
  %6536 = vmatprep.subr.bf16.mxu0 0
  %6537 = vmatpush1.bf16.msra.mxu0 %v6517
  %6538 = vmatprep.subr.bf16.mxu0 0
  %6539 = vmatpush1.bf16.msra.mxu0 %v6518
  %6540 = vmatprep.subr.bf16.mxu0 0
  %6541 = vmatpush1.bf16.msra.mxu0 %v6519
  %6542 = vmatprep.subr.bf16.mxu0 0
  %6543 = vmatpush1.bf16.msra.mxu0 %v6520
  %6544 = vmatprep.subr.bf16.mxu0 0
  %6545 = vmatpush1.bf16.msra.mxu0 %v6521
  %6546 = vmatprep.subr.bf16.mxu0 0
  %6547 = vmatpush1.bf16.msra.mxu0 0
  %6548 = vmatprep.subr.bf16.mxu0 0
  %6549 = vmatpush1.bf16.msra.mxu0 0
  %6550 = vmatprep.subr.bf16.mxu0 0
  %6551 = vmatpush1.bf16.msra.mxu0 0
  %6552 = vmatprep.subr.bf16.mxu0 0
  %6553 = vmatpush1.bf16.msra.mxu0 0
  %6554 = vmatprep.subr.bf16.mxu0 0
  %6555 = vmatpush1.bf16.msra.mxu0 0
  %6556 = vmatprep.subr.bf16.mxu0 0
  %6557 = vmatpush1.bf16.msra.mxu0 0
  %6558 = vmatprep.subr.bf16.mxu0 0
  %6559 = vmatpush1.bf16.msra.mxu0 0
  %6560 = vmatprep.subr.bf16.mxu0 0
  %6561 = vmatpush1.bf16.msra.mxu0 0
  %6562 = vmatprep.mubr.bf16.mxu0 0
  %6563 = vmatmul.mubr.bf16.gmra.mrb[0].mxu0 %v6350
  %v6564 = vpop.f32.mrb[0].mxu0
  %v6565 = vadd.f32 %v6477, %v6564
  %v6566 = vpop.f32.mrb[0].mxu0
  %v6567 = vpop.f32.mrb[0].mxu0
  %v6568 = vpop.f32.mrb[0].mxu0
  %6569 = vdwg.mxu0
  %s6570 = scalar_lea.vmem %s6, 128
  %v6571 = vld [vmem:[%s6570] sm:$0xf]
  %v6572 = vld [vmem:[%s6570 + $0x4] sm:$0xf]
  %v6573 = vld [vmem:[%s6570 + $0x8] sm:$0xf]
  %v6574 = vld [vmem:[%s6570 + $0xc] sm:$0xf]
  %v6575 = vld [vmem:[%s6570 + $0x10] sm:$0xf]
  %v6576 = vld [vmem:[%s6570 + $0x14] sm:$0xf]
  %v6577 = vld [vmem:[%s6570 + $0x18] sm:$0xf]
  %v6578 = vld [vmem:[%s6570 + $0x1c] sm:$0xf]
  %v6579 = vld [vmem:[%s6570 + $0x20] sm:$0xf]
  %v6580 = vld [vmem:[%s6570 + $0x24] sm:$0xf]
  %v6581 = vld [vmem:[%s6570 + $0x28] sm:$0xf]
  %v6582 = vld [vmem:[%s6570 + $0x2c] sm:$0xf]
  %v6583 = vld [vmem:[%s6570 + $0x30] sm:$0xf]
  %v6584 = vld [vmem:[%s6570 + $0x34] sm:$0xf]
  %v6585 = vld [vmem:[%s6570 + $0x38] sm:$0xf]
  %v6586 = vld [vmem:[%s6570 + $0x3c] sm:$0xf]
  %v6603 = vunpack.c.l.b16 %v6571
  %v6604 = vunpack.c.l.b16 %v6572
  %v6605 = vunpack.c.l.b16 %v6573
  %v6606 = vunpack.c.l.b16 %v6574
  %v6607 = vunpack.c.l.b16 %v6575
  %v6608 = vunpack.c.l.b16 %v6576
  %v6609 = vunpack.c.l.b16 %v6577
  %v6610 = vunpack.c.l.b16 %v6578
  %v6611 = vunpack.c.l.b16 %v6579
  %v6612 = vunpack.c.l.b16 %v6580
  %v6613 = vunpack.c.l.b16 %v6581
  %v6614 = vunpack.c.l.b16 %v6582
  %v6615 = vunpack.c.l.b16 %v6583
  %v6616 = vunpack.c.l.b16 %v6584
  %v6617 = vunpack.c.l.b16 %v6585
  %v6618 = vunpack.c.l.b16 %v6586
  %v6619 = vpack.c.b16 %v6604, %v6603
  %v6620 = vpack.c.b16 %v6606, %v6605
  %v6621 = vpack.c.b16 %v6608, %v6607
  %v6622 = vpack.c.b16 %v6610, %v6609
  %v6623 = vpack.c.b16 %v6612, %v6611
  %v6624 = vpack.c.b16 %v6614, %v6613
  %v6625 = vpack.c.b16 %v6616, %v6615
  %v6626 = vpack.c.b16 %v6618, %v6617
  %6635 = vmatprep.subr.bf16.mxu0 0
  %6636 = vmatpush1.bf16.msra.mxu0 %v6619
  %6637 = vmatprep.subr.bf16.mxu0 0
  %6638 = vmatpush1.bf16.msra.mxu0 %v6620
  %6639 = vmatprep.subr.bf16.mxu0 0
  %6640 = vmatpush1.bf16.msra.mxu0 %v6621
  %6641 = vmatprep.subr.bf16.mxu0 0
  %6642 = vmatpush1.bf16.msra.mxu0 %v6622
  %6643 = vmatprep.subr.bf16.mxu0 0
  %6644 = vmatpush1.bf16.msra.mxu0 %v6623
  %6645 = vmatprep.subr.bf16.mxu0 0
  %6646 = vmatpush1.bf16.msra.mxu0 %v6624
  %6647 = vmatprep.subr.bf16.mxu0 0
  %6648 = vmatpush1.bf16.msra.mxu0 %v6625
  %6649 = vmatprep.subr.bf16.mxu0 0
  %6650 = vmatpush1.bf16.msra.mxu0 %v6626
  %6651 = vmatprep.subr.bf16.mxu0 0
  %6652 = vmatpush1.bf16.msra.mxu0 0
  %6653 = vmatprep.subr.bf16.mxu0 0
  %6654 = vmatpush1.bf16.msra.mxu0 0
  %6655 = vmatprep.subr.bf16.mxu0 0
  %6656 = vmatpush1.bf16.msra.mxu0 0
  %6657 = vmatprep.subr.bf16.mxu0 0
  %6658 = vmatpush1.bf16.msra.mxu0 0
  %6659 = vmatprep.subr.bf16.mxu0 0
  %6660 = vmatpush1.bf16.msra.mxu0 0
  %6661 = vmatprep.subr.bf16.mxu0 0
  %6662 = vmatpush1.bf16.msra.mxu0 0
  %6663 = vmatprep.subr.bf16.mxu0 0
  %6664 = vmatpush1.bf16.msra.mxu0 0
  %6665 = vmatprep.subr.bf16.mxu0 0
  %6666 = vmatpush1.bf16.msra.mxu0 0
  %6667 = vmatprep.mubr.bf16.mxu0 0
  %6668 = vmatmul.mubr.bf16.gmra.mrb[0].mxu0 %v6351
  %v6669 = vpop.f32.mrb[0].mxu0
  %v6670 = vadd.f32 0.0, %v6669
  %v6671 = vpop.f32.mrb[0].mxu0
  %v6672 = vpop.f32.mrb[0].mxu0
  %v6673 = vpop.f32.mrb[0].mxu0
  %6674 = vdwg.mxu0
  %v6675 = vadd.f32 %v6565, %v6670
  %s6676 = scalar_lea.vmem %s6, 192
  %v6677 = vld [vmem:[%s6676] sm:$0xf]
  %v6678 = vld [vmem:[%s6676 + $0x4] sm:$0xf]
  %v6679 = vld [vmem:[%s6676 + $0x8] sm:$0xf]
  %v6680 = vld [vmem:[%s6676 + $0xc] sm:$0xf]
  %v6681 = vld [vmem:[%s6676 + $0x10] sm:$0xf]
  %v6682 = vld [vmem:[%s6676 + $0x14] sm:$0xf]
  %v6683 = vld [vmem:[%s6676 + $0x18] sm:$0xf]
  %v6684 = vld [vmem:[%s6676 + $0x1c] sm:$0xf]
  %v6685 = vld [vmem:[%s6676 + $0x20] sm:$0xf]
  %v6686 = vld [vmem:[%s6676 + $0x24] sm:$0xf]
  %v6687 = vld [vmem:[%s6676 + $0x28] sm:$0xf]
  %v6688 = vld [vmem:[%s6676 + $0x2c] sm:$0xf]
  %v6689 = vld [vmem:[%s6676 + $0x30] sm:$0xf]
  %v6690 = vld [vmem:[%s6676 + $0x34] sm:$0xf]
  %v6691 = vld [vmem:[%s6676 + $0x38] sm:$0xf]
  %v6692 = vld [vmem:[%s6676 + $0x3c] sm:$0xf]
  %v6694 = vrot.slane %v6351, 4
  %v6712 = vunpack.c.l.b16 %v6677
  %v6713 = vunpack.c.l.b16 %v6678
  %v6714 = vunpack.c.l.b16 %v6679
  %v6715 = vunpack.c.l.b16 %v6680
  %v6716 = vunpack.c.l.b16 %v6681
  %v6717 = vunpack.c.l.b16 %v6682
  %v6718 = vunpack.c.l.b16 %v6683
  %v6719 = vunpack.c.l.b16 %v6684
  %v6720 = vunpack.c.l.b16 %v6685
  %v6721 = vunpack.c.l.b16 %v6686
  %v6722 = vunpack.c.l.b16 %v6687
  %v6723 = vunpack.c.l.b16 %v6688
  %v6724 = vunpack.c.l.b16 %v6689
  %v6725 = vunpack.c.l.b16 %v6690
  %v6726 = vunpack.c.l.b16 %v6691
  %v6727 = vunpack.c.l.b16 %v6692
  %v6728 = vpack.c.b16 %v6713, %v6712
  %v6729 = vpack.c.b16 %v6715, %v6714
  %v6730 = vpack.c.b16 %v6717, %v6716
  %v6731 = vpack.c.b16 %v6719, %v6718
  %v6732 = vpack.c.b16 %v6721, %v6720
  %v6733 = vpack.c.b16 %v6723, %v6722
  %v6734 = vpack.c.b16 %v6725, %v6724
  %v6735 = vpack.c.b16 %v6727, %v6726
  %6744 = vmatprep.subr.bf16.mxu0 0
  %6745 = vmatpush1.bf16.msra.mxu0 %v6728
  %6746 = vmatprep.subr.bf16.mxu0 0
  %6747 = vmatpush1.bf16.msra.mxu0 %v6729
  %6748 = vmatprep.subr.bf16.mxu0 0
  %6749 = vmatpush1.bf16.msra.mxu0 %v6730
  %6750 = vmatprep.subr.bf16.mxu0 0
  %6751 = vmatpush1.bf16.msra.mxu0 %v6731
  %6752 = vmatprep.subr.bf16.mxu0 0
  %6753 = vmatpush1.bf16.msra.mxu0 %v6732
  %6754 = vmatprep.subr.bf16.mxu0 0
  %6755 = vmatpush1.bf16.msra.mxu0 %v6733
  %6756 = vmatprep.subr.bf16.mxu0 0
  %6757 = vmatpush1.bf16.msra.mxu0 %v6734
  %6758 = vmatprep.subr.bf16.mxu0 0
  %6759 = vmatpush1.bf16.msra.mxu0 %v6735
  %6760 = vmatprep.subr.bf16.mxu0 0
  %6761 = vmatpush1.bf16.msra.mxu0 0
  %6762 = vmatprep.subr.bf16.mxu0 0
  %6763 = vmatpush1.bf16.msra.mxu0 0
  %6764 = vmatprep.subr.bf16.mxu0 0
  %6765 = vmatpush1.bf16.msra.mxu0 0
  %6766 = vmatprep.subr.bf16.mxu0 0
  %6767 = vmatpush1.bf16.msra.mxu0 0
  %6768 = vmatprep.subr.bf16.mxu0 0
  %6769 = vmatpush1.bf16.msra.mxu0 0
  %6770 = vmatprep.subr.bf16.mxu0 0
  %6771 = vmatpush1.bf16.msra.mxu0 0
  %6772 = vmatprep.subr.bf16.mxu0 0
  %6773 = vmatpush1.bf16.msra.mxu0 0
  %6774 = vmatprep.subr.bf16.mxu0 0
  %6775 = vmatpush1.bf16.msra.mxu0 0
  %6776 = vmatprep.mubr.bf16.mxu0 0
  %6777 = vmatmul.mubr.bf16.gmra.mrb[0].mxu0 %v6694
  %v6778 = vpop.f32.mrb[0].mxu0
  %v6779 = vadd.f32 0.0, %v6778
  %v6780 = vpop.f32.mrb[0].mxu0
  %v6781 = vpop.f32.mrb[0].mxu0
  %v6782 = vpop.f32.mrb[0].mxu0
  %6783 = vdwg.mxu0
  %v6784 = vadd.f32 %v6675, %v6779
  %s6785 = scalar_lea.vmem %s6, 256
  %v6786 = vld [vmem:[%s6785] sm:$0xf]
  %v6787 = vld [vmem:[%s6785 + $0x4] sm:$0xf]
  %v6788 = vld [vmem:[%s6785 + $0x8] sm:$0xf]
  %v6789 = vld [vmem:[%s6785 + $0xc] sm:$0xf]
  %v6790 = vld [vmem:[%s6785 + $0x10] sm:$0xf]
  %v6791 = vld [vmem:[%s6785 + $0x14] sm:$0xf]
  %v6792 = vld [vmem:[%s6785 + $0x18] sm:$0xf]
  %v6793 = vld [vmem:[%s6785 + $0x1c] sm:$0xf]
  %v6794 = vld [vmem:[%s6785 + $0x20] sm:$0xf]
  %v6795 = vld [vmem:[%s6785 + $0x24] sm:$0xf]
  %v6796 = vld [vmem:[%s6785 + $0x28] sm:$0xf]
  %v6797 = vld [vmem:[%s6785 + $0x2c] sm:$0xf]
  %v6798 = vld [vmem:[%s6785 + $0x30] sm:$0xf]
  %v6799 = vld [vmem:[%s6785 + $0x34] sm:$0xf]
  %v6800 = vld [vmem:[%s6785 + $0x38] sm:$0xf]
  %v6801 = vld [vmem:[%s6785 + $0x3c] sm:$0xf]
  %v6818 = vunpack.c.l.b16 %v6786
  %v6819 = vunpack.c.l.b16 %v6787
  %v6820 = vunpack.c.l.b16 %v6788
  %v6821 = vunpack.c.l.b16 %v6789
  %v6822 = vunpack.c.l.b16 %v6790
  %v6823 = vunpack.c.l.b16 %v6791
  %v6824 = vunpack.c.l.b16 %v6792
  %v6825 = vunpack.c.l.b16 %v6793
  %v6826 = vunpack.c.l.b16 %v6794
  %v6827 = vunpack.c.l.b16 %v6795
  %v6828 = vunpack.c.l.b16 %v6796
  %v6829 = vunpack.c.l.b16 %v6797
  %v6830 = vunpack.c.l.b16 %v6798
  %v6831 = vunpack.c.l.b16 %v6799
  %v6832 = vunpack.c.l.b16 %v6800
  %v6833 = vunpack.c.l.b16 %v6801
  %v6834 = vpack.c.b16 %v6819, %v6818
  %v6835 = vpack.c.b16 %v6821, %v6820
  %v6836 = vpack.c.b16 %v6823, %v6822
  %v6837 = vpack.c.b16 %v6825, %v6824
  %v6838 = vpack.c.b16 %v6827, %v6826
  %v6839 = vpack.c.b16 %v6829, %v6828
  %v6840 = vpack.c.b16 %v6831, %v6830
  %v6841 = vpack.c.b16 %v6833, %v6832
  %6850 = vmatprep.subr.bf16.mxu0 0
  %6851 = vmatpush1.bf16.msra.mxu0 %v6834
  %6852 = vmatprep.subr.bf16.mxu0 0
  %6853 = vmatpush1.bf16.msra.mxu0 %v6835
  %6854 = vmatprep.subr.bf16.mxu0 0
  %6855 = vmatpush1.bf16.msra.mxu0 %v6836
  %6856 = vmatprep.subr.bf16.mxu0 0
  %6857 = vmatpush1.bf16.msra.mxu0 %v6837
  %6858 = vmatprep.subr.bf16.mxu0 0
  %6859 = vmatpush1.bf16.msra.mxu0 %v6838
  %6860 = vmatprep.subr.bf16.mxu0 0
  %6861 = vmatpush1.bf16.msra.mxu0 %v6839
  %6862 = vmatprep.subr.bf16.mxu0 0
  %6863 = vmatpush1.bf16.msra.mxu0 %v6840
  %6864 = vmatprep.subr.bf16.mxu0 0
  %6865 = vmatpush1.bf16.msra.mxu0 %v6841
  %6866 = vmatprep.subr.bf16.mxu0 0
  %6867 = vmatpush1.bf16.msra.mxu0 0
  %6868 = vmatprep.subr.bf16.mxu0 0
  %6869 = vmatpush1.bf16.msra.mxu0 0
  %6870 = vmatprep.subr.bf16.mxu0 0
  %6871 = vmatpush1.bf16.msra.mxu0 0
  %6872 = vmatprep.subr.bf16.mxu0 0
  %6873 = vmatpush1.bf16.msra.mxu0 0
  %6874 = vmatprep.subr.bf16.mxu0 0
  %6875 = vmatpush1.bf16.msra.mxu0 0
  %6876 = vmatprep.subr.bf16.mxu0 0
  %6877 = vmatpush1.bf16.msra.mxu0 0
  %6878 = vmatprep.subr.bf16.mxu0 0
  %6879 = vmatpush1.bf16.msra.mxu0 0
  %6880 = vmatprep.subr.bf16.mxu0 0
  %6881 = vmatpush1.bf16.msra.mxu0 0
  %6882 = vmatprep.mubr.bf16.mxu0 0
  %6883 = vmatmul.mubr.bf16.gmra.mrb[0].mxu0 %v6352
  %v6884 = vpop.f32.mrb[0].mxu0
  %v6885 = vadd.f32 0.0, %v6884
  %v6886 = vpop.f32.mrb[0].mxu0
  %v6887 = vpop.f32.mrb[0].mxu0
  %v6888 = vpop.f32.mrb[0].mxu0
  %6889 = vdwg.mxu0
  %v6890 = vadd.f32 %v6784, %v6885
  %s6891 = scalar_lea.vmem %s6, 320
  %v6892 = vld [vmem:[%s6891] sm:$0xf]
  %v6893 = vld [vmem:[%s6891 + $0x4] sm:$0xf]
  %v6894 = vld [vmem:[%s6891 + $0x8] sm:$0xf]
  %v6895 = vld [vmem:[%s6891 + $0xc] sm:$0xf]
  %v6896 = vld [vmem:[%s6891 + $0x10] sm:$0xf]
  %v6897 = vld [vmem:[%s6891 + $0x14] sm:$0xf]
  %v6898 = vld [vmem:[%s6891 + $0x18] sm:$0xf]
  %v6899 = vld [vmem:[%s6891 + $0x1c] sm:$0xf]
  %v6900 = vld [vmem:[%s6891 + $0x20] sm:$0xf]
  %v6901 = vld [vmem:[%s6891 + $0x24] sm:$0xf]
  %v6902 = vld [vmem:[%s6891 + $0x28] sm:$0xf]
  %v6903 = vld [vmem:[%s6891 + $0x2c] sm:$0xf]
  %v6904 = vld [vmem:[%s6891 + $0x30] sm:$0xf]
  %v6905 = vld [vmem:[%s6891 + $0x34] sm:$0xf]
  %v6906 = vld [vmem:[%s6891 + $0x38] sm:$0xf]
  %v6907 = vld [vmem:[%s6891 + $0x3c] sm:$0xf]
  %v6909 = vrot.slane %v6352, 4
  %v6927 = vunpack.c.l.b16 %v6892
  %v6928 = vunpack.c.l.b16 %v6893
  %v6929 = vunpack.c.l.b16 %v6894
  %v6930 = vunpack.c.l.b16 %v6895
  %v6931 = vunpack.c.l.b16 %v6896
  %v6932 = vunpack.c.l.b16 %v6897
  %v6933 = vunpack.c.l.b16 %v6898
  %v6934 = vunpack.c.l.b16 %v6899
  %v6935 = vunpack.c.l.b16 %v6900
  %v6936 = vunpack.c.l.b16 %v6901
  %v6937 = vunpack.c.l.b16 %v6902
  %v6938 = vunpack.c.l.b16 %v6903
  %v6939 = vunpack.c.l.b16 %v6904
  %v6940 = vunpack.c.l.b16 %v6905
  %v6941 = vunpack.c.l.b16 %v6906
  %v6942 = vunpack.c.l.b16 %v6907
  %v6943 = vpack.c.b16 %v6928, %v6927
  %v6944 = vpack.c.b16 %v6930, %v6929
  %v6945 = vpack.c.b16 %v6932, %v6931
  %v6946 = vpack.c.b16 %v6934, %v6933
  %v6947 = vpack.c.b16 %v6936, %v6935
  %v6948 = vpack.c.b16 %v6938, %v6937
  %v6949 = vpack.c.b16 %v6940, %v6939
  %v6950 = vpack.c.b16 %v6942, %v6941
  %6959 = vmatprep.subr.bf16.mxu0 0
  %6960 = vmatpush1.bf16.msra.mxu0 %v6943
  %6961 = vmatprep.subr.bf16.mxu0 0
  %6962 = vmatpush1.bf16.msra.mxu0 %v6944
  %6963 = vmatprep.subr.bf16.mxu0 0
  %6964 = vmatpush1.bf16.msra.mxu0 %v6945
  %6965 = vmatprep.subr.bf16.mxu0 0
  %6966 = vmatpush1.bf16.msra.mxu0 %v6946
  %6967 = vmatprep.subr.bf16.mxu0 0
  %6968 = vmatpush1.bf16.msra.mxu0 %v6947
  %6969 = vmatprep.subr.bf16.mxu0 0
  %6970 = vmatpush1.bf16.msra.mxu0 %v6948
  %6971 = vmatprep.subr.bf16.mxu0 0
  %6972 = vmatpush1.bf16.msra.mxu0 %v6949
  %6973 = vmatprep.subr.bf16.mxu0 0
  %6974 = vmatpush1.bf16.msra.mxu0 %v6950
  %6975 = vmatprep.subr.bf16.mxu0 0
  %6976 = vmatpush1.bf16.msra.mxu0 0
  %6977 = vmatprep.subr.bf16.mxu0 0
  %6978 = vmatpush1.bf16.msra.mxu0 0
  %6979 = vmatprep.subr.bf16.mxu0 0
  %6980 = vmatpush1.bf16.msra.mxu0 0
  %6981 = vmatprep.subr.bf16.mxu0 0
  %6982 = vmatpush1.bf16.msra.mxu0 0
  %6983 = vmatprep.subr.bf16.mxu0 0
  %6984 = vmatpush1.bf16.msra.mxu0 0
  %6985 = vmatprep.subr.bf16.mxu0 0
  %6986 = vmatpush1.bf16.msra.mxu0 0
  %6987 = vmatprep.subr.bf16.mxu0 0
  %6988 = vmatpush1.bf16.msra.mxu0 0
  %6989 = vmatprep.subr.bf16.mxu0 0
  %6990 = vmatpush1.bf16.msra.mxu0 0
  %6991 = vmatprep.mubr.bf16.mxu0 0
  %6992 = vmatmul.mubr.bf16.gmra.mrb[0].mxu0 %v6909
  %v6993 = vpop.f32.mrb[0].mxu0
  %v6994 = vadd.f32 0.0, %v6993
  %v6995 = vpop.f32.mrb[0].mxu0
  %v6996 = vpop.f32.mrb[0].mxu0
  %v6997 = vpop.f32.mrb[0].mxu0
  %6998 = vdwg.mxu0
  %v6999 = vadd.f32 %v6890, %v6994
  %s7000 = scalar_lea.vmem %s6, 384
  %v7001 = vld [vmem:[%s7000] sm:$0xf]
  %v7002 = vld [vmem:[%s7000 + $0x4] sm:$0xf]
  %v7003 = vld [vmem:[%s7000 + $0x8] sm:$0xf]
  %v7004 = vld [vmem:[%s7000 + $0xc] sm:$0xf]
  %v7005 = vld [vmem:[%s7000 + $0x10] sm:$0xf]
  %v7006 = vld [vmem:[%s7000 + $0x14] sm:$0xf]
  %v7007 = vld [vmem:[%s7000 + $0x18] sm:$0xf]
  %v7008 = vld [vmem:[%s7000 + $0x1c] sm:$0xf]
  %v7009 = vld [vmem:[%s7000 + $0x20] sm:$0xf]
  %v7010 = vld [vmem:[%s7000 + $0x24] sm:$0xf]
  %v7011 = vld [vmem:[%s7000 + $0x28] sm:$0xf]
  %v7012 = vld [vmem:[%s7000 + $0x2c] sm:$0xf]
  %v7013 = vld [vmem:[%s7000 + $0x30] sm:$0xf]
  %v7014 = vld [vmem:[%s7000 + $0x34] sm:$0xf]
  %v7015 = vld [vmem:[%s7000 + $0x38] sm:$0xf]
  %v7016 = vld [vmem:[%s7000 + $0x3c] sm:$0xf]
  %v7033 = vunpack.c.l.b16 %v7001
  %v7034 = vunpack.c.l.b16 %v7002
  %v7035 = vunpack.c.l.b16 %v7003
  %v7036 = vunpack.c.l.b16 %v7004
  %v7037 = vunpack.c.l.b16 %v7005
  %v7038 = vunpack.c.l.b16 %v7006
  %v7039 = vunpack.c.l.b16 %v7007
  %v7040 = vunpack.c.l.b16 %v7008
  %v7041 = vunpack.c.l.b16 %v7009
  %v7042 = vunpack.c.l.b16 %v7010
  %v7043 = vunpack.c.l.b16 %v7011
  %v7044 = vunpack.c.l.b16 %v7012
  %v7045 = vunpack.c.l.b16 %v7013
  %v7046 = vunpack.c.l.b16 %v7014
  %v7047 = vunpack.c.l.b16 %v7015
  %v7048 = vunpack.c.l.b16 %v7016
  %v7049 = vpack.c.b16 %v7034, %v7033
  %v7050 = vpack.c.b16 %v7036, %v7035
  %v7051 = vpack.c.b16 %v7038, %v7037
  %v7052 = vpack.c.b16 %v7040, %v7039
  %v7053 = vpack.c.b16 %v7042, %v7041
  %v7054 = vpack.c.b16 %v7044, %v7043
  %v7055 = vpack.c.b16 %v7046, %v7045
  %v7056 = vpack.c.b16 %v7048, %v7047
  %7065 = vmatprep.subr.bf16.mxu0 0
  %7066 = vmatpush1.bf16.msra.mxu0 %v7049
  %7067 = vmatprep.subr.bf16.mxu0 0
  %7068 = vmatpush1.bf16.msra.mxu0 %v7050
  %7069 = vmatprep.subr.bf16.mxu0 0
  %7070 = vmatpush1.bf16.msra.mxu0 %v7051
  %7071 = vmatprep.subr.bf16.mxu0 0
  %7072 = vmatpush1.bf16.msra.mxu0 %v7052
  %7073 = vmatprep.subr.bf16.mxu0 0
  %7074 = vmatpush1.bf16.msra.mxu0 %v7053
  %7075 = vmatprep.subr.bf16.mxu0 0
  %7076 = vmatpush1.bf16.msra.mxu0 %v7054
  %7077 = vmatprep.subr.bf16.mxu0 0
  %7078 = vmatpush1.bf16.msra.mxu0 %v7055
  %7079 = vmatprep.subr.bf16.mxu0 0
  %7080 = vmatpush1.bf16.msra.mxu0 %v7056
  %7081 = vmatprep.subr.bf16.mxu0 0
  %7082 = vmatpush1.bf16.msra.mxu0 0
  %7083 = vmatprep.subr.bf16.mxu0 0
  %7084 = vmatpush1.bf16.msra.mxu0 0
  %7085 = vmatprep.subr.bf16.mxu0 0
  %7086 = vmatpush1.bf16.msra.mxu0 0
  %7087 = vmatprep.subr.bf16.mxu0 0
  %7088 = vmatpush1.bf16.msra.mxu0 0
  %7089 = vmatprep.subr.bf16.mxu0 0
  %7090 = vmatpush1.bf16.msra.mxu0 0
  %7091 = vmatprep.subr.bf16.mxu0 0
  %7092 = vmatpush1.bf16.msra.mxu0 0
  %7093 = vmatprep.subr.bf16.mxu0 0
  %7094 = vmatpush1.bf16.msra.mxu0 0
  %7095 = vmatprep.subr.bf16.mxu0 0
  %7096 = vmatpush1.bf16.msra.mxu0 0
  %7097 = vmatprep.mubr.bf16.mxu0 0
  %7098 = vmatmul.mubr.bf16.gmra.mrb[0].mxu0 %v6353
  %v7099 = vpop.f32.mrb[0].mxu0
  %v7100 = vadd.f32 0.0, %v7099
  %v7101 = vpop.f32.mrb[0].mxu0
  %v7102 = vpop.f32.mrb[0].mxu0
  %v7103 = vpop.f32.mrb[0].mxu0
  %7104 = vdwg.mxu0
  %v7105 = vadd.f32 %v6999, %v7100
  %s7106 = scalar_lea.vmem %s6, 448
  %v7107 = vld [vmem:[%s7106] sm:$0xf]
  %v7108 = vld [vmem:[%s7106 + $0x4] sm:$0xf]
  %v7109 = vld [vmem:[%s7106 + $0x8] sm:$0xf]
  %v7110 = vld [vmem:[%s7106 + $0xc] sm:$0xf]
  %v7111 = vld [vmem:[%s7106 + $0x10] sm:$0xf]
  %v7112 = vld [vmem:[%s7106 + $0x14] sm:$0xf]
  %v7113 = vld [vmem:[%s7106 + $0x18] sm:$0xf]
  %v7114 = vld [vmem:[%s7106 + $0x1c] sm:$0xf]
  %v7115 = vld [vmem:[%s7106 + $0x20] sm:$0xf]
  %v7116 = vld [vmem:[%s7106 + $0x24] sm:$0xf]
  %v7117 = vld [vmem:[%s7106 + $0x28] sm:$0xf]
  %v7118 = vld [vmem:[%s7106 + $0x2c] sm:$0xf]
  %v7119 = vld [vmem:[%s7106 + $0x30] sm:$0xf]
  %v7120 = vld [vmem:[%s7106 + $0x34] sm:$0xf]
  %v7121 = vld [vmem:[%s7106 + $0x38] sm:$0xf]
  %v7122 = vld [vmem:[%s7106 + $0x3c] sm:$0xf]
  %v7124 = vrot.slane %v6353, 4
  %v7142 = vunpack.c.l.b16 %v7107
  %v7143 = vunpack.c.l.b16 %v7108
  %v7144 = vunpack.c.l.b16 %v7109
  %v7145 = vunpack.c.l.b16 %v7110
  %v7146 = vunpack.c.l.b16 %v7111
  %v7147 = vunpack.c.l.b16 %v7112
  %v7148 = vunpack.c.l.b16 %v7113
  %v7149 = vunpack.c.l.b16 %v7114
  %v7150 = vunpack.c.l.b16 %v7115
  %v7151 = vunpack.c.l.b16 %v7116
  %v7152 = vunpack.c.l.b16 %v7117
  %v7153 = vunpack.c.l.b16 %v7118
  %v7154 = vunpack.c.l.b16 %v7119
  %v7155 = vunpack.c.l.b16 %v7120
  %v7156 = vunpack.c.l.b16 %v7121
  %v7157 = vunpack.c.l.b16 %v7122
  %v7158 = vpack.c.b16 %v7143, %v7142
  %v7159 = vpack.c.b16 %v7145, %v7144
  %v7160 = vpack.c.b16 %v7147, %v7146
  %v7161 = vpack.c.b16 %v7149, %v7148
  %v7162 = vpack.c.b16 %v7151, %v7150
  %v7163 = vpack.c.b16 %v7153, %v7152
  %v7164 = vpack.c.b16 %v7155, %v7154
  %v7165 = vpack.c.b16 %v7157, %v7156
  %7174 = vmatprep.subr.bf16.mxu0 0
  %7175 = vmatpush1.bf16.msra.mxu0 %v7158
  %7176 = vmatprep.subr.bf16.mxu0 0
  %7177 = vmatpush1.bf16.msra.mxu0 %v7159
  %7178 = vmatprep.subr.bf16.mxu0 0
  %7179 = vmatpush1.bf16.msra.mxu0 %v7160
  %7180 = vmatprep.subr.bf16.mxu0 0
  %7181 = vmatpush1.bf16.msra.mxu0 %v7161
  %7182 = vmatprep.subr.bf16.mxu0 0
  %7183 = vmatpush1.bf16.msra.mxu0 %v7162
  %7184 = vmatprep.subr.bf16.mxu0 0
  %7185 = vmatpush1.bf16.msra.mxu0 %v7163
  %7186 = vmatprep.subr.bf16.mxu0 0
  %7187 = vmatpush1.bf16.msra.mxu0 %v7164
  %7188 = vmatprep.subr.bf16.mxu0 0
  %7189 = vmatpush1.bf16.msra.mxu0 %v7165
  %7190 = vmatprep.subr.bf16.mxu0 0
  %7191 = vmatpush1.bf16.msra.mxu0 0
  %7192 = vmatprep.subr.bf16.mxu0 0
  %7193 = vmatpush1.bf16.msra.mxu0 0
  %7194 = vmatprep.subr.bf16.mxu0 0
  %7195 = vmatpush1.bf16.msra.mxu0 0
  %7196 = vmatprep.subr.bf16.mxu0 0
  %7197 = vmatpush1.bf16.msra.mxu0 0
  %7198 = vmatprep.subr.bf16.mxu0 0
  %7199 = vmatpush1.bf16.msra.mxu0 0
  %7200 = vmatprep.subr.bf16.mxu0 0
  %7201 = vmatpush1.bf16.msra.mxu0 0
  %7202 = vmatprep.subr.bf16.mxu0 0
  %7203 = vmatpush1.bf16.msra.mxu0 0
  %7204 = vmatprep.subr.bf16.mxu0 0
  %7205 = vmatpush1.bf16.msra.mxu0 0
  %7206 = vmatprep.mubr.bf16.mxu0 0
  %7207 = vmatmul.mubr.bf16.gmra.mrb[0].mxu0 %v7124
  %v7208 = vpop.f32.mrb[0].mxu0
  %v7209 = vadd.f32 0.0, %v7208
  %v7210 = vpop.f32.mrb[0].mxu0
  %v7211 = vpop.f32.mrb[0].mxu0
  %v7212 = vpop.f32.mrb[0].mxu0
  %7213 = vdwg.mxu0
  %v7214 = vadd.f32 %v7105, %v7209
  %s7215 = scalar_lea.vmem %s6, 512
  %v7216 = vld [vmem:[%s7215] sm:$0xf]
  %v7217 = vld [vmem:[%s7215 + $0x4] sm:$0xf]
  %v7218 = vld [vmem:[%s7215 + $0x8] sm:$0xf]
  %v7219 = vld [vmem:[%s7215 + $0xc] sm:$0xf]
  %v7220 = vld [vmem:[%s7215 + $0x10] sm:$0xf]
  %v7221 = vld [vmem:[%s7215 + $0x14] sm:$0xf]
  %v7222 = vld [vmem:[%s7215 + $0x18] sm:$0xf]
  %v7223 = vld [vmem:[%s7215 + $0x1c] sm:$0xf]
  %v7224 = vld [vmem:[%s7215 + $0x20] sm:$0xf]
  %v7225 = vld [vmem:[%s7215 + $0x24] sm:$0xf]
  %v7226 = vld [vmem:[%s7215 + $0x28] sm:$0xf]
  %v7227 = vld [vmem:[%s7215 + $0x2c] sm:$0xf]
  %v7228 = vld [vmem:[%s7215 + $0x30] sm:$0xf]
  %v7229 = vld [vmem:[%s7215 + $0x34] sm:$0xf]
  %v7230 = vld [vmem:[%s7215 + $0x38] sm:$0xf]
  %v7231 = vld [vmem:[%s7215 + $0x3c] sm:$0xf]
  %v7248 = vunpack.c.l.b16 %v7216
  %v7249 = vunpack.c.l.b16 %v7217
  %v7250 = vunpack.c.l.b16 %v7218
  %v7251 = vunpack.c.l.b16 %v7219
  %v7252 = vunpack.c.l.b16 %v7220
  %v7253 = vunpack.c.l.b16 %v7221
  %v7254 = vunpack.c.l.b16 %v7222
  %v7255 = vunpack.c.l.b16 %v7223
  %v7256 = vunpack.c.l.b16 %v7224
  %v7257 = vunpack.c.l.b16 %v7225
  %v7258 = vunpack.c.l.b16 %v7226
  %v7259 = vunpack.c.l.b16 %v7227
  %v7260 = vunpack.c.l.b16 %v7228
  %v7261 = vunpack.c.l.b16 %v7229
  %v7262 = vunpack.c.l.b16 %v7230
  %v7263 = vunpack.c.l.b16 %v7231
  %v7264 = vpack.c.b16 %v7249, %v7248
  %v7265 = vpack.c.b16 %v7251, %v7250
  %v7266 = vpack.c.b16 %v7253, %v7252
  %v7267 = vpack.c.b16 %v7255, %v7254
  %v7268 = vpack.c.b16 %v7257, %v7256
  %v7269 = vpack.c.b16 %v7259, %v7258
  %v7270 = vpack.c.b16 %v7261, %v7260
  %v7271 = vpack.c.b16 %v7263, %v7262
  %7280 = vmatprep.subr.bf16.mxu0 0
  %7281 = vmatpush1.bf16.msra.mxu0 %v7264
  %7282 = vmatprep.subr.bf16.mxu0 0
  %7283 = vmatpush1.bf16.msra.mxu0 %v7265
  %7284 = vmatprep.subr.bf16.mxu0 0
  %7285 = vmatpush1.bf16.msra.mxu0 %v7266
  %7286 = vmatprep.subr.bf16.mxu0 0
  %7287 = vmatpush1.bf16.msra.mxu0 %v7267
  %7288 = vmatprep.subr.bf16.mxu0 0
  %7289 = vmatpush1.bf16.msra.mxu0 %v7268
  %7290 = vmatprep.subr.bf16.mxu0 0
  %7291 = vmatpush1.bf16.msra.mxu0 %v7269
  %7292 = vmatprep.subr.bf16.mxu0 0
  %7293 = vmatpush1.bf16.msra.mxu0 %v7270
  %7294 = vmatprep.subr.bf16.mxu0 0
  %7295 = vmatpush1.bf16.msra.mxu0 %v7271
  %7296 = vmatprep.subr.bf16.mxu0 0
  %7297 = vmatpush1.bf16.msra.mxu0 0
  %7298 = vmatprep.subr.bf16.mxu0 0
  %7299 = vmatpush1.bf16.msra.mxu0 0
  %7300 = vmatprep.subr.bf16.mxu0 0
  %7301 = vmatpush1.bf16.msra.mxu0 0
  %7302 = vmatprep.subr.bf16.mxu0 0
  %7303 = vmatpush1.bf16.msra.mxu0 0
  %7304 = vmatprep.subr.bf16.mxu0 0
  %7305 = vmatpush1.bf16.msra.mxu0 0
  %7306 = vmatprep.subr.bf16.mxu0 0
  %7307 = vmatpush1.bf16.msra.mxu0 0
  %7308 = vmatprep.subr.bf16.mxu0 0
  %7309 = vmatpush1.bf16.msra.mxu0 0
  %7310 = vmatprep.subr.bf16.mxu0 0
  %7311 = vmatpush1.bf16.msra.mxu0 0
  %7312 = vmatprep.mubr.bf16.mxu0 0
  %7313 = vmatmul.mubr.bf16.gmra.mrb[0].mxu0 %v6354
  %v7314 = vpop.f32.mrb[0].mxu0
  %v7315 = vadd.f32 0.0, %v7314
  %v7316 = vpop.f32.mrb[0].mxu0
  %v7317 = vpop.f32.mrb[0].mxu0
  %v7318 = vpop.f32.mrb[0].mxu0
  %7319 = vdwg.mxu0
  %v7320 = vadd.f32 %v7214, %v7315
  %s7321 = scalar_lea.vmem %s6, 576
  %v7322 = vld [vmem:[%s7321] sm:$0xf]
  %v7323 = vld [vmem:[%s7321 + $0x4] sm:$0xf]
  %v7324 = vld [vmem:[%s7321 + $0x8] sm:$0xf]
  %v7325 = vld [vmem:[%s7321 + $0xc] sm:$0xf]
  %v7326 = vld [vmem:[%s7321 + $0x10] sm:$0xf]
  %v7327 = vld [vmem:[%s7321 + $0x14] sm:$0xf]
  %v7328 = vld [vmem:[%s7321 + $0x18] sm:$0xf]
  %v7329 = vld [vmem:[%s7321 + $0x1c] sm:$0xf]
  %v7330 = vld [vmem:[%s7321 + $0x20] sm:$0xf]
  %v7331 = vld [vmem:[%s7321 + $0x24] sm:$0xf]
  %v7332 = vld [vmem:[%s7321 + $0x28] sm:$0xf]
  %v7333 = vld [vmem:[%s7321 + $0x2c] sm:$0xf]
  %v7334 = vld [vmem:[%s7321 + $0x30] sm:$0xf]
  %v7335 = vld [vmem:[%s7321 + $0x34] sm:$0xf]
  %v7336 = vld [vmem:[%s7321 + $0x38] sm:$0xf]
  %v7337 = vld [vmem:[%s7321 + $0x3c] sm:$0xf]
  %v7339 = vrot.slane %v6354, 4
  %v7357 = vunpack.c.l.b16 %v7322
  %v7358 = vunpack.c.l.b16 %v7323
  %v7359 = vunpack.c.l.b16 %v7324
  %v7360 = vunpack.c.l.b16 %v7325
  %v7361 = vunpack.c.l.b16 %v7326
  %v7362 = vunpack.c.l.b16 %v7327
  %v7363 = vunpack.c.l.b16 %v7328
  %v7364 = vunpack.c.l.b16 %v7329
  %v7365 = vunpack.c.l.b16 %v7330
  %v7366 = vunpack.c.l.b16 %v7331
  %v7367 = vunpack.c.l.b16 %v7332
  %v7368 = vunpack.c.l.b16 %v7333
  %v7369 = vunpack.c.l.b16 %v7334
  %v7370 = vunpack.c.l.b16 %v7335
  %v7371 = vunpack.c.l.b16 %v7336
  %v7372 = vunpack.c.l.b16 %v7337
  %v7373 = vpack.c.b16 %v7358, %v7357
  %v7374 = vpack.c.b16 %v7360, %v7359
  %v7375 = vpack.c.b16 %v7362, %v7361
  %v7376 = vpack.c.b16 %v7364, %v7363
  %v7377 = vpack.c.b16 %v7366, %v7365
  %v7378 = vpack.c.b16 %v7368, %v7367
  %v7379 = vpack.c.b16 %v7370, %v7369
  %v7380 = vpack.c.b16 %v7372, %v7371
  %7389 = vmatprep.subr.bf16.mxu0 0
  %7390 = vmatpush1.bf16.msra.mxu0 %v7373
  %7391 = vmatprep.subr.bf16.mxu0 0
  %7392 = vmatpush1.bf16.msra.mxu0 %v7374
  %7393 = vmatprep.subr.bf16.mxu0 0
  %7394 = vmatpush1.bf16.msra.mxu0 %v7375
  %7395 = vmatprep.subr.bf16.mxu0 0
  %7396 = vmatpush1.bf16.msra.mxu0 %v7376
  %7397 = vmatprep.subr.bf16.mxu0 0
  %7398 = vmatpush1.bf16.msra.mxu0 %v7377
  %7399 = vmatprep.subr.bf16.mxu0 0
  %7400 = vmatpush1.bf16.msra.mxu0 %v7378
  %7401 = vmatprep.subr.bf16.mxu0 0
  %7402 = vmatpush1.bf16.msra.mxu0 %v7379
  %7403 = vmatprep.subr.bf16.mxu0 0
  %7404 = vmatpush1.bf16.msra.mxu0 %v7380
  %7405 = vmatprep.subr.bf16.mxu0 0
  %7406 = vmatpush1.bf16.msra.mxu0 0
  %7407 = vmatprep.subr.bf16.mxu0 0
  %7408 = vmatpush1.bf16.msra.mxu0 0
  %7409 = vmatprep.subr.bf16.mxu0 0
  %7410 = vmatpush1.bf16.msra.mxu0 0
  %7411 = vmatprep.subr.bf16.mxu0 0
  %7412 = vmatpush1.bf16.msra.mxu0 0
  %7413 = vmatprep.subr.bf16.mxu0 0
  %7414 = vmatpush1.bf16.msra.mxu0 0
  %7415 = vmatprep.subr.bf16.mxu0 0
  %7416 = vmatpush1.bf16.msra.mxu0 0
  %7417 = vmatprep.subr.bf16.mxu0 0
  %7418 = vmatpush1.bf16.msra.mxu0 0
  %7419 = vmatprep.subr.bf16.mxu0 0
  %7420 = vmatpush1.bf16.msra.mxu0 0
  %7421 = vmatprep.mubr.bf16.mxu0 0
  %7422 = vmatmul.mubr.bf16.gmra.mrb[0].mxu0 %v7339
  %v7423 = vpop.f32.mrb[0].mxu0
  %v7424 = vadd.f32 0.0, %v7423
  %v7425 = vpop.f32.mrb[0].mxu0
  %v7426 = vpop.f32.mrb[0].mxu0
  %v7427 = vpop.f32.mrb[0].mxu0
  %7428 = vdwg.mxu0
  %v7429 = vadd.f32 %v7320, %v7424
  %s7430 = scalar_lea.vmem %s6, 640
  %v7431 = vld [vmem:[%s7430] sm:$0xf]
  %v7432 = vld [vmem:[%s7430 + $0x4] sm:$0xf]
  %v7433 = vld [vmem:[%s7430 + $0x8] sm:$0xf]
  %v7434 = vld [vmem:[%s7430 + $0xc] sm:$0xf]
  %v7435 = vld [vmem:[%s7430 + $0x10] sm:$0xf]
  %v7436 = vld [vmem:[%s7430 + $0x14] sm:$0xf]
  %v7437 = vld [vmem:[%s7430 + $0x18] sm:$0xf]
  %v7438 = vld [vmem:[%s7430 + $0x1c] sm:$0xf]
  %v7439 = vld [vmem:[%s7430 + $0x20] sm:$0xf]
  %v7440 = vld [vmem:[%s7430 + $0x24] sm:$0xf]
  %v7441 = vld [vmem:[%s7430 + $0x28] sm:$0xf]
  %v7442 = vld [vmem:[%s7430 + $0x2c] sm:$0xf]
  %v7443 = vld [vmem:[%s7430 + $0x30] sm:$0xf]
  %v7444 = vld [vmem:[%s7430 + $0x34] sm:$0xf]
  %v7445 = vld [vmem:[%s7430 + $0x38] sm:$0xf]
  %v7446 = vld [vmem:[%s7430 + $0x3c] sm:$0xf]
  %v7463 = vunpack.c.l.b16 %v7431
  %v7464 = vunpack.c.l.b16 %v7432
  %v7465 = vunpack.c.l.b16 %v7433
  %v7466 = vunpack.c.l.b16 %v7434
  %v7467 = vunpack.c.l.b16 %v7435
  %v7468 = vunpack.c.l.b16 %v7436
  %v7469 = vunpack.c.l.b16 %v7437
  %v7470 = vunpack.c.l.b16 %v7438
  %v7471 = vunpack.c.l.b16 %v7439
  %v7472 = vunpack.c.l.b16 %v7440
  %v7473 = vunpack.c.l.b16 %v7441
  %v7474 = vunpack.c.l.b16 %v7442
  %v7475 = vunpack.c.l.b16 %v7443
  %v7476 = vunpack.c.l.b16 %v7444
  %v7477 = vunpack.c.l.b16 %v7445
  %v7478 = vunpack.c.l.b16 %v7446
  %v7479 = vpack.c.b16 %v7464, %v7463
  %v7480 = vpack.c.b16 %v7466, %v7465
  %v7481 = vpack.c.b16 %v7468, %v7467
  %v7482 = vpack.c.b16 %v7470, %v7469
  %v7483 = vpack.c.b16 %v7472, %v7471
  %v7484 = vpack.c.b16 %v7474, %v7473
  %v7485 = vpack.c.b16 %v7476, %v7475
  %v7486 = vpack.c.b16 %v7478, %v7477
  %7495 = vmatprep.subr.bf16.mxu0 0
  %7496 = vmatpush1.bf16.msra.mxu0 %v7479
  %7497 = vmatprep.subr.bf16.mxu0 0
  %7498 = vmatpush1.bf16.msra.mxu0 %v7480
  %7499 = vmatprep.subr.bf16.mxu0 0
  %7500 = vmatpush1.bf16.msra.mxu0 %v7481
  %7501 = vmatprep.subr.bf16.mxu0 0
  %7502 = vmatpush1.bf16.msra.mxu0 %v7482
  %7503 = vmatprep.subr.bf16.mxu0 0
  %7504 = vmatpush1.bf16.msra.mxu0 %v7483
  %7505 = vmatprep.subr.bf16.mxu0 0
  %7506 = vmatpush1.bf16.msra.mxu0 %v7484
  %7507 = vmatprep.subr.bf16.mxu0 0
  %7508 = vmatpush1.bf16.msra.mxu0 %v7485
  %7509 = vmatprep.subr.bf16.mxu0 0
  %7510 = vmatpush1.bf16.msra.mxu0 %v7486
  %7511 = vmatprep.subr.bf16.mxu0 0
  %7512 = vmatpush1.bf16.msra.mxu0 0
  %7513 = vmatprep.subr.bf16.mxu0 0
  %7514 = vmatpush1.bf16.msra.mxu0 0
  %7515 = vmatprep.subr.bf16.mxu0 0
  %7516 = vmatpush1.bf16.msra.mxu0 0
  %7517 = vmatprep.subr.bf16.mxu0 0
  %7518 = vmatpush1.bf16.msra.mxu0 0
  %7519 = vmatprep.subr.bf16.mxu0 0
  %7520 = vmatpush1.bf16.msra.mxu0 0
  %7521 = vmatprep.subr.bf16.mxu0 0
  %7522 = vmatpush1.bf16.msra.mxu0 0
  %7523 = vmatprep.subr.bf16.mxu0 0
  %7524 = vmatpush1.bf16.msra.mxu0 0
  %7525 = vmatprep.subr.bf16.mxu0 0
  %7526 = vmatpush1.bf16.msra.mxu0 0
  %7527 = vmatprep.mubr.bf16.mxu0 0
  %7528 = vmatmul.mubr.bf16.gmra.mrb[0].mxu0 %v6355
  %v7529 = vpop.f32.mrb[0].mxu0
  %v7530 = vadd.f32 0.0, %v7529
  %v7531 = vpop.f32.mrb[0].mxu0
  %v7532 = vpop.f32.mrb[0].mxu0
  %v7533 = vpop.f32.mrb[0].mxu0
  %7534 = vdwg.mxu0
  %v7535 = vadd.f32 %v7429, %v7530
  %s7536 = scalar_lea.vmem %s6, 704
  %v7537 = vld [vmem:[%s7536] sm:$0xf]
  %v7538 = vld [vmem:[%s7536 + $0x4] sm:$0xf]
  %v7539 = vld [vmem:[%s7536 + $0x8] sm:$0xf]
  %v7540 = vld [vmem:[%s7536 + $0xc] sm:$0xf]
  %v7541 = vld [vmem:[%s7536 + $0x10] sm:$0xf]
  %v7542 = vld [vmem:[%s7536 + $0x14] sm:$0xf]
  %v7543 = vld [vmem:[%s7536 + $0x18] sm:$0xf]
  %v7544 = vld [vmem:[%s7536 + $0x1c] sm:$0xf]
  %v7545 = vld [vmem:[%s7536 + $0x20] sm:$0xf]
  %v7546 = vld [vmem:[%s7536 + $0x24] sm:$0xf]
  %v7547 = vld [vmem:[%s7536 + $0x28] sm:$0xf]
  %v7548 = vld [vmem:[%s7536 + $0x2c] sm:$0xf]
  %v7549 = vld [vmem:[%s7536 + $0x30] sm:$0xf]
  %v7550 = vld [vmem:[%s7536 + $0x34] sm:$0xf]
  %v7551 = vld [vmem:[%s7536 + $0x38] sm:$0xf]
  %v7552 = vld [vmem:[%s7536 + $0x3c] sm:$0xf]
  %v7554 = vrot.slane %v6355, 4
  %v7572 = vunpack.c.l.b16 %v7537
  %v7573 = vunpack.c.l.b16 %v7538
  %v7574 = vunpack.c.l.b16 %v7539
  %v7575 = vunpack.c.l.b16 %v7540
  %v7576 = vunpack.c.l.b16 %v7541
  %v7577 = vunpack.c.l.b16 %v7542
  %v7578 = vunpack.c.l.b16 %v7543
  %v7579 = vunpack.c.l.b16 %v7544
  %v7580 = vunpack.c.l.b16 %v7545
  %v7581 = vunpack.c.l.b16 %v7546
  %v7582 = vunpack.c.l.b16 %v7547
  %v7583 = vunpack.c.l.b16 %v7548
  %v7584 = vunpack.c.l.b16 %v7549
  %v7585 = vunpack.c.l.b16 %v7550
  %v7586 = vunpack.c.l.b16 %v7551
  %v7587 = vunpack.c.l.b16 %v7552
  %v7588 = vpack.c.b16 %v7573, %v7572
  %v7589 = vpack.c.b16 %v7575, %v7574
  %v7590 = vpack.c.b16 %v7577, %v7576
  %v7591 = vpack.c.b16 %v7579, %v7578
  %v7592 = vpack.c.b16 %v7581, %v7580
  %v7593 = vpack.c.b16 %v7583, %v7582
  %v7594 = vpack.c.b16 %v7585, %v7584
  %v7595 = vpack.c.b16 %v7587, %v7586
  %7604 = vmatprep.subr.bf16.mxu0 0
  %7605 = vmatpush1.bf16.msra.mxu0 %v7588
  %7606 = vmatprep.subr.bf16.mxu0 0
  %7607 = vmatpush1.bf16.msra.mxu0 %v7589
  %7608 = vmatprep.subr.bf16.mxu0 0
  %7609 = vmatpush1.bf16.msra.mxu0 %v7590
  %7610 = vmatprep.subr.bf16.mxu0 0
  %7611 = vmatpush1.bf16.msra.mxu0 %v7591
  %7612 = vmatprep.subr.bf16.mxu0 0
  %7613 = vmatpush1.bf16.msra.mxu0 %v7592
  %7614 = vmatprep.subr.bf16.mxu0 0
  %7615 = vmatpush1.bf16.msra.mxu0 %v7593
  %7616 = vmatprep.subr.bf16.mxu0 0
  %7617 = vmatpush1.bf16.msra.mxu0 %v7594
  %7618 = vmatprep.subr.bf16.mxu0 0
  %7619 = vmatpush1.bf16.msra.mxu0 %v7595
  %7620 = vmatprep.subr.bf16.mxu0 0
  %7621 = vmatpush1.bf16.msra.mxu0 0
  %7622 = vmatprep.subr.bf16.mxu0 0
  %7623 = vmatpush1.bf16.msra.mxu0 0
  %7624 = vmatprep.subr.bf16.mxu0 0
  %7625 = vmatpush1.bf16.msra.mxu0 0
  %7626 = vmatprep.subr.bf16.mxu0 0
  %7627 = vmatpush1.bf16.msra.mxu0 0
  %7628 = vmatprep.subr.bf16.mxu0 0
  %7629 = vmatpush1.bf16.msra.mxu0 0
  %7630 = vmatprep.subr.bf16.mxu0 0
  %7631 = vmatpush1.bf16.msra.mxu0 0
  %7632 = vmatprep.subr.bf16.mxu0 0
  %7633 = vmatpush1.bf16.msra.mxu0 0
  %7634 = vmatprep.subr.bf16.mxu0 0
  %7635 = vmatpush1.bf16.msra.mxu0 0
  %7636 = vmatprep.mubr.bf16.mxu0 0
  %7637 = vmatmul.mubr.bf16.gmra.mrb[0].mxu0 %v7554
  %v7638 = vpop.f32.mrb[0].mxu0
  %v7639 = vadd.f32 0.0, %v7638
  %v7640 = vpop.f32.mrb[0].mxu0
  %v7641 = vpop.f32.mrb[0].mxu0
  %v7642 = vpop.f32.mrb[0].mxu0
  %7643 = vdwg.mxu0
  %v7644 = vadd.f32 %v7535, %v7639
  %s7645 = scalar_lea.vmem %s6, 768
  %v7646 = vld [vmem:[%s7645] sm:$0xf]
  %v7647 = vld [vmem:[%s7645 + $0x4] sm:$0xf]
  %v7648 = vld [vmem:[%s7645 + $0x8] sm:$0xf]
  %v7649 = vld [vmem:[%s7645 + $0xc] sm:$0xf]
  %v7650 = vld [vmem:[%s7645 + $0x10] sm:$0xf]
  %v7651 = vld [vmem:[%s7645 + $0x14] sm:$0xf]
  %v7652 = vld [vmem:[%s7645 + $0x18] sm:$0xf]
  %v7653 = vld [vmem:[%s7645 + $0x1c] sm:$0xf]
  %v7654 = vld [vmem:[%s7645 + $0x20] sm:$0xf]
  %v7655 = vld [vmem:[%s7645 + $0x24] sm:$0xf]
  %v7656 = vld [vmem:[%s7645 + $0x28] sm:$0xf]
  %v7657 = vld [vmem:[%s7645 + $0x2c] sm:$0xf]
  %v7658 = vld [vmem:[%s7645 + $0x30] sm:$0xf]
  %v7659 = vld [vmem:[%s7645 + $0x34] sm:$0xf]
  %v7660 = vld [vmem:[%s7645 + $0x38] sm:$0xf]
  %v7661 = vld [vmem:[%s7645 + $0x3c] sm:$0xf]
  %v7678 = vunpack.c.l.b16 %v7646
  %v7679 = vunpack.c.l.b16 %v7647
  %v7680 = vunpack.c.l.b16 %v7648
  %v7681 = vunpack.c.l.b16 %v7649
  %v7682 = vunpack.c.l.b16 %v7650
  %v7683 = vunpack.c.l.b16 %v7651
  %v7684 = vunpack.c.l.b16 %v7652
  %v7685 = vunpack.c.l.b16 %v7653
  %v7686 = vunpack.c.l.b16 %v7654
  %v7687 = vunpack.c.l.b16 %v7655
  %v7688 = vunpack.c.l.b16 %v7656
  %v7689 = vunpack.c.l.b16 %v7657
  %v7690 = vunpack.c.l.b16 %v7658
  %v7691 = vunpack.c.l.b16 %v7659
  %v7692 = vunpack.c.l.b16 %v7660
  %v7693 = vunpack.c.l.b16 %v7661
  %v7694 = vpack.c.b16 %v7679, %v7678
  %v7695 = vpack.c.b16 %v7681, %v7680
  %v7696 = vpack.c.b16 %v7683, %v7682
  %v7697 = vpack.c.b16 %v7685, %v7684
  %v7698 = vpack.c.b16 %v7687, %v7686
  %v7699 = vpack.c.b16 %v7689, %v7688
  %v7700 = vpack.c.b16 %v7691, %v7690
  %v7701 = vpack.c.b16 %v7693, %v7692
  %7710 = vmatprep.subr.bf16.mxu0 0
  %7711 = vmatpush1.bf16.msra.mxu0 %v7694
  %7712 = vmatprep.subr.bf16.mxu0 0
  %7713 = vmatpush1.bf16.msra.mxu0 %v7695
  %7714 = vmatprep.subr.bf16.mxu0 0
  %7715 = vmatpush1.bf16.msra.mxu0 %v7696
  %7716 = vmatprep.subr.bf16.mxu0 0
  %7717 = vmatpush1.bf16.msra.mxu0 %v7697
  %7718 = vmatprep.subr.bf16.mxu0 0
  %7719 = vmatpush1.bf16.msra.mxu0 %v7698
  %7720 = vmatprep.subr.bf16.mxu0 0
  %7721 = vmatpush1.bf16.msra.mxu0 %v7699
  %7722 = vmatprep.subr.bf16.mxu0 0
  %7723 = vmatpush1.bf16.msra.mxu0 %v7700
  %7724 = vmatprep.subr.bf16.mxu0 0
  %7725 = vmatpush1.bf16.msra.mxu0 %v7701
  %7726 = vmatprep.subr.bf16.mxu0 0
  %7727 = vmatpush1.bf16.msra.mxu0 0
  %7728 = vmatprep.subr.bf16.mxu0 0
  %7729 = vmatpush1.bf16.msra.mxu0 0
  %7730 = vmatprep.subr.bf16.mxu0 0
  %7731 = vmatpush1.bf16.msra.mxu0 0
  %7732 = vmatprep.subr.bf16.mxu0 0
  %7733 = vmatpush1.bf16.msra.mxu0 0
  %7734 = vmatprep.subr.bf16.mxu0 0
  %7735 = vmatpush1.bf16.msra.mxu0 0
  %7736 = vmatprep.subr.bf16.mxu0 0
  %7737 = vmatpush1.bf16.msra.mxu0 0
  %7738 = vmatprep.subr.bf16.mxu0 0
  %7739 = vmatpush1.bf16.msra.mxu0 0
  %7740 = vmatprep.subr.bf16.mxu0 0
  %7741 = vmatpush1.bf16.msra.mxu0 0
  %7742 = vmatprep.mubr.bf16.mxu0 0
  %7743 = vmatmul.mubr.bf16.gmra.mrb[0].mxu0 %v6356
  %v7744 = vpop.f32.mrb[0].mxu0
  %v7745 = vadd.f32 0.0, %v7744
  %v7746 = vpop.f32.mrb[0].mxu0
  %v7747 = vpop.f32.mrb[0].mxu0
  %v7748 = vpop.f32.mrb[0].mxu0
  %7749 = vdwg.mxu0
  %v7750 = vadd.f32 %v7644, %v7745
  %s7751 = scalar_lea.vmem %s6, 832
  %v7752 = vld [vmem:[%s7751] sm:$0xf]
  %v7753 = vld [vmem:[%s7751 + $0x4] sm:$0xf]
  %v7754 = vld [vmem:[%s7751 + $0x8] sm:$0xf]
  %v7755 = vld [vmem:[%s7751 + $0xc] sm:$0xf]
  %v7756 = vld [vmem:[%s7751 + $0x10] sm:$0xf]
  %v7757 = vld [vmem:[%s7751 + $0x14] sm:$0xf]
  %v7758 = vld [vmem:[%s7751 + $0x18] sm:$0xf]
  %v7759 = vld [vmem:[%s7751 + $0x1c] sm:$0xf]
  %v7760 = vld [vmem:[%s7751 + $0x20] sm:$0xf]
  %v7761 = vld [vmem:[%s7751 + $0x24] sm:$0xf]
  %v7762 = vld [vmem:[%s7751 + $0x28] sm:$0xf]
  %v7763 = vld [vmem:[%s7751 + $0x2c] sm:$0xf]
  %v7764 = vld [vmem:[%s7751 + $0x30] sm:$0xf]
  %v7765 = vld [vmem:[%s7751 + $0x34] sm:$0xf]
  %v7766 = vld [vmem:[%s7751 + $0x38] sm:$0xf]
  %v7767 = vld [vmem:[%s7751 + $0x3c] sm:$0xf]
  %v7769 = vrot.slane %v6356, 4
  %v7787 = vunpack.c.l.b16 %v7752
  %v7788 = vunpack.c.l.b16 %v7753
  %v7789 = vunpack.c.l.b16 %v7754
  %v7790 = vunpack.c.l.b16 %v7755
  %v7791 = vunpack.c.l.b16 %v7756
  %v7792 = vunpack.c.l.b16 %v7757
  %v7793 = vunpack.c.l.b16 %v7758
  %v7794 = vunpack.c.l.b16 %v7759
  %v7795 = vunpack.c.l.b16 %v7760
  %v7796 = vunpack.c.l.b16 %v7761
  %v7797 = vunpack.c.l.b16 %v7762
  %v7798 = vunpack.c.l.b16 %v7763
  %v7799 = vunpack.c.l.b16 %v7764
  %v7800 = vunpack.c.l.b16 %v7765
  %v7801 = vunpack.c.l.b16 %v7766
  %v7802 = vunpack.c.l.b16 %v7767
  %v7803 = vpack.c.b16 %v7788, %v7787
  %v7804 = vpack.c.b16 %v7790, %v7789
  %v7805 = vpack.c.b16 %v7792, %v7791
  %v7806 = vpack.c.b16 %v7794, %v7793
  %v7807 = vpack.c.b16 %v7796, %v7795
  %v7808 = vpack.c.b16 %v7798, %v7797
  %v7809 = vpack.c.b16 %v7800, %v7799
  %v7810 = vpack.c.b16 %v7802, %v7801
  %7819 = vmatprep.subr.bf16.mxu0 0
  %7820 = vmatpush1.bf16.msra.mxu0 %v7803
  %7821 = vmatprep.subr.bf16.mxu0 0
  %7822 = vmatpush1.bf16.msra.mxu0 %v7804
  %7823 = vmatprep.subr.bf16.mxu0 0
  %7824 = vmatpush1.bf16.msra.mxu0 %v7805
  %7825 = vmatprep.subr.bf16.mxu0 0
  %7826 = vmatpush1.bf16.msra.mxu0 %v7806
  %7827 = vmatprep.subr.bf16.mxu0 0
  %7828 = vmatpush1.bf16.msra.mxu0 %v7807
  %7829 = vmatprep.subr.bf16.mxu0 0
  %7830 = vmatpush1.bf16.msra.mxu0 %v7808
  %7831 = vmatprep.subr.bf16.mxu0 0
  %7832 = vmatpush1.bf16.msra.mxu0 %v7809
  %7833 = vmatprep.subr.bf16.mxu0 0
  %7834 = vmatpush1.bf16.msra.mxu0 %v7810
  %7835 = vmatprep.subr.bf16.mxu0 0
  %7836 = vmatpush1.bf16.msra.mxu0 0
  %7837 = vmatprep.subr.bf16.mxu0 0
  %7838 = vmatpush1.bf16.msra.mxu0 0
  %7839 = vmatprep.subr.bf16.mxu0 0
  %7840 = vmatpush1.bf16.msra.mxu0 0
  %7841 = vmatprep.subr.bf16.mxu0 0
  %7842 = vmatpush1.bf16.msra.mxu0 0
  %7843 = vmatprep.subr.bf16.mxu0 0
  %7844 = vmatpush1.bf16.msra.mxu0 0
  %7845 = vmatprep.subr.bf16.mxu0 0
  %7846 = vmatpush1.bf16.msra.mxu0 0
  %7847 = vmatprep.subr.bf16.mxu0 0
  %7848 = vmatpush1.bf16.msra.mxu0 0
  %7849 = vmatprep.subr.bf16.mxu0 0
  %7850 = vmatpush1.bf16.msra.mxu0 0
  %7851 = vmatprep.mubr.bf16.mxu0 0
  %7852 = vmatmul.mubr.bf16.gmra.mrb[0].mxu0 %v7769
  %v7853 = vpop.f32.mrb[0].mxu0
  %v7854 = vadd.f32 0.0, %v7853
  %v7855 = vpop.f32.mrb[0].mxu0
  %v7856 = vpop.f32.mrb[0].mxu0
  %v7857 = vpop.f32.mrb[0].mxu0
  %7858 = vdwg.mxu0
  %v7859 = vadd.f32 %v7750, %v7854
  %s7860 = scalar_lea.vmem %s6, 896
  %v7861 = vld [vmem:[%s7860] sm:$0xf]
  %v7862 = vld [vmem:[%s7860 + $0x4] sm:$0xf]
  %v7863 = vld [vmem:[%s7860 + $0x8] sm:$0xf]
  %v7864 = vld [vmem:[%s7860 + $0xc] sm:$0xf]
  %v7865 = vld [vmem:[%s7860 + $0x10] sm:$0xf]
  %v7866 = vld [vmem:[%s7860 + $0x14] sm:$0xf]
  %v7867 = vld [vmem:[%s7860 + $0x18] sm:$0xf]
  %v7868 = vld [vmem:[%s7860 + $0x1c] sm:$0xf]
  %v7869 = vld [vmem:[%s7860 + $0x20] sm:$0xf]
  %v7870 = vld [vmem:[%s7860 + $0x24] sm:$0xf]
  %v7871 = vld [vmem:[%s7860 + $0x28] sm:$0xf]
  %v7872 = vld [vmem:[%s7860 + $0x2c] sm:$0xf]
  %v7873 = vld [vmem:[%s7860 + $0x30] sm:$0xf]
  %v7874 = vld [vmem:[%s7860 + $0x34] sm:$0xf]
  %v7875 = vld [vmem:[%s7860 + $0x38] sm:$0xf]
  %v7876 = vld [vmem:[%s7860 + $0x3c] sm:$0xf]
  %v7893 = vunpack.c.l.b16 %v7861
  %v7894 = vunpack.c.l.b16 %v7862
  %v7895 = vunpack.c.l.b16 %v7863
  %v7896 = vunpack.c.l.b16 %v7864
  %v7897 = vunpack.c.l.b16 %v7865
  %v7898 = vunpack.c.l.b16 %v7866
  %v7899 = vunpack.c.l.b16 %v7867
  %v7900 = vunpack.c.l.b16 %v7868
  %v7901 = vunpack.c.l.b16 %v7869
  %v7902 = vunpack.c.l.b16 %v7870
  %v7903 = vunpack.c.l.b16 %v7871
  %v7904 = vunpack.c.l.b16 %v7872
  %v7905 = vunpack.c.l.b16 %v7873
  %v7906 = vunpack.c.l.b16 %v7874
  %v7907 = vunpack.c.l.b16 %v7875
  %v7908 = vunpack.c.l.b16 %v7876
  %v7909 = vpack.c.b16 %v7894, %v7893
  %v7910 = vpack.c.b16 %v7896, %v7895
  %v7911 = vpack.c.b16 %v7898, %v7897
  %v7912 = vpack.c.b16 %v7900, %v7899
  %v7913 = vpack.c.b16 %v7902, %v7901
  %v7914 = vpack.c.b16 %v7904, %v7903
  %v7915 = vpack.c.b16 %v7906, %v7905
  %v7916 = vpack.c.b16 %v7908, %v7907
  %7925 = vmatprep.subr.bf16.mxu0 0
  %7926 = vmatpush1.bf16.msra.mxu0 %v7909
  %7927 = vmatprep.subr.bf16.mxu0 0
  %7928 = vmatpush1.bf16.msra.mxu0 %v7910
  %7929 = vmatprep.subr.bf16.mxu0 0
  %7930 = vmatpush1.bf16.msra.mxu0 %v7911
  %7931 = vmatprep.subr.bf16.mxu0 0
  %7932 = vmatpush1.bf16.msra.mxu0 %v7912
  %7933 = vmatprep.subr.bf16.mxu0 0
  %7934 = vmatpush1.bf16.msra.mxu0 %v7913
  %7935 = vmatprep.subr.bf16.mxu0 0
  %7936 = vmatpush1.bf16.msra.mxu0 %v7914
  %7937 = vmatprep.subr.bf16.mxu0 0
  %7938 = vmatpush1.bf16.msra.mxu0 %v7915
  %7939 = vmatprep.subr.bf16.mxu0 0
  %7940 = vmatpush1.bf16.msra.mxu0 %v7916
  %7941 = vmatprep.subr.bf16.mxu0 0
  %7942 = vmatpush1.bf16.msra.mxu0 0
  %7943 = vmatprep.subr.bf16.mxu0 0
  %7944 = vmatpush1.bf16.msra.mxu0 0
  %7945 = vmatprep.subr.bf16.mxu0 0
  %7946 = vmatpush1.bf16.msra.mxu0 0
  %7947 = vmatprep.subr.bf16.mxu0 0
  %7948 = vmatpush1.bf16.msra.mxu0 0
  %7949 = vmatprep.subr.bf16.mxu0 0
  %7950 = vmatpush1.bf16.msra.mxu0 0
  %7951 = vmatprep.subr.bf16.mxu0 0
  %7952 = vmatpush1.bf16.msra.mxu0 0
  %7953 = vmatprep.subr.bf16.mxu0 0
  %7954 = vmatpush1.bf16.msra.mxu0 0
  %7955 = vmatprep.subr.bf16.mxu0 0
  %7956 = vmatpush1.bf16.msra.mxu0 0
  %7957 = vmatprep.mubr.bf16.mxu0 0
  %7958 = vmatmul.mubr.bf16.gmra.mrb[0].mxu0 %v6357
  %v7959 = vpop.f32.mrb[0].mxu0
  %v7960 = vadd.f32 0.0, %v7959
  %v7961 = vpop.f32.mrb[0].mxu0
  %v7962 = vpop.f32.mrb[0].mxu0
  %v7963 = vpop.f32.mrb[0].mxu0
  %7964 = vdwg.mxu0
  %v7965 = vadd.f32 %v7859, %v7960
  %s7966 = scalar_lea.vmem %s6, 960
  %v7967 = vld [vmem:[%s7966] sm:$0xf]
  %v7968 = vld [vmem:[%s7966 + $0x4] sm:$0xf]
  %v7969 = vld [vmem:[%s7966 + $0x8] sm:$0xf]
  %v7970 = vld [vmem:[%s7966 + $0xc] sm:$0xf]
  %v7971 = vld [vmem:[%s7966 + $0x10] sm:$0xf]
  %v7972 = vld [vmem:[%s7966 + $0x14] sm:$0xf]
  %v7973 = vld [vmem:[%s7966 + $0x18] sm:$0xf]
  %v7974 = vld [vmem:[%s7966 + $0x1c] sm:$0xf]
  %v7975 = vld [vmem:[%s7966 + $0x20] sm:$0xf]
  %v7976 = vld [vmem:[%s7966 + $0x24] sm:$0xf]
  %v7977 = vld [vmem:[%s7966 + $0x28] sm:$0xf]
  %v7978 = vld [vmem:[%s7966 + $0x2c] sm:$0xf]
  %v7979 = vld [vmem:[%s7966 + $0x30] sm:$0xf]
  %v7980 = vld [vmem:[%s7966 + $0x34] sm:$0xf]
  %v7981 = vld [vmem:[%s7966 + $0x38] sm:$0xf]
  %v7982 = vld [vmem:[%s7966 + $0x3c] sm:$0xf]
  %v7984 = vrot.slane %v6357, 4
  %v8002 = vunpack.c.l.b16 %v7967
  %v8003 = vunpack.c.l.b16 %v7968
  %v8004 = vunpack.c.l.b16 %v7969
  %v8005 = vunpack.c.l.b16 %v7970
  %v8006 = vunpack.c.l.b16 %v7971
  %v8007 = vunpack.c.l.b16 %v7972
  %v8008 = vunpack.c.l.b16 %v7973
  %v8009 = vunpack.c.l.b16 %v7974
  %v8010 = vunpack.c.l.b16 %v7975
  %v8011 = vunpack.c.l.b16 %v7976
  %v8012 = vunpack.c.l.b16 %v7977
  %v8013 = vunpack.c.l.b16 %v7978
  %v8014 = vunpack.c.l.b16 %v7979
  %v8015 = vunpack.c.l.b16 %v7980
  %v8016 = vunpack.c.l.b16 %v7981
  %v8017 = vunpack.c.l.b16 %v7982
  %v8018 = vpack.c.b16 %v8003, %v8002
  %v8019 = vpack.c.b16 %v8005, %v8004
  %v8020 = vpack.c.b16 %v8007, %v8006
  %v8021 = vpack.c.b16 %v8009, %v8008
  %v8022 = vpack.c.b16 %v8011, %v8010
  %v8023 = vpack.c.b16 %v8013, %v8012
  %v8024 = vpack.c.b16 %v8015, %v8014
  %v8025 = vpack.c.b16 %v8017, %v8016
  %8034 = vmatprep.subr.bf16.mxu0 0
  %8035 = vmatpush1.bf16.msra.mxu0 %v8018
  %8036 = vmatprep.subr.bf16.mxu0 0
  %8037 = vmatpush1.bf16.msra.mxu0 %v8019
  %8038 = vmatprep.subr.bf16.mxu0 0
  %8039 = vmatpush1.bf16.msra.mxu0 %v8020
  %8040 = vmatprep.subr.bf16.mxu0 0
  %8041 = vmatpush1.bf16.msra.mxu0 %v8021
  %8042 = vmatprep.subr.bf16.mxu0 0
  %8043 = vmatpush1.bf16.msra.mxu0 %v8022
  %8044 = vmatprep.subr.bf16.mxu0 0
  %8045 = vmatpush1.bf16.msra.mxu0 %v8023
  %8046 = vmatprep.subr.bf16.mxu0 0
  %8047 = vmatpush1.bf16.msra.mxu0 %v8024
  %8048 = vmatprep.subr.bf16.mxu0 0
  %8049 = vmatpush1.bf16.msra.mxu0 %v8025
  %8050 = vmatprep.subr.bf16.mxu0 0
  %8051 = vmatpush1.bf16.msra.mxu0 0
  %8052 = vmatprep.subr.bf16.mxu0 0
  %8053 = vmatpush1.bf16.msra.mxu0 0
  %8054 = vmatprep.subr.bf16.mxu0 0
  %8055 = vmatpush1.bf16.msra.mxu0 0
  %8056 = vmatprep.subr.bf16.mxu0 0
  %8057 = vmatpush1.bf16.msra.mxu0 0
  %8058 = vmatprep.subr.bf16.mxu0 0
  %8059 = vmatpush1.bf16.msra.mxu0 0
  %8060 = vmatprep.subr.bf16.mxu0 0
  %8061 = vmatpush1.bf16.msra.mxu0 0
  %8062 = vmatprep.subr.bf16.mxu0 0
  %8063 = vmatpush1.bf16.msra.mxu0 0
  %8064 = vmatprep.subr.bf16.mxu0 0
  %8065 = vmatpush1.bf16.msra.mxu0 0
  %8066 = vmatprep.mubr.bf16.mxu0 0
  %8067 = vmatmul.mubr.bf16.gmra.mrb[0].mxu0 %v7984
  %v8068 = vpop.f32.mrb[0].mxu0
  %v8069 = vadd.f32 0.0, %v8068
  %v8070 = vpop.f32.mrb[0].mxu0
  %v8071 = vpop.f32.mrb[0].mxu0
  %v8072 = vpop.f32.mrb[0].mxu0
  %8073 = vdwg.mxu0
  %v8074 = vadd.f32 %v7965, %v8069
  %v8075 = vld [vmem:[%s7] sm:$0x1]
  %v8077 = vlaneseq
  %v8078 = vshrl.u32 %v8077, 7
  %v8079 = vsub.s32 0, %v8078
  %v8080 = vrot.slane %v8075, %v8079
  %v8082 = vadd.f32 %v8074, %v8080
  %v8083 = vmax.f32 %v8082, 0.0
  %v8084 = vpack.c.bf16 %v8083, %v8083
  %v8085 = vld [vmem:[%s8] sm:$0xf]
  %v8086 = vld [vmem:[%s8 + $0x4] sm:$0xf]
  %v8087 = vld [vmem:[%s8 + $0x8] sm:$0xf]
  %v8088 = vld [vmem:[%s8 + $0xc] sm:$0xf]
  %v8089 = vld [vmem:[%s8 + $0x10] sm:$0xf]
  %v8090 = vld [vmem:[%s8 + $0x14] sm:$0xf]
  %v8091 = vld [vmem:[%s8 + $0x18] sm:$0xf]
  %v8092 = vld [vmem:[%s8 + $0x1c] sm:$0xf]
  %v8093 = vld [vmem:[%s8 + $0x20] sm:$0xf]
  %v8094 = vld [vmem:[%s8 + $0x24] sm:$0xf]
  %v8095 = vld [vmem:[%s8 + $0x28] sm:$0xf]
  %v8096 = vld [vmem:[%s8 + $0x2c] sm:$0xf]
  %v8097 = vld [vmem:[%s8 + $0x30] sm:$0xf]
  %v8098 = vld [vmem:[%s8 + $0x34] sm:$0xf]
  %v8099 = vld [vmem:[%s8 + $0x38] sm:$0xf]
  %v8100 = vld [vmem:[%s8 + $0x3c] sm:$0xf]
  %v8101 = vld [vmem:[%s9] sm:$0x1]
  %v8103 = vlaneseq
  %v8104 = vshrl.u32 %v8103, 7
  %v8105 = vsub.s32 0, %v8104
  %v8106 = vrot.slane %v8101, %v8105
  %v8124 = vunpack.c.l.b16 %v8085
  %v8125 = vunpack.c.l.b16 %v8086
  %v8126 = vunpack.c.l.b16 %v8087
  %v8127 = vunpack.c.l.b16 %v8088
  %v8128 = vunpack.c.l.b16 %v8089
  %v8129 = vunpack.c.l.b16 %v8090
  %v8130 = vunpack.c.l.b16 %v8091
  %v8131 = vunpack.c.l.b16 %v8092
  %v8132 = vunpack.c.l.b16 %v8093
  %v8133 = vunpack.c.l.b16 %v8094
  %v8134 = vunpack.c.l.b16 %v8095
  %v8135 = vunpack.c.l.b16 %v8096
  %v8136 = vunpack.c.l.b16 %v8097
  %v8137 = vunpack.c.l.b16 %v8098
  %v8138 = vunpack.c.l.b16 %v8099
  %v8139 = vunpack.c.l.b16 %v8100
  %v8140 = vpack.c.b16 %v8125, %v8124
  %v8141 = vpack.c.b16 %v8127, %v8126
  %v8142 = vpack.c.b16 %v8129, %v8128
  %v8143 = vpack.c.b16 %v8131, %v8130
  %v8144 = vpack.c.b16 %v8133, %v8132
  %v8145 = vpack.c.b16 %v8135, %v8134
  %v8146 = vpack.c.b16 %v8137, %v8136
  %v8147 = vpack.c.b16 %v8139, %v8138
  %8156 = vmatprep.subr.bf16.mxu0 0
  %8157 = vmatpush1.bf16.msra.mxu0 %v8140
  %8158 = vmatprep.subr.bf16.mxu0 0
  %8159 = vmatpush1.bf16.msra.mxu0 %v8141
  %8160 = vmatprep.subr.bf16.mxu0 0
  %8161 = vmatpush1.bf16.msra.mxu0 %v8142
  %8162 = vmatprep.subr.bf16.mxu0 0
  %8163 = vmatpush1.bf16.msra.mxu0 %v8143
  %8164 = vmatprep.subr.bf16.mxu0 0
  %8165 = vmatpush1.bf16.msra.mxu0 %v8144
  %8166 = vmatprep.subr.bf16.mxu0 0
  %8167 = vmatpush1.bf16.msra.mxu0 %v8145
  %8168 = vmatprep.subr.bf16.mxu0 0
  %8169 = vmatpush1.bf16.msra.mxu0 %v8146
  %8170 = vmatprep.subr.bf16.mxu0 0
  %8171 = vmatpush1.bf16.msra.mxu0 %v8147
  %8172 = vmatprep.subr.bf16.mxu0 0
  %8173 = vmatpush1.bf16.msra.mxu0 0
  %8174 = vmatprep.subr.bf16.mxu0 0
  %8175 = vmatpush1.bf16.msra.mxu0 0
  %8176 = vmatprep.subr.bf16.mxu0 0
  %8177 = vmatpush1.bf16.msra.mxu0 0
  %8178 = vmatprep.subr.bf16.mxu0 0
  %8179 = vmatpush1.bf16.msra.mxu0 0
  %8180 = vmatprep.subr.bf16.mxu0 0
  %8181 = vmatpush1.bf16.msra.mxu0 0
  %8182 = vmatprep.subr.bf16.mxu0 0
  %8183 = vmatpush1.bf16.msra.mxu0 0
  %8184 = vmatprep.subr.bf16.mxu0 0
  %8185 = vmatpush1.bf16.msra.mxu0 0
  %8186 = vmatprep.subr.bf16.mxu0 0
  %8187 = vmatpush1.bf16.msra.mxu0 0
  %8188 = vmatprep.mubr.bf16.mxu0 0
  %8189 = vmatmul.mubr.bf16.gmra.mrb[0].mxu0 %v8084
  %v8190 = vpop.f32.mrb[0].mxu0
  %v8191 = vadd.f32 %v8106, %v8190
  %v8192 = vpop.f32.mrb[0].mxu0
  %v8193 = vpop.f32.mrb[0].mxu0
  %v8194 = vpop.f32.mrb[0].mxu0
  %8195 = vdwg.mxu0
  %v8196 = vmax.f32 %v8191, 0.0
  %v8197 = vpack.c.bf16 %v8196, %v8196
  %v8198 = vld [vmem:[%s10] sm:$0xf]
  %v8199 = vld [vmem:[%s10 + $0x4] sm:$0xf]
  %v8200 = vld [vmem:[%s10 + $0x8] sm:$0xf]
  %v8201 = vld [vmem:[%s10 + $0xc] sm:$0xf]
  %v8202 = vld [vmem:[%s10 + $0x10] sm:$0xf]
  %v8203 = vld [vmem:[%s10 + $0x14] sm:$0xf]
  %v8204 = vld [vmem:[%s10 + $0x18] sm:$0xf]
  %v8205 = vld [vmem:[%s10 + $0x1c] sm:$0xf]
  %v8206 = vld [vmem:[%s10 + $0x20] sm:$0xf]
  %v8207 = vld [vmem:[%s10 + $0x24] sm:$0xf]
  %v8208 = vld [vmem:[%s10 + $0x28] sm:$0xf]
  %v8209 = vld [vmem:[%s10 + $0x2c] sm:$0xf]
  %v8210 = vld [vmem:[%s10 + $0x30] sm:$0xf]
  %v8211 = vld [vmem:[%s10 + $0x34] sm:$0xf]
  %v8212 = vld [vmem:[%s10 + $0x38] sm:$0xf]
  %v8213 = vld [vmem:[%s10 + $0x3c] sm:$0xf]
  %v8214 = vld [vmem:[%s11] sm:$0x1]
  %v8216 = vlaneseq
  %v8217 = vshrl.u32 %v8216, 7
  %v8218 = vsub.s32 0, %v8217
  %v8219 = vrot.slane %v8214, %v8218
  %v8237 = vunpack.c.l.b16 %v8198
  %v8238 = vunpack.c.l.b16 %v8199
  %v8239 = vunpack.c.l.b16 %v8200
  %v8240 = vunpack.c.l.b16 %v8201
  %v8241 = vunpack.c.l.b16 %v8202
  %v8242 = vunpack.c.l.b16 %v8203
  %v8243 = vunpack.c.l.b16 %v8204
  %v8244 = vunpack.c.l.b16 %v8205
  %v8245 = vunpack.c.l.b16 %v8206
  %v8246 = vunpack.c.l.b16 %v8207
  %v8247 = vunpack.c.l.b16 %v8208
  %v8248 = vunpack.c.l.b16 %v8209
  %v8249 = vunpack.c.l.b16 %v8210
  %v8250 = vunpack.c.l.b16 %v8211
  %v8251 = vunpack.c.l.b16 %v8212
  %v8252 = vunpack.c.l.b16 %v8213
  %v8253 = vpack.c.b16 %v8238, %v8237
  %v8254 = vpack.c.b16 %v8240, %v8239
  %v8255 = vpack.c.b16 %v8242, %v8241
  %v8256 = vpack.c.b16 %v8244, %v8243
  %v8257 = vpack.c.b16 %v8246, %v8245
  %v8258 = vpack.c.b16 %v8248, %v8247
  %v8259 = vpack.c.b16 %v8250, %v8249
  %v8260 = vpack.c.b16 %v8252, %v8251
  %8269 = vmatprep.subr.bf16.mxu0 0
  %8270 = vmatpush1.bf16.msra.mxu0 %v8253
  %8271 = vmatprep.subr.bf16.mxu0 0
  %8272 = vmatpush1.bf16.msra.mxu0 %v8254
  %8273 = vmatprep.subr.bf16.mxu0 0
  %8274 = vmatpush1.bf16.msra.mxu0 %v8255
  %8275 = vmatprep.subr.bf16.mxu0 0
  %8276 = vmatpush1.bf16.msra.mxu0 %v8256
  %8277 = vmatprep.subr.bf16.mxu0 0
  %8278 = vmatpush1.bf16.msra.mxu0 %v8257
  %8279 = vmatprep.subr.bf16.mxu0 0
  %8280 = vmatpush1.bf16.msra.mxu0 %v8258
  %8281 = vmatprep.subr.bf16.mxu0 0
  %8282 = vmatpush1.bf16.msra.mxu0 %v8259
  %8283 = vmatprep.subr.bf16.mxu0 0
  %8284 = vmatpush1.bf16.msra.mxu0 %v8260
  %8285 = vmatprep.subr.bf16.mxu0 0
  %8286 = vmatpush1.bf16.msra.mxu0 0
  %8287 = vmatprep.subr.bf16.mxu0 0
  %8288 = vmatpush1.bf16.msra.mxu0 0
  %8289 = vmatprep.subr.bf16.mxu0 0
  %8290 = vmatpush1.bf16.msra.mxu0 0
  %8291 = vmatprep.subr.bf16.mxu0 0
  %8292 = vmatpush1.bf16.msra.mxu0 0
  %8293 = vmatprep.subr.bf16.mxu0 0
  %8294 = vmatpush1.bf16.msra.mxu0 0
  %8295 = vmatprep.subr.bf16.mxu0 0
  %8296 = vmatpush1.bf16.msra.mxu0 0
  %8297 = vmatprep.subr.bf16.mxu0 0
  %8298 = vmatpush1.bf16.msra.mxu0 0
  %8299 = vmatprep.subr.bf16.mxu0 0
  %8300 = vmatpush1.bf16.msra.mxu0 0
  %8301 = vmatprep.mubr.bf16.mxu0 0
  %8302 = vmatmul.mubr.bf16.gmra.mrb[0].mxu0 %v8197
  %v8303 = vpop.f32.mrb[0].mxu0
  %v8304 = vadd.f32 %v8219, %v8303
  %v8305 = vpop.f32.mrb[0].mxu0
  %v8306 = vpop.f32.mrb[0].mxu0
  %v8307 = vpop.f32.mrb[0].mxu0
  %8308 = vdwg.mxu0
  %8309 = vst [vmem:[%s12] sm:$0xff] %v8304
  // Predicated region
  $region50: #{cnn_model1_forward.1} parent=0 // pred_check
    _
  $region51: #{cnn_model1_forward.1} parent=0 // pred_check_branch
    %8311 = sbr.rel (0) target = $region53
  $region52: #{cnn_model1_forward.1} parent=0 // pred_region
    _
  $region53: #{cnn_model1_forward.1} parent=0 // pred_fallthru
    _
  // Predicated region
  $region54: #{cnn_model1_forward.1} parent=0 // pred_check
    _
  $region55: #{cnn_model1_forward.1} parent=0 // pred_check_branch
    %8313 = sbr.rel (0) target = $region57
  $region56: #{cnn_model1_forward.1} parent=0 // pred_region
    _
  $region57: #{cnn_model1_forward.1} parent=0 // pred_fallthru
    _

</llo_original>
